<compile_context>
chip_gen: v7x
topology: tpu7x:2x2x1
jax: 0.10.0
libtpu: 0.0.40
codegen_flags: <defaults>
</compile_context>

<pallas_src>
import functools

import numpy as np
import jax
import jax.numpy as jnp
from jax import lax
from jax.experimental import pallas as pl
from jax.experimental.pallas import tpu as pltpu


VMEM_LIMIT_BYTES = 32 * 1024 * 1024   # >= default scoped VMEM on v5e/v6e/v7x


# ----------------------------- Pallas kernels ------------------------------


def _bottleneck_kernel(x_ref, w_ref, s_ref, t_ref, o_ref):
    """1x1x1 conv (matmul) + folded-BN affine + ReLU on one row tile."""
    acc = jnp.dot(x_ref[...], w_ref[...], preferred_element_type=jnp.float32)
    acc = acc * s_ref[...] + t_ref[...]
    o_ref[...] = jnp.maximum(acc, 0.0).astype(o_ref.dtype)


def _dwsep_spatial_kernel(h_ref, wd_ref, bd_ref, wh_ref, bh_ref, ww_ref, bw_ref, o_ref):
    """Per-channel (depthwise) 3-tap convs along D, H and W on one (D,H,W,C) volume.

    h_ref : (D, H, W, C) activation block (one batch element, channels-last)
    w*_ref: (3, C) per-channel taps; b*_ref: (1, C) conv bias.
    Zero padding of 1 on both ends of each convolved axis is materialized in VMEM.
    """
    x = h_ref[...]
    d, h, w, c = x.shape

    def taps(wref):
        w3 = wref[...]
        return (w3[0:1, :].reshape(1, 1, 1, c),
                w3[1:2, :].reshape(1, 1, 1, c),
                w3[2:3, :].reshape(1, 1, 1, c))

    def bias(bref):
        return bref[...].reshape(1, 1, 1, c)

    # --- depth (D) axis ---
    w0, w1, w2 = taps(wd_ref)
    z = jnp.zeros((1, h, w, c), jnp.float32)
    xp = jnp.concatenate([z, x, z], axis=0)
    y = xp[0:d] * w0 + xp[1:d + 1] * w1 + xp[2:d + 2] * w2 + bias(bd_ref)

    # --- height (H) axis ---
    w0, w1, w2 = taps(wh_ref)
    z = jnp.zeros((d, 1, w, c), jnp.float32)
    yp = jnp.concatenate([z, y, z], axis=1)
    y = yp[:, 0:h] * w0 + yp[:, 1:h + 1] * w1 + yp[:, 2:h + 2] * w2 + bias(bh_ref)

    # --- width (W) axis ---
    w0, w1, w2 = taps(ww_ref)
    z = jnp.zeros((d, h, 1, c), jnp.float32)
    yp = jnp.concatenate([z, y, z], axis=2)
    y = yp[:, :, 0:w] * w0 + yp[:, :, 1:w + 1] * w1 + yp[:, :, 2:w + 2] * w2 + bias(bw_ref)

    o_ref[...] = y.astype(o_ref.dtype)


def _tail_kernel(h_ref, x_ref, wpw_ref, sb_ref, tb_ref, wex_ref, sc_ref, tc_ref,
                 wr_ref, sr_ref, tr_ref, o_ref, *, use_res_conv):
    """Fused tail on one row tile:
       separable pointwise 1x1x1 + BN + ReLU -> expansion 1x1x1 + BN + ReLU,
       plus the residual branch (1x1x1 + BN + ReLU, or identity) and the final add."""
    h2 = jnp.dot(h_ref[...], wpw_ref[...], preferred_element_type=jnp.float32)
    h2 = jnp.maximum(h2 * sb_ref[...] + tb_ref[...], 0.0)
    h3 = jnp.dot(h2, wex_ref[...], preferred_element_type=jnp.float32)
    h3 = jnp.maximum(h3 * sc_ref[...] + tc_ref[...], 0.0)
    if use_res_conv:
        r = jnp.dot(x_ref[...], wr_ref[...], preferred_element_type=jnp.float32)
        r = jnp.maximum(r * sr_ref[...] + tr_ref[...], 0.0)
    else:
        r = x_ref[...]
    o_ref[...] = (h3 + r).astype(o_ref.dtype)


# ----------------------------- wrappers (glue) ------------------------------


def _row_tile(m, target=512):
    """Largest row tile <= target that divides m (multiple of 8), else m."""
    cand = min(target, m)
    cand -= cand % 8
    while cand >= 8:
        if m % cand == 0:
            return cand
        cand -= 8
    return m


def _cparams():
    return pltpu.CompilerParams(dimension_semantics=("parallel",),
                                vmem_limit_bytes=VMEM_LIMIT_BYTES)


def asym_bottleneck_forward(x_ncdhw, P, *, row_tile=512):
    """Pallas implementation of asym_depthwiseSep_bottleneck_module.forward (eval)."""
    N, Cin, D, H, W = x_ncdhw.shape
    Cmid = P["w_bott"].shape[-1]
    Cout = P["w_exp"].shape[-1]
    use_res = "w_res" in P
    if not use_res:
        assert Cin == Cout, "identity residual requires in_channels == out_channels"

    x = jnp.transpose(x_ncdhw, (0, 2, 3, 4, 1))     # NCDHW -> NDHWC (channels-last)
    M = N * D * H * W
    x2 = x.reshape(M, Cin)
    TM = _row_tile(M, row_tile)
    grid_rows = (M // TM,)

    # --- K1: bottleneck 1x1x1 conv + BN + ReLU (row-tiled matmul) -----------------
    h1 = pl.pallas_call(
        _bottleneck_kernel,
        out_shape=jax.ShapeDtypeStruct((M, Cmid), jnp.float32),
        grid=grid_rows,
        in_specs=[pl.BlockSpec((TM, Cin), lambda i: (i, 0)),
                  pl.BlockSpec((Cin, Cmid), lambda i: (0, 0)),
                  pl.BlockSpec((1, Cmid), lambda i: (0, 0)),
                  pl.BlockSpec((1, Cmid), lambda i: (0, 0))],
        out_specs=pl.BlockSpec((TM, Cmid), lambda i: (i, 0)),
        compiler_params=_cparams(),
        cost_estimate=pl.CostEstimate(
            flops=2 * M * Cin * Cmid, transcendentals=0,
            bytes_accessed=4 * (M * Cin + M * Cmid + Cin * Cmid + 2 * Cmid)),
    )(x2, P["w_bott"], P["bna_s"], P["bna_t"])

    # --- K2: asymmetric depthwise 3-tap convs along D, H, W (per-batch volume) ----
    h1v = h1.reshape(N, D, H, W, Cmid)
    hwv = pl.pallas_call(
        _dwsep_spatial_kernel,
        out_shape=jax.ShapeDtypeStruct((N, D, H, W, Cmid), jnp.float32),
        grid=(N,),
        in_specs=[pl.BlockSpec((None, D, H, W, Cmid), lambda n: (n, 0, 0, 0, 0)),
                  pl.BlockSpec((3, Cmid), lambda n: (0, 0)),
                  pl.BlockSpec((1, Cmid), lambda n: (0, 0)),
                  pl.BlockSpec((3, Cmid), lambda n: (0, 0)),
                  pl.BlockSpec((1, Cmid), lambda n: (0, 0)),
                  pl.BlockSpec((3, Cmid), lambda n: (0, 0)),
                  pl.BlockSpec((1, Cmid), lambda n: (0, 0))],
        out_specs=pl.BlockSpec((None, D, H, W, Cmid), lambda n: (n, 0, 0, 0, 0)),
        compiler_params=_cparams(),
        cost_estimate=pl.CostEstimate(
            flops=18 * M * Cmid, transcendentals=0,
            bytes_accessed=4 * (2 * M * Cmid + 12 * Cmid)),
    )(h1v, P["wd"], P["bd"], P["wh"], P["bh"], P["ww"], P["bw"])
    hw2 = hwv.reshape(M, Cmid)

    # --- K3: fused separable-pointwise + expansion + residual + add ---------------
    if use_res:
        w_res, s_r, t_r = P["w_res"], P["bnr_s"], P["bnr_t"]
        res_flops = 2 * M * Cin * Cout
    else:
        w_res = jnp.zeros((Cin, Cout), jnp.float32)   # never read in-kernel
        s_r = jnp.zeros((1, Cout), jnp.float32)
        t_r = jnp.zeros((1, Cout), jnp.float32)
        res_flops = 0

    out2 = pl.pallas_call(
        functools.partial(_tail_kernel, use_res_conv=use_res),
        out_shape=jax.ShapeDtypeStruct((M, Cout), jnp.float32),
        grid=grid_rows,
        in_specs=[pl.BlockSpec((TM, Cmid), lambda i: (i, 0)),
                  pl.BlockSpec((TM, Cin), lambda i: (i, 0)),
                  pl.BlockSpec((Cmid, Cmid), lambda i: (0, 0)),
                  pl.BlockSpec((1, Cmid), lambda i: (0, 0)),
                  pl.BlockSpec((1, Cmid), lambda i: (0, 0)),
                  pl.BlockSpec((Cmid, Cout), lambda i: (0, 0)),
                  pl.BlockSpec((1, Cout), lambda i: (0, 0)),
                  pl.BlockSpec((1, Cout), lambda i: (0, 0)),
                  pl.BlockSpec((Cin, Cout), lambda i: (0, 0)),
                  pl.BlockSpec((1, Cout), lambda i: (0, 0)),
                  pl.BlockSpec((1, Cout), lambda i: (0, 0))],
        out_specs=pl.BlockSpec((TM, Cout), lambda i: (i, 0)),
        compiler_params=_cparams(),
        cost_estimate=pl.CostEstimate(
            flops=2 * M * (Cmid * Cmid + Cmid * Cout) + res_flops, transcendentals=0,
            bytes_accessed=4 * (M * (Cmid + Cin + Cout)
                                + Cmid * Cmid + Cmid * Cout + Cin * Cout)),
    )(hw2, x2, P["w_pw"], P["bnb_s"], P["bnb_t"], P["w_exp"], P["bnc_s"], P["bnc_t"],
      w_res, s_r, t_r)

    out = out2.reshape(N, D, H, W, Cout)
    return jnp.transpose(out, (0, 4, 1, 2, 3))       # back to NCDHW


# ------------------------ parameters & reference -----------------------------


def init_params(key, cin, cout, compress_factor=2):
    """Deterministic synthetic parameters in PyTorch layouts (OIDHW weights, 1-D BN)."""
    cmid = cin // compress_factor
    ks = iter(jax.random.split(key, 40))

    def nrm(shape, scale=0.15):
        return scale * jax.random.normal(next(ks), shape, jnp.float32)

    p = {}
    p["w_bott"], p["b_bott"] = nrm((cmid, cin, 1, 1, 1)), nrm((cmid,))
    p["w_dwd"], p["b_dwd"] = nrm((cmid, 1, 3, 1, 1)), nrm((cmid,))   # depthwise (3,1,1)
    p["w_dwh"], p["b_dwh"] = nrm((cmid, 1, 1, 3, 1)), nrm((cmid,))   # depthwise (1,3,1)
    p["w_dww"], p["b_dww"] = nrm((cmid, 1, 1, 1, 3)), nrm((cmid,))   # depthwise (1,1,3)
    p["w_pw"], p["b_pw"] = nrm((cmid, cmid, 1, 1, 1)), nrm((cmid,))  # separable pointwise
    p["w_exp"], p["b_exp"] = nrm((cout, cmid, 1, 1, 1)), nrm((cout,))
    bns = [("bna", cmid), ("bnb", cmid), ("bnc", cout)]
    if cin != cout:
        p["w_res"], p["b_res"] = nrm((cout, cin, 1, 1, 1)), nrm((cout,))
        bns.append(("bnr", cout))
    for name, c in bns:
        p[name + "_g"] = 1.0 + 0.1 * jax.random.normal(next(ks), (c,), jnp.float32)
        p[name + "_b"] = 0.05 * jax.random.normal(next(ks), (c,), jnp.float32)
        p[name + "_m"] = 0.1 * jax.random.normal(next(ks), (c,), jnp.float32)
        p[name + "_v"] = 1.0 + 0.2 * jax.random.uniform(next(ks), (c,), jnp.float32)
    return p


def to_kernel_params(p, eps=1e-5):
    """PyTorch-layout params -> kernel layouts; fold eval-mode BN (+ conv bias)."""
    def fold(name, bias):
        s = p[name + "_g"] / jnp.sqrt(p[name + "_v"] + eps)
        t = p[name + "_b"] - p[name + "_m"] * s + bias * s
        return s[None, :], t[None, :]

    k = {}
    k["w_bott"] = jnp.transpose(p["w_bott"][:, :, 0, 0, 0], (1, 0))      # (Cin, Cmid)
    k["bna_s"], k["bna_t"] = fold("bna", p["b_bott"])
    k["wd"] = jnp.transpose(p["w_dwd"][:, 0, :, 0, 0], (1, 0))           # (3, Cmid)
    k["bd"] = p["b_dwd"][None, :]
    k["wh"] = jnp.transpose(p["w_dwh"][:, 0, 0, :, 0], (1, 0))
    k["bh"] = p["b_dwh"][None, :]
    k["ww"] = jnp.transpose(p["w_dww"][:, 0, 0, 0, :], (1, 0))
    k["bw"] = p["b_dww"][None, :]
    k["w_pw"] = jnp.transpose(p["w_pw"][:, :, 0, 0, 0], (1, 0))          # (Cmid, Cmid)
    k["bnb_s"], k["bnb_t"] = fold("bnb", p["b_pw"])
    k["w_exp"] = jnp.transpose(p["w_exp"][:, :, 0, 0, 0], (1, 0))        # (Cmid, Cout)
    k["bnc_s"], k["bnc_t"] = fold("bnc", p["b_exp"])
    if "w_res" in p:
        k["w_res"] = jnp.transpose(p["w_res"][:, :, 0, 0, 0], (1, 0))    # (Cin, Cout)
        k["bnr_s"], k["bnr_t"] = fold("bnr", p["b_res"])
    return k


def reference_forward(x, p, eps=1e-5):
    """Pure-JAX (XLA conv) reference matching torch eval-mode forward."""
    def conv3d(h, w, b, pad, groups=1):
        y = lax.conv_general_dilated(
            h, w, (1, 1, 1), pad,
            dimension_numbers=("NCDHW", "OIDHW", "NCDHW"),
            feature_group_count=groups,
            precision=lax.Precision.HIGHEST)
        return y + b[None, :, None, None, None]

    def bn_relu(h, name):
        s = p[name + "_g"] / jnp.sqrt(p[name + "_v"] + eps)
        t = p[name + "_b"] - p[name + "_m"] * s
        return jnp.maximum(h * s[None, :, None, None, None]
                           + t[None, :, None, None, None], 0.0)

    p0 = ((0, 0), (0, 0), (0, 0))
    pd = ((1, 1), (0, 0), (0, 0))
    ph = ((0, 0), (1, 1), (0, 0))
    pw_ = ((0, 0), (0, 0), (1, 1))
    cmid = p["w_bott"].shape[0]

    h = bn_relu(conv3d(x, p["w_bott"], p["b_bott"], p0), "bna")
    h = conv3d(h, p["w_dwd"], p["b_dwd"], pd, groups=cmid)
    h = conv3d(h, p["w_dwh"], p["b_dwh"], ph, groups=cmid)
    h = conv3d(h, p["w_dww"], p["b_dww"], pw_, groups=cmid)
    h = conv3d(h, p["w_pw"], p["b_pw"], p0)
    h = bn_relu(h, "bnb")
    h = conv3d(h, p["w_exp"], p["b_exp"], p0)
    h = bn_relu(h, "bnc")
    if "w_res" in p:
        r = bn_relu(conv3d(x, p["w_res"], p["b_res"], p0), "bnr")
    else:
        r = x
    return h + r


# ----------------------------------- main ------------------------------------

if __name__ == "__main__":
    N, D, H, W = 2, 8, 8, 8
    key = jax.random.PRNGKey(0)
    kx, kp = jax.random.split(key)
    fwd = jax.jit(asym_bottleneck_forward)

    # Case 1: in_channels != out_channels -> res_conv branch (1x1x1 + BN + ReLU)
    Cin, Cout = 8, 16
    x = jax.random.normal(kx, (N, Cin, D, H, W), jnp.float32)
    p_torch = init_params(kp, Cin, Cout)
    out = jax.block_until_ready(fwd(x, to_kernel_params(p_torch)))
    assert out.shape == (N, Cout, D, H, W)
    ref = reference_forward(x, p_torch)
    if not np.allclose(np.asarray(out), np.asarray(ref), rtol=1e-2, atol=1e-2):
        raise SystemExit("Pallas output (res_conv case) does not match JAX reference")

    # Case 2: in_channels == out_channels -> identity residual
    Cin2 = Cout2 = 8
    x2 = jax.random.normal(jax.random.fold_in(kx, 1), (N, Cin2, D, H, W), jnp.float32)
    p2 = init_params(jax.random.fold_in(kp, 1), Cin2, Cout2)
    out2 = jax.block_until_ready(fwd(x2, to_kernel_params(p2)))
    assert out2.shape == (N, Cout2, D, H, W)
    ref2 = reference_forward(x2, p2)
    if not np.allclose(np.asarray(out2), np.asarray(ref2), rtol=1e-2, atol=1e-2):
        raise SystemExit("Pallas output (identity-residual case) does not match JAX reference")

    print("KERNEL_OK")
</pallas_src>

<mosaic_0001>
module attributes {stable_mosaic.version = 11 : i64} {
  func.func @_bottleneck_kernel(%arg0: i32, %arg1: memref<512x8xf32, #tpu.memory_space<vmem>>, %arg2: memref<8x4xf32, #tpu.memory_space<vmem>>, %arg3: memref<1x4xf32, #tpu.memory_space<vmem>>, %arg4: memref<1x4xf32, #tpu.memory_space<vmem>>, %arg5: memref<512x4xf32, #tpu.memory_space<vmem>>) attributes {dimension_semantics = [#tpu.dimension_semantics<parallel>], iteration_bounds = array<i64: 2>, scalar_prefetch = 0 : i64, scratch_operands = 0 : i64, tpu.core_type = #tpu.core_type<tc>, window_params = [{transform_indices = @transform_0, window_bounds = array<i64: 512, 8>}, {pipeline_mode = #tpu.pipeline_mode<synchronous>, transform_indices = @transform_1, window_bounds = array<i64: 8, 4>}, {pipeline_mode = #tpu.pipeline_mode<synchronous>, transform_indices = @transform_2, window_bounds = array<i64: 1, 4>}, {pipeline_mode = #tpu.pipeline_mode<synchronous>, transform_indices = @transform_3, window_bounds = array<i64: 1, 4>}, {transform_indices = @transform_4, window_bounds = array<i64: 512, 4>}]} {
    %c0 = arith.constant 0 : index
    %c0_0 = arith.constant 0 : index
    %0 = vector.load %arg1[%c0, %c0_0] : memref<512x8xf32, #tpu.memory_space<vmem>>, vector<512x8xf32>
    %c0_1 = arith.constant 0 : index
    %c0_2 = arith.constant 0 : index
    %1 = vector.load %arg2[%c0_1, %c0_2] : memref<8x4xf32, #tpu.memory_space<vmem>>, vector<8x4xf32>
    %cst = arith.constant dense<0.000000e+00> : vector<512x4xf32>
    %2 = tpu.matmul %0, %1, %cst {dimension_numbers = #tpu.dot_dimension_numbers<[1], [0], [0], [1], [0, 0, 1, 1], [], []>} : vector<512x8xf32>, vector<8x4xf32>, vector<512x4xf32> -> vector<512x4xf32>
    %c0_3 = arith.constant 0 : index
    %c0_4 = arith.constant 0 : index
    %3 = vector.load %arg3[%c0_3, %c0_4] : memref<1x4xf32, #tpu.memory_space<vmem>>, vector<1x4xf32>
    %4 = vector.broadcast %3 : vector<1x4xf32> to vector<512x4xf32>
    %5 = arith.mulf %2, %4 : vector<512x4xf32>
    %c0_5 = arith.constant 0 : index
    %c0_6 = arith.constant 0 : index
    %6 = vector.load %arg4[%c0_5, %c0_6] : memref<1x4xf32, #tpu.memory_space<vmem>>, vector<1x4xf32>
    %7 = vector.broadcast %6 : vector<1x4xf32> to vector<512x4xf32>
    %8 = arith.addf %5, %7 : vector<512x4xf32>
    %cst_7 = arith.constant 0.000000e+00 : f32
    %9 = vector.broadcast %cst_7 : f32 to vector<512x4xf32>
    %10 = arith.maximumf %8, %9 : vector<512x4xf32>
    %c0_8 = arith.constant 0 : index
    %c0_9 = arith.constant 0 : index
    %11 = vector.load %arg5[%c0_8, %c0_9] : memref<512x4xf32, #tpu.memory_space<vmem>>, vector<512x4xf32>
    tpu.vector_store %arg5[%c0_8, %c0_9], %10 {strides = array<i32>} : memref<512x4xf32, #tpu.memory_space<vmem>>, vector<512x4xf32>,
    return
  }
  func.func @transform_0(%arg0: i32) -> (i32, i32) {
    %c0_i32 = arith.constant 0 : i32
    %c0_i32_0 = arith.constant 0 : i32
    return %arg0, %c0_i32 : i32, i32
  }
  func.func @transform_1(%arg0: i32) -> (i32, i32) {
    %c0_i32 = arith.constant 0 : i32
    %c0_i32_0 = arith.constant 0 : i32
    %c0_i32_1 = arith.constant 0 : i32
    return %c0_i32, %c0_i32_0 : i32, i32
  }
  func.func @transform_2(%arg0: i32) -> (i32, i32) {
    %c0_i32 = arith.constant 0 : i32
    %c0_i32_0 = arith.constant 0 : i32
    %c0_i32_1 = arith.constant 0 : i32
    return %c0_i32, %c0_i32_0 : i32, i32
  }
  func.func @transform_3(%arg0: i32) -> (i32, i32) {
    %c0_i32 = arith.constant 0 : i32
    %c0_i32_0 = arith.constant 0 : i32
    %c0_i32_1 = arith.constant 0 : i32
    return %c0_i32, %c0_i32_0 : i32, i32
  }
  func.func @transform_4(%arg0: i32) -> (i32, i32) {
    %c0_i32 = arith.constant 0 : i32
    %c0_i32_0 = arith.constant 0 : i32
    return %arg0, %c0_i32 : i32, i32
  }
}

module attributes {stable_mosaic.version = 11 : i64} {
  func.func @_dwsep_spatial_kernel(%arg0: i32, %arg1: memref<1x8x8x8x4xf32, #tpu.memory_space<vmem>>, %arg2: memref<3x4xf32, #tpu.memory_space<vmem>>, %arg3: memref<1x4xf32, #tpu.memory_space<vmem>>, %arg4: memref<3x4xf32, #tpu.memory_space<vmem>>, %arg5: memref<1x4xf32, #tpu.memory_space<vmem>>, %arg6: memref<3x4xf32, #tpu.memory_space<vmem>>, %arg7: memref<1x4xf32, #tpu.memory_space<vmem>>, %arg8: memref<1x8x8x8x4xf32, #tpu.memory_space<vmem>>) attributes {dimension_semantics = [#tpu.dimension_semantics<parallel>], iteration_bounds = array<i64: 2>, scalar_prefetch = 0 : i64, scratch_operands = 0 : i64, tpu.core_type = #tpu.core_type<tc>, window_params = [{transform_indices = @transform_0, window_bounds = array<i64: 1, 8, 8, 8, 4>}, {pipeline_mode = #tpu.pipeline_mode<synchronous>, transform_indices = @transform_1, window_bounds = array<i64: 3, 4>}, {pipeline_mode = #tpu.pipeline_mode<synchronous>, transform_indices = @transform_2, window_bounds = array<i64: 1, 4>}, {pipeline_mode = #tpu.pipeline_mode<synchronous>, transform_indices = @transform_3, window_bounds = array<i64: 3, 4>}, {pipeline_mode = #tpu.pipeline_mode<synchronous>, transform_indices = @transform_4, window_bounds = array<i64: 1, 4>}, {pipeline_mode = #tpu.pipeline_mode<synchronous>, transform_indices = @transform_5, window_bounds = array<i64: 3, 4>}, {pipeline_mode = #tpu.pipeline_mode<synchronous>, transform_indices = @transform_6, window_bounds = array<i64: 1, 4>}, {transform_indices = @transform_7, window_bounds = array<i64: 1, 8, 8, 8, 4>}]} {
    %c0 = arith.constant 0 : index
    %c0_0 = arith.constant 0 : index
    %c0_1 = arith.constant 0 : index
    %c0_2 = arith.constant 0 : index
    %c0_3 = arith.constant 0 : index
    %0 = vector.load %arg1[%c0, %c0_0, %c0_1, %c0_2, %c0_3] : memref<1x8x8x8x4xf32, #tpu.memory_space<vmem>>, vector<1x8x8x8x4xf32>
    %1 = vector.shape_cast %0 : vector<1x8x8x8x4xf32> to vector<8x8x8x4xf32>
    %c0_4 = arith.constant 0 : index
    %c0_5 = arith.constant 0 : index
    %2 = vector.load %arg2[%c0_4, %c0_5] : memref<3x4xf32, #tpu.memory_space<vmem>>, vector<3x4xf32>
    %3 = vector.extract_strided_slice %2 {offsets = [0, 0], sizes = [1, 4], strides = [1, 1]} : vector<3x4xf32> to vector<1x4xf32>
    %4 = vector.shape_cast %3 : vector<1x4xf32> to vector<1x1x1x4xf32>
    %5 = vector.extract_strided_slice %2 {offsets = [1, 0], sizes = [1, 4], strides = [1, 1]} : vector<3x4xf32> to vector<1x4xf32>
    %6 = vector.shape_cast %5 : vector<1x4xf32> to vector<1x1x1x4xf32>
    %7 = vector.extract_strided_slice %2 {offsets = [2, 0], sizes = [1, 4], strides = [1, 1]} : vector<3x4xf32> to vector<1x4xf32>
    %8 = vector.shape_cast %7 : vector<1x4xf32> to vector<1x1x1x4xf32>
    %cst = arith.constant 0.000000e+00 : f32
    %9 = vector.broadcast %cst : f32 to vector<1x8x8x4xf32>
    %10 = tpu.concatenate %9, %1, %9 in 0 : vector<1x8x8x4xf32>, vector<8x8x8x4xf32>, vector<1x8x8x4xf32> -> vector<10x8x8x4xf32>
    %11 = vector.extract_strided_slice %10 {offsets = [0, 0, 0, 0], sizes = [8, 8, 8, 4], strides = [1, 1, 1, 1]} : vector<10x8x8x4xf32> to vector<8x8x8x4xf32>
    %12 = vector.broadcast %4 : vector<1x1x1x4xf32> to vector<8x8x8x4xf32>
    %13 = arith.mulf %11, %12 : vector<8x8x8x4xf32>
    %14 = vector.extract_strided_slice %10 {offsets = [1, 0, 0, 0], sizes = [8, 8, 8, 4], strides = [1, 1, 1, 1]} : vector<10x8x8x4xf32> to vector<8x8x8x4xf32>
    %15 = vector.broadcast %6 : vector<1x1x1x4xf32> to vector<8x8x8x4xf32>
    %16 = arith.mulf %14, %15 : vector<8x8x8x4xf32>
    %17 = arith.addf %13, %16 : vector<8x8x8x4xf32>
    %18 = vector.extract_strided_slice %10 {offsets = [2, 0, 0, 0], sizes = [8, 8, 8, 4], strides = [1, 1, 1, 1]} : vector<10x8x8x4xf32> to vector<8x8x8x4xf32>
    %19 = vector.broadcast %8 : vector<1x1x1x4xf32> to vector<8x8x8x4xf32>
    %20 = arith.mulf %18, %19 : vector<8x8x8x4xf32>
    %21 = arith.addf %17, %20 : vector<8x8x8x4xf32>
    %c0_6 = arith.constant 0 : index
    %c0_7 = arith.constant 0 : index
    %22 = vector.load %arg3[%c0_6, %c0_7] : memref<1x4xf32, #tpu.memory_space<vmem>>, vector<1x4xf32>
    %23 = vector.shape_cast %22 : vector<1x4xf32> to vector<1x1x1x4xf32>
    %24 = vector.broadcast %23 : vector<1x1x1x4xf32> to vector<8x8x8x4xf32>
    %25 = arith.addf %21, %24 : vector<8x8x8x4xf32>
    %c0_8 = arith.constant 0 : index
    %c0_9 = arith.constant 0 : index
    %26 = vector.load %arg4[%c0_8, %c0_9] : memref<3x4xf32, #tpu.memory_space<vmem>>, vector<3x4xf32>
    %27 = vector.extract_strided_slice %26 {offsets = [0, 0], sizes = [1, 4], strides = [1, 1]} : vector<3x4xf32> to vector<1x4xf32>
    %28 = vector.shape_cast %27 : vector<1x4xf32> to vector<1x1x1x4xf32>
    %29 = vector.extract_strided_slice %26 {offsets = [1, 0], sizes = [1, 4], strides = [1, 1]} : vector<3x4xf32> to vector<1x4xf32>
    %30 = vector.shape_cast %29 : vector<1x4xf32> to vector<1x1x1x4xf32>
    %31 = vector.extract_strided_slice %26 {offsets = [2, 0], sizes = [1, 4], strides = [1, 1]} : vector<3x4xf32> to vector<1x4xf32>
    %32 = vector.shape_cast %31 : vector<1x4xf32> to vector<1x1x1x4xf32>
    %cst_10 = arith.constant 0.000000e+00 : f32
    %33 = vector.broadcast %cst_10 : f32 to vector<8x1x8x4xf32>
    %34 = tpu.concatenate %33, %25, %33 in 1 : vector<8x1x8x4xf32>, vector<8x8x8x4xf32>, vector<8x1x8x4xf32> -> vector<8x10x8x4xf32>
    %35 = vector.extract_strided_slice %34 {offsets = [0, 0, 0, 0], sizes = [8, 8, 8, 4], strides = [1, 1, 1, 1]} : vector<8x10x8x4xf32> to vector<8x8x8x4xf32>
    %36 = vector.broadcast %28 : vector<1x1x1x4xf32> to vector<8x8x8x4xf32>
    %37 = arith.mulf %35, %36 : vector<8x8x8x4xf32>
    %38 = vector.extract_strided_slice %34 {offsets = [0, 1, 0, 0], sizes = [8, 8, 8, 4], strides = [1, 1, 1, 1]} : vector<8x10x8x4xf32> to vector<8x8x8x4xf32>
    %39 = vector.broadcast %30 : vector<1x1x1x4xf32> to vector<8x8x8x4xf32>
    %40 = arith.mulf %38, %39 : vector<8x8x8x4xf32>
    %41 = arith.addf %37, %40 : vector<8x8x8x4xf32>
    %42 = vector.extract_strided_slice %34 {offsets = [0, 2, 0, 0], sizes = [8, 8, 8, 4], strides = [1, 1, 1, 1]} : vector<8x10x8x4xf32> to vector<8x8x8x4xf32>
    %43 = vector.broadcast %32 : vector<1x1x1x4xf32> to vector<8x8x8x4xf32>
    %44 = arith.mulf %42, %43 : vector<8x8x8x4xf32>
    %45 = arith.addf %41, %44 : vector<8x8x8x4xf32>
    %c0_11 = arith.constant 0 : index
    %c0_12 = arith.constant 0 : index
    %46 = vector.load %arg5[%c0_11, %c0_12] : memref<1x4xf32, #tpu.memory_space<vmem>>, vector<1x4xf32>
    %47 = vector.shape_cast %46 : vector<1x4xf32> to vector<1x1x1x4xf32>
    %48 = vector.broadcast %47 : vector<1x1x1x4xf32> to vector<8x8x8x4xf32>
    %49 = arith.addf %45, %48 : vector<8x8x8x4xf32>
    %c0_13 = arith.constant 0 : index
    %c0_14 = arith.constant 0 : index
    %50 = vector.load %arg6[%c0_13, %c0_14] : memref<3x4xf32, #tpu.memory_space<vmem>>, vector<3x4xf32>
    %51 = vector.extract_strided_slice %50 {offsets = [0, 0], sizes = [1, 4], strides = [1, 1]} : vector<3x4xf32> to vector<1x4xf32>
    %52 = vector.shape_cast %51 : vector<1x4xf32> to vector<1x1x1x4xf32>
    %53 = vector.extract_strided_slice %50 {offsets = [1, 0], sizes = [1, 4], strides = [1, 1]} : vector<3x4xf32> to vector<1x4xf32>
    %54 = vector.shape_cast %53 : vector<1x4xf32> to vector<1x1x1x4xf32>
    %55 = vector.extract_strided_slice %50 {offsets = [2, 0], sizes = [1, 4], strides = [1, 1]} : vector<3x4xf32> to vector<1x4xf32>
    %56 = vector.shape_cast %55 : vector<1x4xf32> to vector<1x1x1x4xf32>
    %cst_15 = arith.constant 0.000000e+00 : f32
    %57 = vector.broadcast %cst_15 : f32 to vector<8x8x1x4xf32>
    %58 = tpu.concatenate %57, %49, %57 in 2 : vector<8x8x1x4xf32>, vector<8x8x8x4xf32>, vector<8x8x1x4xf32> -> vector<8x8x10x4xf32>
    %59 = vector.extract_strided_slice %58 {offsets = [0, 0, 0, 0], sizes = [8, 8, 8, 4], strides = [1, 1, 1, 1]} : vector<8x8x10x4xf32> to vector<8x8x8x4xf32>
    %60 = vector.broadcast %52 : vector<1x1x1x4xf32> to vector<8x8x8x4xf32>
    %61 = arith.mulf %59, %60 : vector<8x8x8x4xf32>
    %62 = vector.extract_strided_slice %58 {offsets = [0, 0, 1, 0], sizes = [8, 8, 8, 4], strides = [1, 1, 1, 1]} : vector<8x8x10x4xf32> to vector<8x8x8x4xf32>
    %63 = vector.broadcast %54 : vector<1x1x1x4xf32> to vector<8x8x8x4xf32>
    %64 = arith.mulf %62, %63 : vector<8x8x8x4xf32>
    %65 = arith.addf %61, %64 : vector<8x8x8x4xf32>
    %66 = vector.extract_strided_slice %58 {offsets = [0, 0, 2, 0], sizes = [8, 8, 8, 4], strides = [1, 1, 1, 1]} : vector<8x8x10x4xf32> to vector<8x8x8x4xf32>
    %67 = vector.broadcast %56 : vector<1x1x1x4xf32> to vector<8x8x8x4xf32>
    %68 = arith.mulf %66, %67 : vector<8x8x8x4xf32>
    %69 = arith.addf %65, %68 : vector<8x8x8x4xf32>
    %c0_16 = arith.constant 0 : index
    %c0_17 = arith.constant 0 : index
    %70 = vector.load %arg7[%c0_16, %c0_17] : memref<1x4xf32, #tpu.memory_space<vmem>>, vector<1x4xf32>
    %71 = vector.shape_cast %70 : vector<1x4xf32> to vector<1x1x1x4xf32>
    %72 = vector.broadcast %71 : vector<1x1x1x4xf32> to vector<8x8x8x4xf32>
    %73 = arith.addf %69, %72 : vector<8x8x8x4xf32>
    %c0_18 = arith.constant 0 : index
    %c0_19 = arith.constant 0 : index
    %c0_20 = arith.constant 0 : index
    %c0_21 = arith.constant 0 : index
    %c0_22 = arith.constant 0 : index
    %74 = vector.load %arg8[%c0_18, %c0_19, %c0_20, %c0_21, %c0_22] : memref<1x8x8x8x4xf32, #tpu.memory_space<vmem>>, vector<1x8x8x8x4xf32>
    %75 = vector.shape_cast %74 : vector<1x8x8x8x4xf32> to vector<8x8x8x4xf32>
    %76 = vector.shape_cast %73 : vector<8x8x8x4xf32> to vector<1x8x8x8x4xf32>
    tpu.vector_store %arg8[%c0_18, %c0_19, %c0_20, %c0_21, %c0_22], %76 {strides = array<i32>} : memref<1x8x8x8x4xf32, #tpu.memory_space<vmem>>, vector<1x8x8x8x4xf32>,
    return
  }
  func.func @transform_0(%arg0: i32) -> (i32, i32, i32, i32, i32) {
    %c0_i32 = arith.constant 0 : i32
    %c0_i32_0 = arith.constant 0 : i32
    %c0_i32_1 = arith.constant 0 : i32
    %c0_i32_2 = arith.constant 0 : i32
    %c0_i32_3 = arith.constant 0 : i32
    return %arg0, %c0_i32, %c0_i32_0, %c0_i32_1, %c0_i32_2 : i32, i32, i32, i32, i32
  }
  func.func @transform_1(%arg0: i32) -> (i32, i32) {
    %c0_i32 = arith.constant 0 : i32
    %c0_i32_0 = arith.constant 0 : i32
    %c0_i32_1 = arith.constant 0 : i32
    return %c0_i32, %c0_i32_0 : i32, i32
  }
  func.func @transform_2(%arg0: i32) -> (i32, i32) {
    %c0_i32 = arith.constant 0 : i32
    %c0_i32_0 = arith.constant 0 : i32
    %c0_i32_1 = arith.constant 0 : i32
    return %c0_i32, %c0_i32_0 : i32, i32
  }
  func.func @transform_3(%arg0: i32) -> (i32, i32) {
    %c0_i32 = arith.constant 0 : i32
    %c0_i32_0 = arith.constant 0 : i32
    %c0_i32_1 = arith.constant 0 : i32
    return %c0_i32, %c0_i32_0 : i32, i32
  }
  func.func @transform_4(%arg0: i32) -> (i32, i32) {
    %c0_i32 = arith.constant 0 : i32
    %c0_i32_0 = arith.constant 0 : i32
    %c0_i32_1 = arith.constant 0 : i32
    return %c0_i32, %c0_i32_0 : i32, i32
  }
  func.func @transform_5(%arg0: i32) -> (i32, i32) {
    %c0_i32 = arith.constant 0 : i32
    %c0_i32_0 = arith.constant 0 : i32
    %c0_i32_1 = arith.constant 0 : i32
    return %c0_i32, %c0_i32_0 : i32, i32
  }
  func.func @transform_6(%arg0: i32) -> (i32, i32) {
    %c0_i32 = arith.constant 0 : i32
    %c0_i32_0 = arith.constant 0 : i32
    %c0_i32_1 = arith.constant 0 : i32
    return %c0_i32, %c0_i32_0 : i32, i32
  }
  func.func @transform_7(%arg0: i32) -> (i32, i32, i32, i32, i32) {
    %c0_i32 = arith.constant 0 : i32
    %c0_i32_0 = arith.constant 0 : i32
    %c0_i32_1 = arith.constant 0 : i32
    %c0_i32_2 = arith.constant 0 : i32
    %c0_i32_3 = arith.constant 0 : i32
    return %arg0, %c0_i32, %c0_i32_0, %c0_i32_1, %c0_i32_2 : i32, i32, i32, i32, i32
  }
}

module attributes {stable_mosaic.version = 11 : i64} {
  func.func @_tail_kernel(%arg0: i32, %arg1: memref<512x4xf32, #tpu.memory_space<vmem>>, %arg2: memref<512x8xf32, #tpu.memory_space<vmem>>, %arg3: memref<4x4xf32, #tpu.memory_space<vmem>>, %arg4: memref<1x4xf32, #tpu.memory_space<vmem>>, %arg5: memref<1x4xf32, #tpu.memory_space<vmem>>, %arg6: memref<4x16xf32, #tpu.memory_space<vmem>>, %arg7: memref<1x16xf32, #tpu.memory_space<vmem>>, %arg8: memref<1x16xf32, #tpu.memory_space<vmem>>, %arg9: memref<8x16xf32, #tpu.memory_space<vmem>>, %arg10: memref<1x16xf32, #tpu.memory_space<vmem>>, %arg11: memref<1x16xf32, #tpu.memory_space<vmem>>, %arg12: memref<512x16xf32, #tpu.memory_space<vmem>>) attributes {dimension_semantics = [#tpu.dimension_semantics<parallel>], iteration_bounds = array<i64: 2>, scalar_prefetch = 0 : i64, scratch_operands = 0 : i64, tpu.core_type = #tpu.core_type<tc>, window_params = [{transform_indices = @transform_0, window_bounds = array<i64: 512, 4>}, {transform_indices = @transform_1, window_bounds = array<i64: 512, 8>}, {pipeline_mode = #tpu.pipeline_mode<synchronous>, transform_indices = @transform_2, window_bounds = array<i64: 4, 4>}, {pipeline_mode = #tpu.pipeline_mode<synchronous>, transform_indices = @transform_3, window_bounds = array<i64: 1, 4>}, {pipeline_mode = #tpu.pipeline_mode<synchronous>, transform_indices = @transform_4, window_bounds = array<i64: 1, 4>}, {pipeline_mode = #tpu.pipeline_mode<synchronous>, transform_indices = @transform_5, window_bounds = array<i64: 4, 16>}, {pipeline_mode = #tpu.pipeline_mode<synchronous>, transform_indices = @transform_6, window_bounds = array<i64: 1, 16>}, {pipeline_mode = #tpu.pipeline_mode<synchronous>, transform_indices = @transform_7, window_bounds = array<i64: 1, 16>}, {pipeline_mode = #tpu.pipeline_mode<synchronous>, transform_indices = @transform_8, window_bounds = array<i64: 8, 16>}, {pipeline_mode = #tpu.pipeline_mode<synchronous>, transform_indices = @transform_9, window_bounds = array<i64: 1, 16>}, {pipeline_mode = #tpu.pipeline_mode<synchronous>, transform_indices = @transform_10, window_bounds = array<i64: 1, 16>}, {transform_indices = @transform_11, window_bounds = array<i64: 512, 16>}]} {
    %c0 = arith.constant 0 : index
    %c0_0 = arith.constant 0 : index
    %0 = vector.load %arg1[%c0, %c0_0] : memref<512x4xf32, #tpu.memory_space<vmem>>, vector<512x4xf32>
    %c0_1 = arith.constant 0 : index
    %c0_2 = arith.constant 0 : index
    %1 = vector.load %arg3[%c0_1, %c0_2] : memref<4x4xf32, #tpu.memory_space<vmem>>, vector<4x4xf32>
    %cst = arith.constant dense<0.000000e+00> : vector<512x4xf32>
    %2 = tpu.matmul %0, %1, %cst {dimension_numbers = #tpu.dot_dimension_numbers<[1], [0], [0], [1], [0, 0, 1, 1], [], []>} : vector<512x4xf32>, vector<4x4xf32>, vector<512x4xf32> -> vector<512x4xf32>
    %c0_3 = arith.constant 0 : index
    %c0_4 = arith.constant 0 : index
    %3 = vector.load %arg4[%c0_3, %c0_4] : memref<1x4xf32, #tpu.memory_space<vmem>>, vector<1x4xf32>
    %4 = vector.broadcast %3 : vector<1x4xf32> to vector<512x4xf32>
    %5 = arith.mulf %2, %4 : vector<512x4xf32>
    %c0_5 = arith.constant 0 : index
    %c0_6 = arith.constant 0 : index
    %6 = vector.load %arg5[%c0_5, %c0_6] : memref<1x4xf32, #tpu.memory_space<vmem>>, vector<1x4xf32>
    %7 = vector.broadcast %6 : vector<1x4xf32> to vector<512x4xf32>
    %8 = arith.addf %5, %7 : vector<512x4xf32>
    %cst_7 = arith.constant 0.000000e+00 : f32
    %9 = vector.broadcast %cst_7 : f32 to vector<512x4xf32>
    %10 = arith.maximumf %8, %9 : vector<512x4xf32>
    %c0_8 = arith.constant 0 : index
    %c0_9 = arith.constant 0 : index
    %11 = vector.load %arg6[%c0_8, %c0_9] : memref<4x16xf32, #tpu.memory_space<vmem>>, vector<4x16xf32>
    %cst_10 = arith.constant dense<0.000000e+00> : vector<512x16xf32>
    %12 = tpu.matmul %10, %11, %cst_10 {dimension_numbers = #tpu.dot_dimension_numbers<[1], [0], [0], [1], [0, 0, 1, 1], [], []>} : vector<512x4xf32>, vector<4x16xf32>, vector<512x16xf32> -> vector<512x16xf32>
    %c0_11 = arith.constant 0 : index
    %c0_12 = arith.constant 0 : index
    %13 = vector.load %arg7[%c0_11, %c0_12] : memref<1x16xf32, #tpu.memory_space<vmem>>, vector<1x16xf32>
    %14 = vector.broadcast %13 : vector<1x16xf32> to vector<512x16xf32>
    %15 = arith.mulf %12, %14 : vector<512x16xf32>
    %c0_13 = arith.constant 0 : index
    %c0_14 = arith.constant 0 : index
    %16 = vector.load %arg8[%c0_13, %c0_14] : memref<1x16xf32, #tpu.memory_space<vmem>>, vector<1x16xf32>
    %17 = vector.broadcast %16 : vector<1x16xf32> to vector<512x16xf32>
    %18 = arith.addf %15, %17 : vector<512x16xf32>
    %cst_15 = arith.constant 0.000000e+00 : f32
    %19 = vector.broadcast %cst_15 : f32 to vector<512x16xf32>
    %20 = arith.maximumf %18, %19 : vector<512x16xf32>
    %c0_16 = arith.constant 0 : index
    %c0_17 = arith.constant 0 : index
    %21 = vector.load %arg2[%c0_16, %c0_17] : memref<512x8xf32, #tpu.memory_space<vmem>>, vector<512x8xf32>
    %c0_18 = arith.constant 0 : index
    %c0_19 = arith.constant 0 : index
    %22 = vector.load %arg9[%c0_18, %c0_19] : memref<8x16xf32, #tpu.memory_space<vmem>>, vector<8x16xf32>
    %cst_20 = arith.constant dense<0.000000e+00> : vector<512x16xf32>
    %23 = tpu.matmul %21, %22, %cst_20 {dimension_numbers = #tpu.dot_dimension_numbers<[1], [0], [0], [1], [0, 0, 1, 1], [], []>} : vector<512x8xf32>, vector<8x16xf32>, vector<512x16xf32> -> vector<512x16xf32>
    %c0_21 = arith.constant 0 : index
    %c0_22 = arith.constant 0 : index
    %24 = vector.load %arg10[%c0_21, %c0_22] : memref<1x16xf32, #tpu.memory_space<vmem>>, vector<1x16xf32>
    %25 = vector.broadcast %24 : vector<1x16xf32> to vector<512x16xf32>
    %26 = arith.mulf %23, %25 : vector<512x16xf32>
    %c0_23 = arith.constant 0 : index
    %c0_24 = arith.constant 0 : index
    %27 = vector.load %arg11[%c0_23, %c0_24] : memref<1x16xf32, #tpu.memory_space<vmem>>, vector<1x16xf32>
    %28 = vector.broadcast %27 : vector<1x16xf32> to vector<512x16xf32>
    %29 = arith.addf %26, %28 : vector<512x16xf32>
    %cst_25 = arith.constant 0.000000e+00 : f32
    %30 = vector.broadcast %cst_25 : f32 to vector<512x16xf32>
    %31 = arith.maximumf %29, %30 : vector<512x16xf32>
    %32 = arith.addf %20, %31 : vector<512x16xf32>
    %c0_26 = arith.constant 0 : index
    %c0_27 = arith.constant 0 : index
    %33 = vector.load %arg12[%c0_26, %c0_27] : memref<512x16xf32, #tpu.memory_space<vmem>>, vector<512x16xf32>
    tpu.vector_store %arg12[%c0_26, %c0_27], %32 {strides = array<i32>} : memref<512x16xf32, #tpu.memory_space<vmem>>, vector<512x16xf32>,
    return
  }
  func.func @transform_0(%arg0: i32) -> (i32, i32) {
    %c0_i32 = arith.constant 0 : i32
    %c0_i32_0 = arith.constant 0 : i32
    return %arg0, %c0_i32 : i32, i32
  }
  func.func @transform_1(%arg0: i32) -> (i32, i32) {
    %c0_i32 = arith.constant 0 : i32
    %c0_i32_0 = arith.constant 0 : i32
    return %arg0, %c0_i32 : i32, i32
  }
  func.func @transform_2(%arg0: i32) -> (i32, i32) {
    %c0_i32 = arith.constant 0 : i32
    %c0_i32_0 = arith.constant 0 : i32
    %c0_i32_1 = arith.constant 0 : i32
    return %c0_i32, %c0_i32_0 : i32, i32
  }
  func.func @transform_3(%arg0: i32) -> (i32, i32) {
    %c0_i32 = arith.constant 0 : i32
    %c0_i32_0 = arith.constant 0 : i32
    %c0_i32_1 = arith.constant 0 : i32
    return %c0_i32, %c0_i32_0 : i32, i32
  }
  func.func @transform_4(%arg0: i32) -> (i32, i32) {
    %c0_i32 = arith.constant 0 : i32
    %c0_i32_0 = arith.constant 0 : i32
    %c0_i32_1 = arith.constant 0 : i32
    return %c0_i32, %c0_i32_0 : i32, i32
  }
  func.func @transform_5(%arg0: i32) -> (i32, i32) {
    %c0_i32 = arith.constant 0 : i32
    %c0_i32_0 = arith.constant 0 : i32
    %c0_i32_1 = arith.constant 0 : i32
    return %c0_i32, %c0_i32_0 : i32, i32
  }
  func.func @transform_6(%arg0: i32) -> (i32, i32) {
    %c0_i32 = arith.constant 0 : i32
    %c0_i32_0 = arith.constant 0 : i32
    %c0_i32_1 = arith.constant 0 : i32
    return %c0_i32, %c0_i32_0 : i32, i32
  }
  func.func @transform_7(%arg0: i32) -> (i32, i32) {
    %c0_i32 = arith.constant 0 : i32
    %c0_i32_0 = arith.constant 0 : i32
    %c0_i32_1 = arith.constant 0 : i32
    return %c0_i32, %c0_i32_0 : i32, i32
  }
  func.func @transform_8(%arg0: i32) -> (i32, i32) {
    %c0_i32 = arith.constant 0 : i32
    %c0_i32_0 = arith.constant 0 : i32
    %c0_i32_1 = arith.constant 0 : i32
    return %c0_i32, %c0_i32_0 : i32, i32
  }
  func.func @transform_9(%arg0: i32) -> (i32, i32) {
    %c0_i32 = arith.constant 0 : i32
    %c0_i32_0 = arith.constant 0 : i32
    %c0_i32_1 = arith.constant 0 : i32
    return %c0_i32, %c0_i32_0 : i32, i32
  }
  func.func @transform_10(%arg0: i32) -> (i32, i32) {
    %c0_i32 = arith.constant 0 : i32
    %c0_i32_0 = arith.constant 0 : i32
    %c0_i32_1 = arith.constant 0 : i32
    return %c0_i32, %c0_i32_0 : i32, i32
  }
  func.func @transform_11(%arg0: i32) -> (i32, i32) {
    %c0_i32 = arith.constant 0 : i32
    %c0_i32_0 = arith.constant 0 : i32
    return %arg0, %c0_i32 : i32, i32
  }
}

</mosaic_0001>

<llo_original>
// kernel: asym_bottleneck_forward.3
$region0: #{asym_bottleneck_forward.3}
  #allocation0 [shape = 'u32[]', space=smem, size = 0x4, offset = 0x4, fixed_abs, tag = 'smem constant byte address 0x4 - core index']
  #allocation1 [shape = 'u32[144,128]{1,0:T(1,128)}', space=vmem, size = 0x12000, scoped, tag = 'internal scratch']
  %s0 = inlined_call_operand.vmem [shape: f32[1024,8], index: 0, kind: input, shape index: {}]
  %s1 = inlined_call_operand.vmem [shape: f32[8,4], index: 1, kind: input, shape index: {}]
  %s2 = inlined_call_operand.vmem [shape: f32[1,4], index: 2, kind: input, shape index: {}]
  %s3 = inlined_call_operand.vmem [shape: f32[1,4], index: 3, kind: input, shape index: {}]
  %s4 = inlined_call_operand.vmem [shape: f32[1024,4], index: 4, kind: output, shape index: {}]
  %s5 = sld [smem:[#allocation0]]
  $region49: #{asym_bottleneck_forward.3} parent=0
    _
  %s7 = ssub.s32 1, %s5
  %s8 = scalar_select 0, %s7, %s5
  loop: start=0, step=1, limit=4
  $region2: #{asym_bottleneck_forward.3} parent=0 // loop_pre_header
    _
  $region3: #{asym_bottleneck_forward.3} parent=0 // loop_header
    %s10 = sphi 0, %s14
    %p11 = scmp.ge.s32.totalorder %s10, 4
    %s20 = sphi 0, %s22
    %s23 = sphi 0, %s20
    %s24 = sphi 0, %s23
    %s40 = sphi 0, %s24
    %s44 = sphi 0, %s44
    %s46 = sphi 0, %s44
    %s47 = sphi 0, %s46
    %s61 = sphi 0, %s47
    %s65 = sphi 0, %s65
    %s67 = sphi 0, %s65
    %s68 = sphi 0, %s67
    %s82 = sphi 0, %s68
    %s86 = sphi 0, %s86
    %s88 = sphi 0, %s86
    %s89 = sphi 0, %s88
    %s103 = sphi 0, %s89
    %s109 = sphi 0, %s111
    %s112 = sphi 0, %s109
    %s113 = sphi 0, %s112
    %s129 = sphi 0, %s113
  $region4: #{asym_bottleneck_forward.3} parent=0 // loop_header_branch
    %13 = sbr.rel (%p11) target = $region8
  $region5: #{asym_bottleneck_forward.3} parent=0 // loop_body
    %s15 = ssub.s32 %s10, 1
    %s16 = ssub.s32 %s10, 2
    %s17 = sadd.s32 %s10, 1
    %s18 = ssub.s32 %s10, %s17
    %p19 = scmp.eq.s32.totalorder %s18, 0
    %s21 = sadd.s32 %s20, 1
    %s22 = scalar_select %p19, %s20, %s21
    %p25 = pneg %p19
    %p26 = scmp.eq.s32.totalorder %s10, 1
    %p27 = por %p25, %p26
    %p28 = scmp.ne.s32.totalorder %s20, %s23
    %p29 = scmp.eq.s32.totalorder %s10, 0
    %p30 = por %p28, %p29
    %p31 = scmp.ne.s32.totalorder %s20, %s23
    %p32 = scmp.eq.s32.totalorder %s15, 1
    %p33 = por %p31, %p32
    %p34 = scmp.ne.s32.totalorder %s23, %s24
    %p35 = scmp.eq.s32.totalorder %s15, 0
    %p36 = por %p34, %p35
    %p37 = scmp.ne.s32.totalorder %s23, %s24
    %p38 = scmp.eq.s32.totalorder %s16, 1
    %p39 = por %p37, %p38
    %p41 = scmp.ne.s32.totalorder %s24, %s40
    %p42 = scmp.eq.s32.totalorder %s16, 0
    %p43 = por %p41, %p42
    %s45 = sadd.s32 %s44, 1
    %p48 = scmp.eq.s32.totalorder %s10, 1
    %p49 = scmp.ne.s32.totalorder %s44, %s46
    %p50 = scmp.eq.s32.totalorder %s10, 0
    %p51 = por %p49, %p50
    %p52 = scmp.ne.s32.totalorder %s44, %s46
    %p53 = scmp.eq.s32.totalorder %s15, 1
    %p54 = por %p52, %p53
    %p55 = scmp.ne.s32.totalorder %s46, %s47
    %p56 = scmp.eq.s32.totalorder %s15, 0
    %p57 = por %p55, %p56
    %p58 = scmp.ne.s32.totalorder %s46, %s47
    %p59 = scmp.eq.s32.totalorder %s16, 1
    %p60 = por %p58, %p59
    %p62 = scmp.ne.s32.totalorder %s47, %s61
    %p63 = scmp.eq.s32.totalorder %s16, 0
    %p64 = por %p62, %p63
    %s66 = sadd.s32 %s65, 1
    %p69 = scmp.eq.s32.totalorder %s10, 1
    %p70 = scmp.ne.s32.totalorder %s65, %s67
    %p71 = scmp.eq.s32.totalorder %s10, 0
    %p72 = por %p70, %p71
    %p73 = scmp.ne.s32.totalorder %s65, %s67
    %p74 = scmp.eq.s32.totalorder %s15, 1
    %p75 = por %p73, %p74
    %p76 = scmp.ne.s32.totalorder %s67, %s68
    %p77 = scmp.eq.s32.totalorder %s15, 0
    %p78 = por %p76, %p77
    %p79 = scmp.ne.s32.totalorder %s67, %s68
    %p80 = scmp.eq.s32.totalorder %s16, 1
    %p81 = por %p79, %p80
    %p83 = scmp.ne.s32.totalorder %s68, %s82
    %p84 = scmp.eq.s32.totalorder %s16, 0
    %p85 = por %p83, %p84
    %s87 = sadd.s32 %s86, 1
    %p90 = scmp.eq.s32.totalorder %s10, 1
    %p91 = scmp.ne.s32.totalorder %s86, %s88
    %p92 = scmp.eq.s32.totalorder %s10, 0
    %p93 = por %p91, %p92
    %p94 = scmp.ne.s32.totalorder %s86, %s88
    %p95 = scmp.eq.s32.totalorder %s15, 1
    %p96 = por %p94, %p95
    %p97 = scmp.ne.s32.totalorder %s88, %s89
    %p98 = scmp.eq.s32.totalorder %s15, 0
    %p99 = por %p97, %p98
    %p100 = scmp.ne.s32.totalorder %s88, %s89
    %p101 = scmp.eq.s32.totalorder %s16, 1
    %p102 = por %p100, %p101
    %p104 = scmp.ne.s32.totalorder %s89, %s103
    %p105 = scmp.eq.s32.totalorder %s16, 0
    %p106 = por %p104, %p105
    %s107 = ssub.s32 %s10, %s17
    %p108 = scmp.eq.s32.totalorder %s107, 0
    %s110 = sadd.s32 %s109, 1
    %s111 = scalar_select %p108, %s109, %s110
    %p114 = pneg %p108
    %p115 = scmp.eq.s32.totalorder %s10, 1
    %p116 = por %p114, %p115
    %p117 = scmp.ne.s32.totalorder %s109, %s112
    %p118 = scmp.eq.s32.totalorder %s10, 0
    %p119 = por %p117, %p118
    %p120 = scmp.ne.s32.totalorder %s109, %s112
    %p121 = scmp.eq.s32.totalorder %s15, 1
    %p122 = por %p120, %p121
    %p123 = scmp.ne.s32.totalorder %s112, %s113
    %p124 = scmp.eq.s32.totalorder %s15, 0
    %p125 = por %p123, %p124
    %p126 = scmp.ne.s32.totalorder %s112, %s113
    %p127 = scmp.eq.s32.totalorder %s16, 1
    %p128 = por %p126, %p127
    %p130 = scmp.ne.s32.totalorder %s113, %s129
    %p131 = scmp.eq.s32.totalorder %s16, 0
    %p132 = por %p130, %p131
    %p133 = scmp.le.s32.totalorder 1, %s10
    %p134 = scmp.lt.s32.totalorder %s10, 3
    %p135 = pnand %p133, %p134
    %p136 = pneg %p135
    // Predicated region
    $region9: #{asym_bottleneck_forward.3} parent=5 // pred_check
      _
    $region10: #{asym_bottleneck_forward.3} parent=5 // pred_check_branch
      %138 = sbr.rel (%p135) target = $region12
    $region11: #{asym_bottleneck_forward.3} parent=5 // pred_region
      %s139 = ssub.s32 %s10, 1
      // Predicated region
      $region13: #{asym_bottleneck_forward.3} parent=11 // pred_check
        %p140 = pneg %p57
      $region14: #{asym_bottleneck_forward.3} parent=11 // pred_check_branch
        %142 = sbr.rel (%p140) target = $region16
      $region15: #{asym_bottleneck_forward.3} parent=11 // pred_region
        _
      $region16: #{asym_bottleneck_forward.3} parent=11 // pred_fallthru
        _
      // Predicated region
      $region17: #{asym_bottleneck_forward.3} parent=11 // pred_check
        %p143 = pneg %p78
      $region18: #{asym_bottleneck_forward.3} parent=11 // pred_check_branch
        %145 = sbr.rel (%p143) target = $region20
      $region19: #{asym_bottleneck_forward.3} parent=11 // pred_region
        _
      $region20: #{asym_bottleneck_forward.3} parent=11 // pred_fallthru
        _
      // Predicated region
      $region21: #{asym_bottleneck_forward.3} parent=11 // pred_check
        %p146 = pneg %p99
      $region22: #{asym_bottleneck_forward.3} parent=11 // pred_check_branch
        %148 = sbr.rel (%p146) target = $region24
      $region23: #{asym_bottleneck_forward.3} parent=11 // pred_region
        _
      $region24: #{asym_bottleneck_forward.3} parent=11 // pred_fallthru
        _
    $region12: #{asym_bottleneck_forward.3} parent=5 // pred_fallthru
      _
    %p149 = scmp.lt.s32.totalorder %s10, 2
    // Predicated region
    $region25: #{asym_bottleneck_forward.3} parent=5 // pred_check
      %p150 = pneg %p149
    $region26: #{asym_bottleneck_forward.3} parent=5 // pred_check_branch
      %152 = sbr.rel (%p150) target = $region28
    $region27: #{asym_bottleneck_forward.3} parent=5 // pred_region
      // Predicated region
      $region29: #{asym_bottleneck_forward.3} parent=27 // pred_check
        %p153 = pneg %p30
      $region30: #{asym_bottleneck_forward.3} parent=27 // pred_check_branch
        %155 = sbr.rel (%p153) target = $region32
      $region31: #{asym_bottleneck_forward.3} parent=27 // pred_region
        %s156 = smul.u32 64, %s10
        %p157 = scmp.lt.s32.totalorder %s156, 127
        %s158 = scalar_select %p157, %s156, 127
        %s159 = smul.addr %s158, 8
        %s160 = scalar_lea.vmem %s0, %s159
        %s161 = smul.u32 64, %s10
      $region32: #{asym_bottleneck_forward.3} parent=27 // pred_fallthru
        _
    $region28: #{asym_bottleneck_forward.3} parent=5 // pred_fallthru
      _
    %p162 = scmp.le.s32.totalorder 1, %s10
    %p163 = scmp.lt.s32.totalorder %s10, 3
    %p164 = pnand %p162, %p163
    %p165 = pneg %p164
    // Predicated region
    $region33: #{asym_bottleneck_forward.3} parent=5 // pred_check
      _
    $region34: #{asym_bottleneck_forward.3} parent=5 // pred_check_branch
      %167 = sbr.rel (%p164) target = $region36
    $region35: #{asym_bottleneck_forward.3} parent=5 // pred_region
      %s168 = ssub.s32 %s10, 1
      %s169 = smul.u32 64, %s15
      %p170 = scmp.lt.s32.totalorder %s169, 127
      %s171 = scalar_select %p170, %s169, 127
      %s172 = smul.addr %s171, 8
      %s173 = scalar_lea.vmem %s0, %s172
      %p174 = pneg %p36
      %p175 = pneg %p33
      %p176 = pneg %p57
      %p177 = pneg %p54
      %p178 = pneg %p78
      %p179 = pneg %p75
      %p180 = pneg %p99
      %p181 = pneg %p96
      %p182 = pneg %p125
      %p183 = pneg %p122
      %s184 = smul.u32 64, %s15
      %p185 = scmp.lt.s32.totalorder %s184, 127
      %s186 = scalar_select %p185, %s184, 127
      %s187 = smul.addr %s186, 8
      %s188 = scalar_lea.vmem %s4, %s187
      %s189 = smul.u32 64, %s15
      %p190 = scmp.lt.s32.totalorder %s189, 127
      %s191 = scalar_select %p190, %s189, 127
      %s192 = smul.addr %s191, 8
      %s193 = scalar_lea.vmem %s0, %s192
      %s194 = smul.u32 64, %s15
      %s195 = smul.u32 64, %s15
      %p196 = scmp.lt.s32.totalorder %s195, 127
      %s197 = scalar_select %p196, %s195, 127
      %s198 = smul.addr %s197, 8
      %s199 = scalar_lea.vmem %s4, %s198
      %s200 = smul.u32 64, %s15
      %v201 = vld [vmem:[%s193] sm:$0xff]
      %v202 = vld [vmem:[%s193 + $0x8] sm:$0xff]
      %v203 = vld [vmem:[%s193 + $0x10] sm:$0xff]
      %v204 = vld [vmem:[%s193 + $0x18] sm:$0xff]
      %v205 = vld [vmem:[%s193 + $0x20] sm:$0xff]
      %v206 = vld [vmem:[%s193 + $0x28] sm:$0xff]
      %v207 = vld [vmem:[%s193 + $0x30] sm:$0xff]
      %v208 = vld [vmem:[%s193 + $0x38] sm:$0xff]
      %v209 = vld [vmem:[%s193 + $0x40] sm:$0xff]
      %v210 = vld [vmem:[%s193 + $0x48] sm:$0xff]
      %v211 = vld [vmem:[%s193 + $0x50] sm:$0xff]
      %v212 = vld [vmem:[%s193 + $0x58] sm:$0xff]
      %v213 = vld [vmem:[%s193 + $0x60] sm:$0xff]
      %v214 = vld [vmem:[%s193 + $0x68] sm:$0xff]
      %v215 = vld [vmem:[%s193 + $0x70] sm:$0xff]
      %v216 = vld [vmem:[%s193 + $0x78] sm:$0xff]
      %v217 = vld [vmem:[%s193 + $0x80] sm:$0xff]
      %v218 = vld [vmem:[%s193 + $0x88] sm:$0xff]
      %v219 = vld [vmem:[%s193 + $0x90] sm:$0xff]
      %v220 = vld [vmem:[%s193 + $0x98] sm:$0xff]
      %v221 = vld [vmem:[%s193 + $0xa0] sm:$0xff]
      %v222 = vld [vmem:[%s193 + $0xa8] sm:$0xff]
      %v223 = vld [vmem:[%s193 + $0xb0] sm:$0xff]
      %v224 = vld [vmem:[%s193 + $0xb8] sm:$0xff]
      %v225 = vld [vmem:[%s193 + $0xc0] sm:$0xff]
      %v226 = vld [vmem:[%s193 + $0xc8] sm:$0xff]
      %v227 = vld [vmem:[%s193 + $0xd0] sm:$0xff]
      %v228 = vld [vmem:[%s193 + $0xd8] sm:$0xff]
      %v229 = vld [vmem:[%s193 + $0xe0] sm:$0xff]
      %v230 = vld [vmem:[%s193 + $0xe8] sm:$0xff]
      %v231 = vld [vmem:[%s193 + $0xf0] sm:$0xff]
      %v232 = vld [vmem:[%s193 + $0xf8] sm:$0xff]
      %v233 = vld [vmem:[%s193 + $0x100] sm:$0xff]
      %v234 = vld [vmem:[%s193 + $0x108] sm:$0xff]
      %v235 = vld [vmem:[%s193 + $0x110] sm:$0xff]
      %v236 = vld [vmem:[%s193 + $0x118] sm:$0xff]
      %v237 = vld [vmem:[%s193 + $0x120] sm:$0xff]
      %v238 = vld [vmem:[%s193 + $0x128] sm:$0xff]
      %v239 = vld [vmem:[%s193 + $0x130] sm:$0xff]
      %v240 = vld [vmem:[%s193 + $0x138] sm:$0xff]
      %v241 = vld [vmem:[%s193 + $0x140] sm:$0xff]
      %v242 = vld [vmem:[%s193 + $0x148] sm:$0xff]
      %v243 = vld [vmem:[%s193 + $0x150] sm:$0xff]
      %v244 = vld [vmem:[%s193 + $0x158] sm:$0xff]
      %v245 = vld [vmem:[%s193 + $0x160] sm:$0xff]
      %v246 = vld [vmem:[%s193 + $0x168] sm:$0xff]
      %v247 = vld [vmem:[%s193 + $0x170] sm:$0xff]
      %v248 = vld [vmem:[%s193 + $0x178] sm:$0xff]
      %v249 = vld [vmem:[%s193 + $0x180] sm:$0xff]
      %v250 = vld [vmem:[%s193 + $0x188] sm:$0xff]
      %v251 = vld [vmem:[%s193 + $0x190] sm:$0xff]
      %v252 = vld [vmem:[%s193 + $0x198] sm:$0xff]
      %v253 = vld [vmem:[%s193 + $0x1a0] sm:$0xff]
      %v254 = vld [vmem:[%s193 + $0x1a8] sm:$0xff]
      %v255 = vld [vmem:[%s193 + $0x1b0] sm:$0xff]
      %v256 = vld [vmem:[%s193 + $0x1b8] sm:$0xff]
      %v257 = vld [vmem:[%s193 + $0x1c0] sm:$0xff]
      %v258 = vld [vmem:[%s193 + $0x1c8] sm:$0xff]
      %v259 = vld [vmem:[%s193 + $0x1d0] sm:$0xff]
      %v260 = vld [vmem:[%s193 + $0x1d8] sm:$0xff]
      %v261 = vld [vmem:[%s193 + $0x1e0] sm:$0xff]
      %v262 = vld [vmem:[%s193 + $0x1e8] sm:$0xff]
      %v263 = vld [vmem:[%s193 + $0x1f0] sm:$0xff]
      %v264 = vld [vmem:[%s193 + $0x1f8] sm:$0xff]
      %v265 = vld [vmem:[%s1] sm:$0xff]
      %vm266 = vcmask 64512
      %v268 = vsel %vm266, %v201, 0
      %v271 = vsel %vm266, %v202, 0
      %v274 = vsel %vm266, %v203, 0
      %v277 = vsel %vm266, %v204, 0
      %v280 = vsel %vm266, %v205, 0
      %v283 = vsel %vm266, %v206, 0
      %v286 = vsel %vm266, %v207, 0
      %v289 = vsel %vm266, %v208, 0
      %v292 = vsel %vm266, %v209, 0
      %v295 = vsel %vm266, %v210, 0
      %v298 = vsel %vm266, %v211, 0
      %v301 = vsel %vm266, %v212, 0
      %v304 = vsel %vm266, %v213, 0
      %v307 = vsel %vm266, %v214, 0
      %v310 = vsel %vm266, %v215, 0
      %v313 = vsel %vm266, %v216, 0
      %v316 = vsel %vm266, %v217, 0
      %v319 = vsel %vm266, %v218, 0
      %v322 = vsel %vm266, %v219, 0
      %v325 = vsel %vm266, %v220, 0
      %v328 = vsel %vm266, %v221, 0
      %v331 = vsel %vm266, %v222, 0
      %v334 = vsel %vm266, %v223, 0
      %v337 = vsel %vm266, %v224, 0
      %v340 = vsel %vm266, %v225, 0
      %v343 = vsel %vm266, %v226, 0
      %v346 = vsel %vm266, %v227, 0
      %v349 = vsel %vm266, %v228, 0
      %v352 = vsel %vm266, %v229, 0
      %v355 = vsel %vm266, %v230, 0
      %v358 = vsel %vm266, %v231, 0
      %v361 = vsel %vm266, %v232, 0
      %v364 = vsel %vm266, %v233, 0
      %v367 = vsel %vm266, %v234, 0
      %v370 = vsel %vm266, %v235, 0
      %v373 = vsel %vm266, %v236, 0
      %v376 = vsel %vm266, %v237, 0
      %v379 = vsel %vm266, %v238, 0
      %v382 = vsel %vm266, %v239, 0
      %v385 = vsel %vm266, %v240, 0
      %v388 = vsel %vm266, %v241, 0
      %v391 = vsel %vm266, %v242, 0
      %v394 = vsel %vm266, %v243, 0
      %v397 = vsel %vm266, %v244, 0
      %v400 = vsel %vm266, %v245, 0
      %v403 = vsel %vm266, %v246, 0
      %v406 = vsel %vm266, %v247, 0
      %v409 = vsel %vm266, %v248, 0
      %v412 = vsel %vm266, %v249, 0
      %v415 = vsel %vm266, %v250, 0
      %v418 = vsel %vm266, %v251, 0
      %v421 = vsel %vm266, %v252, 0
      %v424 = vsel %vm266, %v253, 0
      %v427 = vsel %vm266, %v254, 0
      %v430 = vsel %vm266, %v255, 0
      %v433 = vsel %vm266, %v256, 0
      %v436 = vsel %vm266, %v257, 0
      %v439 = vsel %vm266, %v258, 0
      %v442 = vsel %vm266, %v259, 0
      %v445 = vsel %vm266, %v260, 0
      %v448 = vsel %vm266, %v261, 0
      %v451 = vsel %vm266, %v262, 0
      %v454 = vsel %vm266, %v263, 0
      %v457 = vsel %vm266, %v264, 0
      %459 = vmatprep.subr.mxu0 0.0
      %460 = vmatpush1.msra.mxu0 %v265
      %461 = vmatprep.subr.mxu0 0.0
      %462 = vmatpush1.msra.mxu0 0.0
      %463 = vmatprep.subr.mxu0 0.0
      %464 = vmatpush1.msra.mxu0 0.0
      %465 = vmatprep.subr.mxu0 0.0
      %466 = vmatpush1.msra.mxu0 0.0
      %467 = vmatprep.subr.mxu0 0.0
      %468 = vmatpush1.msra.mxu0 0.0
      %469 = vmatprep.subr.mxu0 0.0
      %470 = vmatpush1.msra.mxu0 0.0
      %471 = vmatprep.subr.mxu0 0.0
      %472 = vmatpush1.msra.mxu0 0.0
      %473 = vmatprep.subr.mxu0 0.0
      %474 = vmatpush1.msra.mxu0 0.0
      %475 = vmatprep.subr.mxu0 0.0
      %476 = vmatpush1.msra.mxu0 0.0
      %477 = vmatprep.subr.mxu0 0.0
      %478 = vmatpush1.msra.mxu0 0.0
      %479 = vmatprep.subr.mxu0 0.0
      %480 = vmatpush1.msra.mxu0 0.0
      %481 = vmatprep.subr.mxu0 0.0
      %482 = vmatpush1.msra.mxu0 0.0
      %483 = vmatprep.subr.mxu0 0.0
      %484 = vmatpush1.msra.mxu0 0.0
      %485 = vmatprep.subr.mxu0 0.0
      %486 = vmatpush1.msra.mxu0 0.0
      %487 = vmatprep.subr.mxu0 0.0
      %488 = vmatpush1.msra.mxu0 0.0
      %489 = vmatprep.subr.mxu0 0.0
      %490 = vmatpush1.msra.mxu0 0.0
      %491 = vmatprep.subr.mxu0 0.0
      %492 = vmatpush1.msra.mxu0 0.0
      %493 = vmatprep.subr.mxu0 0.0
      %494 = vmatpush1.msra.mxu0 0.0
      %495 = vmatprep.subr.mxu0 0.0
      %496 = vmatpush1.msra.mxu0 0.0
      %497 = vmatprep.subr.mxu0 0.0
      %498 = vmatpush1.msra.mxu0 0.0
      %499 = vmatprep.subr.mxu0 0.0
      %500 = vmatpush1.msra.mxu0 0.0
      %501 = vmatprep.subr.mxu0 0.0
      %502 = vmatpush1.msra.mxu0 0.0
      %503 = vmatprep.subr.mxu0 0.0
      %504 = vmatpush1.msra.mxu0 0.0
      %505 = vmatprep.subr.mxu0 0.0
      %506 = vmatpush1.msra.mxu0 0.0
      %507 = vmatprep.subr.mxu0 0.0
      %508 = vmatpush1.msra.mxu0 0.0
      %509 = vmatprep.subr.mxu0 0.0
      %510 = vmatpush1.msra.mxu0 0.0
      %511 = vmatprep.subr.mxu0 0.0
      %512 = vmatpush1.msra.mxu0 0.0
      %513 = vmatprep.subr.mxu0 0.0
      %514 = vmatpush1.msra.mxu0 0.0
      %515 = vmatprep.subr.mxu0 0.0
      %516 = vmatpush1.msra.mxu0 0.0
      %517 = vmatprep.subr.mxu0 0.0
      %518 = vmatpush1.msra.mxu0 0.0
      %519 = vmatprep.subr.mxu0 0.0
      %520 = vmatpush1.msra.mxu0 0.0
      %521 = vmatprep.subr.mxu0 0.0
      %522 = vmatpush1.msra.mxu0 0.0
      %523 = vmatprep.mubr.f32.mxu0 0.0
      %524 = vmatmul.mubr.f32.gmra.mrb[0].mxu0 %v268
      %v525 = vpop.f32.mrb[0].mxu0
      %v526 = vadd.f32 0.0, %v525
      %v527 = vpop.f32.mrb[0].mxu0
      %528 = vmatprep.mubr.f32.mxu0 0.0
      %529 = vmatmul.mubr.f32.gmra.mrb[0].mxu0 %v271
      %v530 = vpop.f32.mrb[0].mxu0
      %v531 = vadd.f32 0.0, %v530
      %v532 = vpop.f32.mrb[0].mxu0
      %533 = vmatprep.mubr.f32.mxu0 0.0
      %534 = vmatmul.mubr.f32.gmra.mrb[0].mxu0 %v274
      %v535 = vpop.f32.mrb[0].mxu0
      %v536 = vadd.f32 0.0, %v535
      %v537 = vpop.f32.mrb[0].mxu0
      %538 = vmatprep.mubr.f32.mxu0 0.0
      %539 = vmatmul.mubr.f32.gmra.mrb[0].mxu0 %v277
      %v540 = vpop.f32.mrb[0].mxu0
      %v541 = vadd.f32 0.0, %v540
      %v542 = vpop.f32.mrb[0].mxu0
      %543 = vmatprep.mubr.f32.mxu0 0.0
      %544 = vmatmul.mubr.f32.gmra.mrb[0].mxu0 %v280
      %v545 = vpop.f32.mrb[0].mxu0
      %v546 = vadd.f32 0.0, %v545
      %v547 = vpop.f32.mrb[0].mxu0
      %548 = vmatprep.mubr.f32.mxu0 0.0
      %549 = vmatmul.mubr.f32.gmra.mrb[0].mxu0 %v283
      %v550 = vpop.f32.mrb[0].mxu0
      %v551 = vadd.f32 0.0, %v550
      %v552 = vpop.f32.mrb[0].mxu0
      %553 = vmatprep.mubr.f32.mxu0 0.0
      %554 = vmatmul.mubr.f32.gmra.mrb[0].mxu0 %v286
      %v555 = vpop.f32.mrb[0].mxu0
      %v556 = vadd.f32 0.0, %v555
      %v557 = vpop.f32.mrb[0].mxu0
      %558 = vmatprep.mubr.f32.mxu0 0.0
      %559 = vmatmul.mubr.f32.gmra.mrb[0].mxu0 %v289
      %v560 = vpop.f32.mrb[0].mxu0
      %v561 = vadd.f32 0.0, %v560
      %v562 = vpop.f32.mrb[0].mxu0
      %563 = vmatprep.mubr.f32.mxu0 0.0
      %564 = vmatmul.mubr.f32.gmra.mrb[0].mxu0 %v292
      %v565 = vpop.f32.mrb[0].mxu0
      %v566 = vadd.f32 0.0, %v565
      %v567 = vpop.f32.mrb[0].mxu0
      %568 = vmatprep.mubr.f32.mxu0 0.0
      %569 = vmatmul.mubr.f32.gmra.mrb[0].mxu0 %v295
      %v570 = vpop.f32.mrb[0].mxu0
      %v571 = vadd.f32 0.0, %v570
      %v572 = vpop.f32.mrb[0].mxu0
      %573 = vmatprep.mubr.f32.mxu0 0.0
      %574 = vmatmul.mubr.f32.gmra.mrb[0].mxu0 %v298
      %v575 = vpop.f32.mrb[0].mxu0
      %v576 = vadd.f32 0.0, %v575
      %v577 = vpop.f32.mrb[0].mxu0
      %578 = vmatprep.mubr.f32.mxu0 0.0
      %579 = vmatmul.mubr.f32.gmra.mrb[0].mxu0 %v301
      %v580 = vpop.f32.mrb[0].mxu0
      %v581 = vadd.f32 0.0, %v580
      %v582 = vpop.f32.mrb[0].mxu0
      %583 = vmatprep.mubr.f32.mxu0 0.0
      %584 = vmatmul.mubr.f32.gmra.mrb[0].mxu0 %v304
      %v585 = vpop.f32.mrb[0].mxu0
      %v586 = vadd.f32 0.0, %v585
      %v587 = vpop.f32.mrb[0].mxu0
      %588 = vmatprep.mubr.f32.mxu0 0.0
      %589 = vmatmul.mubr.f32.gmra.mrb[0].mxu0 %v307
      %v590 = vpop.f32.mrb[0].mxu0
      %v591 = vadd.f32 0.0, %v590
      %v592 = vpop.f32.mrb[0].mxu0
      %593 = vmatprep.mubr.f32.mxu0 0.0
      %594 = vmatmul.mubr.f32.gmra.mrb[0].mxu0 %v310
      %v595 = vpop.f32.mrb[0].mxu0
      %v596 = vadd.f32 0.0, %v595
      %v597 = vpop.f32.mrb[0].mxu0
      %598 = vmatprep.mubr.f32.mxu0 0.0
      %599 = vmatmul.mubr.f32.gmra.mrb[0].mxu0 %v313
      %v600 = vpop.f32.mrb[0].mxu0
      %v601 = vadd.f32 0.0, %v600
      %v602 = vpop.f32.mrb[0].mxu0
      %603 = vmatprep.mubr.f32.mxu0 0.0
      %604 = vmatmul.mubr.f32.gmra.mrb[0].mxu0 %v316
      %v605 = vpop.f32.mrb[0].mxu0
      %v606 = vadd.f32 0.0, %v605
      %v607 = vpop.f32.mrb[0].mxu0
      %608 = vmatprep.mubr.f32.mxu0 0.0
      %609 = vmatmul.mubr.f32.gmra.mrb[0].mxu0 %v319
      %v610 = vpop.f32.mrb[0].mxu0
      %v611 = vadd.f32 0.0, %v610
      %v612 = vpop.f32.mrb[0].mxu0
      %613 = vmatprep.mubr.f32.mxu0 0.0
      %614 = vmatmul.mubr.f32.gmra.mrb[0].mxu0 %v322
      %v615 = vpop.f32.mrb[0].mxu0
      %v616 = vadd.f32 0.0, %v615
      %v617 = vpop.f32.mrb[0].mxu0
      %618 = vmatprep.mubr.f32.mxu0 0.0
      %619 = vmatmul.mubr.f32.gmra.mrb[0].mxu0 %v325
      %v620 = vpop.f32.mrb[0].mxu0
      %v621 = vadd.f32 0.0, %v620
      %v622 = vpop.f32.mrb[0].mxu0
      %623 = vmatprep.mubr.f32.mxu0 0.0
      %624 = vmatmul.mubr.f32.gmra.mrb[0].mxu0 %v328
      %v625 = vpop.f32.mrb[0].mxu0
      %v626 = vadd.f32 0.0, %v625
      %v627 = vpop.f32.mrb[0].mxu0
      %628 = vmatprep.mubr.f32.mxu0 0.0
      %629 = vmatmul.mubr.f32.gmra.mrb[0].mxu0 %v331
      %v630 = vpop.f32.mrb[0].mxu0
      %v631 = vadd.f32 0.0, %v630
      %v632 = vpop.f32.mrb[0].mxu0
      %633 = vmatprep.mubr.f32.mxu0 0.0
      %634 = vmatmul.mubr.f32.gmra.mrb[0].mxu0 %v334
      %v635 = vpop.f32.mrb[0].mxu0
      %v636 = vadd.f32 0.0, %v635
      %v637 = vpop.f32.mrb[0].mxu0
      %638 = vmatprep.mubr.f32.mxu0 0.0
      %639 = vmatmul.mubr.f32.gmra.mrb[0].mxu0 %v337
      %v640 = vpop.f32.mrb[0].mxu0
      %v641 = vadd.f32 0.0, %v640
      %v642 = vpop.f32.mrb[0].mxu0
      %643 = vmatprep.mubr.f32.mxu0 0.0
      %644 = vmatmul.mubr.f32.gmra.mrb[0].mxu0 %v340
      %v645 = vpop.f32.mrb[0].mxu0
      %v646 = vadd.f32 0.0, %v645
      %v647 = vpop.f32.mrb[0].mxu0
      %648 = vmatprep.mubr.f32.mxu0 0.0
      %649 = vmatmul.mubr.f32.gmra.mrb[0].mxu0 %v343
      %v650 = vpop.f32.mrb[0].mxu0
      %v651 = vadd.f32 0.0, %v650
      %v652 = vpop.f32.mrb[0].mxu0
      %653 = vmatprep.mubr.f32.mxu0 0.0
      %654 = vmatmul.mubr.f32.gmra.mrb[0].mxu0 %v346
      %v655 = vpop.f32.mrb[0].mxu0
      %v656 = vadd.f32 0.0, %v655
      %v657 = vpop.f32.mrb[0].mxu0
      %658 = vmatprep.mubr.f32.mxu0 0.0
      %659 = vmatmul.mubr.f32.gmra.mrb[0].mxu0 %v349
      %v660 = vpop.f32.mrb[0].mxu0
      %v661 = vadd.f32 0.0, %v660
      %v662 = vpop.f32.mrb[0].mxu0
      %663 = vmatprep.mubr.f32.mxu0 0.0
      %664 = vmatmul.mubr.f32.gmra.mrb[0].mxu0 %v352
      %v665 = vpop.f32.mrb[0].mxu0
      %v666 = vadd.f32 0.0, %v665
      %v667 = vpop.f32.mrb[0].mxu0
      %668 = vmatprep.mubr.f32.mxu0 0.0
      %669 = vmatmul.mubr.f32.gmra.mrb[0].mxu0 %v355
      %v670 = vpop.f32.mrb[0].mxu0
      %v671 = vadd.f32 0.0, %v670
      %v672 = vpop.f32.mrb[0].mxu0
      %673 = vmatprep.mubr.f32.mxu0 0.0
      %674 = vmatmul.mubr.f32.gmra.mrb[0].mxu0 %v358
      %v675 = vpop.f32.mrb[0].mxu0
      %v676 = vadd.f32 0.0, %v675
      %v677 = vpop.f32.mrb[0].mxu0
      %678 = vmatprep.mubr.f32.mxu0 0.0
      %679 = vmatmul.mubr.f32.gmra.mrb[0].mxu0 %v361
      %v680 = vpop.f32.mrb[0].mxu0
      %v681 = vadd.f32 0.0, %v680
      %v682 = vpop.f32.mrb[0].mxu0
      %683 = vmatprep.mubr.f32.mxu0 0.0
      %684 = vmatmul.mubr.f32.gmra.mrb[0].mxu0 %v364
      %v685 = vpop.f32.mrb[0].mxu0
      %v686 = vadd.f32 0.0, %v685
      %v687 = vpop.f32.mrb[0].mxu0
      %688 = vmatprep.mubr.f32.mxu0 0.0
      %689 = vmatmul.mubr.f32.gmra.mrb[0].mxu0 %v367
      %v690 = vpop.f32.mrb[0].mxu0
      %v691 = vadd.f32 0.0, %v690
      %v692 = vpop.f32.mrb[0].mxu0
      %693 = vmatprep.mubr.f32.mxu0 0.0
      %694 = vmatmul.mubr.f32.gmra.mrb[0].mxu0 %v370
      %v695 = vpop.f32.mrb[0].mxu0
      %v696 = vadd.f32 0.0, %v695
      %v697 = vpop.f32.mrb[0].mxu0
      %698 = vmatprep.mubr.f32.mxu0 0.0
      %699 = vmatmul.mubr.f32.gmra.mrb[0].mxu0 %v373
      %v700 = vpop.f32.mrb[0].mxu0
      %v701 = vadd.f32 0.0, %v700
      %v702 = vpop.f32.mrb[0].mxu0
      %703 = vmatprep.mubr.f32.mxu0 0.0
      %704 = vmatmul.mubr.f32.gmra.mrb[0].mxu0 %v376
      %v705 = vpop.f32.mrb[0].mxu0
      %v706 = vadd.f32 0.0, %v705
      %v707 = vpop.f32.mrb[0].mxu0
      %708 = vmatprep.mubr.f32.mxu0 0.0
      %709 = vmatmul.mubr.f32.gmra.mrb[0].mxu0 %v379
      %v710 = vpop.f32.mrb[0].mxu0
      %v711 = vadd.f32 0.0, %v710
      %v712 = vpop.f32.mrb[0].mxu0
      %713 = vmatprep.mubr.f32.mxu0 0.0
      %714 = vmatmul.mubr.f32.gmra.mrb[0].mxu0 %v382
      %v715 = vpop.f32.mrb[0].mxu0
      %v716 = vadd.f32 0.0, %v715
      %v717 = vpop.f32.mrb[0].mxu0
      %718 = vmatprep.mubr.f32.mxu0 0.0
      %719 = vmatmul.mubr.f32.gmra.mrb[0].mxu0 %v385
      %v720 = vpop.f32.mrb[0].mxu0
      %v721 = vadd.f32 0.0, %v720
      %v722 = vpop.f32.mrb[0].mxu0
      %723 = vmatprep.mubr.f32.mxu0 0.0
      %724 = vmatmul.mubr.f32.gmra.mrb[0].mxu0 %v388
      %v725 = vpop.f32.mrb[0].mxu0
      %v726 = vadd.f32 0.0, %v725
      %v727 = vpop.f32.mrb[0].mxu0
      %728 = vmatprep.mubr.f32.mxu0 0.0
      %729 = vmatmul.mubr.f32.gmra.mrb[0].mxu0 %v391
      %v730 = vpop.f32.mrb[0].mxu0
      %v731 = vadd.f32 0.0, %v730
      %v732 = vpop.f32.mrb[0].mxu0
      %733 = vmatprep.mubr.f32.mxu0 0.0
      %734 = vmatmul.mubr.f32.gmra.mrb[0].mxu0 %v394
      %v735 = vpop.f32.mrb[0].mxu0
      %v736 = vadd.f32 0.0, %v735
      %v737 = vpop.f32.mrb[0].mxu0
      %738 = vmatprep.mubr.f32.mxu0 0.0
      %739 = vmatmul.mubr.f32.gmra.mrb[0].mxu0 %v397
      %v740 = vpop.f32.mrb[0].mxu0
      %v741 = vadd.f32 0.0, %v740
      %v742 = vpop.f32.mrb[0].mxu0
      %743 = vmatprep.mubr.f32.mxu0 0.0
      %744 = vmatmul.mubr.f32.gmra.mrb[0].mxu0 %v400
      %v745 = vpop.f32.mrb[0].mxu0
      %v746 = vadd.f32 0.0, %v745
      %v747 = vpop.f32.mrb[0].mxu0
      %748 = vmatprep.mubr.f32.mxu0 0.0
      %749 = vmatmul.mubr.f32.gmra.mrb[0].mxu0 %v403
      %v750 = vpop.f32.mrb[0].mxu0
      %v751 = vadd.f32 0.0, %v750
      %v752 = vpop.f32.mrb[0].mxu0
      %753 = vmatprep.mubr.f32.mxu0 0.0
      %754 = vmatmul.mubr.f32.gmra.mrb[0].mxu0 %v406
      %v755 = vpop.f32.mrb[0].mxu0
      %v756 = vadd.f32 0.0, %v755
      %v757 = vpop.f32.mrb[0].mxu0
      %758 = vmatprep.mubr.f32.mxu0 0.0
      %759 = vmatmul.mubr.f32.gmra.mrb[0].mxu0 %v409
      %v760 = vpop.f32.mrb[0].mxu0
      %v761 = vadd.f32 0.0, %v760
      %v762 = vpop.f32.mrb[0].mxu0
      %763 = vmatprep.mubr.f32.mxu0 0.0
      %764 = vmatmul.mubr.f32.gmra.mrb[0].mxu0 %v412
      %v765 = vpop.f32.mrb[0].mxu0
      %v766 = vadd.f32 0.0, %v765
      %v767 = vpop.f32.mrb[0].mxu0
      %768 = vmatprep.mubr.f32.mxu0 0.0
      %769 = vmatmul.mubr.f32.gmra.mrb[0].mxu0 %v415
      %v770 = vpop.f32.mrb[0].mxu0
      %v771 = vadd.f32 0.0, %v770
      %v772 = vpop.f32.mrb[0].mxu0
      %773 = vmatprep.mubr.f32.mxu0 0.0
      %774 = vmatmul.mubr.f32.gmra.mrb[0].mxu0 %v418
      %v775 = vpop.f32.mrb[0].mxu0
      %v776 = vadd.f32 0.0, %v775
      %v777 = vpop.f32.mrb[0].mxu0
      %778 = vmatprep.mubr.f32.mxu0 0.0
      %779 = vmatmul.mubr.f32.gmra.mrb[0].mxu0 %v421
      %v780 = vpop.f32.mrb[0].mxu0
      %v781 = vadd.f32 0.0, %v780
      %v782 = vpop.f32.mrb[0].mxu0
      %783 = vmatprep.mubr.f32.mxu0 0.0
      %784 = vmatmul.mubr.f32.gmra.mrb[0].mxu0 %v424
      %v785 = vpop.f32.mrb[0].mxu0
      %v786 = vadd.f32 0.0, %v785
      %v787 = vpop.f32.mrb[0].mxu0
      %788 = vmatprep.mubr.f32.mxu0 0.0
      %789 = vmatmul.mubr.f32.gmra.mrb[0].mxu0 %v427
      %v790 = vpop.f32.mrb[0].mxu0
      %v791 = vadd.f32 0.0, %v790
      %v792 = vpop.f32.mrb[0].mxu0
      %793 = vmatprep.mubr.f32.mxu0 0.0
      %794 = vmatmul.mubr.f32.gmra.mrb[0].mxu0 %v430
      %v795 = vpop.f32.mrb[0].mxu0
      %v796 = vadd.f32 0.0, %v795
      %v797 = vpop.f32.mrb[0].mxu0
      %798 = vmatprep.mubr.f32.mxu0 0.0
      %799 = vmatmul.mubr.f32.gmra.mrb[0].mxu0 %v433
      %v800 = vpop.f32.mrb[0].mxu0
      %v801 = vadd.f32 0.0, %v800
      %v802 = vpop.f32.mrb[0].mxu0
      %803 = vmatprep.mubr.f32.mxu0 0.0
      %804 = vmatmul.mubr.f32.gmra.mrb[0].mxu0 %v436
      %v805 = vpop.f32.mrb[0].mxu0
      %v806 = vadd.f32 0.0, %v805
      %v807 = vpop.f32.mrb[0].mxu0
      %808 = vmatprep.mubr.f32.mxu0 0.0
      %809 = vmatmul.mubr.f32.gmra.mrb[0].mxu0 %v439
      %v810 = vpop.f32.mrb[0].mxu0
      %v811 = vadd.f32 0.0, %v810
      %v812 = vpop.f32.mrb[0].mxu0
      %813 = vmatprep.mubr.f32.mxu0 0.0
      %814 = vmatmul.mubr.f32.gmra.mrb[0].mxu0 %v442
      %v815 = vpop.f32.mrb[0].mxu0
      %v816 = vadd.f32 0.0, %v815
      %v817 = vpop.f32.mrb[0].mxu0
      %818 = vmatprep.mubr.f32.mxu0 0.0
      %819 = vmatmul.mubr.f32.gmra.mrb[0].mxu0 %v445
      %v820 = vpop.f32.mrb[0].mxu0
      %v821 = vadd.f32 0.0, %v820
      %v822 = vpop.f32.mrb[0].mxu0
      %823 = vmatprep.mubr.f32.mxu0 0.0
      %824 = vmatmul.mubr.f32.gmra.mrb[0].mxu0 %v448
      %v825 = vpop.f32.mrb[0].mxu0
      %v826 = vadd.f32 0.0, %v825
      %v827 = vpop.f32.mrb[0].mxu0
      %828 = vmatprep.mubr.f32.mxu0 0.0
      %829 = vmatmul.mubr.f32.gmra.mrb[0].mxu0 %v451
      %v830 = vpop.f32.mrb[0].mxu0
      %v831 = vadd.f32 0.0, %v830
      %v832 = vpop.f32.mrb[0].mxu0
      %833 = vmatprep.mubr.f32.mxu0 0.0
      %834 = vmatmul.mubr.f32.gmra.mrb[0].mxu0 %v454
      %v835 = vpop.f32.mrb[0].mxu0
      %v836 = vadd.f32 0.0, %v835
      %v837 = vpop.f32.mrb[0].mxu0
      %838 = vmatprep.mubr.f32.mxu0 0.0
      %839 = vmatmul.mubr.f32.gmra.mrb[0].mxu0 %v457
      %v840 = vpop.f32.mrb[0].mxu0
      %v841 = vadd.f32 0.0, %v840
      %v842 = vpop.f32.mrb[0].mxu0
      %843 = vdwg.mxu0
      %v844 = vld [vmem:[%s2] sm:$0x1]
      %v846 = vlaneseq
      %v847 = vshrl.u32 %v846, 7
      %v848 = vsub.s32 0, %v847
      %v849 = vrot.slane %v844, %v848
      %v851 = vmul.f32 %v526, %v849
      %v852 = vmul.f32 %v531, %v849
      %v853 = vmul.f32 %v536, %v849
      %v854 = vmul.f32 %v541, %v849
      %v855 = vmul.f32 %v546, %v849
      %v856 = vmul.f32 %v551, %v849
      %v857 = vmul.f32 %v556, %v849
      %v858 = vmul.f32 %v561, %v849
      %v859 = vmul.f32 %v566, %v849
      %v860 = vmul.f32 %v571, %v849
      %v861 = vmul.f32 %v576, %v849
      %v862 = vmul.f32 %v581, %v849
      %v863 = vmul.f32 %v586, %v849
      %v864 = vmul.f32 %v591, %v849
      %v865 = vmul.f32 %v596, %v849
      %v866 = vmul.f32 %v601, %v849
      %v867 = vmul.f32 %v606, %v849
      %v868 = vmul.f32 %v611, %v849
      %v869 = vmul.f32 %v616, %v849
      %v870 = vmul.f32 %v621, %v849
      %v871 = vmul.f32 %v626, %v849
      %v872 = vmul.f32 %v631, %v849
      %v873 = vmul.f32 %v636, %v849
      %v874 = vmul.f32 %v641, %v849
      %v875 = vmul.f32 %v646, %v849
      %v876 = vmul.f32 %v651, %v849
      %v877 = vmul.f32 %v656, %v849
      %v878 = vmul.f32 %v661, %v849
      %v879 = vmul.f32 %v666, %v849
      %v880 = vmul.f32 %v671, %v849
      %v881 = vmul.f32 %v676, %v849
      %v882 = vmul.f32 %v681, %v849
      %v883 = vmul.f32 %v686, %v849
      %v884 = vmul.f32 %v691, %v849
      %v885 = vmul.f32 %v696, %v849
      %v886 = vmul.f32 %v701, %v849
      %v887 = vmul.f32 %v706, %v849
      %v888 = vmul.f32 %v711, %v849
      %v889 = vmul.f32 %v716, %v849
      %v890 = vmul.f32 %v721, %v849
      %v891 = vmul.f32 %v726, %v849
      %v892 = vmul.f32 %v731, %v849
      %v893 = vmul.f32 %v736, %v849
      %v894 = vmul.f32 %v741, %v849
      %v895 = vmul.f32 %v746, %v849
      %v896 = vmul.f32 %v751, %v849
      %v897 = vmul.f32 %v756, %v849
      %v898 = vmul.f32 %v761, %v849
      %v899 = vmul.f32 %v766, %v849
      %v900 = vmul.f32 %v771, %v849
      %v901 = vmul.f32 %v776, %v849
      %v902 = vmul.f32 %v781, %v849
      %v903 = vmul.f32 %v786, %v849
      %v904 = vmul.f32 %v791, %v849
      %v905 = vmul.f32 %v796, %v849
      %v906 = vmul.f32 %v801, %v849
      %v907 = vmul.f32 %v806, %v849
      %v908 = vmul.f32 %v811, %v849
      %v909 = vmul.f32 %v816, %v849
      %v910 = vmul.f32 %v821, %v849
      %v911 = vmul.f32 %v826, %v849
      %v912 = vmul.f32 %v831, %v849
      %v913 = vmul.f32 %v836, %v849
      %v914 = vmul.f32 %v841, %v849
      %v915 = vld [vmem:[%s3] sm:$0x1]
      %v917 = vlaneseq
      %v918 = vshrl.u32 %v917, 7
      %v919 = vsub.s32 0, %v918
      %v920 = vrot.slane %v915, %v919
      %v922 = vadd.f32 %v851, %v920
      %v923 = vadd.f32 %v852, %v920
      %v924 = vadd.f32 %v853, %v920
      %v925 = vadd.f32 %v854, %v920
      %v926 = vadd.f32 %v855, %v920
      %v927 = vadd.f32 %v856, %v920
      %v928 = vadd.f32 %v857, %v920
      %v929 = vadd.f32 %v858, %v920
      %v930 = vadd.f32 %v859, %v920
      %v931 = vadd.f32 %v860, %v920
      %v932 = vadd.f32 %v861, %v920
      %v933 = vadd.f32 %v862, %v920
      %v934 = vadd.f32 %v863, %v920
      %v935 = vadd.f32 %v864, %v920
      %v936 = vadd.f32 %v865, %v920
      %v937 = vadd.f32 %v866, %v920
      %v938 = vadd.f32 %v867, %v920
      %v939 = vadd.f32 %v868, %v920
      %v940 = vadd.f32 %v869, %v920
      %v941 = vadd.f32 %v870, %v920
      %v942 = vadd.f32 %v871, %v920
      %v943 = vadd.f32 %v872, %v920
      %v944 = vadd.f32 %v873, %v920
      %v945 = vadd.f32 %v874, %v920
      %v946 = vadd.f32 %v875, %v920
      %v947 = vadd.f32 %v876, %v920
      %v948 = vadd.f32 %v877, %v920
      %v949 = vadd.f32 %v878, %v920
      %v950 = vadd.f32 %v879, %v920
      %v951 = vadd.f32 %v880, %v920
      %v952 = vadd.f32 %v881, %v920
      %v953 = vadd.f32 %v882, %v920
      %v954 = vadd.f32 %v883, %v920
      %v955 = vadd.f32 %v884, %v920
      %v956 = vadd.f32 %v885, %v920
      %v957 = vadd.f32 %v886, %v920
      %v958 = vadd.f32 %v887, %v920
      %v959 = vadd.f32 %v888, %v920
      %v960 = vadd.f32 %v889, %v920
      %v961 = vadd.f32 %v890, %v920
      %v962 = vadd.f32 %v891, %v920
      %v963 = vadd.f32 %v892, %v920
      %v964 = vadd.f32 %v893, %v920
      %v965 = vadd.f32 %v894, %v920
      %v966 = vadd.f32 %v895, %v920
      %v967 = vadd.f32 %v896, %v920
      %v968 = vadd.f32 %v897, %v920
      %v969 = vadd.f32 %v898, %v920
      %v970 = vadd.f32 %v899, %v920
      %v971 = vadd.f32 %v900, %v920
      %v972 = vadd.f32 %v901, %v920
      %v973 = vadd.f32 %v902, %v920
      %v974 = vadd.f32 %v903, %v920
      %v975 = vadd.f32 %v904, %v920
      %v976 = vadd.f32 %v905, %v920
      %v977 = vadd.f32 %v906, %v920
      %v978 = vadd.f32 %v907, %v920
      %v979 = vadd.f32 %v908, %v920
      %v980 = vadd.f32 %v909, %v920
      %v981 = vadd.f32 %v910, %v920
      %v982 = vadd.f32 %v911, %v920
      %v983 = vadd.f32 %v912, %v920
      %v984 = vadd.f32 %v913, %v920
      %v985 = vadd.f32 %v914, %v920
      %v986 = vmax.f32 %v922, 0.0
      %v987 = vmax.f32 %v923, 0.0
      %v988 = vmax.f32 %v924, 0.0
      %v989 = vmax.f32 %v925, 0.0
      %v990 = vmax.f32 %v926, 0.0
      %v991 = vmax.f32 %v927, 0.0
      %v992 = vmax.f32 %v928, 0.0
      %v993 = vmax.f32 %v929, 0.0
      %v994 = vmax.f32 %v930, 0.0
      %v995 = vmax.f32 %v931, 0.0
      %v996 = vmax.f32 %v932, 0.0
      %v997 = vmax.f32 %v933, 0.0
      %v998 = vmax.f32 %v934, 0.0
      %v999 = vmax.f32 %v935, 0.0
      %v1000 = vmax.f32 %v936, 0.0
      %v1001 = vmax.f32 %v937, 0.0
      %v1002 = vmax.f32 %v938, 0.0
      %v1003 = vmax.f32 %v939, 0.0
      %v1004 = vmax.f32 %v940, 0.0
      %v1005 = vmax.f32 %v941, 0.0
      %v1006 = vmax.f32 %v942, 0.0
      %v1007 = vmax.f32 %v943, 0.0
      %v1008 = vmax.f32 %v944, 0.0
      %v1009 = vmax.f32 %v945, 0.0
      %v1010 = vmax.f32 %v946, 0.0
      %v1011 = vmax.f32 %v947, 0.0
      %v1012 = vmax.f32 %v948, 0.0
      %v1013 = vmax.f32 %v949, 0.0
      %v1014 = vmax.f32 %v950, 0.0
      %v1015 = vmax.f32 %v951, 0.0
      %v1016 = vmax.f32 %v952, 0.0
      %v1017 = vmax.f32 %v953, 0.0
      %v1018 = vmax.f32 %v954, 0.0
      %v1019 = vmax.f32 %v955, 0.0
      %v1020 = vmax.f32 %v956, 0.0
      %v1021 = vmax.f32 %v957, 0.0
      %v1022 = vmax.f32 %v958, 0.0
      %v1023 = vmax.f32 %v959, 0.0
      %v1024 = vmax.f32 %v960, 0.0
      %v1025 = vmax.f32 %v961, 0.0
      %v1026 = vmax.f32 %v962, 0.0
      %v1027 = vmax.f32 %v963, 0.0
      %v1028 = vmax.f32 %v964, 0.0
      %v1029 = vmax.f32 %v965, 0.0
      %v1030 = vmax.f32 %v966, 0.0
      %v1031 = vmax.f32 %v967, 0.0
      %v1032 = vmax.f32 %v968, 0.0
      %v1033 = vmax.f32 %v969, 0.0
      %v1034 = vmax.f32 %v970, 0.0
      %v1035 = vmax.f32 %v971, 0.0
      %v1036 = vmax.f32 %v972, 0.0
      %v1037 = vmax.f32 %v973, 0.0
      %v1038 = vmax.f32 %v974, 0.0
      %v1039 = vmax.f32 %v975, 0.0
      %v1040 = vmax.f32 %v976, 0.0
      %v1041 = vmax.f32 %v977, 0.0
      %v1042 = vmax.f32 %v978, 0.0
      %v1043 = vmax.f32 %v979, 0.0
      %v1044 = vmax.f32 %v980, 0.0
      %v1045 = vmax.f32 %v981, 0.0
      %v1046 = vmax.f32 %v982, 0.0
      %v1047 = vmax.f32 %v983, 0.0
      %v1048 = vmax.f32 %v984, 0.0
      %v1049 = vmax.f32 %v985, 0.0
      %vm1050 = vcmask 31744
      %1051 = vst.msk [vmem:[%s199] sm:$0xff] %vm1050, %v986
      %1052 = vst.msk [vmem:[%s199 + $0x8] sm:$0xff] %vm1050, %v987
      %1053 = vst.msk [vmem:[%s199 + $0x10] sm:$0xff] %vm1050, %v988
      %1054 = vst.msk [vmem:[%s199 + $0x18] sm:$0xff] %vm1050, %v989
      %1055 = vst.msk [vmem:[%s199 + $0x20] sm:$0xff] %vm1050, %v990
      %1056 = vst.msk [vmem:[%s199 + $0x28] sm:$0xff] %vm1050, %v991
      %1057 = vst.msk [vmem:[%s199 + $0x30] sm:$0xff] %vm1050, %v992
      %1058 = vst.msk [vmem:[%s199 + $0x38] sm:$0xff] %vm1050, %v993
      %1059 = vst.msk [vmem:[%s199 + $0x40] sm:$0xff] %vm1050, %v994
      %1060 = vst.msk [vmem:[%s199 + $0x48] sm:$0xff] %vm1050, %v995
      %1061 = vst.msk [vmem:[%s199 + $0x50] sm:$0xff] %vm1050, %v996
      %1062 = vst.msk [vmem:[%s199 + $0x58] sm:$0xff] %vm1050, %v997
      %1063 = vst.msk [vmem:[%s199 + $0x60] sm:$0xff] %vm1050, %v998
      %1064 = vst.msk [vmem:[%s199 + $0x68] sm:$0xff] %vm1050, %v999
      %1065 = vst.msk [vmem:[%s199 + $0x70] sm:$0xff] %vm1050, %v1000
      %1066 = vst.msk [vmem:[%s199 + $0x78] sm:$0xff] %vm1050, %v1001
      %1067 = vst.msk [vmem:[%s199 + $0x80] sm:$0xff] %vm1050, %v1002
      %1068 = vst.msk [vmem:[%s199 + $0x88] sm:$0xff] %vm1050, %v1003
      %1069 = vst.msk [vmem:[%s199 + $0x90] sm:$0xff] %vm1050, %v1004
      %1070 = vst.msk [vmem:[%s199 + $0x98] sm:$0xff] %vm1050, %v1005
      %1071 = vst.msk [vmem:[%s199 + $0xa0] sm:$0xff] %vm1050, %v1006
      %1072 = vst.msk [vmem:[%s199 + $0xa8] sm:$0xff] %vm1050, %v1007
      %1073 = vst.msk [vmem:[%s199 + $0xb0] sm:$0xff] %vm1050, %v1008
      %1074 = vst.msk [vmem:[%s199 + $0xb8] sm:$0xff] %vm1050, %v1009
      %1075 = vst.msk [vmem:[%s199 + $0xc0] sm:$0xff] %vm1050, %v1010
      %1076 = vst.msk [vmem:[%s199 + $0xc8] sm:$0xff] %vm1050, %v1011
      %1077 = vst.msk [vmem:[%s199 + $0xd0] sm:$0xff] %vm1050, %v1012
      %1078 = vst.msk [vmem:[%s199 + $0xd8] sm:$0xff] %vm1050, %v1013
      %1079 = vst.msk [vmem:[%s199 + $0xe0] sm:$0xff] %vm1050, %v1014
      %1080 = vst.msk [vmem:[%s199 + $0xe8] sm:$0xff] %vm1050, %v1015
      %1081 = vst.msk [vmem:[%s199 + $0xf0] sm:$0xff] %vm1050, %v1016
      %1082 = vst.msk [vmem:[%s199 + $0xf8] sm:$0xff] %vm1050, %v1017
      %1083 = vst.msk [vmem:[%s199 + $0x100] sm:$0xff] %vm1050, %v1018
      %1084 = vst.msk [vmem:[%s199 + $0x108] sm:$0xff] %vm1050, %v1019
      %1085 = vst.msk [vmem:[%s199 + $0x110] sm:$0xff] %vm1050, %v1020
      %1086 = vst.msk [vmem:[%s199 + $0x118] sm:$0xff] %vm1050, %v1021
      %1087 = vst.msk [vmem:[%s199 + $0x120] sm:$0xff] %vm1050, %v1022
      %1088 = vst.msk [vmem:[%s199 + $0x128] sm:$0xff] %vm1050, %v1023
      %1089 = vst.msk [vmem:[%s199 + $0x130] sm:$0xff] %vm1050, %v1024
      %1090 = vst.msk [vmem:[%s199 + $0x138] sm:$0xff] %vm1050, %v1025
      %1091 = vst.msk [vmem:[%s199 + $0x140] sm:$0xff] %vm1050, %v1026
      %1092 = vst.msk [vmem:[%s199 + $0x148] sm:$0xff] %vm1050, %v1027
      %1093 = vst.msk [vmem:[%s199 + $0x150] sm:$0xff] %vm1050, %v1028
      %1094 = vst.msk [vmem:[%s199 + $0x158] sm:$0xff] %vm1050, %v1029
      %1095 = vst.msk [vmem:[%s199 + $0x160] sm:$0xff] %vm1050, %v1030
      %1096 = vst.msk [vmem:[%s199 + $0x168] sm:$0xff] %vm1050, %v1031
      %1097 = vst.msk [vmem:[%s199 + $0x170] sm:$0xff] %vm1050, %v1032
      %1098 = vst.msk [vmem:[%s199 + $0x178] sm:$0xff] %vm1050, %v1033
      %1099 = vst.msk [vmem:[%s199 + $0x180] sm:$0xff] %vm1050, %v1034
      %1100 = vst.msk [vmem:[%s199 + $0x188] sm:$0xff] %vm1050, %v1035
      %1101 = vst.msk [vmem:[%s199 + $0x190] sm:$0xff] %vm1050, %v1036
      %1102 = vst.msk [vmem:[%s199 + $0x198] sm:$0xff] %vm1050, %v1037
      %1103 = vst.msk [vmem:[%s199 + $0x1a0] sm:$0xff] %vm1050, %v1038
      %1104 = vst.msk [vmem:[%s199 + $0x1a8] sm:$0xff] %vm1050, %v1039
      %1105 = vst.msk [vmem:[%s199 + $0x1b0] sm:$0xff] %vm1050, %v1040
      %1106 = vst.msk [vmem:[%s199 + $0x1b8] sm:$0xff] %vm1050, %v1041
      %1107 = vst.msk [vmem:[%s199 + $0x1c0] sm:$0xff] %vm1050, %v1042
      %1108 = vst.msk [vmem:[%s199 + $0x1c8] sm:$0xff] %vm1050, %v1043
      %1109 = vst.msk [vmem:[%s199 + $0x1d0] sm:$0xff] %vm1050, %v1044
      %1110 = vst.msk [vmem:[%s199 + $0x1d8] sm:$0xff] %vm1050, %v1045
      %1111 = vst.msk [vmem:[%s199 + $0x1e0] sm:$0xff] %vm1050, %v1046
      %1112 = vst.msk [vmem:[%s199 + $0x1e8] sm:$0xff] %vm1050, %v1047
      %1113 = vst.msk [vmem:[%s199 + $0x1f0] sm:$0xff] %vm1050, %v1048
      %1114 = vst.msk [vmem:[%s199 + $0x1f8] sm:$0xff] %vm1050, %v1049
      %s1115 = smul.u32 64, %s15
      %p1116 = scmp.lt.s32.totalorder %s1115, 127
      %s1117 = scalar_select %p1116, %s1115, 127
      %s1118 = smul.addr %s1117, 8
      %s1119 = scalar_lea.vmem %s4, %s1118
      // Predicated region
      $region37: #{asym_bottleneck_forward.3} parent=35 // pred_check
        %p1120 = pneg %p122
      $region38: #{asym_bottleneck_forward.3} parent=35 // pred_check_branch
        %1122 = sbr.rel (%p1120) target = $region40
      $region39: #{asym_bottleneck_forward.3} parent=35 // pred_region
        %s1123 = smul.u32 64, %s15
      $region40: #{asym_bottleneck_forward.3} parent=35 // pred_fallthru
        _
    $region36: #{asym_bottleneck_forward.3} parent=5 // pred_fallthru
      _
    %p1124 = scmp.le.s32.totalorder 2, %s10
    // Predicated region
    $region41: #{asym_bottleneck_forward.3} parent=5 // pred_check
      %p1125 = pneg %p1124
    $region42: #{asym_bottleneck_forward.3} parent=5 // pred_check_branch
      %1127 = sbr.rel (%p1125) target = $region44
    $region43: #{asym_bottleneck_forward.3} parent=5 // pred_region
      %s1128 = ssub.s32 %s10, 2
      // Predicated region
      $region45: #{asym_bottleneck_forward.3} parent=43 // pred_check
        %p1129 = pneg %p128
      $region46: #{asym_bottleneck_forward.3} parent=43 // pred_check_branch
        %1131 = sbr.rel (%p1129) target = $region48
      $region47: #{asym_bottleneck_forward.3} parent=43 // pred_region
        %s1132 = smul.u32 64, %s16
        %p1133 = scmp.lt.s32.totalorder %s1132, 127
        %s1134 = scalar_select %p1133, %s1132, 127
        %s1135 = smul.addr %s1134, 8
        %s1136 = scalar_lea.vmem %s4, %s1135
      $region48: #{asym_bottleneck_forward.3} parent=43 // pred_fallthru
        _
    $region44: #{asym_bottleneck_forward.3} parent=5 // pred_fallthru
      _
  $region6: #{asym_bottleneck_forward.3} parent=0 // loop_footer
    %s14 = sadd.s32 1, %s10
  $region7: #{asym_bottleneck_forward.3} parent=0 // loop_footer_branch
    %9 = sbr.rel target = $region3
  $region8: #{asym_bottleneck_forward.3} parent=0 // loop_exit
    _

// kernel: asym_bottleneck_forward.4
$region0: #{asym_bottleneck_forward.4}
  #allocation0 [shape = 'u32[]', space=smem, size = 0x4, offset = 0x4, fixed_abs, tag = 'smem constant byte address 0x4 - core index']
  #allocation1 [shape = 'u32[144,128]{1,0:T(1,128)}', space=vmem, size = 0x12000, scoped, tag = 'internal scratch']
  %s0 = inlined_call_operand.vmem [shape: f32[2,8,8,8,4], index: 0, kind: input, shape index: {}]
  %s1 = inlined_call_operand.vmem [shape: f32[3,4], index: 1, kind: input, shape index: {}]
  %s2 = inlined_call_operand.vmem [shape: f32[1,4], index: 2, kind: input, shape index: {}]
  %s3 = inlined_call_operand.vmem [shape: f32[3,4], index: 3, kind: input, shape index: {}]
  %s4 = inlined_call_operand.vmem [shape: f32[1,4], index: 4, kind: input, shape index: {}]
  %s5 = inlined_call_operand.vmem [shape: f32[3,4], index: 5, kind: input, shape index: {}]
  %s6 = inlined_call_operand.vmem [shape: f32[1,4], index: 6, kind: input, shape index: {}]
  %s7 = inlined_call_operand.vmem [shape: f32[2,8,8,8,4], index: 7, kind: output, shape index: {}]
  %s8 = sld [smem:[#allocation0]]
  $region61: #{asym_bottleneck_forward.4} parent=0
    _
  %s10 = ssub.s32 1, %s8
  %s11 = scalar_select 0, %s10, %s8
  loop: start=0, step=1, limit=4
  $region2: #{asym_bottleneck_forward.4} parent=0 // loop_pre_header
    _
  $region3: #{asym_bottleneck_forward.4} parent=0 // loop_header
    %s13 = sphi 0, %s17
    %p14 = scmp.ge.s32.totalorder %s13, 4
    %s23 = sphi 0, %s25
    %s26 = sphi 0, %s23
    %s27 = sphi 0, %s26
    %s43 = sphi 0, %s27
    %s47 = sphi 0, %s47
    %s49 = sphi 0, %s47
    %s50 = sphi 0, %s49
    %s64 = sphi 0, %s50
    %s68 = sphi 0, %s68
    %s70 = sphi 0, %s68
    %s71 = sphi 0, %s70
    %s85 = sphi 0, %s71
    %s89 = sphi 0, %s89
    %s91 = sphi 0, %s89
    %s92 = sphi 0, %s91
    %s106 = sphi 0, %s92
    %s110 = sphi 0, %s110
    %s112 = sphi 0, %s110
    %s113 = sphi 0, %s112
    %s127 = sphi 0, %s113
    %s131 = sphi 0, %s131
    %s133 = sphi 0, %s131
    %s134 = sphi 0, %s133
    %s148 = sphi 0, %s134
    %s152 = sphi 0, %s152
    %s154 = sphi 0, %s152
    %s155 = sphi 0, %s154
    %s169 = sphi 0, %s155
    %s175 = sphi 0, %s177
    %s178 = sphi 0, %s175
    %s179 = sphi 0, %s178
    %s195 = sphi 0, %s179
  $region4: #{asym_bottleneck_forward.4} parent=0 // loop_header_branch
    %16 = sbr.rel (%p14) target = $region8
  $region5: #{asym_bottleneck_forward.4} parent=0 // loop_body
    %s18 = ssub.s32 %s13, 1
    %s19 = ssub.s32 %s13, 2
    %s20 = sadd.s32 %s13, 1
    %s21 = ssub.s32 %s13, %s20
    %p22 = scmp.eq.s32.totalorder %s21, 0
    %s24 = sadd.s32 %s23, 1
    %s25 = scalar_select %p22, %s23, %s24
    %p28 = pneg %p22
    %p29 = scmp.eq.s32.totalorder %s13, 1
    %p30 = por %p28, %p29
    %p31 = scmp.ne.s32.totalorder %s23, %s26
    %p32 = scmp.eq.s32.totalorder %s13, 0
    %p33 = por %p31, %p32
    %p34 = scmp.ne.s32.totalorder %s23, %s26
    %p35 = scmp.eq.s32.totalorder %s18, 1
    %p36 = por %p34, %p35
    %p37 = scmp.ne.s32.totalorder %s26, %s27
    %p38 = scmp.eq.s32.totalorder %s18, 0
    %p39 = por %p37, %p38
    %p40 = scmp.ne.s32.totalorder %s26, %s27
    %p41 = scmp.eq.s32.totalorder %s19, 1
    %p42 = por %p40, %p41
    %p44 = scmp.ne.s32.totalorder %s27, %s43
    %p45 = scmp.eq.s32.totalorder %s19, 0
    %p46 = por %p44, %p45
    %s48 = sadd.s32 %s47, 1
    %p51 = scmp.eq.s32.totalorder %s13, 1
    %p52 = scmp.ne.s32.totalorder %s47, %s49
    %p53 = scmp.eq.s32.totalorder %s13, 0
    %p54 = por %p52, %p53
    %p55 = scmp.ne.s32.totalorder %s47, %s49
    %p56 = scmp.eq.s32.totalorder %s18, 1
    %p57 = por %p55, %p56
    %p58 = scmp.ne.s32.totalorder %s49, %s50
    %p59 = scmp.eq.s32.totalorder %s18, 0
    %p60 = por %p58, %p59
    %p61 = scmp.ne.s32.totalorder %s49, %s50
    %p62 = scmp.eq.s32.totalorder %s19, 1
    %p63 = por %p61, %p62
    %p65 = scmp.ne.s32.totalorder %s50, %s64
    %p66 = scmp.eq.s32.totalorder %s19, 0
    %p67 = por %p65, %p66
    %s69 = sadd.s32 %s68, 1
    %p72 = scmp.eq.s32.totalorder %s13, 1
    %p73 = scmp.ne.s32.totalorder %s68, %s70
    %p74 = scmp.eq.s32.totalorder %s13, 0
    %p75 = por %p73, %p74
    %p76 = scmp.ne.s32.totalorder %s68, %s70
    %p77 = scmp.eq.s32.totalorder %s18, 1
    %p78 = por %p76, %p77
    %p79 = scmp.ne.s32.totalorder %s70, %s71
    %p80 = scmp.eq.s32.totalorder %s18, 0
    %p81 = por %p79, %p80
    %p82 = scmp.ne.s32.totalorder %s70, %s71
    %p83 = scmp.eq.s32.totalorder %s19, 1
    %p84 = por %p82, %p83
    %p86 = scmp.ne.s32.totalorder %s71, %s85
    %p87 = scmp.eq.s32.totalorder %s19, 0
    %p88 = por %p86, %p87
    %s90 = sadd.s32 %s89, 1
    %p93 = scmp.eq.s32.totalorder %s13, 1
    %p94 = scmp.ne.s32.totalorder %s89, %s91
    %p95 = scmp.eq.s32.totalorder %s13, 0
    %p96 = por %p94, %p95
    %p97 = scmp.ne.s32.totalorder %s89, %s91
    %p98 = scmp.eq.s32.totalorder %s18, 1
    %p99 = por %p97, %p98
    %p100 = scmp.ne.s32.totalorder %s91, %s92
    %p101 = scmp.eq.s32.totalorder %s18, 0
    %p102 = por %p100, %p101
    %p103 = scmp.ne.s32.totalorder %s91, %s92
    %p104 = scmp.eq.s32.totalorder %s19, 1
    %p105 = por %p103, %p104
    %p107 = scmp.ne.s32.totalorder %s92, %s106
    %p108 = scmp.eq.s32.totalorder %s19, 0
    %p109 = por %p107, %p108
    %s111 = sadd.s32 %s110, 1
    %p114 = scmp.eq.s32.totalorder %s13, 1
    %p115 = scmp.ne.s32.totalorder %s110, %s112
    %p116 = scmp.eq.s32.totalorder %s13, 0
    %p117 = por %p115, %p116
    %p118 = scmp.ne.s32.totalorder %s110, %s112
    %p119 = scmp.eq.s32.totalorder %s18, 1
    %p120 = por %p118, %p119
    %p121 = scmp.ne.s32.totalorder %s112, %s113
    %p122 = scmp.eq.s32.totalorder %s18, 0
    %p123 = por %p121, %p122
    %p124 = scmp.ne.s32.totalorder %s112, %s113
    %p125 = scmp.eq.s32.totalorder %s19, 1
    %p126 = por %p124, %p125
    %p128 = scmp.ne.s32.totalorder %s113, %s127
    %p129 = scmp.eq.s32.totalorder %s19, 0
    %p130 = por %p128, %p129
    %s132 = sadd.s32 %s131, 1
    %p135 = scmp.eq.s32.totalorder %s13, 1
    %p136 = scmp.ne.s32.totalorder %s131, %s133
    %p137 = scmp.eq.s32.totalorder %s13, 0
    %p138 = por %p136, %p137
    %p139 = scmp.ne.s32.totalorder %s131, %s133
    %p140 = scmp.eq.s32.totalorder %s18, 1
    %p141 = por %p139, %p140
    %p142 = scmp.ne.s32.totalorder %s133, %s134
    %p143 = scmp.eq.s32.totalorder %s18, 0
    %p144 = por %p142, %p143
    %p145 = scmp.ne.s32.totalorder %s133, %s134
    %p146 = scmp.eq.s32.totalorder %s19, 1
    %p147 = por %p145, %p146
    %p149 = scmp.ne.s32.totalorder %s134, %s148
    %p150 = scmp.eq.s32.totalorder %s19, 0
    %p151 = por %p149, %p150
    %s153 = sadd.s32 %s152, 1
    %p156 = scmp.eq.s32.totalorder %s13, 1
    %p157 = scmp.ne.s32.totalorder %s152, %s154
    %p158 = scmp.eq.s32.totalorder %s13, 0
    %p159 = por %p157, %p158
    %p160 = scmp.ne.s32.totalorder %s152, %s154
    %p161 = scmp.eq.s32.totalorder %s18, 1
    %p162 = por %p160, %p161
    %p163 = scmp.ne.s32.totalorder %s154, %s155
    %p164 = scmp.eq.s32.totalorder %s18, 0
    %p165 = por %p163, %p164
    %p166 = scmp.ne.s32.totalorder %s154, %s155
    %p167 = scmp.eq.s32.totalorder %s19, 1
    %p168 = por %p166, %p167
    %p170 = scmp.ne.s32.totalorder %s155, %s169
    %p171 = scmp.eq.s32.totalorder %s19, 0
    %p172 = por %p170, %p171
    %s173 = ssub.s32 %s13, %s20
    %p174 = scmp.eq.s32.totalorder %s173, 0
    %s176 = sadd.s32 %s175, 1
    %s177 = scalar_select %p174, %s175, %s176
    %p180 = pneg %p174
    %p181 = scmp.eq.s32.totalorder %s13, 1
    %p182 = por %p180, %p181
    %p183 = scmp.ne.s32.totalorder %s175, %s178
    %p184 = scmp.eq.s32.totalorder %s13, 0
    %p185 = por %p183, %p184
    %p186 = scmp.ne.s32.totalorder %s175, %s178
    %p187 = scmp.eq.s32.totalorder %s18, 1
    %p188 = por %p186, %p187
    %p189 = scmp.ne.s32.totalorder %s178, %s179
    %p190 = scmp.eq.s32.totalorder %s18, 0
    %p191 = por %p189, %p190
    %p192 = scmp.ne.s32.totalorder %s178, %s179
    %p193 = scmp.eq.s32.totalorder %s19, 1
    %p194 = por %p192, %p193
    %p196 = scmp.ne.s32.totalorder %s179, %s195
    %p197 = scmp.eq.s32.totalorder %s19, 0
    %p198 = por %p196, %p197
    %p199 = scmp.le.s32.totalorder 1, %s13
    %p200 = scmp.lt.s32.totalorder %s13, 3
    %p201 = pnand %p199, %p200
    %p202 = pneg %p201
    // Predicated region
    $region9: #{asym_bottleneck_forward.4} parent=5 // pred_check
      _
    $region10: #{asym_bottleneck_forward.4} parent=5 // pred_check_branch
      %204 = sbr.rel (%p201) target = $region12
    $region11: #{asym_bottleneck_forward.4} parent=5 // pred_region
      %s205 = ssub.s32 %s13, 1
      // Predicated region
      $region13: #{asym_bottleneck_forward.4} parent=11 // pred_check
        %p206 = pneg %p60
      $region14: #{asym_bottleneck_forward.4} parent=11 // pred_check_branch
        %208 = sbr.rel (%p206) target = $region16
      $region15: #{asym_bottleneck_forward.4} parent=11 // pred_region
        _
      $region16: #{asym_bottleneck_forward.4} parent=11 // pred_fallthru
        _
      // Predicated region
      $region17: #{asym_bottleneck_forward.4} parent=11 // pred_check
        %p209 = pneg %p81
      $region18: #{asym_bottleneck_forward.4} parent=11 // pred_check_branch
        %211 = sbr.rel (%p209) target = $region20
      $region19: #{asym_bottleneck_forward.4} parent=11 // pred_region
        _
      $region20: #{asym_bottleneck_forward.4} parent=11 // pred_fallthru
        _
      // Predicated region
      $region21: #{asym_bottleneck_forward.4} parent=11 // pred_check
        %p212 = pneg %p102
      $region22: #{asym_bottleneck_forward.4} parent=11 // pred_check_branch
        %214 = sbr.rel (%p212) target = $region24
      $region23: #{asym_bottleneck_forward.4} parent=11 // pred_region
        _
      $region24: #{asym_bottleneck_forward.4} parent=11 // pred_fallthru
        _
      // Predicated region
      $region25: #{asym_bottleneck_forward.4} parent=11 // pred_check
        %p215 = pneg %p123
      $region26: #{asym_bottleneck_forward.4} parent=11 // pred_check_branch
        %217 = sbr.rel (%p215) target = $region28
      $region27: #{asym_bottleneck_forward.4} parent=11 // pred_region
        _
      $region28: #{asym_bottleneck_forward.4} parent=11 // pred_fallthru
        _
      // Predicated region
      $region29: #{asym_bottleneck_forward.4} parent=11 // pred_check
        %p218 = pneg %p144
      $region30: #{asym_bottleneck_forward.4} parent=11 // pred_check_branch
        %220 = sbr.rel (%p218) target = $region32
      $region31: #{asym_bottleneck_forward.4} parent=11 // pred_region
        _
      $region32: #{asym_bottleneck_forward.4} parent=11 // pred_fallthru
        _
      // Predicated region
      $region33: #{asym_bottleneck_forward.4} parent=11 // pred_check
        %p221 = pneg %p165
      $region34: #{asym_bottleneck_forward.4} parent=11 // pred_check_branch
        %223 = sbr.rel (%p221) target = $region36
      $region35: #{asym_bottleneck_forward.4} parent=11 // pred_region
        _
      $region36: #{asym_bottleneck_forward.4} parent=11 // pred_fallthru
        _
    $region12: #{asym_bottleneck_forward.4} parent=5 // pred_fallthru
      _
    %p224 = scmp.lt.s32.totalorder %s13, 2
    // Predicated region
    $region37: #{asym_bottleneck_forward.4} parent=5 // pred_check
      %p225 = pneg %p224
    $region38: #{asym_bottleneck_forward.4} parent=5 // pred_check_branch
      %227 = sbr.rel (%p225) target = $region40
    $region39: #{asym_bottleneck_forward.4} parent=5 // pred_region
      // Predicated region
      $region41: #{asym_bottleneck_forward.4} parent=39 // pred_check
        %p228 = pneg %p33
      $region42: #{asym_bottleneck_forward.4} parent=39 // pred_check_branch
        %230 = sbr.rel (%p228) target = $region44
      $region43: #{asym_bottleneck_forward.4} parent=39 // pred_region
        %p231 = scmp.lt.s32.totalorder %s13, 1
        %s232 = scalar_select %p231, %s13, 1
        %s233 = smul.addr %s232, 64
        %s234 = smul.addr %s233, 8
        %s235 = scalar_lea.vmem %s0, %s234
      $region44: #{asym_bottleneck_forward.4} parent=39 // pred_fallthru
        _
    $region40: #{asym_bottleneck_forward.4} parent=5 // pred_fallthru
      _
    %p236 = scmp.le.s32.totalorder 1, %s13
    %p237 = scmp.lt.s32.totalorder %s13, 3
    %p238 = pnand %p236, %p237
    %p239 = pneg %p238
    // Predicated region
    $region45: #{asym_bottleneck_forward.4} parent=5 // pred_check
      _
    $region46: #{asym_bottleneck_forward.4} parent=5 // pred_check_branch
      %241 = sbr.rel (%p238) target = $region48
    $region47: #{asym_bottleneck_forward.4} parent=5 // pred_region
      %s242 = ssub.s32 %s13, 1
      %p243 = scmp.lt.s32.totalorder %s18, 1
      %s244 = scalar_select %p243, %s18, 1
      %s245 = smul.addr %s244, 64
      %s246 = smul.addr %s245, 8
      %s247 = scalar_lea.vmem %s0, %s246
      %p248 = pneg %p39
      %p249 = pneg %p36
      %p250 = pneg %p60
      %p251 = pneg %p57
      %p252 = pneg %p81
      %p253 = pneg %p78
      %p254 = pneg %p102
      %p255 = pneg %p99
      %p256 = pneg %p123
      %p257 = pneg %p120
      %p258 = pneg %p144
      %p259 = pneg %p141
      %p260 = pneg %p165
      %p261 = pneg %p162
      %p262 = pneg %p191
      %p263 = pneg %p188
      %p264 = scmp.lt.s32.totalorder %s18, 1
      %s265 = scalar_select %p264, %s18, 1
      %s266 = smul.addr %s265, 64
      %s267 = smul.addr %s266, 8
      %s268 = scalar_lea.vmem %s7, %s267
      %p269 = scmp.lt.s32.totalorder %s18, 1
      %s270 = scalar_select %p269, %s18, 1
      %s271 = smul.addr %s270, 64
      %s272 = smul.addr %s271, 8
      %s273 = scalar_lea.vmem %s0, %s272
      %p274 = scmp.lt.s32.totalorder %s18, 1
      %s275 = scalar_select %p274, %s18, 1
      %s276 = smul.addr %s275, 64
      %s277 = smul.addr %s276, 8
      %s278 = scalar_lea.vmem %s7, %s277
      %v279 = vld [vmem:[%s273] sm:$0xff]
      %v280 = vld [vmem:[%s273 + $0x8] sm:$0xff]
      %v281 = vld [vmem:[%s273 + $0x10] sm:$0xff]
      %v282 = vld [vmem:[%s273 + $0x18] sm:$0xff]
      %v283 = vld [vmem:[%s273 + $0x20] sm:$0xff]
      %v284 = vld [vmem:[%s273 + $0x28] sm:$0xff]
      %v285 = vld [vmem:[%s273 + $0x30] sm:$0xff]
      %v286 = vld [vmem:[%s273 + $0x38] sm:$0xff]
      %v287 = vld [vmem:[%s273 + $0x40] sm:$0xff]
      %v288 = vld [vmem:[%s273 + $0x48] sm:$0xff]
      %v289 = vld [vmem:[%s273 + $0x50] sm:$0xff]
      %v290 = vld [vmem:[%s273 + $0x58] sm:$0xff]
      %v291 = vld [vmem:[%s273 + $0x60] sm:$0xff]
      %v292 = vld [vmem:[%s273 + $0x68] sm:$0xff]
      %v293 = vld [vmem:[%s273 + $0x70] sm:$0xff]
      %v294 = vld [vmem:[%s273 + $0x78] sm:$0xff]
      %v295 = vld [vmem:[%s273 + $0x80] sm:$0xff]
      %v296 = vld [vmem:[%s273 + $0x88] sm:$0xff]
      %v297 = vld [vmem:[%s273 + $0x90] sm:$0xff]
      %v298 = vld [vmem:[%s273 + $0x98] sm:$0xff]
      %v299 = vld [vmem:[%s273 + $0xa0] sm:$0xff]
      %v300 = vld [vmem:[%s273 + $0xa8] sm:$0xff]
      %v301 = vld [vmem:[%s273 + $0xb0] sm:$0xff]
      %v302 = vld [vmem:[%s273 + $0xb8] sm:$0xff]
      %v303 = vld [vmem:[%s273 + $0xc0] sm:$0xff]
      %v304 = vld [vmem:[%s273 + $0xc8] sm:$0xff]
      %v305 = vld [vmem:[%s273 + $0xd0] sm:$0xff]
      %v306 = vld [vmem:[%s273 + $0xd8] sm:$0xff]
      %v307 = vld [vmem:[%s273 + $0xe0] sm:$0xff]
      %v308 = vld [vmem:[%s273 + $0xe8] sm:$0xff]
      %v309 = vld [vmem:[%s273 + $0xf0] sm:$0xff]
      %v310 = vld [vmem:[%s273 + $0xf8] sm:$0xff]
      %v311 = vld [vmem:[%s273 + $0x100] sm:$0xff]
      %v312 = vld [vmem:[%s273 + $0x108] sm:$0xff]
      %v313 = vld [vmem:[%s273 + $0x110] sm:$0xff]
      %v314 = vld [vmem:[%s273 + $0x118] sm:$0xff]
      %v315 = vld [vmem:[%s273 + $0x120] sm:$0xff]
      %v316 = vld [vmem:[%s273 + $0x128] sm:$0xff]
      %v317 = vld [vmem:[%s273 + $0x130] sm:$0xff]
      %v318 = vld [vmem:[%s273 + $0x138] sm:$0xff]
      %v319 = vld [vmem:[%s273 + $0x140] sm:$0xff]
      %v320 = vld [vmem:[%s273 + $0x148] sm:$0xff]
      %v321 = vld [vmem:[%s273 + $0x150] sm:$0xff]
      %v322 = vld [vmem:[%s273 + $0x158] sm:$0xff]
      %v323 = vld [vmem:[%s273 + $0x160] sm:$0xff]
      %v324 = vld [vmem:[%s273 + $0x168] sm:$0xff]
      %v325 = vld [vmem:[%s273 + $0x170] sm:$0xff]
      %v326 = vld [vmem:[%s273 + $0x178] sm:$0xff]
      %v327 = vld [vmem:[%s273 + $0x180] sm:$0xff]
      %v328 = vld [vmem:[%s273 + $0x188] sm:$0xff]
      %v329 = vld [vmem:[%s273 + $0x190] sm:$0xff]
      %v330 = vld [vmem:[%s273 + $0x198] sm:$0xff]
      %v331 = vld [vmem:[%s273 + $0x1a0] sm:$0xff]
      %v332 = vld [vmem:[%s273 + $0x1a8] sm:$0xff]
      %v333 = vld [vmem:[%s273 + $0x1b0] sm:$0xff]
      %v334 = vld [vmem:[%s273 + $0x1b8] sm:$0xff]
      %v335 = vld [vmem:[%s273 + $0x1c0] sm:$0xff]
      %v336 = vld [vmem:[%s273 + $0x1c8] sm:$0xff]
      %v337 = vld [vmem:[%s273 + $0x1d0] sm:$0xff]
      %v338 = vld [vmem:[%s273 + $0x1d8] sm:$0xff]
      %v339 = vld [vmem:[%s273 + $0x1e0] sm:$0xff]
      %v340 = vld [vmem:[%s273 + $0x1e8] sm:$0xff]
      %v341 = vld [vmem:[%s273 + $0x1f0] sm:$0xff]
      %v342 = vld [vmem:[%s273 + $0x1f8] sm:$0xff]
      %v343 = vld [vmem:[%s1] sm:$0x7]
      %v344 = vlaneseq
      %v345 = vshrl.u32 %v344, 7
      %v346 = vsub.s32 0, %v345
      %v347 = vrot.slane %v343, %v346
      %v348 = vmul.f32 %v347, 0.0
      %v349 = vmul.f32 %v279, %v347
      %v350 = vmul.f32 %v280, %v347
      %v351 = vmul.f32 %v281, %v347
      %v352 = vmul.f32 %v282, %v347
      %v353 = vmul.f32 %v283, %v347
      %v354 = vmul.f32 %v284, %v347
      %v355 = vmul.f32 %v285, %v347
      %v356 = vmul.f32 %v286, %v347
      %v357 = vmul.f32 %v287, %v347
      %v358 = vmul.f32 %v288, %v347
      %v359 = vmul.f32 %v289, %v347
      %v360 = vmul.f32 %v290, %v347
      %v361 = vmul.f32 %v291, %v347
      %v362 = vmul.f32 %v292, %v347
      %v363 = vmul.f32 %v293, %v347
      %v364 = vmul.f32 %v294, %v347
      %v365 = vmul.f32 %v295, %v347
      %v366 = vmul.f32 %v296, %v347
      %v367 = vmul.f32 %v297, %v347
      %v368 = vmul.f32 %v298, %v347
      %v369 = vmul.f32 %v299, %v347
      %v370 = vmul.f32 %v300, %v347
      %v371 = vmul.f32 %v301, %v347
      %v372 = vmul.f32 %v302, %v347
      %v373 = vmul.f32 %v303, %v347
      %v374 = vmul.f32 %v304, %v347
      %v375 = vmul.f32 %v305, %v347
      %v376 = vmul.f32 %v306, %v347
      %v377 = vmul.f32 %v307, %v347
      %v378 = vmul.f32 %v308, %v347
      %v379 = vmul.f32 %v309, %v347
      %v380 = vmul.f32 %v310, %v347
      %v381 = vmul.f32 %v311, %v347
      %v382 = vmul.f32 %v312, %v347
      %v383 = vmul.f32 %v313, %v347
      %v384 = vmul.f32 %v314, %v347
      %v385 = vmul.f32 %v315, %v347
      %v386 = vmul.f32 %v316, %v347
      %v387 = vmul.f32 %v317, %v347
      %v388 = vmul.f32 %v318, %v347
      %v389 = vmul.f32 %v319, %v347
      %v390 = vmul.f32 %v320, %v347
      %v391 = vmul.f32 %v321, %v347
      %v392 = vmul.f32 %v322, %v347
      %v393 = vmul.f32 %v323, %v347
      %v394 = vmul.f32 %v324, %v347
      %v395 = vmul.f32 %v325, %v347
      %v396 = vmul.f32 %v326, %v347
      %v397 = vmul.f32 %v327, %v347
      %v398 = vmul.f32 %v328, %v347
      %v399 = vmul.f32 %v329, %v347
      %v400 = vmul.f32 %v330, %v347
      %v401 = vmul.f32 %v331, %v347
      %v402 = vmul.f32 %v332, %v347
      %v403 = vmul.f32 %v333, %v347
      %v404 = vmul.f32 %v334, %v347
      %v405 = vlaneseq
      %v406 = vshrl.u32 %v405, 7
      %v407 = vsub.s32 1, %v406
      %v408 = vrot.slane %v343, %v407
      %v409 = vmul.f32 %v279, %v408
      %v410 = vmul.f32 %v280, %v408
      %v411 = vmul.f32 %v281, %v408
      %v412 = vmul.f32 %v282, %v408
      %v413 = vmul.f32 %v283, %v408
      %v414 = vmul.f32 %v284, %v408
      %v415 = vmul.f32 %v285, %v408
      %v416 = vmul.f32 %v286, %v408
      %v417 = vmul.f32 %v287, %v408
      %v418 = vmul.f32 %v288, %v408
      %v419 = vmul.f32 %v289, %v408
      %v420 = vmul.f32 %v290, %v408
      %v421 = vmul.f32 %v291, %v408
      %v422 = vmul.f32 %v292, %v408
      %v423 = vmul.f32 %v293, %v408
      %v424 = vmul.f32 %v294, %v408
      %v425 = vmul.f32 %v295, %v408
      %v426 = vmul.f32 %v296, %v408
      %v427 = vmul.f32 %v297, %v408
      %v428 = vmul.f32 %v298, %v408
      %v429 = vmul.f32 %v299, %v408
      %v430 = vmul.f32 %v300, %v408
      %v431 = vmul.f32 %v301, %v408
      %v432 = vmul.f32 %v302, %v408
      %v433 = vmul.f32 %v303, %v408
      %v434 = vmul.f32 %v304, %v408
      %v435 = vmul.f32 %v305, %v408
      %v436 = vmul.f32 %v306, %v408
      %v437 = vmul.f32 %v307, %v408
      %v438 = vmul.f32 %v308, %v408
      %v439 = vmul.f32 %v309, %v408
      %v440 = vmul.f32 %v310, %v408
      %v441 = vmul.f32 %v311, %v408
      %v442 = vmul.f32 %v312, %v408
      %v443 = vmul.f32 %v313, %v408
      %v444 = vmul.f32 %v314, %v408
      %v445 = vmul.f32 %v315, %v408
      %v446 = vmul.f32 %v316, %v408
      %v447 = vmul.f32 %v317, %v408
      %v448 = vmul.f32 %v318, %v408
      %v449 = vmul.f32 %v319, %v408
      %v450 = vmul.f32 %v320, %v408
      %v451 = vmul.f32 %v321, %v408
      %v452 = vmul.f32 %v322, %v408
      %v453 = vmul.f32 %v323, %v408
      %v454 = vmul.f32 %v324, %v408
      %v455 = vmul.f32 %v325, %v408
      %v456 = vmul.f32 %v326, %v408
      %v457 = vmul.f32 %v327, %v408
      %v458 = vmul.f32 %v328, %v408
      %v459 = vmul.f32 %v329, %v408
      %v460 = vmul.f32 %v330, %v408
      %v461 = vmul.f32 %v331, %v408
      %v462 = vmul.f32 %v332, %v408
      %v463 = vmul.f32 %v333, %v408
      %v464 = vmul.f32 %v334, %v408
      %v465 = vmul.f32 %v335, %v408
      %v466 = vmul.f32 %v336, %v408
      %v467 = vmul.f32 %v337, %v408
      %v468 = vmul.f32 %v338, %v408
      %v469 = vmul.f32 %v339, %v408
      %v470 = vmul.f32 %v340, %v408
      %v471 = vmul.f32 %v341, %v408
      %v472 = vmul.f32 %v342, %v408
      %v473 = vadd.f32 %v348, %v409
      %v474 = vadd.f32 %v348, %v410
      %v475 = vadd.f32 %v348, %v411
      %v476 = vadd.f32 %v348, %v412
      %v477 = vadd.f32 %v348, %v413
      %v478 = vadd.f32 %v348, %v414
      %v479 = vadd.f32 %v348, %v415
      %v480 = vadd.f32 %v348, %v416
      %v481 = vadd.f32 %v349, %v417
      %v482 = vadd.f32 %v350, %v418
      %v483 = vadd.f32 %v351, %v419
      %v484 = vadd.f32 %v352, %v420
      %v485 = vadd.f32 %v353, %v421
      %v486 = vadd.f32 %v354, %v422
      %v487 = vadd.f32 %v355, %v423
      %v488 = vadd.f32 %v356, %v424
      %v489 = vadd.f32 %v357, %v425
      %v490 = vadd.f32 %v358, %v426
      %v491 = vadd.f32 %v359, %v427
      %v492 = vadd.f32 %v360, %v428
      %v493 = vadd.f32 %v361, %v429
      %v494 = vadd.f32 %v362, %v430
      %v495 = vadd.f32 %v363, %v431
      %v496 = vadd.f32 %v364, %v432
      %v497 = vadd.f32 %v365, %v433
      %v498 = vadd.f32 %v366, %v434
      %v499 = vadd.f32 %v367, %v435
      %v500 = vadd.f32 %v368, %v436
      %v501 = vadd.f32 %v369, %v437
      %v502 = vadd.f32 %v370, %v438
      %v503 = vadd.f32 %v371, %v439
      %v504 = vadd.f32 %v372, %v440
      %v505 = vadd.f32 %v373, %v441
      %v506 = vadd.f32 %v374, %v442
      %v507 = vadd.f32 %v375, %v443
      %v508 = vadd.f32 %v376, %v444
      %v509 = vadd.f32 %v377, %v445
      %v510 = vadd.f32 %v378, %v446
      %v511 = vadd.f32 %v379, %v447
      %v512 = vadd.f32 %v380, %v448
      %v513 = vadd.f32 %v381, %v449
      %v514 = vadd.f32 %v382, %v450
      %v515 = vadd.f32 %v383, %v451
      %v516 = vadd.f32 %v384, %v452
      %v517 = vadd.f32 %v385, %v453
      %v518 = vadd.f32 %v386, %v454
      %v519 = vadd.f32 %v387, %v455
      %v520 = vadd.f32 %v388, %v456
      %v521 = vadd.f32 %v389, %v457
      %v522 = vadd.f32 %v390, %v458
      %v523 = vadd.f32 %v391, %v459
      %v524 = vadd.f32 %v392, %v460
      %v525 = vadd.f32 %v393, %v461
      %v526 = vadd.f32 %v394, %v462
      %v527 = vadd.f32 %v395, %v463
      %v528 = vadd.f32 %v396, %v464
      %v529 = vadd.f32 %v397, %v465
      %v530 = vadd.f32 %v398, %v466
      %v531 = vadd.f32 %v399, %v467
      %v532 = vadd.f32 %v400, %v468
      %v533 = vadd.f32 %v401, %v469
      %v534 = vadd.f32 %v402, %v470
      %v535 = vadd.f32 %v403, %v471
      %v536 = vadd.f32 %v404, %v472
      %v537 = vlaneseq
      %v538 = vshrl.u32 %v537, 7
      %v539 = vsub.s32 2, %v538
      %v540 = vrot.slane %v343, %v539
      %v541 = vmul.f32 %v287, %v540
      %v542 = vmul.f32 %v288, %v540
      %v543 = vmul.f32 %v289, %v540
      %v544 = vmul.f32 %v290, %v540
      %v545 = vmul.f32 %v291, %v540
      %v546 = vmul.f32 %v292, %v540
      %v547 = vmul.f32 %v293, %v540
      %v548 = vmul.f32 %v294, %v540
      %v549 = vmul.f32 %v295, %v540
      %v550 = vmul.f32 %v296, %v540
      %v551 = vmul.f32 %v297, %v540
      %v552 = vmul.f32 %v298, %v540
      %v553 = vmul.f32 %v299, %v540
      %v554 = vmul.f32 %v300, %v540
      %v555 = vmul.f32 %v301, %v540
      %v556 = vmul.f32 %v302, %v540
      %v557 = vmul.f32 %v303, %v540
      %v558 = vmul.f32 %v304, %v540
      %v559 = vmul.f32 %v305, %v540
      %v560 = vmul.f32 %v306, %v540
      %v561 = vmul.f32 %v307, %v540
      %v562 = vmul.f32 %v308, %v540
      %v563 = vmul.f32 %v309, %v540
      %v564 = vmul.f32 %v310, %v540
      %v565 = vmul.f32 %v311, %v540
      %v566 = vmul.f32 %v312, %v540
      %v567 = vmul.f32 %v313, %v540
      %v568 = vmul.f32 %v314, %v540
      %v569 = vmul.f32 %v315, %v540
      %v570 = vmul.f32 %v316, %v540
      %v571 = vmul.f32 %v317, %v540
      %v572 = vmul.f32 %v318, %v540
      %v573 = vmul.f32 %v319, %v540
      %v574 = vmul.f32 %v320, %v540
      %v575 = vmul.f32 %v321, %v540
      %v576 = vmul.f32 %v322, %v540
      %v577 = vmul.f32 %v323, %v540
      %v578 = vmul.f32 %v324, %v540
      %v579 = vmul.f32 %v325, %v540
      %v580 = vmul.f32 %v326, %v540
      %v581 = vmul.f32 %v327, %v540
      %v582 = vmul.f32 %v328, %v540
      %v583 = vmul.f32 %v329, %v540
      %v584 = vmul.f32 %v330, %v540
      %v585 = vmul.f32 %v331, %v540
      %v586 = vmul.f32 %v332, %v540
      %v587 = vmul.f32 %v333, %v540
      %v588 = vmul.f32 %v334, %v540
      %v589 = vmul.f32 %v335, %v540
      %v590 = vmul.f32 %v336, %v540
      %v591 = vmul.f32 %v337, %v540
      %v592 = vmul.f32 %v338, %v540
      %v593 = vmul.f32 %v339, %v540
      %v594 = vmul.f32 %v340, %v540
      %v595 = vmul.f32 %v341, %v540
      %v596 = vmul.f32 %v342, %v540
      %v597 = vmul.f32 %v540, 0.0
      %v598 = vadd.f32 %v473, %v541
      %v599 = vadd.f32 %v474, %v542
      %v600 = vadd.f32 %v475, %v543
      %v601 = vadd.f32 %v476, %v544
      %v602 = vadd.f32 %v477, %v545
      %v603 = vadd.f32 %v478, %v546
      %v604 = vadd.f32 %v479, %v547
      %v605 = vadd.f32 %v480, %v548
      %v606 = vadd.f32 %v481, %v549
      %v607 = vadd.f32 %v482, %v550
      %v608 = vadd.f32 %v483, %v551
      %v609 = vadd.f32 %v484, %v552
      %v610 = vadd.f32 %v485, %v553
      %v611 = vadd.f32 %v486, %v554
      %v612 = vadd.f32 %v487, %v555
      %v613 = vadd.f32 %v488, %v556
      %v614 = vadd.f32 %v489, %v557
      %v615 = vadd.f32 %v490, %v558
      %v616 = vadd.f32 %v491, %v559
      %v617 = vadd.f32 %v492, %v560
      %v618 = vadd.f32 %v493, %v561
      %v619 = vadd.f32 %v494, %v562
      %v620 = vadd.f32 %v495, %v563
      %v621 = vadd.f32 %v496, %v564
      %v622 = vadd.f32 %v497, %v565
      %v623 = vadd.f32 %v498, %v566
      %v624 = vadd.f32 %v499, %v567
      %v625 = vadd.f32 %v500, %v568
      %v626 = vadd.f32 %v501, %v569
      %v627 = vadd.f32 %v502, %v570
      %v628 = vadd.f32 %v503, %v571
      %v629 = vadd.f32 %v504, %v572
      %v630 = vadd.f32 %v505, %v573
      %v631 = vadd.f32 %v506, %v574
      %v632 = vadd.f32 %v507, %v575
      %v633 = vadd.f32 %v508, %v576
      %v634 = vadd.f32 %v509, %v577
      %v635 = vadd.f32 %v510, %v578
      %v636 = vadd.f32 %v511, %v579
      %v637 = vadd.f32 %v512, %v580
      %v638 = vadd.f32 %v513, %v581
      %v639 = vadd.f32 %v514, %v582
      %v640 = vadd.f32 %v515, %v583
      %v641 = vadd.f32 %v516, %v584
      %v642 = vadd.f32 %v517, %v585
      %v643 = vadd.f32 %v518, %v586
      %v644 = vadd.f32 %v519, %v587
      %v645 = vadd.f32 %v520, %v588
      %v646 = vadd.f32 %v521, %v589
      %v647 = vadd.f32 %v522, %v590
      %v648 = vadd.f32 %v523, %v591
      %v649 = vadd.f32 %v524, %v592
      %v650 = vadd.f32 %v525, %v593
      %v651 = vadd.f32 %v526, %v594
      %v652 = vadd.f32 %v527, %v595
      %v653 = vadd.f32 %v528, %v596
      %v654 = vadd.f32 %v529, %v597
      %v655 = vadd.f32 %v530, %v597
      %v656 = vadd.f32 %v531, %v597
      %v657 = vadd.f32 %v532, %v597
      %v658 = vadd.f32 %v533, %v597
      %v659 = vadd.f32 %v534, %v597
      %v660 = vadd.f32 %v535, %v597
      %v661 = vadd.f32 %v536, %v597
      %v662 = vld [vmem:[%s2] sm:$0x1]
      %v664 = vlaneseq
      %v665 = vshrl.u32 %v664, 7
      %v666 = vsub.s32 0, %v665
      %v667 = vrot.slane %v662, %v666
      %v669 = vadd.f32 %v598, %v667
      %v670 = vadd.f32 %v599, %v667
      %v671 = vadd.f32 %v600, %v667
      %v672 = vadd.f32 %v601, %v667
      %v673 = vadd.f32 %v602, %v667
      %v674 = vadd.f32 %v603, %v667
      %v675 = vadd.f32 %v604, %v667
      %v676 = vadd.f32 %v605, %v667
      %v677 = vadd.f32 %v606, %v667
      %v678 = vadd.f32 %v607, %v667
      %v679 = vadd.f32 %v608, %v667
      %v680 = vadd.f32 %v609, %v667
      %v681 = vadd.f32 %v610, %v667
      %v682 = vadd.f32 %v611, %v667
      %v683 = vadd.f32 %v612, %v667
      %v684 = vadd.f32 %v613, %v667
      %v685 = vadd.f32 %v614, %v667
      %v686 = vadd.f32 %v615, %v667
      %v687 = vadd.f32 %v616, %v667
      %v688 = vadd.f32 %v617, %v667
      %v689 = vadd.f32 %v618, %v667
      %v690 = vadd.f32 %v619, %v667
      %v691 = vadd.f32 %v620, %v667
      %v692 = vadd.f32 %v621, %v667
      %v693 = vadd.f32 %v622, %v667
      %v694 = vadd.f32 %v623, %v667
      %v695 = vadd.f32 %v624, %v667
      %v696 = vadd.f32 %v625, %v667
      %v697 = vadd.f32 %v626, %v667
      %v698 = vadd.f32 %v627, %v667
      %v699 = vadd.f32 %v628, %v667
      %v700 = vadd.f32 %v629, %v667
      %v701 = vadd.f32 %v630, %v667
      %v702 = vadd.f32 %v631, %v667
      %v703 = vadd.f32 %v632, %v667
      %v704 = vadd.f32 %v633, %v667
      %v705 = vadd.f32 %v634, %v667
      %v706 = vadd.f32 %v635, %v667
      %v707 = vadd.f32 %v636, %v667
      %v708 = vadd.f32 %v637, %v667
      %v709 = vadd.f32 %v638, %v667
      %v710 = vadd.f32 %v639, %v667
      %v711 = vadd.f32 %v640, %v667
      %v712 = vadd.f32 %v641, %v667
      %v713 = vadd.f32 %v642, %v667
      %v714 = vadd.f32 %v643, %v667
      %v715 = vadd.f32 %v644, %v667
      %v716 = vadd.f32 %v645, %v667
      %v717 = vadd.f32 %v646, %v667
      %v718 = vadd.f32 %v647, %v667
      %v719 = vadd.f32 %v648, %v667
      %v720 = vadd.f32 %v649, %v667
      %v721 = vadd.f32 %v650, %v667
      %v722 = vadd.f32 %v651, %v667
      %v723 = vadd.f32 %v652, %v667
      %v724 = vadd.f32 %v653, %v667
      %v725 = vadd.f32 %v654, %v667
      %v726 = vadd.f32 %v655, %v667
      %v727 = vadd.f32 %v656, %v667
      %v728 = vadd.f32 %v657, %v667
      %v729 = vadd.f32 %v658, %v667
      %v730 = vadd.f32 %v659, %v667
      %v731 = vadd.f32 %v660, %v667
      %v732 = vadd.f32 %v661, %v667
      %v733 = vld [vmem:[%s3] sm:$0x7]
      %v734 = vlaneseq
      %v735 = vshrl.u32 %v734, 7
      %v736 = vsub.s32 0, %v735
      %v737 = vrot.slane %v733, %v736
      %v738 = vmul.f32 %v737, 0.0
      %v739 = vmul.f32 %v669, %v737
      %v740 = vmul.f32 %v670, %v737
      %v741 = vmul.f32 %v671, %v737
      %v742 = vmul.f32 %v672, %v737
      %v743 = vmul.f32 %v673, %v737
      %v744 = vmul.f32 %v674, %v737
      %v745 = vmul.f32 %v675, %v737
      %v746 = vmul.f32 %v677, %v737
      %v747 = vmul.f32 %v678, %v737
      %v748 = vmul.f32 %v679, %v737
      %v749 = vmul.f32 %v680, %v737
      %v750 = vmul.f32 %v681, %v737
      %v751 = vmul.f32 %v682, %v737
      %v752 = vmul.f32 %v683, %v737
      %v753 = vmul.f32 %v685, %v737
      %v754 = vmul.f32 %v686, %v737
      %v755 = vmul.f32 %v687, %v737
      %v756 = vmul.f32 %v688, %v737
      %v757 = vmul.f32 %v689, %v737
      %v758 = vmul.f32 %v690, %v737
      %v759 = vmul.f32 %v691, %v737
      %v760 = vmul.f32 %v693, %v737
      %v761 = vmul.f32 %v694, %v737
      %v762 = vmul.f32 %v695, %v737
      %v763 = vmul.f32 %v696, %v737
      %v764 = vmul.f32 %v697, %v737
      %v765 = vmul.f32 %v698, %v737
      %v766 = vmul.f32 %v699, %v737
      %v767 = vmul.f32 %v701, %v737
      %v768 = vmul.f32 %v702, %v737
      %v769 = vmul.f32 %v703, %v737
      %v770 = vmul.f32 %v704, %v737
      %v771 = vmul.f32 %v705, %v737
      %v772 = vmul.f32 %v706, %v737
      %v773 = vmul.f32 %v707, %v737
      %v774 = vmul.f32 %v709, %v737
      %v775 = vmul.f32 %v710, %v737
      %v776 = vmul.f32 %v711, %v737
      %v777 = vmul.f32 %v712, %v737
      %v778 = vmul.f32 %v713, %v737
      %v779 = vmul.f32 %v714, %v737
      %v780 = vmul.f32 %v715, %v737
      %v781 = vmul.f32 %v717, %v737
      %v782 = vmul.f32 %v718, %v737
      %v783 = vmul.f32 %v719, %v737
      %v784 = vmul.f32 %v720, %v737
      %v785 = vmul.f32 %v721, %v737
      %v786 = vmul.f32 %v722, %v737
      %v787 = vmul.f32 %v723, %v737
      %v788 = vmul.f32 %v725, %v737
      %v789 = vmul.f32 %v726, %v737
      %v790 = vmul.f32 %v727, %v737
      %v791 = vmul.f32 %v728, %v737
      %v792 = vmul.f32 %v729, %v737
      %v793 = vmul.f32 %v730, %v737
      %v794 = vmul.f32 %v731, %v737
      %v795 = vlaneseq
      %v796 = vshrl.u32 %v795, 7
      %v797 = vsub.s32 1, %v796
      %v798 = vrot.slane %v733, %v797
      %v799 = vmul.f32 %v669, %v798
      %v800 = vmul.f32 %v670, %v798
      %v801 = vmul.f32 %v671, %v798
      %v802 = vmul.f32 %v672, %v798
      %v803 = vmul.f32 %v673, %v798
      %v804 = vmul.f32 %v674, %v798
      %v805 = vmul.f32 %v675, %v798
      %v806 = vmul.f32 %v676, %v798
      %v807 = vmul.f32 %v677, %v798
      %v808 = vmul.f32 %v678, %v798
      %v809 = vmul.f32 %v679, %v798
      %v810 = vmul.f32 %v680, %v798
      %v811 = vmul.f32 %v681, %v798
      %v812 = vmul.f32 %v682, %v798
      %v813 = vmul.f32 %v683, %v798
      %v814 = vmul.f32 %v684, %v798
      %v815 = vmul.f32 %v685, %v798
      %v816 = vmul.f32 %v686, %v798
      %v817 = vmul.f32 %v687, %v798
      %v818 = vmul.f32 %v688, %v798
      %v819 = vmul.f32 %v689, %v798
      %v820 = vmul.f32 %v690, %v798
      %v821 = vmul.f32 %v691, %v798
      %v822 = vmul.f32 %v692, %v798
      %v823 = vmul.f32 %v693, %v798
      %v824 = vmul.f32 %v694, %v798
      %v825 = vmul.f32 %v695, %v798
      %v826 = vmul.f32 %v696, %v798
      %v827 = vmul.f32 %v697, %v798
      %v828 = vmul.f32 %v698, %v798
      %v829 = vmul.f32 %v699, %v798
      %v830 = vmul.f32 %v700, %v798
      %v831 = vmul.f32 %v701, %v798
      %v832 = vmul.f32 %v702, %v798
      %v833 = vmul.f32 %v703, %v798
      %v834 = vmul.f32 %v704, %v798
      %v835 = vmul.f32 %v705, %v798
      %v836 = vmul.f32 %v706, %v798
      %v837 = vmul.f32 %v707, %v798
      %v838 = vmul.f32 %v708, %v798
      %v839 = vmul.f32 %v709, %v798
      %v840 = vmul.f32 %v710, %v798
      %v841 = vmul.f32 %v711, %v798
      %v842 = vmul.f32 %v712, %v798
      %v843 = vmul.f32 %v713, %v798
      %v844 = vmul.f32 %v714, %v798
      %v845 = vmul.f32 %v715, %v798
      %v846 = vmul.f32 %v716, %v798
      %v847 = vmul.f32 %v717, %v798
      %v848 = vmul.f32 %v718, %v798
      %v849 = vmul.f32 %v719, %v798
      %v850 = vmul.f32 %v720, %v798
      %v851 = vmul.f32 %v721, %v798
      %v852 = vmul.f32 %v722, %v798
      %v853 = vmul.f32 %v723, %v798
      %v854 = vmul.f32 %v724, %v798
      %v855 = vmul.f32 %v725, %v798
      %v856 = vmul.f32 %v726, %v798
      %v857 = vmul.f32 %v727, %v798
      %v858 = vmul.f32 %v728, %v798
      %v859 = vmul.f32 %v729, %v798
      %v860 = vmul.f32 %v730, %v798
      %v861 = vmul.f32 %v731, %v798
      %v862 = vmul.f32 %v732, %v798
      %v863 = vadd.f32 %v738, %v799
      %v864 = vadd.f32 %v739, %v800
      %v865 = vadd.f32 %v740, %v801
      %v866 = vadd.f32 %v741, %v802
      %v867 = vadd.f32 %v742, %v803
      %v868 = vadd.f32 %v743, %v804
      %v869 = vadd.f32 %v744, %v805
      %v870 = vadd.f32 %v745, %v806
      %v871 = vadd.f32 %v738, %v807
      %v872 = vadd.f32 %v746, %v808
      %v873 = vadd.f32 %v747, %v809
      %v874 = vadd.f32 %v748, %v810
      %v875 = vadd.f32 %v749, %v811
      %v876 = vadd.f32 %v750, %v812
      %v877 = vadd.f32 %v751, %v813
      %v878 = vadd.f32 %v752, %v814
      %v879 = vadd.f32 %v738, %v815
      %v880 = vadd.f32 %v753, %v816
      %v881 = vadd.f32 %v754, %v817
      %v882 = vadd.f32 %v755, %v818
      %v883 = vadd.f32 %v756, %v819
      %v884 = vadd.f32 %v757, %v820
      %v885 = vadd.f32 %v758, %v821
      %v886 = vadd.f32 %v759, %v822
      %v887 = vadd.f32 %v738, %v823
      %v888 = vadd.f32 %v760, %v824
      %v889 = vadd.f32 %v761, %v825
      %v890 = vadd.f32 %v762, %v826
      %v891 = vadd.f32 %v763, %v827
      %v892 = vadd.f32 %v764, %v828
      %v893 = vadd.f32 %v765, %v829
      %v894 = vadd.f32 %v766, %v830
      %v895 = vadd.f32 %v738, %v831
      %v896 = vadd.f32 %v767, %v832
      %v897 = vadd.f32 %v768, %v833
      %v898 = vadd.f32 %v769, %v834
      %v899 = vadd.f32 %v770, %v835
      %v900 = vadd.f32 %v771, %v836
      %v901 = vadd.f32 %v772, %v837
      %v902 = vadd.f32 %v773, %v838
      %v903 = vadd.f32 %v738, %v839
      %v904 = vadd.f32 %v774, %v840
      %v905 = vadd.f32 %v775, %v841
      %v906 = vadd.f32 %v776, %v842
      %v907 = vadd.f32 %v777, %v843
      %v908 = vadd.f32 %v778, %v844
      %v909 = vadd.f32 %v779, %v845
      %v910 = vadd.f32 %v780, %v846
      %v911 = vadd.f32 %v738, %v847
      %v912 = vadd.f32 %v781, %v848
      %v913 = vadd.f32 %v782, %v849
      %v914 = vadd.f32 %v783, %v850
      %v915 = vadd.f32 %v784, %v851
      %v916 = vadd.f32 %v785, %v852
      %v917 = vadd.f32 %v786, %v853
      %v918 = vadd.f32 %v787, %v854
      %v919 = vadd.f32 %v738, %v855
      %v920 = vadd.f32 %v788, %v856
      %v921 = vadd.f32 %v789, %v857
      %v922 = vadd.f32 %v790, %v858
      %v923 = vadd.f32 %v791, %v859
      %v924 = vadd.f32 %v792, %v860
      %v925 = vadd.f32 %v793, %v861
      %v926 = vadd.f32 %v794, %v862
      %v927 = vlaneseq
      %v928 = vshrl.u32 %v927, 7
      %v929 = vsub.s32 2, %v928
      %v930 = vrot.slane %v733, %v929
      %v931 = vmul.f32 %v670, %v930
      %v932 = vmul.f32 %v671, %v930
      %v933 = vmul.f32 %v672, %v930
      %v934 = vmul.f32 %v673, %v930
      %v935 = vmul.f32 %v674, %v930
      %v936 = vmul.f32 %v675, %v930
      %v937 = vmul.f32 %v676, %v930
      %v938 = vmul.f32 %v930, 0.0
      %v939 = vmul.f32 %v678, %v930
      %v940 = vmul.f32 %v679, %v930
      %v941 = vmul.f32 %v680, %v930
      %v942 = vmul.f32 %v681, %v930
      %v943 = vmul.f32 %v682, %v930
      %v944 = vmul.f32 %v683, %v930
      %v945 = vmul.f32 %v684, %v930
      %v946 = vmul.f32 %v686, %v930
      %v947 = vmul.f32 %v687, %v930
      %v948 = vmul.f32 %v688, %v930
      %v949 = vmul.f32 %v689, %v930
      %v950 = vmul.f32 %v690, %v930
      %v951 = vmul.f32 %v691, %v930
      %v952 = vmul.f32 %v692, %v930
      %v953 = vmul.f32 %v694, %v930
      %v954 = vmul.f32 %v695, %v930
      %v955 = vmul.f32 %v696, %v930
      %v956 = vmul.f32 %v697, %v930
      %v957 = vmul.f32 %v698, %v930
      %v958 = vmul.f32 %v699, %v930
      %v959 = vmul.f32 %v700, %v930
      %v960 = vmul.f32 %v702, %v930
      %v961 = vmul.f32 %v703, %v930
      %v962 = vmul.f32 %v704, %v930
      %v963 = vmul.f32 %v705, %v930
      %v964 = vmul.f32 %v706, %v930
      %v965 = vmul.f32 %v707, %v930
      %v966 = vmul.f32 %v708, %v930
      %v967 = vmul.f32 %v710, %v930
      %v968 = vmul.f32 %v711, %v930
      %v969 = vmul.f32 %v712, %v930
      %v970 = vmul.f32 %v713, %v930
      %v971 = vmul.f32 %v714, %v930
      %v972 = vmul.f32 %v715, %v930
      %v973 = vmul.f32 %v716, %v930
      %v974 = vmul.f32 %v718, %v930
      %v975 = vmul.f32 %v719, %v930
      %v976 = vmul.f32 %v720, %v930
      %v977 = vmul.f32 %v721, %v930
      %v978 = vmul.f32 %v722, %v930
      %v979 = vmul.f32 %v723, %v930
      %v980 = vmul.f32 %v724, %v930
      %v981 = vmul.f32 %v726, %v930
      %v982 = vmul.f32 %v727, %v930
      %v983 = vmul.f32 %v728, %v930
      %v984 = vmul.f32 %v729, %v930
      %v985 = vmul.f32 %v730, %v930
      %v986 = vmul.f32 %v731, %v930
      %v987 = vmul.f32 %v732, %v930
      %v988 = vadd.f32 %v863, %v931
      %v989 = vadd.f32 %v864, %v932
      %v990 = vadd.f32 %v865, %v933
      %v991 = vadd.f32 %v866, %v934
      %v992 = vadd.f32 %v867, %v935
      %v993 = vadd.f32 %v868, %v936
      %v994 = vadd.f32 %v869, %v937
      %v995 = vadd.f32 %v870, %v938
      %v996 = vadd.f32 %v871, %v939
      %v997 = vadd.f32 %v872, %v940
      %v998 = vadd.f32 %v873, %v941
      %v999 = vadd.f32 %v874, %v942
      %v1000 = vadd.f32 %v875, %v943
      %v1001 = vadd.f32 %v876, %v944
      %v1002 = vadd.f32 %v877, %v945
      %v1003 = vadd.f32 %v878, %v938
      %v1004 = vadd.f32 %v879, %v946
      %v1005 = vadd.f32 %v880, %v947
      %v1006 = vadd.f32 %v881, %v948
      %v1007 = vadd.f32 %v882, %v949
      %v1008 = vadd.f32 %v883, %v950
      %v1009 = vadd.f32 %v884, %v951
      %v1010 = vadd.f32 %v885, %v952
      %v1011 = vadd.f32 %v886, %v938
      %v1012 = vadd.f32 %v887, %v953
      %v1013 = vadd.f32 %v888, %v954
      %v1014 = vadd.f32 %v889, %v955
      %v1015 = vadd.f32 %v890, %v956
      %v1016 = vadd.f32 %v891, %v957
      %v1017 = vadd.f32 %v892, %v958
      %v1018 = vadd.f32 %v893, %v959
      %v1019 = vadd.f32 %v894, %v938
      %v1020 = vadd.f32 %v895, %v960
      %v1021 = vadd.f32 %v896, %v961
      %v1022 = vadd.f32 %v897, %v962
      %v1023 = vadd.f32 %v898, %v963
      %v1024 = vadd.f32 %v899, %v964
      %v1025 = vadd.f32 %v900, %v965
      %v1026 = vadd.f32 %v901, %v966
      %v1027 = vadd.f32 %v902, %v938
      %v1028 = vadd.f32 %v903, %v967
      %v1029 = vadd.f32 %v904, %v968
      %v1030 = vadd.f32 %v905, %v969
      %v1031 = vadd.f32 %v906, %v970
      %v1032 = vadd.f32 %v907, %v971
      %v1033 = vadd.f32 %v908, %v972
      %v1034 = vadd.f32 %v909, %v973
      %v1035 = vadd.f32 %v910, %v938
      %v1036 = vadd.f32 %v911, %v974
      %v1037 = vadd.f32 %v912, %v975
      %v1038 = vadd.f32 %v913, %v976
      %v1039 = vadd.f32 %v914, %v977
      %v1040 = vadd.f32 %v915, %v978
      %v1041 = vadd.f32 %v916, %v979
      %v1042 = vadd.f32 %v917, %v980
      %v1043 = vadd.f32 %v918, %v938
      %v1044 = vadd.f32 %v919, %v981
      %v1045 = vadd.f32 %v920, %v982
      %v1046 = vadd.f32 %v921, %v983
      %v1047 = vadd.f32 %v922, %v984
      %v1048 = vadd.f32 %v923, %v985
      %v1049 = vadd.f32 %v924, %v986
      %v1050 = vadd.f32 %v925, %v987
      %v1051 = vadd.f32 %v926, %v938
      %v1052 = vld [vmem:[%s4] sm:$0x1]
      %v1054 = vlaneseq
      %v1055 = vshrl.u32 %v1054, 7
      %v1056 = vsub.s32 0, %v1055
      %v1057 = vrot.slane %v1052, %v1056
      %v1059 = vadd.f32 %v988, %v1057
      %v1060 = vadd.f32 %v989, %v1057
      %v1061 = vadd.f32 %v990, %v1057
      %v1062 = vadd.f32 %v991, %v1057
      %v1063 = vadd.f32 %v992, %v1057
      %v1064 = vadd.f32 %v993, %v1057
      %v1065 = vadd.f32 %v994, %v1057
      %v1066 = vadd.f32 %v995, %v1057
      %v1067 = vadd.f32 %v996, %v1057
      %v1068 = vadd.f32 %v997, %v1057
      %v1069 = vadd.f32 %v998, %v1057
      %v1070 = vadd.f32 %v999, %v1057
      %v1071 = vadd.f32 %v1000, %v1057
      %v1072 = vadd.f32 %v1001, %v1057
      %v1073 = vadd.f32 %v1002, %v1057
      %v1074 = vadd.f32 %v1003, %v1057
      %v1075 = vadd.f32 %v1004, %v1057
      %v1076 = vadd.f32 %v1005, %v1057
      %v1077 = vadd.f32 %v1006, %v1057
      %v1078 = vadd.f32 %v1007, %v1057
      %v1079 = vadd.f32 %v1008, %v1057
      %v1080 = vadd.f32 %v1009, %v1057
      %v1081 = vadd.f32 %v1010, %v1057
      %v1082 = vadd.f32 %v1011, %v1057
      %v1083 = vadd.f32 %v1012, %v1057
      %v1084 = vadd.f32 %v1013, %v1057
      %v1085 = vadd.f32 %v1014, %v1057
      %v1086 = vadd.f32 %v1015, %v1057
      %v1087 = vadd.f32 %v1016, %v1057
      %v1088 = vadd.f32 %v1017, %v1057
      %v1089 = vadd.f32 %v1018, %v1057
      %v1090 = vadd.f32 %v1019, %v1057
      %v1091 = vadd.f32 %v1020, %v1057
      %v1092 = vadd.f32 %v1021, %v1057
      %v1093 = vadd.f32 %v1022, %v1057
      %v1094 = vadd.f32 %v1023, %v1057
      %v1095 = vadd.f32 %v1024, %v1057
      %v1096 = vadd.f32 %v1025, %v1057
      %v1097 = vadd.f32 %v1026, %v1057
      %v1098 = vadd.f32 %v1027, %v1057
      %v1099 = vadd.f32 %v1028, %v1057
      %v1100 = vadd.f32 %v1029, %v1057
      %v1101 = vadd.f32 %v1030, %v1057
      %v1102 = vadd.f32 %v1031, %v1057
      %v1103 = vadd.f32 %v1032, %v1057
      %v1104 = vadd.f32 %v1033, %v1057
      %v1105 = vadd.f32 %v1034, %v1057
      %v1106 = vadd.f32 %v1035, %v1057
      %v1107 = vadd.f32 %v1036, %v1057
      %v1108 = vadd.f32 %v1037, %v1057
      %v1109 = vadd.f32 %v1038, %v1057
      %v1110 = vadd.f32 %v1039, %v1057
      %v1111 = vadd.f32 %v1040, %v1057
      %v1112 = vadd.f32 %v1041, %v1057
      %v1113 = vadd.f32 %v1042, %v1057
      %v1114 = vadd.f32 %v1043, %v1057
      %v1115 = vadd.f32 %v1044, %v1057
      %v1116 = vadd.f32 %v1045, %v1057
      %v1117 = vadd.f32 %v1046, %v1057
      %v1118 = vadd.f32 %v1047, %v1057
      %v1119 = vadd.f32 %v1048, %v1057
      %v1120 = vadd.f32 %v1049, %v1057
      %v1121 = vadd.f32 %v1050, %v1057
      %v1122 = vadd.f32 %v1051, %v1057
      %v1123 = vld [vmem:[%s5] sm:$0x7]
      %v1188 = vrot.slane %v1059, 7
      %v1189 = vrot.slane %v1060, 7
      %v1190 = vrot.slane %v1061, 7
      %v1191 = vrot.slane %v1062, 7
      %v1192 = vrot.slane %v1063, 7
      %v1193 = vrot.slane %v1064, 7
      %v1194 = vrot.slane %v1065, 7
      %v1195 = vrot.slane %v1066, 7
      %v1196 = vrot.slane %v1067, 7
      %v1197 = vrot.slane %v1068, 7
      %v1198 = vrot.slane %v1069, 7
      %v1199 = vrot.slane %v1070, 7
      %v1200 = vrot.slane %v1071, 7
      %v1201 = vrot.slane %v1072, 7
      %v1202 = vrot.slane %v1073, 7
      %v1203 = vrot.slane %v1074, 7
      %v1204 = vrot.slane %v1075, 7
      %v1205 = vrot.slane %v1076, 7
      %v1206 = vrot.slane %v1077, 7
      %v1207 = vrot.slane %v1078, 7
      %v1208 = vrot.slane %v1079, 7
      %v1209 = vrot.slane %v1080, 7
      %v1210 = vrot.slane %v1081, 7
      %v1211 = vrot.slane %v1082, 7
      %v1212 = vrot.slane %v1083, 7
      %v1213 = vrot.slane %v1084, 7
      %v1214 = vrot.slane %v1085, 7
      %v1215 = vrot.slane %v1086, 7
      %v1216 = vrot.slane %v1087, 7
      %v1217 = vrot.slane %v1088, 7
      %v1218 = vrot.slane %v1089, 7
      %v1219 = vrot.slane %v1090, 7
      %v1220 = vrot.slane %v1091, 7
      %v1221 = vrot.slane %v1092, 7
      %v1222 = vrot.slane %v1093, 7
      %v1223 = vrot.slane %v1094, 7
      %v1224 = vrot.slane %v1095, 7
      %v1225 = vrot.slane %v1096, 7
      %v1226 = vrot.slane %v1097, 7
      %v1227 = vrot.slane %v1098, 7
      %v1228 = vrot.slane %v1099, 7
      %v1229 = vrot.slane %v1100, 7
      %v1230 = vrot.slane %v1101, 7
      %v1231 = vrot.slane %v1102, 7
      %v1232 = vrot.slane %v1103, 7
      %v1233 = vrot.slane %v1104, 7
      %v1234 = vrot.slane %v1105, 7
      %v1235 = vrot.slane %v1106, 7
      %v1236 = vrot.slane %v1107, 7
      %v1237 = vrot.slane %v1108, 7
      %v1238 = vrot.slane %v1109, 7
      %v1239 = vrot.slane %v1110, 7
      %v1240 = vrot.slane %v1111, 7
      %v1241 = vrot.slane %v1112, 7
      %v1242 = vrot.slane %v1113, 7
      %v1243 = vrot.slane %v1114, 7
      %v1244 = vrot.slane %v1115, 7
      %v1245 = vrot.slane %v1116, 7
      %v1246 = vrot.slane %v1117, 7
      %v1247 = vrot.slane %v1118, 7
      %v1248 = vrot.slane %v1119, 7
      %v1249 = vrot.slane %v1120, 7
      %v1250 = vrot.slane %v1121, 7
      %v1251 = vrot.slane %v1122, 7
      %vm1316 = vcmask 1040384
      %v1317 = vsel %vm1316, 0.0, %v1188
      %v1318 = vsel %vm1316, 0.0, %v1189
      %v1319 = vsel %vm1316, 0.0, %v1190
      %v1320 = vsel %vm1316, 0.0, %v1191
      %v1321 = vsel %vm1316, 0.0, %v1192
      %v1322 = vsel %vm1316, 0.0, %v1193
      %v1323 = vsel %vm1316, 0.0, %v1194
      %v1324 = vsel %vm1316, 0.0, %v1195
      %v1325 = vsel %vm1316, 0.0, %v1196
      %v1326 = vsel %vm1316, 0.0, %v1197
      %v1327 = vsel %vm1316, 0.0, %v1198
      %v1328 = vsel %vm1316, 0.0, %v1199
      %v1329 = vsel %vm1316, 0.0, %v1200
      %v1330 = vsel %vm1316, 0.0, %v1201
      %v1331 = vsel %vm1316, 0.0, %v1202
      %v1332 = vsel %vm1316, 0.0, %v1203
      %v1333 = vsel %vm1316, 0.0, %v1204
      %v1334 = vsel %vm1316, 0.0, %v1205
      %v1335 = vsel %vm1316, 0.0, %v1206
      %v1336 = vsel %vm1316, 0.0, %v1207
      %v1337 = vsel %vm1316, 0.0, %v1208
      %v1338 = vsel %vm1316, 0.0, %v1209
      %v1339 = vsel %vm1316, 0.0, %v1210
      %v1340 = vsel %vm1316, 0.0, %v1211
      %v1341 = vsel %vm1316, 0.0, %v1212
      %v1342 = vsel %vm1316, 0.0, %v1213
      %v1343 = vsel %vm1316, 0.0, %v1214
      %v1344 = vsel %vm1316, 0.0, %v1215
      %v1345 = vsel %vm1316, 0.0, %v1216
      %v1346 = vsel %vm1316, 0.0, %v1217
      %v1347 = vsel %vm1316, 0.0, %v1218
      %v1348 = vsel %vm1316, 0.0, %v1219
      %v1349 = vsel %vm1316, 0.0, %v1220
      %v1350 = vsel %vm1316, 0.0, %v1221
      %v1351 = vsel %vm1316, 0.0, %v1222
      %v1352 = vsel %vm1316, 0.0, %v1223
      %v1353 = vsel %vm1316, 0.0, %v1224
      %v1354 = vsel %vm1316, 0.0, %v1225
      %v1355 = vsel %vm1316, 0.0, %v1226
      %v1356 = vsel %vm1316, 0.0, %v1227
      %v1357 = vsel %vm1316, 0.0, %v1228
      %v1358 = vsel %vm1316, 0.0, %v1229
      %v1359 = vsel %vm1316, 0.0, %v1230
      %v1360 = vsel %vm1316, 0.0, %v1231
      %v1361 = vsel %vm1316, 0.0, %v1232
      %v1362 = vsel %vm1316, 0.0, %v1233
      %v1363 = vsel %vm1316, 0.0, %v1234
      %v1364 = vsel %vm1316, 0.0, %v1235
      %v1365 = vsel %vm1316, 0.0, %v1236
      %v1366 = vsel %vm1316, 0.0, %v1237
      %v1367 = vsel %vm1316, 0.0, %v1238
      %v1368 = vsel %vm1316, 0.0, %v1239
      %v1369 = vsel %vm1316, 0.0, %v1240
      %v1370 = vsel %vm1316, 0.0, %v1241
      %v1371 = vsel %vm1316, 0.0, %v1242
      %v1372 = vsel %vm1316, 0.0, %v1243
      %v1373 = vsel %vm1316, 0.0, %v1244
      %v1374 = vsel %vm1316, 0.0, %v1245
      %v1375 = vsel %vm1316, 0.0, %v1246
      %v1376 = vsel %vm1316, 0.0, %v1247
      %v1377 = vsel %vm1316, 0.0, %v1248
      %v1378 = vsel %vm1316, 0.0, %v1249
      %v1379 = vsel %vm1316, 0.0, %v1250
      %v1380 = vsel %vm1316, 0.0, %v1251
      %v1381 = vsel %vm1316, %v1188, 0.0
      %v1382 = vsel %vm1316, %v1189, 0.0
      %v1383 = vsel %vm1316, %v1190, 0.0
      %v1384 = vsel %vm1316, %v1191, 0.0
      %v1385 = vsel %vm1316, %v1192, 0.0
      %v1386 = vsel %vm1316, %v1193, 0.0
      %v1387 = vsel %vm1316, %v1194, 0.0
      %v1388 = vsel %vm1316, %v1195, 0.0
      %v1389 = vsel %vm1316, %v1196, 0.0
      %v1390 = vsel %vm1316, %v1197, 0.0
      %v1391 = vsel %vm1316, %v1198, 0.0
      %v1392 = vsel %vm1316, %v1199, 0.0
      %v1393 = vsel %vm1316, %v1200, 0.0
      %v1394 = vsel %vm1316, %v1201, 0.0
      %v1395 = vsel %vm1316, %v1202, 0.0
      %v1396 = vsel %vm1316, %v1203, 0.0
      %v1397 = vsel %vm1316, %v1204, 0.0
      %v1398 = vsel %vm1316, %v1205, 0.0
      %v1399 = vsel %vm1316, %v1206, 0.0
      %v1400 = vsel %vm1316, %v1207, 0.0
      %v1401 = vsel %vm1316, %v1208, 0.0
      %v1402 = vsel %vm1316, %v1209, 0.0
      %v1403 = vsel %vm1316, %v1210, 0.0
      %v1404 = vsel %vm1316, %v1211, 0.0
      %v1405 = vsel %vm1316, %v1212, 0.0
      %v1406 = vsel %vm1316, %v1213, 0.0
      %v1407 = vsel %vm1316, %v1214, 0.0
      %v1408 = vsel %vm1316, %v1215, 0.0
      %v1409 = vsel %vm1316, %v1216, 0.0
      %v1410 = vsel %vm1316, %v1217, 0.0
      %v1411 = vsel %vm1316, %v1218, 0.0
      %v1412 = vsel %vm1316, %v1219, 0.0
      %v1413 = vsel %vm1316, %v1220, 0.0
      %v1414 = vsel %vm1316, %v1221, 0.0
      %v1415 = vsel %vm1316, %v1222, 0.0
      %v1416 = vsel %vm1316, %v1223, 0.0
      %v1417 = vsel %vm1316, %v1224, 0.0
      %v1418 = vsel %vm1316, %v1225, 0.0
      %v1419 = vsel %vm1316, %v1226, 0.0
      %v1420 = vsel %vm1316, %v1227, 0.0
      %v1421 = vsel %vm1316, %v1228, 0.0
      %v1422 = vsel %vm1316, %v1229, 0.0
      %v1423 = vsel %vm1316, %v1230, 0.0
      %v1424 = vsel %vm1316, %v1231, 0.0
      %v1425 = vsel %vm1316, %v1232, 0.0
      %v1426 = vsel %vm1316, %v1233, 0.0
      %v1427 = vsel %vm1316, %v1234, 0.0
      %v1428 = vsel %vm1316, %v1235, 0.0
      %v1429 = vsel %vm1316, %v1236, 0.0
      %v1430 = vsel %vm1316, %v1237, 0.0
      %v1431 = vsel %vm1316, %v1238, 0.0
      %v1432 = vsel %vm1316, %v1239, 0.0
      %v1433 = vsel %vm1316, %v1240, 0.0
      %v1434 = vsel %vm1316, %v1241, 0.0
      %v1435 = vsel %vm1316, %v1242, 0.0
      %v1436 = vsel %vm1316, %v1243, 0.0
      %v1437 = vsel %vm1316, %v1244, 0.0
      %v1438 = vsel %vm1316, %v1245, 0.0
      %v1439 = vsel %vm1316, %v1246, 0.0
      %v1440 = vsel %vm1316, %v1247, 0.0
      %v1441 = vsel %vm1316, %v1248, 0.0
      %v1442 = vsel %vm1316, %v1249, 0.0
      %v1443 = vsel %vm1316, %v1250, 0.0
      %v1444 = vsel %vm1316, %v1251, 0.0
      %v1445 = vlaneseq
      %v1446 = vshrl.u32 %v1445, 7
      %v1447 = vsub.s32 0, %v1446
      %v1448 = vrot.slane %v1123, %v1447
      %v1449 = vmul.f32 %v1317, %v1448
      %v1450 = vmul.f32 %v1318, %v1448
      %v1451 = vmul.f32 %v1319, %v1448
      %v1452 = vmul.f32 %v1320, %v1448
      %v1453 = vmul.f32 %v1321, %v1448
      %v1454 = vmul.f32 %v1322, %v1448
      %v1455 = vmul.f32 %v1323, %v1448
      %v1456 = vmul.f32 %v1324, %v1448
      %v1457 = vmul.f32 %v1325, %v1448
      %v1458 = vmul.f32 %v1326, %v1448
      %v1459 = vmul.f32 %v1327, %v1448
      %v1460 = vmul.f32 %v1328, %v1448
      %v1461 = vmul.f32 %v1329, %v1448
      %v1462 = vmul.f32 %v1330, %v1448
      %v1463 = vmul.f32 %v1331, %v1448
      %v1464 = vmul.f32 %v1332, %v1448
      %v1465 = vmul.f32 %v1333, %v1448
      %v1466 = vmul.f32 %v1334, %v1448
      %v1467 = vmul.f32 %v1335, %v1448
      %v1468 = vmul.f32 %v1336, %v1448
      %v1469 = vmul.f32 %v1337, %v1448
      %v1470 = vmul.f32 %v1338, %v1448
      %v1471 = vmul.f32 %v1339, %v1448
      %v1472 = vmul.f32 %v1340, %v1448
      %v1473 = vmul.f32 %v1341, %v1448
      %v1474 = vmul.f32 %v1342, %v1448
      %v1475 = vmul.f32 %v1343, %v1448
      %v1476 = vmul.f32 %v1344, %v1448
      %v1477 = vmul.f32 %v1345, %v1448
      %v1478 = vmul.f32 %v1346, %v1448
      %v1479 = vmul.f32 %v1347, %v1448
      %v1480 = vmul.f32 %v1348, %v1448
      %v1481 = vmul.f32 %v1349, %v1448
      %v1482 = vmul.f32 %v1350, %v1448
      %v1483 = vmul.f32 %v1351, %v1448
      %v1484 = vmul.f32 %v1352, %v1448
      %v1485 = vmul.f32 %v1353, %v1448
      %v1486 = vmul.f32 %v1354, %v1448
      %v1487 = vmul.f32 %v1355, %v1448
      %v1488 = vmul.f32 %v1356, %v1448
      %v1489 = vmul.f32 %v1357, %v1448
      %v1490 = vmul.f32 %v1358, %v1448
      %v1491 = vmul.f32 %v1359, %v1448
      %v1492 = vmul.f32 %v1360, %v1448
      %v1493 = vmul.f32 %v1361, %v1448
      %v1494 = vmul.f32 %v1362, %v1448
      %v1495 = vmul.f32 %v1363, %v1448
      %v1496 = vmul.f32 %v1364, %v1448
      %v1497 = vmul.f32 %v1365, %v1448
      %v1498 = vmul.f32 %v1366, %v1448
      %v1499 = vmul.f32 %v1367, %v1448
      %v1500 = vmul.f32 %v1368, %v1448
      %v1501 = vmul.f32 %v1369, %v1448
      %v1502 = vmul.f32 %v1370, %v1448
      %v1503 = vmul.f32 %v1371, %v1448
      %v1504 = vmul.f32 %v1372, %v1448
      %v1505 = vmul.f32 %v1373, %v1448
      %v1506 = vmul.f32 %v1374, %v1448
      %v1507 = vmul.f32 %v1375, %v1448
      %v1508 = vmul.f32 %v1376, %v1448
      %v1509 = vmul.f32 %v1377, %v1448
      %v1510 = vmul.f32 %v1378, %v1448
      %v1511 = vmul.f32 %v1379, %v1448
      %v1512 = vmul.f32 %v1380, %v1448
      %v1513 = vlaneseq
      %v1514 = vshrl.u32 %v1513, 7
      %v1515 = vsub.s32 1, %v1514
      %v1516 = vrot.slane %v1123, %v1515
      %v1517 = vmul.f32 %v1317, %v1516
      %v1518 = vmul.f32 %v1381, %v1516
      %v1519 = vmul.f32 %v1318, %v1516
      %v1520 = vmul.f32 %v1382, %v1516
      %v1521 = vmul.f32 %v1319, %v1516
      %v1522 = vmul.f32 %v1383, %v1516
      %v1523 = vmul.f32 %v1320, %v1516
      %v1524 = vmul.f32 %v1384, %v1516
      %v1525 = vmul.f32 %v1321, %v1516
      %v1526 = vmul.f32 %v1385, %v1516
      %v1527 = vmul.f32 %v1322, %v1516
      %v1528 = vmul.f32 %v1386, %v1516
      %v1529 = vmul.f32 %v1323, %v1516
      %v1530 = vmul.f32 %v1387, %v1516
      %v1531 = vmul.f32 %v1324, %v1516
      %v1532 = vmul.f32 %v1388, %v1516
      %v1533 = vmul.f32 %v1325, %v1516
      %v1534 = vmul.f32 %v1389, %v1516
      %v1535 = vmul.f32 %v1326, %v1516
      %v1536 = vmul.f32 %v1390, %v1516
      %v1537 = vmul.f32 %v1327, %v1516
      %v1538 = vmul.f32 %v1391, %v1516
      %v1539 = vmul.f32 %v1328, %v1516
      %v1540 = vmul.f32 %v1392, %v1516
      %v1541 = vmul.f32 %v1329, %v1516
      %v1542 = vmul.f32 %v1393, %v1516
      %v1543 = vmul.f32 %v1330, %v1516
      %v1544 = vmul.f32 %v1394, %v1516
      %v1545 = vmul.f32 %v1331, %v1516
      %v1546 = vmul.f32 %v1395, %v1516
      %v1547 = vmul.f32 %v1332, %v1516
      %v1548 = vmul.f32 %v1396, %v1516
      %v1549 = vmul.f32 %v1333, %v1516
      %v1550 = vmul.f32 %v1397, %v1516
      %v1551 = vmul.f32 %v1334, %v1516
      %v1552 = vmul.f32 %v1398, %v1516
      %v1553 = vmul.f32 %v1335, %v1516
      %v1554 = vmul.f32 %v1399, %v1516
      %v1555 = vmul.f32 %v1336, %v1516
      %v1556 = vmul.f32 %v1400, %v1516
      %v1557 = vmul.f32 %v1337, %v1516
      %v1558 = vmul.f32 %v1401, %v1516
      %v1559 = vmul.f32 %v1338, %v1516
      %v1560 = vmul.f32 %v1402, %v1516
      %v1561 = vmul.f32 %v1339, %v1516
      %v1562 = vmul.f32 %v1403, %v1516
      %v1563 = vmul.f32 %v1340, %v1516
      %v1564 = vmul.f32 %v1404, %v1516
      %v1565 = vmul.f32 %v1341, %v1516
      %v1566 = vmul.f32 %v1405, %v1516
      %v1567 = vmul.f32 %v1342, %v1516
      %v1568 = vmul.f32 %v1406, %v1516
      %v1569 = vmul.f32 %v1343, %v1516
      %v1570 = vmul.f32 %v1407, %v1516
      %v1571 = vmul.f32 %v1344, %v1516
      %v1572 = vmul.f32 %v1408, %v1516
      %v1573 = vmul.f32 %v1345, %v1516
      %v1574 = vmul.f32 %v1409, %v1516
      %v1575 = vmul.f32 %v1346, %v1516
      %v1576 = vmul.f32 %v1410, %v1516
      %v1577 = vmul.f32 %v1347, %v1516
      %v1578 = vmul.f32 %v1411, %v1516
      %v1579 = vmul.f32 %v1348, %v1516
      %v1580 = vmul.f32 %v1412, %v1516
      %v1581 = vmul.f32 %v1349, %v1516
      %v1582 = vmul.f32 %v1413, %v1516
      %v1583 = vmul.f32 %v1350, %v1516
      %v1584 = vmul.f32 %v1414, %v1516
      %v1585 = vmul.f32 %v1351, %v1516
      %v1586 = vmul.f32 %v1415, %v1516
      %v1587 = vmul.f32 %v1352, %v1516
      %v1588 = vmul.f32 %v1416, %v1516
      %v1589 = vmul.f32 %v1353, %v1516
      %v1590 = vmul.f32 %v1417, %v1516
      %v1591 = vmul.f32 %v1354, %v1516
      %v1592 = vmul.f32 %v1418, %v1516
      %v1593 = vmul.f32 %v1355, %v1516
      %v1594 = vmul.f32 %v1419, %v1516
      %v1595 = vmul.f32 %v1356, %v1516
      %v1596 = vmul.f32 %v1420, %v1516
      %v1597 = vmul.f32 %v1357, %v1516
      %v1598 = vmul.f32 %v1421, %v1516
      %v1599 = vmul.f32 %v1358, %v1516
      %v1600 = vmul.f32 %v1422, %v1516
      %v1601 = vmul.f32 %v1359, %v1516
      %v1602 = vmul.f32 %v1423, %v1516
      %v1603 = vmul.f32 %v1360, %v1516
      %v1604 = vmul.f32 %v1424, %v1516
      %v1605 = vmul.f32 %v1361, %v1516
      %v1606 = vmul.f32 %v1425, %v1516
      %v1607 = vmul.f32 %v1362, %v1516
      %v1608 = vmul.f32 %v1426, %v1516
      %v1609 = vmul.f32 %v1363, %v1516
      %v1610 = vmul.f32 %v1427, %v1516
      %v1611 = vmul.f32 %v1364, %v1516
      %v1612 = vmul.f32 %v1428, %v1516
      %v1613 = vmul.f32 %v1365, %v1516
      %v1614 = vmul.f32 %v1429, %v1516
      %v1615 = vmul.f32 %v1366, %v1516
      %v1616 = vmul.f32 %v1430, %v1516
      %v1617 = vmul.f32 %v1367, %v1516
      %v1618 = vmul.f32 %v1431, %v1516
      %v1619 = vmul.f32 %v1368, %v1516
      %v1620 = vmul.f32 %v1432, %v1516
      %v1621 = vmul.f32 %v1369, %v1516
      %v1622 = vmul.f32 %v1433, %v1516
      %v1623 = vmul.f32 %v1370, %v1516
      %v1624 = vmul.f32 %v1434, %v1516
      %v1625 = vmul.f32 %v1371, %v1516
      %v1626 = vmul.f32 %v1435, %v1516
      %v1627 = vmul.f32 %v1372, %v1516
      %v1628 = vmul.f32 %v1436, %v1516
      %v1629 = vmul.f32 %v1373, %v1516
      %v1630 = vmul.f32 %v1437, %v1516
      %v1631 = vmul.f32 %v1374, %v1516
      %v1632 = vmul.f32 %v1438, %v1516
      %v1633 = vmul.f32 %v1375, %v1516
      %v1634 = vmul.f32 %v1439, %v1516
      %v1635 = vmul.f32 %v1376, %v1516
      %v1636 = vmul.f32 %v1440, %v1516
      %v1637 = vmul.f32 %v1377, %v1516
      %v1638 = vmul.f32 %v1441, %v1516
      %v1639 = vmul.f32 %v1378, %v1516
      %v1640 = vmul.f32 %v1442, %v1516
      %v1641 = vmul.f32 %v1379, %v1516
      %v1642 = vmul.f32 %v1443, %v1516
      %v1643 = vmul.f32 %v1380, %v1516
      %v1644 = vmul.f32 %v1444, %v1516
      %vm1773 = vcmask 1046528
      %v1774 = vrot.slane %v1517, 1
      %v1775 = vrot.slane %v1518, 1
      %v1776 = vsel %vm1773, %v1774, %v1775
      %v1777 = vrot.slane %v1519, 1
      %v1778 = vrot.slane %v1520, 1
      %v1779 = vsel %vm1773, %v1777, %v1778
      %v1780 = vrot.slane %v1521, 1
      %v1781 = vrot.slane %v1522, 1
      %v1782 = vsel %vm1773, %v1780, %v1781
      %v1783 = vrot.slane %v1523, 1
      %v1784 = vrot.slane %v1524, 1
      %v1785 = vsel %vm1773, %v1783, %v1784
      %v1786 = vrot.slane %v1525, 1
      %v1787 = vrot.slane %v1526, 1
      %v1788 = vsel %vm1773, %v1786, %v1787
      %v1789 = vrot.slane %v1527, 1
      %v1790 = vrot.slane %v1528, 1
      %v1791 = vsel %vm1773, %v1789, %v1790
      %v1792 = vrot.slane %v1529, 1
      %v1793 = vrot.slane %v1530, 1
      %v1794 = vsel %vm1773, %v1792, %v1793
      %v1795 = vrot.slane %v1531, 1
      %v1796 = vrot.slane %v1532, 1
      %v1797 = vsel %vm1773, %v1795, %v1796
      %v1798 = vrot.slane %v1533, 1
      %v1799 = vrot.slane %v1534, 1
      %v1800 = vsel %vm1773, %v1798, %v1799
      %v1801 = vrot.slane %v1535, 1
      %v1802 = vrot.slane %v1536, 1
      %v1803 = vsel %vm1773, %v1801, %v1802
      %v1804 = vrot.slane %v1537, 1
      %v1805 = vrot.slane %v1538, 1
      %v1806 = vsel %vm1773, %v1804, %v1805
      %v1807 = vrot.slane %v1539, 1
      %v1808 = vrot.slane %v1540, 1
      %v1809 = vsel %vm1773, %v1807, %v1808
      %v1810 = vrot.slane %v1541, 1
      %v1811 = vrot.slane %v1542, 1
      %v1812 = vsel %vm1773, %v1810, %v1811
      %v1813 = vrot.slane %v1543, 1
      %v1814 = vrot.slane %v1544, 1
      %v1815 = vsel %vm1773, %v1813, %v1814
      %v1816 = vrot.slane %v1545, 1
      %v1817 = vrot.slane %v1546, 1
      %v1818 = vsel %vm1773, %v1816, %v1817
      %v1819 = vrot.slane %v1547, 1
      %v1820 = vrot.slane %v1548, 1
      %v1821 = vsel %vm1773, %v1819, %v1820
      %v1822 = vrot.slane %v1549, 1
      %v1823 = vrot.slane %v1550, 1
      %v1824 = vsel %vm1773, %v1822, %v1823
      %v1825 = vrot.slane %v1551, 1
      %v1826 = vrot.slane %v1552, 1
      %v1827 = vsel %vm1773, %v1825, %v1826
      %v1828 = vrot.slane %v1553, 1
      %v1829 = vrot.slane %v1554, 1
      %v1830 = vsel %vm1773, %v1828, %v1829
      %v1831 = vrot.slane %v1555, 1
      %v1832 = vrot.slane %v1556, 1
      %v1833 = vsel %vm1773, %v1831, %v1832
      %v1834 = vrot.slane %v1557, 1
      %v1835 = vrot.slane %v1558, 1
      %v1836 = vsel %vm1773, %v1834, %v1835
      %v1837 = vrot.slane %v1559, 1
      %v1838 = vrot.slane %v1560, 1
      %v1839 = vsel %vm1773, %v1837, %v1838
      %v1840 = vrot.slane %v1561, 1
      %v1841 = vrot.slane %v1562, 1
      %v1842 = vsel %vm1773, %v1840, %v1841
      %v1843 = vrot.slane %v1563, 1
      %v1844 = vrot.slane %v1564, 1
      %v1845 = vsel %vm1773, %v1843, %v1844
      %v1846 = vrot.slane %v1565, 1
      %v1847 = vrot.slane %v1566, 1
      %v1848 = vsel %vm1773, %v1846, %v1847
      %v1849 = vrot.slane %v1567, 1
      %v1850 = vrot.slane %v1568, 1
      %v1851 = vsel %vm1773, %v1849, %v1850
      %v1852 = vrot.slane %v1569, 1
      %v1853 = vrot.slane %v1570, 1
      %v1854 = vsel %vm1773, %v1852, %v1853
      %v1855 = vrot.slane %v1571, 1
      %v1856 = vrot.slane %v1572, 1
      %v1857 = vsel %vm1773, %v1855, %v1856
      %v1858 = vrot.slane %v1573, 1
      %v1859 = vrot.slane %v1574, 1
      %v1860 = vsel %vm1773, %v1858, %v1859
      %v1861 = vrot.slane %v1575, 1
      %v1862 = vrot.slane %v1576, 1
      %v1863 = vsel %vm1773, %v1861, %v1862
      %v1864 = vrot.slane %v1577, 1
      %v1865 = vrot.slane %v1578, 1
      %v1866 = vsel %vm1773, %v1864, %v1865
      %v1867 = vrot.slane %v1579, 1
      %v1868 = vrot.slane %v1580, 1
      %v1869 = vsel %vm1773, %v1867, %v1868
      %v1870 = vrot.slane %v1581, 1
      %v1871 = vrot.slane %v1582, 1
      %v1872 = vsel %vm1773, %v1870, %v1871
      %v1873 = vrot.slane %v1583, 1
      %v1874 = vrot.slane %v1584, 1
      %v1875 = vsel %vm1773, %v1873, %v1874
      %v1876 = vrot.slane %v1585, 1
      %v1877 = vrot.slane %v1586, 1
      %v1878 = vsel %vm1773, %v1876, %v1877
      %v1879 = vrot.slane %v1587, 1
      %v1880 = vrot.slane %v1588, 1
      %v1881 = vsel %vm1773, %v1879, %v1880
      %v1882 = vrot.slane %v1589, 1
      %v1883 = vrot.slane %v1590, 1
      %v1884 = vsel %vm1773, %v1882, %v1883
      %v1885 = vrot.slane %v1591, 1
      %v1886 = vrot.slane %v1592, 1
      %v1887 = vsel %vm1773, %v1885, %v1886
      %v1888 = vrot.slane %v1593, 1
      %v1889 = vrot.slane %v1594, 1
      %v1890 = vsel %vm1773, %v1888, %v1889
      %v1891 = vrot.slane %v1595, 1
      %v1892 = vrot.slane %v1596, 1
      %v1893 = vsel %vm1773, %v1891, %v1892
      %v1894 = vrot.slane %v1597, 1
      %v1895 = vrot.slane %v1598, 1
      %v1896 = vsel %vm1773, %v1894, %v1895
      %v1897 = vrot.slane %v1599, 1
      %v1898 = vrot.slane %v1600, 1
      %v1899 = vsel %vm1773, %v1897, %v1898
      %v1900 = vrot.slane %v1601, 1
      %v1901 = vrot.slane %v1602, 1
      %v1902 = vsel %vm1773, %v1900, %v1901
      %v1903 = vrot.slane %v1603, 1
      %v1904 = vrot.slane %v1604, 1
      %v1905 = vsel %vm1773, %v1903, %v1904
      %v1906 = vrot.slane %v1605, 1
      %v1907 = vrot.slane %v1606, 1
      %v1908 = vsel %vm1773, %v1906, %v1907
      %v1909 = vrot.slane %v1607, 1
      %v1910 = vrot.slane %v1608, 1
      %v1911 = vsel %vm1773, %v1909, %v1910
      %v1912 = vrot.slane %v1609, 1
      %v1913 = vrot.slane %v1610, 1
      %v1914 = vsel %vm1773, %v1912, %v1913
      %v1915 = vrot.slane %v1611, 1
      %v1916 = vrot.slane %v1612, 1
      %v1917 = vsel %vm1773, %v1915, %v1916
      %v1918 = vrot.slane %v1613, 1
      %v1919 = vrot.slane %v1614, 1
      %v1920 = vsel %vm1773, %v1918, %v1919
      %v1921 = vrot.slane %v1615, 1
      %v1922 = vrot.slane %v1616, 1
      %v1923 = vsel %vm1773, %v1921, %v1922
      %v1924 = vrot.slane %v1617, 1
      %v1925 = vrot.slane %v1618, 1
      %v1926 = vsel %vm1773, %v1924, %v1925
      %v1927 = vrot.slane %v1619, 1
      %v1928 = vrot.slane %v1620, 1
      %v1929 = vsel %vm1773, %v1927, %v1928
      %v1930 = vrot.slane %v1621, 1
      %v1931 = vrot.slane %v1622, 1
      %v1932 = vsel %vm1773, %v1930, %v1931
      %v1933 = vrot.slane %v1623, 1
      %v1934 = vrot.slane %v1624, 1
      %v1935 = vsel %vm1773, %v1933, %v1934
      %v1936 = vrot.slane %v1625, 1
      %v1937 = vrot.slane %v1626, 1
      %v1938 = vsel %vm1773, %v1936, %v1937
      %v1939 = vrot.slane %v1627, 1
      %v1940 = vrot.slane %v1628, 1
      %v1941 = vsel %vm1773, %v1939, %v1940
      %v1942 = vrot.slane %v1629, 1
      %v1943 = vrot.slane %v1630, 1
      %v1944 = vsel %vm1773, %v1942, %v1943
      %v1945 = vrot.slane %v1631, 1
      %v1946 = vrot.slane %v1632, 1
      %v1947 = vsel %vm1773, %v1945, %v1946
      %v1948 = vrot.slane %v1633, 1
      %v1949 = vrot.slane %v1634, 1
      %v1950 = vsel %vm1773, %v1948, %v1949
      %v1951 = vrot.slane %v1635, 1
      %v1952 = vrot.slane %v1636, 1
      %v1953 = vsel %vm1773, %v1951, %v1952
      %v1954 = vrot.slane %v1637, 1
      %v1955 = vrot.slane %v1638, 1
      %v1956 = vsel %vm1773, %v1954, %v1955
      %v1957 = vrot.slane %v1639, 1
      %v1958 = vrot.slane %v1640, 1
      %v1959 = vsel %vm1773, %v1957, %v1958
      %v1960 = vrot.slane %v1641, 1
      %v1961 = vrot.slane %v1642, 1
      %v1962 = vsel %vm1773, %v1960, %v1961
      %v1963 = vrot.slane %v1643, 1
      %v1964 = vrot.slane %v1644, 1
      %v1965 = vsel %vm1773, %v1963, %v1964
      %v2030 = vadd.f32 %v1449, %v1776
      %v2031 = vadd.f32 %v1450, %v1779
      %v2032 = vadd.f32 %v1451, %v1782
      %v2033 = vadd.f32 %v1452, %v1785
      %v2034 = vadd.f32 %v1453, %v1788
      %v2035 = vadd.f32 %v1454, %v1791
      %v2036 = vadd.f32 %v1455, %v1794
      %v2037 = vadd.f32 %v1456, %v1797
      %v2038 = vadd.f32 %v1457, %v1800
      %v2039 = vadd.f32 %v1458, %v1803
      %v2040 = vadd.f32 %v1459, %v1806
      %v2041 = vadd.f32 %v1460, %v1809
      %v2042 = vadd.f32 %v1461, %v1812
      %v2043 = vadd.f32 %v1462, %v1815
      %v2044 = vadd.f32 %v1463, %v1818
      %v2045 = vadd.f32 %v1464, %v1821
      %v2046 = vadd.f32 %v1465, %v1824
      %v2047 = vadd.f32 %v1466, %v1827
      %v2048 = vadd.f32 %v1467, %v1830
      %v2049 = vadd.f32 %v1468, %v1833
      %v2050 = vadd.f32 %v1469, %v1836
      %v2051 = vadd.f32 %v1470, %v1839
      %v2052 = vadd.f32 %v1471, %v1842
      %v2053 = vadd.f32 %v1472, %v1845
      %v2054 = vadd.f32 %v1473, %v1848
      %v2055 = vadd.f32 %v1474, %v1851
      %v2056 = vadd.f32 %v1475, %v1854
      %v2057 = vadd.f32 %v1476, %v1857
      %v2058 = vadd.f32 %v1477, %v1860
      %v2059 = vadd.f32 %v1478, %v1863
      %v2060 = vadd.f32 %v1479, %v1866
      %v2061 = vadd.f32 %v1480, %v1869
      %v2062 = vadd.f32 %v1481, %v1872
      %v2063 = vadd.f32 %v1482, %v1875
      %v2064 = vadd.f32 %v1483, %v1878
      %v2065 = vadd.f32 %v1484, %v1881
      %v2066 = vadd.f32 %v1485, %v1884
      %v2067 = vadd.f32 %v1486, %v1887
      %v2068 = vadd.f32 %v1487, %v1890
      %v2069 = vadd.f32 %v1488, %v1893
      %v2070 = vadd.f32 %v1489, %v1896
      %v2071 = vadd.f32 %v1490, %v1899
      %v2072 = vadd.f32 %v1491, %v1902
      %v2073 = vadd.f32 %v1492, %v1905
      %v2074 = vadd.f32 %v1493, %v1908
      %v2075 = vadd.f32 %v1494, %v1911
      %v2076 = vadd.f32 %v1495, %v1914
      %v2077 = vadd.f32 %v1496, %v1917
      %v2078 = vadd.f32 %v1497, %v1920
      %v2079 = vadd.f32 %v1498, %v1923
      %v2080 = vadd.f32 %v1499, %v1926
      %v2081 = vadd.f32 %v1500, %v1929
      %v2082 = vadd.f32 %v1501, %v1932
      %v2083 = vadd.f32 %v1502, %v1935
      %v2084 = vadd.f32 %v1503, %v1938
      %v2085 = vadd.f32 %v1504, %v1941
      %v2086 = vadd.f32 %v1505, %v1944
      %v2087 = vadd.f32 %v1506, %v1947
      %v2088 = vadd.f32 %v1507, %v1950
      %v2089 = vadd.f32 %v1508, %v1953
      %v2090 = vadd.f32 %v1509, %v1956
      %v2091 = vadd.f32 %v1510, %v1959
      %v2092 = vadd.f32 %v1511, %v1962
      %v2093 = vadd.f32 %v1512, %v1965
      %v2094 = vlaneseq
      %v2095 = vshrl.u32 %v2094, 7
      %v2096 = vsub.s32 2, %v2095
      %v2097 = vrot.slane %v1123, %v2096
      %v2098 = vmul.f32 %v1317, %v2097
      %v2099 = vmul.f32 %v1381, %v2097
      %v2100 = vmul.f32 %v1318, %v2097
      %v2101 = vmul.f32 %v1382, %v2097
      %v2102 = vmul.f32 %v1319, %v2097
      %v2103 = vmul.f32 %v1383, %v2097
      %v2104 = vmul.f32 %v1320, %v2097
      %v2105 = vmul.f32 %v1384, %v2097
      %v2106 = vmul.f32 %v1321, %v2097
      %v2107 = vmul.f32 %v1385, %v2097
      %v2108 = vmul.f32 %v1322, %v2097
      %v2109 = vmul.f32 %v1386, %v2097
      %v2110 = vmul.f32 %v1323, %v2097
      %v2111 = vmul.f32 %v1387, %v2097
      %v2112 = vmul.f32 %v1324, %v2097
      %v2113 = vmul.f32 %v1388, %v2097
      %v2114 = vmul.f32 %v1325, %v2097
      %v2115 = vmul.f32 %v1389, %v2097
      %v2116 = vmul.f32 %v1326, %v2097
      %v2117 = vmul.f32 %v1390, %v2097
      %v2118 = vmul.f32 %v1327, %v2097
      %v2119 = vmul.f32 %v1391, %v2097
      %v2120 = vmul.f32 %v1328, %v2097
      %v2121 = vmul.f32 %v1392, %v2097
      %v2122 = vmul.f32 %v1329, %v2097
      %v2123 = vmul.f32 %v1393, %v2097
      %v2124 = vmul.f32 %v1330, %v2097
      %v2125 = vmul.f32 %v1394, %v2097
      %v2126 = vmul.f32 %v1331, %v2097
      %v2127 = vmul.f32 %v1395, %v2097
      %v2128 = vmul.f32 %v1332, %v2097
      %v2129 = vmul.f32 %v1396, %v2097
      %v2130 = vmul.f32 %v1333, %v2097
      %v2131 = vmul.f32 %v1397, %v2097
      %v2132 = vmul.f32 %v1334, %v2097
      %v2133 = vmul.f32 %v1398, %v2097
      %v2134 = vmul.f32 %v1335, %v2097
      %v2135 = vmul.f32 %v1399, %v2097
      %v2136 = vmul.f32 %v1336, %v2097
      %v2137 = vmul.f32 %v1400, %v2097
      %v2138 = vmul.f32 %v1337, %v2097
      %v2139 = vmul.f32 %v1401, %v2097
      %v2140 = vmul.f32 %v1338, %v2097
      %v2141 = vmul.f32 %v1402, %v2097
      %v2142 = vmul.f32 %v1339, %v2097
      %v2143 = vmul.f32 %v1403, %v2097
      %v2144 = vmul.f32 %v1340, %v2097
      %v2145 = vmul.f32 %v1404, %v2097
      %v2146 = vmul.f32 %v1341, %v2097
      %v2147 = vmul.f32 %v1405, %v2097
      %v2148 = vmul.f32 %v1342, %v2097
      %v2149 = vmul.f32 %v1406, %v2097
      %v2150 = vmul.f32 %v1343, %v2097
      %v2151 = vmul.f32 %v1407, %v2097
      %v2152 = vmul.f32 %v1344, %v2097
      %v2153 = vmul.f32 %v1408, %v2097
      %v2154 = vmul.f32 %v1345, %v2097
      %v2155 = vmul.f32 %v1409, %v2097
      %v2156 = vmul.f32 %v1346, %v2097
      %v2157 = vmul.f32 %v1410, %v2097
      %v2158 = vmul.f32 %v1347, %v2097
      %v2159 = vmul.f32 %v1411, %v2097
      %v2160 = vmul.f32 %v1348, %v2097
      %v2161 = vmul.f32 %v1412, %v2097
      %v2162 = vmul.f32 %v1349, %v2097
      %v2163 = vmul.f32 %v1413, %v2097
      %v2164 = vmul.f32 %v1350, %v2097
      %v2165 = vmul.f32 %v1414, %v2097
      %v2166 = vmul.f32 %v1351, %v2097
      %v2167 = vmul.f32 %v1415, %v2097
      %v2168 = vmul.f32 %v1352, %v2097
      %v2169 = vmul.f32 %v1416, %v2097
      %v2170 = vmul.f32 %v1353, %v2097
      %v2171 = vmul.f32 %v1417, %v2097
      %v2172 = vmul.f32 %v1354, %v2097
      %v2173 = vmul.f32 %v1418, %v2097
      %v2174 = vmul.f32 %v1355, %v2097
      %v2175 = vmul.f32 %v1419, %v2097
      %v2176 = vmul.f32 %v1356, %v2097
      %v2177 = vmul.f32 %v1420, %v2097
      %v2178 = vmul.f32 %v1357, %v2097
      %v2179 = vmul.f32 %v1421, %v2097
      %v2180 = vmul.f32 %v1358, %v2097
      %v2181 = vmul.f32 %v1422, %v2097
      %v2182 = vmul.f32 %v1359, %v2097
      %v2183 = vmul.f32 %v1423, %v2097
      %v2184 = vmul.f32 %v1360, %v2097
      %v2185 = vmul.f32 %v1424, %v2097
      %v2186 = vmul.f32 %v1361, %v2097
      %v2187 = vmul.f32 %v1425, %v2097
      %v2188 = vmul.f32 %v1362, %v2097
      %v2189 = vmul.f32 %v1426, %v2097
      %v2190 = vmul.f32 %v1363, %v2097
      %v2191 = vmul.f32 %v1427, %v2097
      %v2192 = vmul.f32 %v1364, %v2097
      %v2193 = vmul.f32 %v1428, %v2097
      %v2194 = vmul.f32 %v1365, %v2097
      %v2195 = vmul.f32 %v1429, %v2097
      %v2196 = vmul.f32 %v1366, %v2097
      %v2197 = vmul.f32 %v1430, %v2097
      %v2198 = vmul.f32 %v1367, %v2097
      %v2199 = vmul.f32 %v1431, %v2097
      %v2200 = vmul.f32 %v1368, %v2097
      %v2201 = vmul.f32 %v1432, %v2097
      %v2202 = vmul.f32 %v1369, %v2097
      %v2203 = vmul.f32 %v1433, %v2097
      %v2204 = vmul.f32 %v1370, %v2097
      %v2205 = vmul.f32 %v1434, %v2097
      %v2206 = vmul.f32 %v1371, %v2097
      %v2207 = vmul.f32 %v1435, %v2097
      %v2208 = vmul.f32 %v1372, %v2097
      %v2209 = vmul.f32 %v1436, %v2097
      %v2210 = vmul.f32 %v1373, %v2097
      %v2211 = vmul.f32 %v1437, %v2097
      %v2212 = vmul.f32 %v1374, %v2097
      %v2213 = vmul.f32 %v1438, %v2097
      %v2214 = vmul.f32 %v1375, %v2097
      %v2215 = vmul.f32 %v1439, %v2097
      %v2216 = vmul.f32 %v1376, %v2097
      %v2217 = vmul.f32 %v1440, %v2097
      %v2218 = vmul.f32 %v1377, %v2097
      %v2219 = vmul.f32 %v1441, %v2097
      %v2220 = vmul.f32 %v1378, %v2097
      %v2221 = vmul.f32 %v1442, %v2097
      %v2222 = vmul.f32 %v1379, %v2097
      %v2223 = vmul.f32 %v1443, %v2097
      %v2224 = vmul.f32 %v1380, %v2097
      %v2225 = vmul.f32 %v1444, %v2097
      %vm2354 = vcmask 1045504
      %v2355 = vrot.slane %v2098, 2
      %v2356 = vrot.slane %v2099, 2
      %v2357 = vsel %vm2354, %v2355, %v2356
      %v2358 = vrot.slane %v2100, 2
      %v2359 = vrot.slane %v2101, 2
      %v2360 = vsel %vm2354, %v2358, %v2359
      %v2361 = vrot.slane %v2102, 2
      %v2362 = vrot.slane %v2103, 2
      %v2363 = vsel %vm2354, %v2361, %v2362
      %v2364 = vrot.slane %v2104, 2
      %v2365 = vrot.slane %v2105, 2
      %v2366 = vsel %vm2354, %v2364, %v2365
      %v2367 = vrot.slane %v2106, 2
      %v2368 = vrot.slane %v2107, 2
      %v2369 = vsel %vm2354, %v2367, %v2368
      %v2370 = vrot.slane %v2108, 2
      %v2371 = vrot.slane %v2109, 2
      %v2372 = vsel %vm2354, %v2370, %v2371
      %v2373 = vrot.slane %v2110, 2
      %v2374 = vrot.slane %v2111, 2
      %v2375 = vsel %vm2354, %v2373, %v2374
      %v2376 = vrot.slane %v2112, 2
      %v2377 = vrot.slane %v2113, 2
      %v2378 = vsel %vm2354, %v2376, %v2377
      %v2379 = vrot.slane %v2114, 2
      %v2380 = vrot.slane %v2115, 2
      %v2381 = vsel %vm2354, %v2379, %v2380
      %v2382 = vrot.slane %v2116, 2
      %v2383 = vrot.slane %v2117, 2
      %v2384 = vsel %vm2354, %v2382, %v2383
      %v2385 = vrot.slane %v2118, 2
      %v2386 = vrot.slane %v2119, 2
      %v2387 = vsel %vm2354, %v2385, %v2386
      %v2388 = vrot.slane %v2120, 2
      %v2389 = vrot.slane %v2121, 2
      %v2390 = vsel %vm2354, %v2388, %v2389
      %v2391 = vrot.slane %v2122, 2
      %v2392 = vrot.slane %v2123, 2
      %v2393 = vsel %vm2354, %v2391, %v2392
      %v2394 = vrot.slane %v2124, 2
      %v2395 = vrot.slane %v2125, 2
      %v2396 = vsel %vm2354, %v2394, %v2395
      %v2397 = vrot.slane %v2126, 2
      %v2398 = vrot.slane %v2127, 2
      %v2399 = vsel %vm2354, %v2397, %v2398
      %v2400 = vrot.slane %v2128, 2
      %v2401 = vrot.slane %v2129, 2
      %v2402 = vsel %vm2354, %v2400, %v2401
      %v2403 = vrot.slane %v2130, 2
      %v2404 = vrot.slane %v2131, 2
      %v2405 = vsel %vm2354, %v2403, %v2404
      %v2406 = vrot.slane %v2132, 2
      %v2407 = vrot.slane %v2133, 2
      %v2408 = vsel %vm2354, %v2406, %v2407
      %v2409 = vrot.slane %v2134, 2
      %v2410 = vrot.slane %v2135, 2
      %v2411 = vsel %vm2354, %v2409, %v2410
      %v2412 = vrot.slane %v2136, 2
      %v2413 = vrot.slane %v2137, 2
      %v2414 = vsel %vm2354, %v2412, %v2413
      %v2415 = vrot.slane %v2138, 2
      %v2416 = vrot.slane %v2139, 2
      %v2417 = vsel %vm2354, %v2415, %v2416
      %v2418 = vrot.slane %v2140, 2
      %v2419 = vrot.slane %v2141, 2
      %v2420 = vsel %vm2354, %v2418, %v2419
      %v2421 = vrot.slane %v2142, 2
      %v2422 = vrot.slane %v2143, 2
      %v2423 = vsel %vm2354, %v2421, %v2422
      %v2424 = vrot.slane %v2144, 2
      %v2425 = vrot.slane %v2145, 2
      %v2426 = vsel %vm2354, %v2424, %v2425
      %v2427 = vrot.slane %v2146, 2
      %v2428 = vrot.slane %v2147, 2
      %v2429 = vsel %vm2354, %v2427, %v2428
      %v2430 = vrot.slane %v2148, 2
      %v2431 = vrot.slane %v2149, 2
      %v2432 = vsel %vm2354, %v2430, %v2431
      %v2433 = vrot.slane %v2150, 2
      %v2434 = vrot.slane %v2151, 2
      %v2435 = vsel %vm2354, %v2433, %v2434
      %v2436 = vrot.slane %v2152, 2
      %v2437 = vrot.slane %v2153, 2
      %v2438 = vsel %vm2354, %v2436, %v2437
      %v2439 = vrot.slane %v2154, 2
      %v2440 = vrot.slane %v2155, 2
      %v2441 = vsel %vm2354, %v2439, %v2440
      %v2442 = vrot.slane %v2156, 2
      %v2443 = vrot.slane %v2157, 2
      %v2444 = vsel %vm2354, %v2442, %v2443
      %v2445 = vrot.slane %v2158, 2
      %v2446 = vrot.slane %v2159, 2
      %v2447 = vsel %vm2354, %v2445, %v2446
      %v2448 = vrot.slane %v2160, 2
      %v2449 = vrot.slane %v2161, 2
      %v2450 = vsel %vm2354, %v2448, %v2449
      %v2451 = vrot.slane %v2162, 2
      %v2452 = vrot.slane %v2163, 2
      %v2453 = vsel %vm2354, %v2451, %v2452
      %v2454 = vrot.slane %v2164, 2
      %v2455 = vrot.slane %v2165, 2
      %v2456 = vsel %vm2354, %v2454, %v2455
      %v2457 = vrot.slane %v2166, 2
      %v2458 = vrot.slane %v2167, 2
      %v2459 = vsel %vm2354, %v2457, %v2458
      %v2460 = vrot.slane %v2168, 2
      %v2461 = vrot.slane %v2169, 2
      %v2462 = vsel %vm2354, %v2460, %v2461
      %v2463 = vrot.slane %v2170, 2
      %v2464 = vrot.slane %v2171, 2
      %v2465 = vsel %vm2354, %v2463, %v2464
      %v2466 = vrot.slane %v2172, 2
      %v2467 = vrot.slane %v2173, 2
      %v2468 = vsel %vm2354, %v2466, %v2467
      %v2469 = vrot.slane %v2174, 2
      %v2470 = vrot.slane %v2175, 2
      %v2471 = vsel %vm2354, %v2469, %v2470
      %v2472 = vrot.slane %v2176, 2
      %v2473 = vrot.slane %v2177, 2
      %v2474 = vsel %vm2354, %v2472, %v2473
      %v2475 = vrot.slane %v2178, 2
      %v2476 = vrot.slane %v2179, 2
      %v2477 = vsel %vm2354, %v2475, %v2476
      %v2478 = vrot.slane %v2180, 2
      %v2479 = vrot.slane %v2181, 2
      %v2480 = vsel %vm2354, %v2478, %v2479
      %v2481 = vrot.slane %v2182, 2
      %v2482 = vrot.slane %v2183, 2
      %v2483 = vsel %vm2354, %v2481, %v2482
      %v2484 = vrot.slane %v2184, 2
      %v2485 = vrot.slane %v2185, 2
      %v2486 = vsel %vm2354, %v2484, %v2485
      %v2487 = vrot.slane %v2186, 2
      %v2488 = vrot.slane %v2187, 2
      %v2489 = vsel %vm2354, %v2487, %v2488
      %v2490 = vrot.slane %v2188, 2
      %v2491 = vrot.slane %v2189, 2
      %v2492 = vsel %vm2354, %v2490, %v2491
      %v2493 = vrot.slane %v2190, 2
      %v2494 = vrot.slane %v2191, 2
      %v2495 = vsel %vm2354, %v2493, %v2494
      %v2496 = vrot.slane %v2192, 2
      %v2497 = vrot.slane %v2193, 2
      %v2498 = vsel %vm2354, %v2496, %v2497
      %v2499 = vrot.slane %v2194, 2
      %v2500 = vrot.slane %v2195, 2
      %v2501 = vsel %vm2354, %v2499, %v2500
      %v2502 = vrot.slane %v2196, 2
      %v2503 = vrot.slane %v2197, 2
      %v2504 = vsel %vm2354, %v2502, %v2503
      %v2505 = vrot.slane %v2198, 2
      %v2506 = vrot.slane %v2199, 2
      %v2507 = vsel %vm2354, %v2505, %v2506
      %v2508 = vrot.slane %v2200, 2
      %v2509 = vrot.slane %v2201, 2
      %v2510 = vsel %vm2354, %v2508, %v2509
      %v2511 = vrot.slane %v2202, 2
      %v2512 = vrot.slane %v2203, 2
      %v2513 = vsel %vm2354, %v2511, %v2512
      %v2514 = vrot.slane %v2204, 2
      %v2515 = vrot.slane %v2205, 2
      %v2516 = vsel %vm2354, %v2514, %v2515
      %v2517 = vrot.slane %v2206, 2
      %v2518 = vrot.slane %v2207, 2
      %v2519 = vsel %vm2354, %v2517, %v2518
      %v2520 = vrot.slane %v2208, 2
      %v2521 = vrot.slane %v2209, 2
      %v2522 = vsel %vm2354, %v2520, %v2521
      %v2523 = vrot.slane %v2210, 2
      %v2524 = vrot.slane %v2211, 2
      %v2525 = vsel %vm2354, %v2523, %v2524
      %v2526 = vrot.slane %v2212, 2
      %v2527 = vrot.slane %v2213, 2
      %v2528 = vsel %vm2354, %v2526, %v2527
      %v2529 = vrot.slane %v2214, 2
      %v2530 = vrot.slane %v2215, 2
      %v2531 = vsel %vm2354, %v2529, %v2530
      %v2532 = vrot.slane %v2216, 2
      %v2533 = vrot.slane %v2217, 2
      %v2534 = vsel %vm2354, %v2532, %v2533
      %v2535 = vrot.slane %v2218, 2
      %v2536 = vrot.slane %v2219, 2
      %v2537 = vsel %vm2354, %v2535, %v2536
      %v2538 = vrot.slane %v2220, 2
      %v2539 = vrot.slane %v2221, 2
      %v2540 = vsel %vm2354, %v2538, %v2539
      %v2541 = vrot.slane %v2222, 2
      %v2542 = vrot.slane %v2223, 2
      %v2543 = vsel %vm2354, %v2541, %v2542
      %v2544 = vrot.slane %v2224, 2
      %v2545 = vrot.slane %v2225, 2
      %v2546 = vsel %vm2354, %v2544, %v2545
      %v2611 = vadd.f32 %v2030, %v2357
      %v2612 = vadd.f32 %v2031, %v2360
      %v2613 = vadd.f32 %v2032, %v2363
      %v2614 = vadd.f32 %v2033, %v2366
      %v2615 = vadd.f32 %v2034, %v2369
      %v2616 = vadd.f32 %v2035, %v2372
      %v2617 = vadd.f32 %v2036, %v2375
      %v2618 = vadd.f32 %v2037, %v2378
      %v2619 = vadd.f32 %v2038, %v2381
      %v2620 = vadd.f32 %v2039, %v2384
      %v2621 = vadd.f32 %v2040, %v2387
      %v2622 = vadd.f32 %v2041, %v2390
      %v2623 = vadd.f32 %v2042, %v2393
      %v2624 = vadd.f32 %v2043, %v2396
      %v2625 = vadd.f32 %v2044, %v2399
      %v2626 = vadd.f32 %v2045, %v2402
      %v2627 = vadd.f32 %v2046, %v2405
      %v2628 = vadd.f32 %v2047, %v2408
      %v2629 = vadd.f32 %v2048, %v2411
      %v2630 = vadd.f32 %v2049, %v2414
      %v2631 = vadd.f32 %v2050, %v2417
      %v2632 = vadd.f32 %v2051, %v2420
      %v2633 = vadd.f32 %v2052, %v2423
      %v2634 = vadd.f32 %v2053, %v2426
      %v2635 = vadd.f32 %v2054, %v2429
      %v2636 = vadd.f32 %v2055, %v2432
      %v2637 = vadd.f32 %v2056, %v2435
      %v2638 = vadd.f32 %v2057, %v2438
      %v2639 = vadd.f32 %v2058, %v2441
      %v2640 = vadd.f32 %v2059, %v2444
      %v2641 = vadd.f32 %v2060, %v2447
      %v2642 = vadd.f32 %v2061, %v2450
      %v2643 = vadd.f32 %v2062, %v2453
      %v2644 = vadd.f32 %v2063, %v2456
      %v2645 = vadd.f32 %v2064, %v2459
      %v2646 = vadd.f32 %v2065, %v2462
      %v2647 = vadd.f32 %v2066, %v2465
      %v2648 = vadd.f32 %v2067, %v2468
      %v2649 = vadd.f32 %v2068, %v2471
      %v2650 = vadd.f32 %v2069, %v2474
      %v2651 = vadd.f32 %v2070, %v2477
      %v2652 = vadd.f32 %v2071, %v2480
      %v2653 = vadd.f32 %v2072, %v2483
      %v2654 = vadd.f32 %v2073, %v2486
      %v2655 = vadd.f32 %v2074, %v2489
      %v2656 = vadd.f32 %v2075, %v2492
      %v2657 = vadd.f32 %v2076, %v2495
      %v2658 = vadd.f32 %v2077, %v2498
      %v2659 = vadd.f32 %v2078, %v2501
      %v2660 = vadd.f32 %v2079, %v2504
      %v2661 = vadd.f32 %v2080, %v2507
      %v2662 = vadd.f32 %v2081, %v2510
      %v2663 = vadd.f32 %v2082, %v2513
      %v2664 = vadd.f32 %v2083, %v2516
      %v2665 = vadd.f32 %v2084, %v2519
      %v2666 = vadd.f32 %v2085, %v2522
      %v2667 = vadd.f32 %v2086, %v2525
      %v2668 = vadd.f32 %v2087, %v2528
      %v2669 = vadd.f32 %v2088, %v2531
      %v2670 = vadd.f32 %v2089, %v2534
      %v2671 = vadd.f32 %v2090, %v2537
      %v2672 = vadd.f32 %v2091, %v2540
      %v2673 = vadd.f32 %v2092, %v2543
      %v2674 = vadd.f32 %v2093, %v2546
      %v2675 = vld [vmem:[%s6] sm:$0x1]
      %v2677 = vlaneseq
      %v2678 = vshrl.u32 %v2677, 7
      %v2679 = vsub.s32 0, %v2678
      %v2680 = vrot.slane %v2675, %v2679
      %v2682 = vadd.f32 %v2611, %v2680
      %v2683 = vadd.f32 %v2612, %v2680
      %v2684 = vadd.f32 %v2613, %v2680
      %v2685 = vadd.f32 %v2614, %v2680
      %v2686 = vadd.f32 %v2615, %v2680
      %v2687 = vadd.f32 %v2616, %v2680
      %v2688 = vadd.f32 %v2617, %v2680
      %v2689 = vadd.f32 %v2618, %v2680
      %v2690 = vadd.f32 %v2619, %v2680
      %v2691 = vadd.f32 %v2620, %v2680
      %v2692 = vadd.f32 %v2621, %v2680
      %v2693 = vadd.f32 %v2622, %v2680
      %v2694 = vadd.f32 %v2623, %v2680
      %v2695 = vadd.f32 %v2624, %v2680
      %v2696 = vadd.f32 %v2625, %v2680
      %v2697 = vadd.f32 %v2626, %v2680
      %v2698 = vadd.f32 %v2627, %v2680
      %v2699 = vadd.f32 %v2628, %v2680
      %v2700 = vadd.f32 %v2629, %v2680
      %v2701 = vadd.f32 %v2630, %v2680
      %v2702 = vadd.f32 %v2631, %v2680
      %v2703 = vadd.f32 %v2632, %v2680
      %v2704 = vadd.f32 %v2633, %v2680
      %v2705 = vadd.f32 %v2634, %v2680
      %v2706 = vadd.f32 %v2635, %v2680
      %v2707 = vadd.f32 %v2636, %v2680
      %v2708 = vadd.f32 %v2637, %v2680
      %v2709 = vadd.f32 %v2638, %v2680
      %v2710 = vadd.f32 %v2639, %v2680
      %v2711 = vadd.f32 %v2640, %v2680
      %v2712 = vadd.f32 %v2641, %v2680
      %v2713 = vadd.f32 %v2642, %v2680
      %v2714 = vadd.f32 %v2643, %v2680
      %v2715 = vadd.f32 %v2644, %v2680
      %v2716 = vadd.f32 %v2645, %v2680
      %v2717 = vadd.f32 %v2646, %v2680
      %v2718 = vadd.f32 %v2647, %v2680
      %v2719 = vadd.f32 %v2648, %v2680
      %v2720 = vadd.f32 %v2649, %v2680
      %v2721 = vadd.f32 %v2650, %v2680
      %v2722 = vadd.f32 %v2651, %v2680
      %v2723 = vadd.f32 %v2652, %v2680
      %v2724 = vadd.f32 %v2653, %v2680
      %v2725 = vadd.f32 %v2654, %v2680
      %v2726 = vadd.f32 %v2655, %v2680
      %v2727 = vadd.f32 %v2656, %v2680
      %v2728 = vadd.f32 %v2657, %v2680
      %v2729 = vadd.f32 %v2658, %v2680
      %v2730 = vadd.f32 %v2659, %v2680
      %v2731 = vadd.f32 %v2660, %v2680
      %v2732 = vadd.f32 %v2661, %v2680
      %v2733 = vadd.f32 %v2662, %v2680
      %v2734 = vadd.f32 %v2663, %v2680
      %v2735 = vadd.f32 %v2664, %v2680
      %v2736 = vadd.f32 %v2665, %v2680
      %v2737 = vadd.f32 %v2666, %v2680
      %v2738 = vadd.f32 %v2667, %v2680
      %v2739 = vadd.f32 %v2668, %v2680
      %v2740 = vadd.f32 %v2669, %v2680
      %v2741 = vadd.f32 %v2670, %v2680
      %v2742 = vadd.f32 %v2671, %v2680
      %v2743 = vadd.f32 %v2672, %v2680
      %v2744 = vadd.f32 %v2673, %v2680
      %v2745 = vadd.f32 %v2674, %v2680
      %vm2746 = vcmask 31744
      %2747 = vst.msk [vmem:[%s278] sm:$0xff] %vm2746, %v2682
      %2748 = vst.msk [vmem:[%s278 + $0x8] sm:$0xff] %vm2746, %v2683
      %2749 = vst.msk [vmem:[%s278 + $0x10] sm:$0xff] %vm2746, %v2684
      %2750 = vst.msk [vmem:[%s278 + $0x18] sm:$0xff] %vm2746, %v2685
      %2751 = vst.msk [vmem:[%s278 + $0x20] sm:$0xff] %vm2746, %v2686
      %2752 = vst.msk [vmem:[%s278 + $0x28] sm:$0xff] %vm2746, %v2687
      %2753 = vst.msk [vmem:[%s278 + $0x30] sm:$0xff] %vm2746, %v2688
      %2754 = vst.msk [vmem:[%s278 + $0x38] sm:$0xff] %vm2746, %v2689
      %2755 = vst.msk [vmem:[%s278 + $0x40] sm:$0xff] %vm2746, %v2690
      %2756 = vst.msk [vmem:[%s278 + $0x48] sm:$0xff] %vm2746, %v2691
      %2757 = vst.msk [vmem:[%s278 + $0x50] sm:$0xff] %vm2746, %v2692
      %2758 = vst.msk [vmem:[%s278 + $0x58] sm:$0xff] %vm2746, %v2693
      %2759 = vst.msk [vmem:[%s278 + $0x60] sm:$0xff] %vm2746, %v2694
      %2760 = vst.msk [vmem:[%s278 + $0x68] sm:$0xff] %vm2746, %v2695
      %2761 = vst.msk [vmem:[%s278 + $0x70] sm:$0xff] %vm2746, %v2696
      %2762 = vst.msk [vmem:[%s278 + $0x78] sm:$0xff] %vm2746, %v2697
      %2763 = vst.msk [vmem:[%s278 + $0x80] sm:$0xff] %vm2746, %v2698
      %2764 = vst.msk [vmem:[%s278 + $0x88] sm:$0xff] %vm2746, %v2699
      %2765 = vst.msk [vmem:[%s278 + $0x90] sm:$0xff] %vm2746, %v2700
      %2766 = vst.msk [vmem:[%s278 + $0x98] sm:$0xff] %vm2746, %v2701
      %2767 = vst.msk [vmem:[%s278 + $0xa0] sm:$0xff] %vm2746, %v2702
      %2768 = vst.msk [vmem:[%s278 + $0xa8] sm:$0xff] %vm2746, %v2703
      %2769 = vst.msk [vmem:[%s278 + $0xb0] sm:$0xff] %vm2746, %v2704
      %2770 = vst.msk [vmem:[%s278 + $0xb8] sm:$0xff] %vm2746, %v2705
      %2771 = vst.msk [vmem:[%s278 + $0xc0] sm:$0xff] %vm2746, %v2706
      %2772 = vst.msk [vmem:[%s278 + $0xc8] sm:$0xff] %vm2746, %v2707
      %2773 = vst.msk [vmem:[%s278 + $0xd0] sm:$0xff] %vm2746, %v2708
      %2774 = vst.msk [vmem:[%s278 + $0xd8] sm:$0xff] %vm2746, %v2709
      %2775 = vst.msk [vmem:[%s278 + $0xe0] sm:$0xff] %vm2746, %v2710
      %2776 = vst.msk [vmem:[%s278 + $0xe8] sm:$0xff] %vm2746, %v2711
      %2777 = vst.msk [vmem:[%s278 + $0xf0] sm:$0xff] %vm2746, %v2712
      %2778 = vst.msk [vmem:[%s278 + $0xf8] sm:$0xff] %vm2746, %v2713
      %2779 = vst.msk [vmem:[%s278 + $0x100] sm:$0xff] %vm2746, %v2714
      %2780 = vst.msk [vmem:[%s278 + $0x108] sm:$0xff] %vm2746, %v2715
      %2781 = vst.msk [vmem:[%s278 + $0x110] sm:$0xff] %vm2746, %v2716
      %2782 = vst.msk [vmem:[%s278 + $0x118] sm:$0xff] %vm2746, %v2717
      %2783 = vst.msk [vmem:[%s278 + $0x120] sm:$0xff] %vm2746, %v2718
      %2784 = vst.msk [vmem:[%s278 + $0x128] sm:$0xff] %vm2746, %v2719
      %2785 = vst.msk [vmem:[%s278 + $0x130] sm:$0xff] %vm2746, %v2720
      %2786 = vst.msk [vmem:[%s278 + $0x138] sm:$0xff] %vm2746, %v2721
      %2787 = vst.msk [vmem:[%s278 + $0x140] sm:$0xff] %vm2746, %v2722
      %2788 = vst.msk [vmem:[%s278 + $0x148] sm:$0xff] %vm2746, %v2723
      %2789 = vst.msk [vmem:[%s278 + $0x150] sm:$0xff] %vm2746, %v2724
      %2790 = vst.msk [vmem:[%s278 + $0x158] sm:$0xff] %vm2746, %v2725
      %2791 = vst.msk [vmem:[%s278 + $0x160] sm:$0xff] %vm2746, %v2726
      %2792 = vst.msk [vmem:[%s278 + $0x168] sm:$0xff] %vm2746, %v2727
      %2793 = vst.msk [vmem:[%s278 + $0x170] sm:$0xff] %vm2746, %v2728
      %2794 = vst.msk [vmem:[%s278 + $0x178] sm:$0xff] %vm2746, %v2729
      %2795 = vst.msk [vmem:[%s278 + $0x180] sm:$0xff] %vm2746, %v2730
      %2796 = vst.msk [vmem:[%s278 + $0x188] sm:$0xff] %vm2746, %v2731
      %2797 = vst.msk [vmem:[%s278 + $0x190] sm:$0xff] %vm2746, %v2732
      %2798 = vst.msk [vmem:[%s278 + $0x198] sm:$0xff] %vm2746, %v2733
      %2799 = vst.msk [vmem:[%s278 + $0x1a0] sm:$0xff] %vm2746, %v2734
      %2800 = vst.msk [vmem:[%s278 + $0x1a8] sm:$0xff] %vm2746, %v2735
      %2801 = vst.msk [vmem:[%s278 + $0x1b0] sm:$0xff] %vm2746, %v2736
      %2802 = vst.msk [vmem:[%s278 + $0x1b8] sm:$0xff] %vm2746, %v2737
      %2803 = vst.msk [vmem:[%s278 + $0x1c0] sm:$0xff] %vm2746, %v2738
      %2804 = vst.msk [vmem:[%s278 + $0x1c8] sm:$0xff] %vm2746, %v2739
      %2805 = vst.msk [vmem:[%s278 + $0x1d0] sm:$0xff] %vm2746, %v2740
      %2806 = vst.msk [vmem:[%s278 + $0x1d8] sm:$0xff] %vm2746, %v2741
      %2807 = vst.msk [vmem:[%s278 + $0x1e0] sm:$0xff] %vm2746, %v2742
      %2808 = vst.msk [vmem:[%s278 + $0x1e8] sm:$0xff] %vm2746, %v2743
      %2809 = vst.msk [vmem:[%s278 + $0x1f0] sm:$0xff] %vm2746, %v2744
      %2810 = vst.msk [vmem:[%s278 + $0x1f8] sm:$0xff] %vm2746, %v2745
      %p2811 = scmp.lt.s32.totalorder %s18, 1
      %s2812 = scalar_select %p2811, %s18, 1
      %s2813 = smul.addr %s2812, 64
      %s2814 = smul.addr %s2813, 8
      %s2815 = scalar_lea.vmem %s7, %s2814
      // Predicated region
      $region49: #{asym_bottleneck_forward.4} parent=47 // pred_check
        %p2816 = pneg %p188
      $region50: #{asym_bottleneck_forward.4} parent=47 // pred_check_branch
        %2818 = sbr.rel (%p2816) target = $region52
      $region51: #{asym_bottleneck_forward.4} parent=47 // pred_region
        _
      $region52: #{asym_bottleneck_forward.4} parent=47 // pred_fallthru
        _
    $region48: #{asym_bottleneck_forward.4} parent=5 // pred_fallthru
      _
    %p2819 = scmp.le.s32.totalorder 2, %s13
    // Predicated region
    $region53: #{asym_bottleneck_forward.4} parent=5 // pred_check
      %p2820 = pneg %p2819
    $region54: #{asym_bottleneck_forward.4} parent=5 // pred_check_branch
      %2822 = sbr.rel (%p2820) target = $region56
    $region55: #{asym_bottleneck_forward.4} parent=5 // pred_region
      %s2823 = ssub.s32 %s13, 2
      // Predicated region
      $region57: #{asym_bottleneck_forward.4} parent=55 // pred_check
        %p2824 = pneg %p194
      $region58: #{asym_bottleneck_forward.4} parent=55 // pred_check_branch
        %2826 = sbr.rel (%p2824) target = $region60
      $region59: #{asym_bottleneck_forward.4} parent=55 // pred_region
        %p2827 = scmp.lt.s32.totalorder %s19, 1
        %s2828 = scalar_select %p2827, %s19, 1
        %s2829 = smul.addr %s2828, 64
        %s2830 = smul.addr %s2829, 8
        %s2831 = scalar_lea.vmem %s7, %s2830
      $region60: #{asym_bottleneck_forward.4} parent=55 // pred_fallthru
        _
    $region56: #{asym_bottleneck_forward.4} parent=5 // pred_fallthru
      _
  $region6: #{asym_bottleneck_forward.4} parent=0 // loop_footer
    %s17 = sadd.s32 1, %s13
  $region7: #{asym_bottleneck_forward.4} parent=0 // loop_footer_branch
    %12 = sbr.rel target = $region3
  $region8: #{asym_bottleneck_forward.4} parent=0 // loop_exit
    _

// kernel: asym_bottleneck_forward.5
$region0: #{asym_bottleneck_forward.5}
  #allocation0 [shape = 'u32[]', space=smem, size = 0x4, offset = 0x4, fixed_abs, tag = 'smem constant byte address 0x4 - core index']
  #allocation1 [shape = 'u32[144,128]{1,0:T(1,128)}', space=vmem, size = 0x12000, scoped, tag = 'internal scratch']
  %s0 = inlined_call_operand.vmem [shape: f32[1024,4], index: 0, kind: input, shape index: {}]
  %s1 = inlined_call_operand.vmem [shape: f32[1024,8], index: 1, kind: input, shape index: {}]
  %s2 = inlined_call_operand.vmem [shape: f32[4,4], index: 2, kind: input, shape index: {}]
  %s3 = inlined_call_operand.vmem [shape: f32[1,4], index: 3, kind: input, shape index: {}]
  %s4 = inlined_call_operand.vmem [shape: f32[1,4], index: 4, kind: input, shape index: {}]
  %s5 = inlined_call_operand.vmem [shape: f32[4,16], index: 5, kind: input, shape index: {}]
  %s6 = inlined_call_operand.vmem [shape: f32[1,16], index: 6, kind: input, shape index: {}]
  %s7 = inlined_call_operand.vmem [shape: f32[1,16], index: 7, kind: input, shape index: {}]
  %s8 = inlined_call_operand.vmem [shape: f32[8,16], index: 8, kind: input, shape index: {}]
  %s9 = inlined_call_operand.vmem [shape: f32[1,16], index: 9, kind: input, shape index: {}]
  %s10 = inlined_call_operand.vmem [shape: f32[1,16], index: 10, kind: input, shape index: {}]
  %s11 = inlined_call_operand.hbm [shape: f32[1024,16], index: 11, kind: output, shape index: {}]
  %s12 = sld [smem:[#allocation0]]
  $region77: #{asym_bottleneck_forward.5} parent=0
    _
  %s14 = ssub.s32 1, %s12
  %s15 = scalar_select 0, %s14, %s12
  $region1: #{asym_bottleneck_forward.5} parent=0
    #allocation2 [shape = 'u8[524288]{0}', space=vmem, size = 0x80000, scoped, tag = 'output window, operand 0']
    #allocation3 [shape = 's32[2]{0}', space=sflag, size = 0x8, scoped, tag = 'scoped memory for asym_bottleneck_forward.5']
    %16 = vsyncpa [#allocation3], 0
    %s17 = scalar_lea.sflag [#allocation3], 1
    %18 = vsyncpa %s17, 0
    loop: start=0, step=1, limit=4
    $region2: #{asym_bottleneck_forward.5} parent=1 // loop_pre_header
      _
    $region3: #{asym_bottleneck_forward.5} parent=1 // loop_header
      %s20 = sphi 0, %s24
      %p21 = scmp.ge.s32.totalorder %s20, 4
      %s30 = sphi 0, %s32
      %s33 = sphi 0, %s30
      %s34 = sphi 0, %s33
      %s50 = sphi 0, %s34
      %s56 = sphi 0, %s58
      %s59 = sphi 0, %s56
      %s60 = sphi 0, %s59
      %s76 = sphi 0, %s60
      %s80 = sphi 0, %s80
      %s82 = sphi 0, %s80
      %s83 = sphi 0, %s82
      %s97 = sphi 0, %s83
      %s101 = sphi 0, %s101
      %s103 = sphi 0, %s101
      %s104 = sphi 0, %s103
      %s118 = sphi 0, %s104
      %s122 = sphi 0, %s122
      %s124 = sphi 0, %s122
      %s125 = sphi 0, %s124
      %s139 = sphi 0, %s125
      %s143 = sphi 0, %s143
      %s145 = sphi 0, %s143
      %s146 = sphi 0, %s145
      %s160 = sphi 0, %s146
      %s164 = sphi 0, %s164
      %s166 = sphi 0, %s164
      %s167 = sphi 0, %s166
      %s181 = sphi 0, %s167
      %s185 = sphi 0, %s185
      %s187 = sphi 0, %s185
      %s188 = sphi 0, %s187
      %s202 = sphi 0, %s188
      %s206 = sphi 0, %s206
      %s208 = sphi 0, %s206
      %s209 = sphi 0, %s208
      %s223 = sphi 0, %s209
      %s227 = sphi 0, %s227
      %s229 = sphi 0, %s227
      %s230 = sphi 0, %s229
      %s244 = sphi 0, %s230
      %s248 = sphi 0, %s248
      %s250 = sphi 0, %s248
      %s251 = sphi 0, %s250
      %s265 = sphi 0, %s251
      %s271 = sphi 0, %s273
      %s274 = sphi 0, %s271
      %s275 = sphi 0, %s274
      %s291 = sphi 0, %s275
    $region4: #{asym_bottleneck_forward.5} parent=1 // loop_header_branch
      %23 = sbr.rel (%p21) target = $region8
    $region5: #{asym_bottleneck_forward.5} parent=1 // loop_body
      %s25 = ssub.s32 %s20, 1
      %s26 = ssub.s32 %s20, 2
      %s27 = sadd.s32 %s20, 1
      %s28 = ssub.s32 %s20, %s27
      %p29 = scmp.eq.s32.totalorder %s28, 0
      %s31 = sadd.s32 %s30, 1
      %s32 = scalar_select %p29, %s30, %s31
      %p35 = pneg %p29
      %p36 = scmp.eq.s32.totalorder %s20, 1
      %p37 = por %p35, %p36
      %p38 = scmp.ne.s32.totalorder %s30, %s33
      %p39 = scmp.eq.s32.totalorder %s20, 0
      %p40 = por %p38, %p39
      %p41 = scmp.ne.s32.totalorder %s30, %s33
      %p42 = scmp.eq.s32.totalorder %s25, 1
      %p43 = por %p41, %p42
      %p44 = scmp.ne.s32.totalorder %s33, %s34
      %p45 = scmp.eq.s32.totalorder %s25, 0
      %p46 = por %p44, %p45
      %p47 = scmp.ne.s32.totalorder %s33, %s34
      %p48 = scmp.eq.s32.totalorder %s26, 1
      %p49 = por %p47, %p48
      %p51 = scmp.ne.s32.totalorder %s34, %s50
      %p52 = scmp.eq.s32.totalorder %s26, 0
      %p53 = por %p51, %p52
      %s54 = ssub.s32 %s20, %s27
      %p55 = scmp.eq.s32.totalorder %s54, 0
      %s57 = sadd.s32 %s56, 1
      %s58 = scalar_select %p55, %s56, %s57
      %p61 = pneg %p55
      %p62 = scmp.eq.s32.totalorder %s20, 1
      %p63 = por %p61, %p62
      %p64 = scmp.ne.s32.totalorder %s56, %s59
      %p65 = scmp.eq.s32.totalorder %s20, 0
      %p66 = por %p64, %p65
      %p67 = scmp.ne.s32.totalorder %s56, %s59
      %p68 = scmp.eq.s32.totalorder %s25, 1
      %p69 = por %p67, %p68
      %p70 = scmp.ne.s32.totalorder %s59, %s60
      %p71 = scmp.eq.s32.totalorder %s25, 0
      %p72 = por %p70, %p71
      %p73 = scmp.ne.s32.totalorder %s59, %s60
      %p74 = scmp.eq.s32.totalorder %s26, 1
      %p75 = por %p73, %p74
      %p77 = scmp.ne.s32.totalorder %s60, %s76
      %p78 = scmp.eq.s32.totalorder %s26, 0
      %p79 = por %p77, %p78
      %s81 = sadd.s32 %s80, 1
      %p84 = scmp.eq.s32.totalorder %s20, 1
      %p85 = scmp.ne.s32.totalorder %s80, %s82
      %p86 = scmp.eq.s32.totalorder %s20, 0
      %p87 = por %p85, %p86
      %p88 = scmp.ne.s32.totalorder %s80, %s82
      %p89 = scmp.eq.s32.totalorder %s25, 1
      %p90 = por %p88, %p89
      %p91 = scmp.ne.s32.totalorder %s82, %s83
      %p92 = scmp.eq.s32.totalorder %s25, 0
      %p93 = por %p91, %p92
      %p94 = scmp.ne.s32.totalorder %s82, %s83
      %p95 = scmp.eq.s32.totalorder %s26, 1
      %p96 = por %p94, %p95
      %p98 = scmp.ne.s32.totalorder %s83, %s97
      %p99 = scmp.eq.s32.totalorder %s26, 0
      %p100 = por %p98, %p99
      %s102 = sadd.s32 %s101, 1
      %p105 = scmp.eq.s32.totalorder %s20, 1
      %p106 = scmp.ne.s32.totalorder %s101, %s103
      %p107 = scmp.eq.s32.totalorder %s20, 0
      %p108 = por %p106, %p107
      %p109 = scmp.ne.s32.totalorder %s101, %s103
      %p110 = scmp.eq.s32.totalorder %s25, 1
      %p111 = por %p109, %p110
      %p112 = scmp.ne.s32.totalorder %s103, %s104
      %p113 = scmp.eq.s32.totalorder %s25, 0
      %p114 = por %p112, %p113
      %p115 = scmp.ne.s32.totalorder %s103, %s104
      %p116 = scmp.eq.s32.totalorder %s26, 1
      %p117 = por %p115, %p116
      %p119 = scmp.ne.s32.totalorder %s104, %s118
      %p120 = scmp.eq.s32.totalorder %s26, 0
      %p121 = por %p119, %p120
      %s123 = sadd.s32 %s122, 1
      %p126 = scmp.eq.s32.totalorder %s20, 1
      %p127 = scmp.ne.s32.totalorder %s122, %s124
      %p128 = scmp.eq.s32.totalorder %s20, 0
      %p129 = por %p127, %p128
      %p130 = scmp.ne.s32.totalorder %s122, %s124
      %p131 = scmp.eq.s32.totalorder %s25, 1
      %p132 = por %p130, %p131
      %p133 = scmp.ne.s32.totalorder %s124, %s125
      %p134 = scmp.eq.s32.totalorder %s25, 0
      %p135 = por %p133, %p134
      %p136 = scmp.ne.s32.totalorder %s124, %s125
      %p137 = scmp.eq.s32.totalorder %s26, 1
      %p138 = por %p136, %p137
      %p140 = scmp.ne.s32.totalorder %s125, %s139
      %p141 = scmp.eq.s32.totalorder %s26, 0
      %p142 = por %p140, %p141
      %s144 = sadd.s32 %s143, 1
      %p147 = scmp.eq.s32.totalorder %s20, 1
      %p148 = scmp.ne.s32.totalorder %s143, %s145
      %p149 = scmp.eq.s32.totalorder %s20, 0
      %p150 = por %p148, %p149
      %p151 = scmp.ne.s32.totalorder %s143, %s145
      %p152 = scmp.eq.s32.totalorder %s25, 1
      %p153 = por %p151, %p152
      %p154 = scmp.ne.s32.totalorder %s145, %s146
      %p155 = scmp.eq.s32.totalorder %s25, 0
      %p156 = por %p154, %p155
      %p157 = scmp.ne.s32.totalorder %s145, %s146
      %p158 = scmp.eq.s32.totalorder %s26, 1
      %p159 = por %p157, %p158
      %p161 = scmp.ne.s32.totalorder %s146, %s160
      %p162 = scmp.eq.s32.totalorder %s26, 0
      %p163 = por %p161, %p162
      %s165 = sadd.s32 %s164, 1
      %p168 = scmp.eq.s32.totalorder %s20, 1
      %p169 = scmp.ne.s32.totalorder %s164, %s166
      %p170 = scmp.eq.s32.totalorder %s20, 0
      %p171 = por %p169, %p170
      %p172 = scmp.ne.s32.totalorder %s164, %s166
      %p173 = scmp.eq.s32.totalorder %s25, 1
      %p174 = por %p172, %p173
      %p175 = scmp.ne.s32.totalorder %s166, %s167
      %p176 = scmp.eq.s32.totalorder %s25, 0
      %p177 = por %p175, %p176
      %p178 = scmp.ne.s32.totalorder %s166, %s167
      %p179 = scmp.eq.s32.totalorder %s26, 1
      %p180 = por %p178, %p179
      %p182 = scmp.ne.s32.totalorder %s167, %s181
      %p183 = scmp.eq.s32.totalorder %s26, 0
      %p184 = por %p182, %p183
      %s186 = sadd.s32 %s185, 1
      %p189 = scmp.eq.s32.totalorder %s20, 1
      %p190 = scmp.ne.s32.totalorder %s185, %s187
      %p191 = scmp.eq.s32.totalorder %s20, 0
      %p192 = por %p190, %p191
      %p193 = scmp.ne.s32.totalorder %s185, %s187
      %p194 = scmp.eq.s32.totalorder %s25, 1
      %p195 = por %p193, %p194
      %p196 = scmp.ne.s32.totalorder %s187, %s188
      %p197 = scmp.eq.s32.totalorder %s25, 0
      %p198 = por %p196, %p197
      %p199 = scmp.ne.s32.totalorder %s187, %s188
      %p200 = scmp.eq.s32.totalorder %s26, 1
      %p201 = por %p199, %p200
      %p203 = scmp.ne.s32.totalorder %s188, %s202
      %p204 = scmp.eq.s32.totalorder %s26, 0
      %p205 = por %p203, %p204
      %s207 = sadd.s32 %s206, 1
      %p210 = scmp.eq.s32.totalorder %s20, 1
      %p211 = scmp.ne.s32.totalorder %s206, %s208
      %p212 = scmp.eq.s32.totalorder %s20, 0
      %p213 = por %p211, %p212
      %p214 = scmp.ne.s32.totalorder %s206, %s208
      %p215 = scmp.eq.s32.totalorder %s25, 1
      %p216 = por %p214, %p215
      %p217 = scmp.ne.s32.totalorder %s208, %s209
      %p218 = scmp.eq.s32.totalorder %s25, 0
      %p219 = por %p217, %p218
      %p220 = scmp.ne.s32.totalorder %s208, %s209
      %p221 = scmp.eq.s32.totalorder %s26, 1
      %p222 = por %p220, %p221
      %p224 = scmp.ne.s32.totalorder %s209, %s223
      %p225 = scmp.eq.s32.totalorder %s26, 0
      %p226 = por %p224, %p225
      %s228 = sadd.s32 %s227, 1
      %p231 = scmp.eq.s32.totalorder %s20, 1
      %p232 = scmp.ne.s32.totalorder %s227, %s229
      %p233 = scmp.eq.s32.totalorder %s20, 0
      %p234 = por %p232, %p233
      %p235 = scmp.ne.s32.totalorder %s227, %s229
      %p236 = scmp.eq.s32.totalorder %s25, 1
      %p237 = por %p235, %p236
      %p238 = scmp.ne.s32.totalorder %s229, %s230
      %p239 = scmp.eq.s32.totalorder %s25, 0
      %p240 = por %p238, %p239
      %p241 = scmp.ne.s32.totalorder %s229, %s230
      %p242 = scmp.eq.s32.totalorder %s26, 1
      %p243 = por %p241, %p242
      %p245 = scmp.ne.s32.totalorder %s230, %s244
      %p246 = scmp.eq.s32.totalorder %s26, 0
      %p247 = por %p245, %p246
      %s249 = sadd.s32 %s248, 1
      %p252 = scmp.eq.s32.totalorder %s20, 1
      %p253 = scmp.ne.s32.totalorder %s248, %s250
      %p254 = scmp.eq.s32.totalorder %s20, 0
      %p255 = por %p253, %p254
      %p256 = scmp.ne.s32.totalorder %s248, %s250
      %p257 = scmp.eq.s32.totalorder %s25, 1
      %p258 = por %p256, %p257
      %p259 = scmp.ne.s32.totalorder %s250, %s251
      %p260 = scmp.eq.s32.totalorder %s25, 0
      %p261 = por %p259, %p260
      %p262 = scmp.ne.s32.totalorder %s250, %s251
      %p263 = scmp.eq.s32.totalorder %s26, 1
      %p264 = por %p262, %p263
      %p266 = scmp.ne.s32.totalorder %s251, %s265
      %p267 = scmp.eq.s32.totalorder %s26, 0
      %p268 = por %p266, %p267
      %s269 = ssub.s32 %s20, %s27
      %p270 = scmp.eq.s32.totalorder %s269, 0
      %s272 = sadd.s32 %s271, 1
      %s273 = scalar_select %p270, %s271, %s272
      %p276 = pneg %p270
      %p277 = scmp.eq.s32.totalorder %s20, 1
      %p278 = por %p276, %p277
      %p279 = scmp.ne.s32.totalorder %s271, %s274
      %p280 = scmp.eq.s32.totalorder %s20, 0
      %p281 = por %p279, %p280
      %p282 = scmp.ne.s32.totalorder %s271, %s274
      %p283 = scmp.eq.s32.totalorder %s25, 1
      %p284 = por %p282, %p283
      %p285 = scmp.ne.s32.totalorder %s274, %s275
      %p286 = scmp.eq.s32.totalorder %s25, 0
      %p287 = por %p285, %p286
      %p288 = scmp.ne.s32.totalorder %s274, %s275
      %p289 = scmp.eq.s32.totalorder %s26, 1
      %p290 = por %p288, %p289
      %p292 = scmp.ne.s32.totalorder %s275, %s291
      %p293 = scmp.eq.s32.totalorder %s26, 0
      %p294 = por %p292, %p293
      %p295 = scmp.le.s32.totalorder 1, %s20
      %p296 = scmp.lt.s32.totalorder %s20, 3
      %p297 = pnand %p295, %p296
      %p298 = pneg %p297
      // Predicated region
      $region9: #{asym_bottleneck_forward.5} parent=5 // pred_check
        _
      $region10: #{asym_bottleneck_forward.5} parent=5 // pred_check_branch
        %300 = sbr.rel (%p297) target = $region12
      $region11: #{asym_bottleneck_forward.5} parent=5 // pred_region
        %s301 = ssub.s32 %s20, 1
        // Predicated region
        $region13: #{asym_bottleneck_forward.5} parent=11 // pred_check
          %p302 = pneg %p93
        $region14: #{asym_bottleneck_forward.5} parent=11 // pred_check_branch
          %304 = sbr.rel (%p302) target = $region16
        $region15: #{asym_bottleneck_forward.5} parent=11 // pred_region
          _
        $region16: #{asym_bottleneck_forward.5} parent=11 // pred_fallthru
          _
        // Predicated region
        $region17: #{asym_bottleneck_forward.5} parent=11 // pred_check
          %p305 = pneg %p114
        $region18: #{asym_bottleneck_forward.5} parent=11 // pred_check_branch
          %307 = sbr.rel (%p305) target = $region20
        $region19: #{asym_bottleneck_forward.5} parent=11 // pred_region
          _
        $region20: #{asym_bottleneck_forward.5} parent=11 // pred_fallthru
          _
        // Predicated region
        $region21: #{asym_bottleneck_forward.5} parent=11 // pred_check
          %p308 = pneg %p135
        $region22: #{asym_bottleneck_forward.5} parent=11 // pred_check_branch
          %310 = sbr.rel (%p308) target = $region24
        $region23: #{asym_bottleneck_forward.5} parent=11 // pred_region
          _
        $region24: #{asym_bottleneck_forward.5} parent=11 // pred_fallthru
          _
        // Predicated region
        $region25: #{asym_bottleneck_forward.5} parent=11 // pred_check
          %p311 = pneg %p156
        $region26: #{asym_bottleneck_forward.5} parent=11 // pred_check_branch
          %313 = sbr.rel (%p311) target = $region28
        $region27: #{asym_bottleneck_forward.5} parent=11 // pred_region
          _
        $region28: #{asym_bottleneck_forward.5} parent=11 // pred_fallthru
          _
        // Predicated region
        $region29: #{asym_bottleneck_forward.5} parent=11 // pred_check
          %p314 = pneg %p177
        $region30: #{asym_bottleneck_forward.5} parent=11 // pred_check_branch
          %316 = sbr.rel (%p314) target = $region32
        $region31: #{asym_bottleneck_forward.5} parent=11 // pred_region
          _
        $region32: #{asym_bottleneck_forward.5} parent=11 // pred_fallthru
          _
        // Predicated region
        $region33: #{asym_bottleneck_forward.5} parent=11 // pred_check
          %p317 = pneg %p198
        $region34: #{asym_bottleneck_forward.5} parent=11 // pred_check_branch
          %319 = sbr.rel (%p317) target = $region36
        $region35: #{asym_bottleneck_forward.5} parent=11 // pred_region
          _
        $region36: #{asym_bottleneck_forward.5} parent=11 // pred_fallthru
          _
        // Predicated region
        $region37: #{asym_bottleneck_forward.5} parent=11 // pred_check
          %p320 = pneg %p219
        $region38: #{asym_bottleneck_forward.5} parent=11 // pred_check_branch
          %322 = sbr.rel (%p320) target = $region40
        $region39: #{asym_bottleneck_forward.5} parent=11 // pred_region
          _
        $region40: #{asym_bottleneck_forward.5} parent=11 // pred_fallthru
          _
        // Predicated region
        $region41: #{asym_bottleneck_forward.5} parent=11 // pred_check
          %p323 = pneg %p240
        $region42: #{asym_bottleneck_forward.5} parent=11 // pred_check_branch
          %325 = sbr.rel (%p323) target = $region44
        $region43: #{asym_bottleneck_forward.5} parent=11 // pred_region
          _
        $region44: #{asym_bottleneck_forward.5} parent=11 // pred_fallthru
          _
        // Predicated region
        $region45: #{asym_bottleneck_forward.5} parent=11 // pred_check
          %p326 = pneg %p261
        $region46: #{asym_bottleneck_forward.5} parent=11 // pred_check_branch
          %328 = sbr.rel (%p326) target = $region48
        $region47: #{asym_bottleneck_forward.5} parent=11 // pred_region
          _
        $region48: #{asym_bottleneck_forward.5} parent=11 // pred_fallthru
          _
      $region12: #{asym_bottleneck_forward.5} parent=5 // pred_fallthru
        _
      %p329 = scmp.lt.s32.totalorder %s20, 2
      // Predicated region
      $region49: #{asym_bottleneck_forward.5} parent=5 // pred_check
        %p330 = pneg %p329
      $region50: #{asym_bottleneck_forward.5} parent=5 // pred_check_branch
        %332 = sbr.rel (%p330) target = $region52
      $region51: #{asym_bottleneck_forward.5} parent=5 // pred_region
        // Predicated region
        $region53: #{asym_bottleneck_forward.5} parent=51 // pred_check
          %p333 = pneg %p40
        $region54: #{asym_bottleneck_forward.5} parent=51 // pred_check_branch
          %335 = sbr.rel (%p333) target = $region56
        $region55: #{asym_bottleneck_forward.5} parent=51 // pred_region
          %s336 = smul.u32 64, %s20
          %p337 = scmp.lt.s32.totalorder %s336, 127
          %s338 = scalar_select %p337, %s336, 127
          %s339 = smul.addr %s338, 8
          %s340 = scalar_lea.vmem %s0, %s339
          %s341 = smul.u32 64, %s20
        $region56: #{asym_bottleneck_forward.5} parent=51 // pred_fallthru
          _
        // Predicated region
        $region57: #{asym_bottleneck_forward.5} parent=51 // pred_check
          %p342 = pneg %p66
        $region58: #{asym_bottleneck_forward.5} parent=51 // pred_check_branch
          %344 = sbr.rel (%p342) target = $region60
        $region59: #{asym_bottleneck_forward.5} parent=51 // pred_region
          %s345 = smul.u32 64, %s20
          %p346 = scmp.lt.s32.totalorder %s345, 127
          %s347 = scalar_select %p346, %s345, 127
          %s348 = smul.addr %s347, 8
          %s349 = scalar_lea.vmem %s1, %s348
          %s350 = smul.u32 64, %s20
        $region60: #{asym_bottleneck_forward.5} parent=51 // pred_fallthru
          _
      $region52: #{asym_bottleneck_forward.5} parent=5 // pred_fallthru
        _
      %p351 = scmp.le.s32.totalorder 1, %s20
      %p352 = scmp.lt.s32.totalorder %s20, 3
      %p353 = pnand %p351, %p352
      %p354 = pneg %p353
      // Predicated region
      $region61: #{asym_bottleneck_forward.5} parent=5 // pred_check
        _
      $region62: #{asym_bottleneck_forward.5} parent=5 // pred_check_branch
        %356 = sbr.rel (%p353) target = $region64
      $region63: #{asym_bottleneck_forward.5} parent=5 // pred_region
        %s357 = ssub.s32 %s20, 1
        %s358 = smul.u32 64, %s25
        %p359 = scmp.lt.s32.totalorder %s358, 127
        %s360 = scalar_select %p359, %s358, 127
        %s361 = smul.addr %s360, 8
        %s362 = scalar_lea.vmem %s0, %s361
        %p363 = pneg %p46
        %p364 = pneg %p43
        %s365 = smul.u32 64, %s25
        %p366 = scmp.lt.s32.totalorder %s365, 127
        %s367 = scalar_select %p366, %s365, 127
        %s368 = smul.addr %s367, 8
        %s369 = scalar_lea.vmem %s1, %s368
        %p370 = pneg %p72
        %p371 = pneg %p69
        %p372 = pneg %p93
        %p373 = pneg %p90
        %p374 = pneg %p114
        %p375 = pneg %p111
        %p376 = pneg %p135
        %p377 = pneg %p132
        %p378 = pneg %p156
        %p379 = pneg %p153
        %p380 = pneg %p177
        %p381 = pneg %p174
        %p382 = pneg %p198
        %p383 = pneg %p195
        %p384 = pneg %p219
        %p385 = pneg %p216
        %p386 = pneg %p240
        %p387 = pneg %p237
        %p388 = pneg %p261
        %p389 = pneg %p258
        %p390 = pneg %p287
        %p391 = pneg %p284
        %s392 = sand.u32 %s274, 1
        %s393 = scalar_lea.sflag [#allocation3], %s392
        %s394 = sand.u32 %s274, 1
        %s395 = smul.addr %s394, 512
        %s396 = scalar_lea.vmem [#allocation2], %s395
        %s397 = smul.u32 64, %s25
        %p398 = scmp.lt.s32.totalorder %s397, 127
        %s399 = scalar_select %p398, %s397, 127
        %s400 = smul.addr %s399, 8
        %s401 = scalar_lea.vmem %s0, %s400
        %s402 = smul.u32 64, %s25
        %s403 = smul.u32 64, %s25
        %p404 = scmp.lt.s32.totalorder %s403, 127
        %s405 = scalar_select %p404, %s403, 127
        %s406 = smul.addr %s405, 8
        %s407 = scalar_lea.vmem %s1, %s406
        %s408 = smul.u32 64, %s25
        %s409 = smul.u32 64, %s25
        %v410 = vld [vmem:[%s401] sm:$0xff]
        %v411 = vld [vmem:[%s401 + $0x8] sm:$0xff]
        %v412 = vld [vmem:[%s401 + $0x10] sm:$0xff]
        %v413 = vld [vmem:[%s401 + $0x18] sm:$0xff]
        %v414 = vld [vmem:[%s401 + $0x20] sm:$0xff]
        %v415 = vld [vmem:[%s401 + $0x28] sm:$0xff]
        %v416 = vld [vmem:[%s401 + $0x30] sm:$0xff]
        %v417 = vld [vmem:[%s401 + $0x38] sm:$0xff]
        %v418 = vld [vmem:[%s401 + $0x40] sm:$0xff]
        %v419 = vld [vmem:[%s401 + $0x48] sm:$0xff]
        %v420 = vld [vmem:[%s401 + $0x50] sm:$0xff]
        %v421 = vld [vmem:[%s401 + $0x58] sm:$0xff]
        %v422 = vld [vmem:[%s401 + $0x60] sm:$0xff]
        %v423 = vld [vmem:[%s401 + $0x68] sm:$0xff]
        %v424 = vld [vmem:[%s401 + $0x70] sm:$0xff]
        %v425 = vld [vmem:[%s401 + $0x78] sm:$0xff]
        %v426 = vld [vmem:[%s401 + $0x80] sm:$0xff]
        %v427 = vld [vmem:[%s401 + $0x88] sm:$0xff]
        %v428 = vld [vmem:[%s401 + $0x90] sm:$0xff]
        %v429 = vld [vmem:[%s401 + $0x98] sm:$0xff]
        %v430 = vld [vmem:[%s401 + $0xa0] sm:$0xff]
        %v431 = vld [vmem:[%s401 + $0xa8] sm:$0xff]
        %v432 = vld [vmem:[%s401 + $0xb0] sm:$0xff]
        %v433 = vld [vmem:[%s401 + $0xb8] sm:$0xff]
        %v434 = vld [vmem:[%s401 + $0xc0] sm:$0xff]
        %v435 = vld [vmem:[%s401 + $0xc8] sm:$0xff]
        %v436 = vld [vmem:[%s401 + $0xd0] sm:$0xff]
        %v437 = vld [vmem:[%s401 + $0xd8] sm:$0xff]
        %v438 = vld [vmem:[%s401 + $0xe0] sm:$0xff]
        %v439 = vld [vmem:[%s401 + $0xe8] sm:$0xff]
        %v440 = vld [vmem:[%s401 + $0xf0] sm:$0xff]
        %v441 = vld [vmem:[%s401 + $0xf8] sm:$0xff]
        %v442 = vld [vmem:[%s401 + $0x100] sm:$0xff]
        %v443 = vld [vmem:[%s401 + $0x108] sm:$0xff]
        %v444 = vld [vmem:[%s401 + $0x110] sm:$0xff]
        %v445 = vld [vmem:[%s401 + $0x118] sm:$0xff]
        %v446 = vld [vmem:[%s401 + $0x120] sm:$0xff]
        %v447 = vld [vmem:[%s401 + $0x128] sm:$0xff]
        %v448 = vld [vmem:[%s401 + $0x130] sm:$0xff]
        %v449 = vld [vmem:[%s401 + $0x138] sm:$0xff]
        %v450 = vld [vmem:[%s401 + $0x140] sm:$0xff]
        %v451 = vld [vmem:[%s401 + $0x148] sm:$0xff]
        %v452 = vld [vmem:[%s401 + $0x150] sm:$0xff]
        %v453 = vld [vmem:[%s401 + $0x158] sm:$0xff]
        %v454 = vld [vmem:[%s401 + $0x160] sm:$0xff]
        %v455 = vld [vmem:[%s401 + $0x168] sm:$0xff]
        %v456 = vld [vmem:[%s401 + $0x170] sm:$0xff]
        %v457 = vld [vmem:[%s401 + $0x178] sm:$0xff]
        %v458 = vld [vmem:[%s401 + $0x180] sm:$0xff]
        %v459 = vld [vmem:[%s401 + $0x188] sm:$0xff]
        %v460 = vld [vmem:[%s401 + $0x190] sm:$0xff]
        %v461 = vld [vmem:[%s401 + $0x198] sm:$0xff]
        %v462 = vld [vmem:[%s401 + $0x1a0] sm:$0xff]
        %v463 = vld [vmem:[%s401 + $0x1a8] sm:$0xff]
        %v464 = vld [vmem:[%s401 + $0x1b0] sm:$0xff]
        %v465 = vld [vmem:[%s401 + $0x1b8] sm:$0xff]
        %v466 = vld [vmem:[%s401 + $0x1c0] sm:$0xff]
        %v467 = vld [vmem:[%s401 + $0x1c8] sm:$0xff]
        %v468 = vld [vmem:[%s401 + $0x1d0] sm:$0xff]
        %v469 = vld [vmem:[%s401 + $0x1d8] sm:$0xff]
        %v470 = vld [vmem:[%s401 + $0x1e0] sm:$0xff]
        %v471 = vld [vmem:[%s401 + $0x1e8] sm:$0xff]
        %v472 = vld [vmem:[%s401 + $0x1f0] sm:$0xff]
        %v473 = vld [vmem:[%s401 + $0x1f8] sm:$0xff]
        %v474 = vld [vmem:[%s2] sm:$0xf]
        %vm475 = vcmask 31744
        %v477 = vsel %vm475, %v410, 0
        %v480 = vsel %vm475, %v411, 0
        %v483 = vsel %vm475, %v412, 0
        %v486 = vsel %vm475, %v413, 0
        %v489 = vsel %vm475, %v414, 0
        %v492 = vsel %vm475, %v415, 0
        %v495 = vsel %vm475, %v416, 0
        %v498 = vsel %vm475, %v417, 0
        %v501 = vsel %vm475, %v418, 0
        %v504 = vsel %vm475, %v419, 0
        %v507 = vsel %vm475, %v420, 0
        %v510 = vsel %vm475, %v421, 0
        %v513 = vsel %vm475, %v422, 0
        %v516 = vsel %vm475, %v423, 0
        %v519 = vsel %vm475, %v424, 0
        %v522 = vsel %vm475, %v425, 0
        %v525 = vsel %vm475, %v426, 0
        %v528 = vsel %vm475, %v427, 0
        %v531 = vsel %vm475, %v428, 0
        %v534 = vsel %vm475, %v429, 0
        %v537 = vsel %vm475, %v430, 0
        %v540 = vsel %vm475, %v431, 0
        %v543 = vsel %vm475, %v432, 0
        %v546 = vsel %vm475, %v433, 0
        %v549 = vsel %vm475, %v434, 0
        %v552 = vsel %vm475, %v435, 0
        %v555 = vsel %vm475, %v436, 0
        %v558 = vsel %vm475, %v437, 0
        %v561 = vsel %vm475, %v438, 0
        %v564 = vsel %vm475, %v439, 0
        %v567 = vsel %vm475, %v440, 0
        %v570 = vsel %vm475, %v441, 0
        %v573 = vsel %vm475, %v442, 0
        %v576 = vsel %vm475, %v443, 0
        %v579 = vsel %vm475, %v444, 0
        %v582 = vsel %vm475, %v445, 0
        %v585 = vsel %vm475, %v446, 0
        %v588 = vsel %vm475, %v447, 0
        %v591 = vsel %vm475, %v448, 0
        %v594 = vsel %vm475, %v449, 0
        %v597 = vsel %vm475, %v450, 0
        %v600 = vsel %vm475, %v451, 0
        %v603 = vsel %vm475, %v452, 0
        %v606 = vsel %vm475, %v453, 0
        %v609 = vsel %vm475, %v454, 0
        %v612 = vsel %vm475, %v455, 0
        %v615 = vsel %vm475, %v456, 0
        %v618 = vsel %vm475, %v457, 0
        %v621 = vsel %vm475, %v458, 0
        %v624 = vsel %vm475, %v459, 0
        %v627 = vsel %vm475, %v460, 0
        %v630 = vsel %vm475, %v461, 0
        %v633 = vsel %vm475, %v462, 0
        %v636 = vsel %vm475, %v463, 0
        %v639 = vsel %vm475, %v464, 0
        %v642 = vsel %vm475, %v465, 0
        %v645 = vsel %vm475, %v466, 0
        %v648 = vsel %vm475, %v467, 0
        %v651 = vsel %vm475, %v468, 0
        %v654 = vsel %vm475, %v469, 0
        %v657 = vsel %vm475, %v470, 0
        %v660 = vsel %vm475, %v471, 0
        %v663 = vsel %vm475, %v472, 0
        %v666 = vsel %vm475, %v473, 0
        %vm668 = vcmask 1043456
        %v670 = vsel %vm668, %v474, 0
        %672 = vmatprep.subr.mxu0 0.0
        %673 = vmatpush1.msra.mxu0 %v670
        %674 = vmatprep.subr.mxu0 0.0
        %675 = vmatpush1.msra.mxu0 0.0
        %676 = vmatprep.subr.mxu0 0.0
        %677 = vmatpush1.msra.mxu0 0.0
        %678 = vmatprep.subr.mxu0 0.0
        %679 = vmatpush1.msra.mxu0 0.0
        %680 = vmatprep.subr.mxu0 0.0
        %681 = vmatpush1.msra.mxu0 0.0
        %682 = vmatprep.subr.mxu0 0.0
        %683 = vmatpush1.msra.mxu0 0.0
        %684 = vmatprep.subr.mxu0 0.0
        %685 = vmatpush1.msra.mxu0 0.0
        %686 = vmatprep.subr.mxu0 0.0
        %687 = vmatpush1.msra.mxu0 0.0
        %688 = vmatprep.subr.mxu0 0.0
        %689 = vmatpush1.msra.mxu0 0.0
        %690 = vmatprep.subr.mxu0 0.0
        %691 = vmatpush1.msra.mxu0 0.0
        %692 = vmatprep.subr.mxu0 0.0
        %693 = vmatpush1.msra.mxu0 0.0
        %694 = vmatprep.subr.mxu0 0.0
        %695 = vmatpush1.msra.mxu0 0.0
        %696 = vmatprep.subr.mxu0 0.0
        %697 = vmatpush1.msra.mxu0 0.0
        %698 = vmatprep.subr.mxu0 0.0
        %699 = vmatpush1.msra.mxu0 0.0
        %700 = vmatprep.subr.mxu0 0.0
        %701 = vmatpush1.msra.mxu0 0.0
        %702 = vmatprep.subr.mxu0 0.0
        %703 = vmatpush1.msra.mxu0 0.0
        %704 = vmatprep.subr.mxu0 0.0
        %705 = vmatpush1.msra.mxu0 0.0
        %706 = vmatprep.subr.mxu0 0.0
        %707 = vmatpush1.msra.mxu0 0.0
        %708 = vmatprep.subr.mxu0 0.0
        %709 = vmatpush1.msra.mxu0 0.0
        %710 = vmatprep.subr.mxu0 0.0
        %711 = vmatpush1.msra.mxu0 0.0
        %712 = vmatprep.subr.mxu0 0.0
        %713 = vmatpush1.msra.mxu0 0.0
        %714 = vmatprep.subr.mxu0 0.0
        %715 = vmatpush1.msra.mxu0 0.0
        %716 = vmatprep.subr.mxu0 0.0
        %717 = vmatpush1.msra.mxu0 0.0
        %718 = vmatprep.subr.mxu0 0.0
        %719 = vmatpush1.msra.mxu0 0.0
        %720 = vmatprep.subr.mxu0 0.0
        %721 = vmatpush1.msra.mxu0 0.0
        %722 = vmatprep.subr.mxu0 0.0
        %723 = vmatpush1.msra.mxu0 0.0
        %724 = vmatprep.subr.mxu0 0.0
        %725 = vmatpush1.msra.mxu0 0.0
        %726 = vmatprep.subr.mxu0 0.0
        %727 = vmatpush1.msra.mxu0 0.0
        %728 = vmatprep.subr.mxu0 0.0
        %729 = vmatpush1.msra.mxu0 0.0
        %730 = vmatprep.subr.mxu0 0.0
        %731 = vmatpush1.msra.mxu0 0.0
        %732 = vmatprep.subr.mxu0 0.0
        %733 = vmatpush1.msra.mxu0 0.0
        %734 = vmatprep.subr.mxu0 0.0
        %735 = vmatpush1.msra.mxu0 0.0
        %736 = vmatprep.mubr.f32.mxu0 0.0
        %737 = vmatmul.mubr.f32.gmra.mrb[0].mxu0 %v477
        %v738 = vpop.f32.mrb[0].mxu0
        %v739 = vadd.f32 0.0, %v738
        %v740 = vpop.f32.mrb[0].mxu0
        %741 = vmatprep.mubr.f32.mxu0 0.0
        %742 = vmatmul.mubr.f32.gmra.mrb[0].mxu0 %v480
        %v743 = vpop.f32.mrb[0].mxu0
        %v744 = vadd.f32 0.0, %v743
        %v745 = vpop.f32.mrb[0].mxu0
        %746 = vmatprep.mubr.f32.mxu0 0.0
        %747 = vmatmul.mubr.f32.gmra.mrb[0].mxu0 %v483
        %v748 = vpop.f32.mrb[0].mxu0
        %v749 = vadd.f32 0.0, %v748
        %v750 = vpop.f32.mrb[0].mxu0
        %751 = vmatprep.mubr.f32.mxu0 0.0
        %752 = vmatmul.mubr.f32.gmra.mrb[0].mxu0 %v486
        %v753 = vpop.f32.mrb[0].mxu0
        %v754 = vadd.f32 0.0, %v753
        %v755 = vpop.f32.mrb[0].mxu0
        %756 = vmatprep.mubr.f32.mxu0 0.0
        %757 = vmatmul.mubr.f32.gmra.mrb[0].mxu0 %v489
        %v758 = vpop.f32.mrb[0].mxu0
        %v759 = vadd.f32 0.0, %v758
        %v760 = vpop.f32.mrb[0].mxu0
        %761 = vmatprep.mubr.f32.mxu0 0.0
        %762 = vmatmul.mubr.f32.gmra.mrb[0].mxu0 %v492
        %v763 = vpop.f32.mrb[0].mxu0
        %v764 = vadd.f32 0.0, %v763
        %v765 = vpop.f32.mrb[0].mxu0
        %766 = vmatprep.mubr.f32.mxu0 0.0
        %767 = vmatmul.mubr.f32.gmra.mrb[0].mxu0 %v495
        %v768 = vpop.f32.mrb[0].mxu0
        %v769 = vadd.f32 0.0, %v768
        %v770 = vpop.f32.mrb[0].mxu0
        %771 = vmatprep.mubr.f32.mxu0 0.0
        %772 = vmatmul.mubr.f32.gmra.mrb[0].mxu0 %v498
        %v773 = vpop.f32.mrb[0].mxu0
        %v774 = vadd.f32 0.0, %v773
        %v775 = vpop.f32.mrb[0].mxu0
        %776 = vmatprep.mubr.f32.mxu0 0.0
        %777 = vmatmul.mubr.f32.gmra.mrb[0].mxu0 %v501
        %v778 = vpop.f32.mrb[0].mxu0
        %v779 = vadd.f32 0.0, %v778
        %v780 = vpop.f32.mrb[0].mxu0
        %781 = vmatprep.mubr.f32.mxu0 0.0
        %782 = vmatmul.mubr.f32.gmra.mrb[0].mxu0 %v504
        %v783 = vpop.f32.mrb[0].mxu0
        %v784 = vadd.f32 0.0, %v783
        %v785 = vpop.f32.mrb[0].mxu0
        %786 = vmatprep.mubr.f32.mxu0 0.0
        %787 = vmatmul.mubr.f32.gmra.mrb[0].mxu0 %v507
        %v788 = vpop.f32.mrb[0].mxu0
        %v789 = vadd.f32 0.0, %v788
        %v790 = vpop.f32.mrb[0].mxu0
        %791 = vmatprep.mubr.f32.mxu0 0.0
        %792 = vmatmul.mubr.f32.gmra.mrb[0].mxu0 %v510
        %v793 = vpop.f32.mrb[0].mxu0
        %v794 = vadd.f32 0.0, %v793
        %v795 = vpop.f32.mrb[0].mxu0
        %796 = vmatprep.mubr.f32.mxu0 0.0
        %797 = vmatmul.mubr.f32.gmra.mrb[0].mxu0 %v513
        %v798 = vpop.f32.mrb[0].mxu0
        %v799 = vadd.f32 0.0, %v798
        %v800 = vpop.f32.mrb[0].mxu0
        %801 = vmatprep.mubr.f32.mxu0 0.0
        %802 = vmatmul.mubr.f32.gmra.mrb[0].mxu0 %v516
        %v803 = vpop.f32.mrb[0].mxu0
        %v804 = vadd.f32 0.0, %v803
        %v805 = vpop.f32.mrb[0].mxu0
        %806 = vmatprep.mubr.f32.mxu0 0.0
        %807 = vmatmul.mubr.f32.gmra.mrb[0].mxu0 %v519
        %v808 = vpop.f32.mrb[0].mxu0
        %v809 = vadd.f32 0.0, %v808
        %v810 = vpop.f32.mrb[0].mxu0
        %811 = vmatprep.mubr.f32.mxu0 0.0
        %812 = vmatmul.mubr.f32.gmra.mrb[0].mxu0 %v522
        %v813 = vpop.f32.mrb[0].mxu0
        %v814 = vadd.f32 0.0, %v813
        %v815 = vpop.f32.mrb[0].mxu0
        %816 = vmatprep.mubr.f32.mxu0 0.0
        %817 = vmatmul.mubr.f32.gmra.mrb[0].mxu0 %v525
        %v818 = vpop.f32.mrb[0].mxu0
        %v819 = vadd.f32 0.0, %v818
        %v820 = vpop.f32.mrb[0].mxu0
        %821 = vmatprep.mubr.f32.mxu0 0.0
        %822 = vmatmul.mubr.f32.gmra.mrb[0].mxu0 %v528
        %v823 = vpop.f32.mrb[0].mxu0
        %v824 = vadd.f32 0.0, %v823
        %v825 = vpop.f32.mrb[0].mxu0
        %826 = vmatprep.mubr.f32.mxu0 0.0
        %827 = vmatmul.mubr.f32.gmra.mrb[0].mxu0 %v531
        %v828 = vpop.f32.mrb[0].mxu0
        %v829 = vadd.f32 0.0, %v828
        %v830 = vpop.f32.mrb[0].mxu0
        %831 = vmatprep.mubr.f32.mxu0 0.0
        %832 = vmatmul.mubr.f32.gmra.mrb[0].mxu0 %v534
        %v833 = vpop.f32.mrb[0].mxu0
        %v834 = vadd.f32 0.0, %v833
        %v835 = vpop.f32.mrb[0].mxu0
        %836 = vmatprep.mubr.f32.mxu0 0.0
        %837 = vmatmul.mubr.f32.gmra.mrb[0].mxu0 %v537
        %v838 = vpop.f32.mrb[0].mxu0
        %v839 = vadd.f32 0.0, %v838
        %v840 = vpop.f32.mrb[0].mxu0
        %841 = vmatprep.mubr.f32.mxu0 0.0
        %842 = vmatmul.mubr.f32.gmra.mrb[0].mxu0 %v540
        %v843 = vpop.f32.mrb[0].mxu0
        %v844 = vadd.f32 0.0, %v843
        %v845 = vpop.f32.mrb[0].mxu0
        %846 = vmatprep.mubr.f32.mxu0 0.0
        %847 = vmatmul.mubr.f32.gmra.mrb[0].mxu0 %v543
        %v848 = vpop.f32.mrb[0].mxu0
        %v849 = vadd.f32 0.0, %v848
        %v850 = vpop.f32.mrb[0].mxu0
        %851 = vmatprep.mubr.f32.mxu0 0.0
        %852 = vmatmul.mubr.f32.gmra.mrb[0].mxu0 %v546
        %v853 = vpop.f32.mrb[0].mxu0
        %v854 = vadd.f32 0.0, %v853
        %v855 = vpop.f32.mrb[0].mxu0
        %856 = vmatprep.mubr.f32.mxu0 0.0
        %857 = vmatmul.mubr.f32.gmra.mrb[0].mxu0 %v549
        %v858 = vpop.f32.mrb[0].mxu0
        %v859 = vadd.f32 0.0, %v858
        %v860 = vpop.f32.mrb[0].mxu0
        %861 = vmatprep.mubr.f32.mxu0 0.0
        %862 = vmatmul.mubr.f32.gmra.mrb[0].mxu0 %v552
        %v863 = vpop.f32.mrb[0].mxu0
        %v864 = vadd.f32 0.0, %v863
        %v865 = vpop.f32.mrb[0].mxu0
        %866 = vmatprep.mubr.f32.mxu0 0.0
        %867 = vmatmul.mubr.f32.gmra.mrb[0].mxu0 %v555
        %v868 = vpop.f32.mrb[0].mxu0
        %v869 = vadd.f32 0.0, %v868
        %v870 = vpop.f32.mrb[0].mxu0
        %871 = vmatprep.mubr.f32.mxu0 0.0
        %872 = vmatmul.mubr.f32.gmra.mrb[0].mxu0 %v558
        %v873 = vpop.f32.mrb[0].mxu0
        %v874 = vadd.f32 0.0, %v873
        %v875 = vpop.f32.mrb[0].mxu0
        %876 = vmatprep.mubr.f32.mxu0 0.0
        %877 = vmatmul.mubr.f32.gmra.mrb[0].mxu0 %v561
        %v878 = vpop.f32.mrb[0].mxu0
        %v879 = vadd.f32 0.0, %v878
        %v880 = vpop.f32.mrb[0].mxu0
        %881 = vmatprep.mubr.f32.mxu0 0.0
        %882 = vmatmul.mubr.f32.gmra.mrb[0].mxu0 %v564
        %v883 = vpop.f32.mrb[0].mxu0
        %v884 = vadd.f32 0.0, %v883
        %v885 = vpop.f32.mrb[0].mxu0
        %886 = vmatprep.mubr.f32.mxu0 0.0
        %887 = vmatmul.mubr.f32.gmra.mrb[0].mxu0 %v567
        %v888 = vpop.f32.mrb[0].mxu0
        %v889 = vadd.f32 0.0, %v888
        %v890 = vpop.f32.mrb[0].mxu0
        %891 = vmatprep.mubr.f32.mxu0 0.0
        %892 = vmatmul.mubr.f32.gmra.mrb[0].mxu0 %v570
        %v893 = vpop.f32.mrb[0].mxu0
        %v894 = vadd.f32 0.0, %v893
        %v895 = vpop.f32.mrb[0].mxu0
        %896 = vmatprep.mubr.f32.mxu0 0.0
        %897 = vmatmul.mubr.f32.gmra.mrb[0].mxu0 %v573
        %v898 = vpop.f32.mrb[0].mxu0
        %v899 = vadd.f32 0.0, %v898
        %v900 = vpop.f32.mrb[0].mxu0
        %901 = vmatprep.mubr.f32.mxu0 0.0
        %902 = vmatmul.mubr.f32.gmra.mrb[0].mxu0 %v576
        %v903 = vpop.f32.mrb[0].mxu0
        %v904 = vadd.f32 0.0, %v903
        %v905 = vpop.f32.mrb[0].mxu0
        %906 = vmatprep.mubr.f32.mxu0 0.0
        %907 = vmatmul.mubr.f32.gmra.mrb[0].mxu0 %v579
        %v908 = vpop.f32.mrb[0].mxu0
        %v909 = vadd.f32 0.0, %v908
        %v910 = vpop.f32.mrb[0].mxu0
        %911 = vmatprep.mubr.f32.mxu0 0.0
        %912 = vmatmul.mubr.f32.gmra.mrb[0].mxu0 %v582
        %v913 = vpop.f32.mrb[0].mxu0
        %v914 = vadd.f32 0.0, %v913
        %v915 = vpop.f32.mrb[0].mxu0
        %916 = vmatprep.mubr.f32.mxu0 0.0
        %917 = vmatmul.mubr.f32.gmra.mrb[0].mxu0 %v585
        %v918 = vpop.f32.mrb[0].mxu0
        %v919 = vadd.f32 0.0, %v918
        %v920 = vpop.f32.mrb[0].mxu0
        %921 = vmatprep.mubr.f32.mxu0 0.0
        %922 = vmatmul.mubr.f32.gmra.mrb[0].mxu0 %v588
        %v923 = vpop.f32.mrb[0].mxu0
        %v924 = vadd.f32 0.0, %v923
        %v925 = vpop.f32.mrb[0].mxu0
        %926 = vmatprep.mubr.f32.mxu0 0.0
        %927 = vmatmul.mubr.f32.gmra.mrb[0].mxu0 %v591
        %v928 = vpop.f32.mrb[0].mxu0
        %v929 = vadd.f32 0.0, %v928
        %v930 = vpop.f32.mrb[0].mxu0
        %931 = vmatprep.mubr.f32.mxu0 0.0
        %932 = vmatmul.mubr.f32.gmra.mrb[0].mxu0 %v594
        %v933 = vpop.f32.mrb[0].mxu0
        %v934 = vadd.f32 0.0, %v933
        %v935 = vpop.f32.mrb[0].mxu0
        %936 = vmatprep.mubr.f32.mxu0 0.0
        %937 = vmatmul.mubr.f32.gmra.mrb[0].mxu0 %v597
        %v938 = vpop.f32.mrb[0].mxu0
        %v939 = vadd.f32 0.0, %v938
        %v940 = vpop.f32.mrb[0].mxu0
        %941 = vmatprep.mubr.f32.mxu0 0.0
        %942 = vmatmul.mubr.f32.gmra.mrb[0].mxu0 %v600
        %v943 = vpop.f32.mrb[0].mxu0
        %v944 = vadd.f32 0.0, %v943
        %v945 = vpop.f32.mrb[0].mxu0
        %946 = vmatprep.mubr.f32.mxu0 0.0
        %947 = vmatmul.mubr.f32.gmra.mrb[0].mxu0 %v603
        %v948 = vpop.f32.mrb[0].mxu0
        %v949 = vadd.f32 0.0, %v948
        %v950 = vpop.f32.mrb[0].mxu0
        %951 = vmatprep.mubr.f32.mxu0 0.0
        %952 = vmatmul.mubr.f32.gmra.mrb[0].mxu0 %v606
        %v953 = vpop.f32.mrb[0].mxu0
        %v954 = vadd.f32 0.0, %v953
        %v955 = vpop.f32.mrb[0].mxu0
        %956 = vmatprep.mubr.f32.mxu0 0.0
        %957 = vmatmul.mubr.f32.gmra.mrb[0].mxu0 %v609
        %v958 = vpop.f32.mrb[0].mxu0
        %v959 = vadd.f32 0.0, %v958
        %v960 = vpop.f32.mrb[0].mxu0
        %961 = vmatprep.mubr.f32.mxu0 0.0
        %962 = vmatmul.mubr.f32.gmra.mrb[0].mxu0 %v612
        %v963 = vpop.f32.mrb[0].mxu0
        %v964 = vadd.f32 0.0, %v963
        %v965 = vpop.f32.mrb[0].mxu0
        %966 = vmatprep.mubr.f32.mxu0 0.0
        %967 = vmatmul.mubr.f32.gmra.mrb[0].mxu0 %v615
        %v968 = vpop.f32.mrb[0].mxu0
        %v969 = vadd.f32 0.0, %v968
        %v970 = vpop.f32.mrb[0].mxu0
        %971 = vmatprep.mubr.f32.mxu0 0.0
        %972 = vmatmul.mubr.f32.gmra.mrb[0].mxu0 %v618
        %v973 = vpop.f32.mrb[0].mxu0
        %v974 = vadd.f32 0.0, %v973
        %v975 = vpop.f32.mrb[0].mxu0
        %976 = vmatprep.mubr.f32.mxu0 0.0
        %977 = vmatmul.mubr.f32.gmra.mrb[0].mxu0 %v621
        %v978 = vpop.f32.mrb[0].mxu0
        %v979 = vadd.f32 0.0, %v978
        %v980 = vpop.f32.mrb[0].mxu0
        %981 = vmatprep.mubr.f32.mxu0 0.0
        %982 = vmatmul.mubr.f32.gmra.mrb[0].mxu0 %v624
        %v983 = vpop.f32.mrb[0].mxu0
        %v984 = vadd.f32 0.0, %v983
        %v985 = vpop.f32.mrb[0].mxu0
        %986 = vmatprep.mubr.f32.mxu0 0.0
        %987 = vmatmul.mubr.f32.gmra.mrb[0].mxu0 %v627
        %v988 = vpop.f32.mrb[0].mxu0
        %v989 = vadd.f32 0.0, %v988
        %v990 = vpop.f32.mrb[0].mxu0
        %991 = vmatprep.mubr.f32.mxu0 0.0
        %992 = vmatmul.mubr.f32.gmra.mrb[0].mxu0 %v630
        %v993 = vpop.f32.mrb[0].mxu0
        %v994 = vadd.f32 0.0, %v993
        %v995 = vpop.f32.mrb[0].mxu0
        %996 = vmatprep.mubr.f32.mxu0 0.0
        %997 = vmatmul.mubr.f32.gmra.mrb[0].mxu0 %v633
        %v998 = vpop.f32.mrb[0].mxu0
        %v999 = vadd.f32 0.0, %v998
        %v1000 = vpop.f32.mrb[0].mxu0
        %1001 = vmatprep.mubr.f32.mxu0 0.0
        %1002 = vmatmul.mubr.f32.gmra.mrb[0].mxu0 %v636
        %v1003 = vpop.f32.mrb[0].mxu0
        %v1004 = vadd.f32 0.0, %v1003
        %v1005 = vpop.f32.mrb[0].mxu0
        %1006 = vmatprep.mubr.f32.mxu0 0.0
        %1007 = vmatmul.mubr.f32.gmra.mrb[0].mxu0 %v639
        %v1008 = vpop.f32.mrb[0].mxu0
        %v1009 = vadd.f32 0.0, %v1008
        %v1010 = vpop.f32.mrb[0].mxu0
        %1011 = vmatprep.mubr.f32.mxu0 0.0
        %1012 = vmatmul.mubr.f32.gmra.mrb[0].mxu0 %v642
        %v1013 = vpop.f32.mrb[0].mxu0
        %v1014 = vadd.f32 0.0, %v1013
        %v1015 = vpop.f32.mrb[0].mxu0
        %1016 = vmatprep.mubr.f32.mxu0 0.0
        %1017 = vmatmul.mubr.f32.gmra.mrb[0].mxu0 %v645
        %v1018 = vpop.f32.mrb[0].mxu0
        %v1019 = vadd.f32 0.0, %v1018
        %v1020 = vpop.f32.mrb[0].mxu0
        %1021 = vmatprep.mubr.f32.mxu0 0.0
        %1022 = vmatmul.mubr.f32.gmra.mrb[0].mxu0 %v648
        %v1023 = vpop.f32.mrb[0].mxu0
        %v1024 = vadd.f32 0.0, %v1023
        %v1025 = vpop.f32.mrb[0].mxu0
        %1026 = vmatprep.mubr.f32.mxu0 0.0
        %1027 = vmatmul.mubr.f32.gmra.mrb[0].mxu0 %v651
        %v1028 = vpop.f32.mrb[0].mxu0
        %v1029 = vadd.f32 0.0, %v1028
        %v1030 = vpop.f32.mrb[0].mxu0
        %1031 = vmatprep.mubr.f32.mxu0 0.0
        %1032 = vmatmul.mubr.f32.gmra.mrb[0].mxu0 %v654
        %v1033 = vpop.f32.mrb[0].mxu0
        %v1034 = vadd.f32 0.0, %v1033
        %v1035 = vpop.f32.mrb[0].mxu0
        %1036 = vmatprep.mubr.f32.mxu0 0.0
        %1037 = vmatmul.mubr.f32.gmra.mrb[0].mxu0 %v657
        %v1038 = vpop.f32.mrb[0].mxu0
        %v1039 = vadd.f32 0.0, %v1038
        %v1040 = vpop.f32.mrb[0].mxu0
        %1041 = vmatprep.mubr.f32.mxu0 0.0
        %1042 = vmatmul.mubr.f32.gmra.mrb[0].mxu0 %v660
        %v1043 = vpop.f32.mrb[0].mxu0
        %v1044 = vadd.f32 0.0, %v1043
        %v1045 = vpop.f32.mrb[0].mxu0
        %1046 = vmatprep.mubr.f32.mxu0 0.0
        %1047 = vmatmul.mubr.f32.gmra.mrb[0].mxu0 %v663
        %v1048 = vpop.f32.mrb[0].mxu0
        %v1049 = vadd.f32 0.0, %v1048
        %v1050 = vpop.f32.mrb[0].mxu0
        %1051 = vmatprep.mubr.f32.mxu0 0.0
        %1052 = vmatmul.mubr.f32.gmra.mrb[0].mxu0 %v666
        %v1053 = vpop.f32.mrb[0].mxu0
        %v1054 = vadd.f32 0.0, %v1053
        %v1055 = vpop.f32.mrb[0].mxu0
        %1056 = vdwg.mxu0
        %v1057 = vld [vmem:[%s3] sm:$0x1]
        %v1059 = vlaneseq
        %v1060 = vshrl.u32 %v1059, 7
        %v1061 = vsub.s32 0, %v1060
        %v1062 = vrot.slane %v1057, %v1061
        %v1064 = vmul.f32 %v739, %v1062
        %v1065 = vmul.f32 %v744, %v1062
        %v1066 = vmul.f32 %v749, %v1062
        %v1067 = vmul.f32 %v754, %v1062
        %v1068 = vmul.f32 %v759, %v1062
        %v1069 = vmul.f32 %v764, %v1062
        %v1070 = vmul.f32 %v769, %v1062
        %v1071 = vmul.f32 %v774, %v1062
        %v1072 = vmul.f32 %v779, %v1062
        %v1073 = vmul.f32 %v784, %v1062
        %v1074 = vmul.f32 %v789, %v1062
        %v1075 = vmul.f32 %v794, %v1062
        %v1076 = vmul.f32 %v799, %v1062
        %v1077 = vmul.f32 %v804, %v1062
        %v1078 = vmul.f32 %v809, %v1062
        %v1079 = vmul.f32 %v814, %v1062
        %v1080 = vmul.f32 %v819, %v1062
        %v1081 = vmul.f32 %v824, %v1062
        %v1082 = vmul.f32 %v829, %v1062
        %v1083 = vmul.f32 %v834, %v1062
        %v1084 = vmul.f32 %v839, %v1062
        %v1085 = vmul.f32 %v844, %v1062
        %v1086 = vmul.f32 %v849, %v1062
        %v1087 = vmul.f32 %v854, %v1062
        %v1088 = vmul.f32 %v859, %v1062
        %v1089 = vmul.f32 %v864, %v1062
        %v1090 = vmul.f32 %v869, %v1062
        %v1091 = vmul.f32 %v874, %v1062
        %v1092 = vmul.f32 %v879, %v1062
        %v1093 = vmul.f32 %v884, %v1062
        %v1094 = vmul.f32 %v889, %v1062
        %v1095 = vmul.f32 %v894, %v1062
        %v1096 = vmul.f32 %v899, %v1062
        %v1097 = vmul.f32 %v904, %v1062
        %v1098 = vmul.f32 %v909, %v1062
        %v1099 = vmul.f32 %v914, %v1062
        %v1100 = vmul.f32 %v919, %v1062
        %v1101 = vmul.f32 %v924, %v1062
        %v1102 = vmul.f32 %v929, %v1062
        %v1103 = vmul.f32 %v934, %v1062
        %v1104 = vmul.f32 %v939, %v1062
        %v1105 = vmul.f32 %v944, %v1062
        %v1106 = vmul.f32 %v949, %v1062
        %v1107 = vmul.f32 %v954, %v1062
        %v1108 = vmul.f32 %v959, %v1062
        %v1109 = vmul.f32 %v964, %v1062
        %v1110 = vmul.f32 %v969, %v1062
        %v1111 = vmul.f32 %v974, %v1062
        %v1112 = vmul.f32 %v979, %v1062
        %v1113 = vmul.f32 %v984, %v1062
        %v1114 = vmul.f32 %v989, %v1062
        %v1115 = vmul.f32 %v994, %v1062
        %v1116 = vmul.f32 %v999, %v1062
        %v1117 = vmul.f32 %v1004, %v1062
        %v1118 = vmul.f32 %v1009, %v1062
        %v1119 = vmul.f32 %v1014, %v1062
        %v1120 = vmul.f32 %v1019, %v1062
        %v1121 = vmul.f32 %v1024, %v1062
        %v1122 = vmul.f32 %v1029, %v1062
        %v1123 = vmul.f32 %v1034, %v1062
        %v1124 = vmul.f32 %v1039, %v1062
        %v1125 = vmul.f32 %v1044, %v1062
        %v1126 = vmul.f32 %v1049, %v1062
        %v1127 = vmul.f32 %v1054, %v1062
        %v1128 = vld [vmem:[%s4] sm:$0x1]
        %v1130 = vlaneseq
        %v1131 = vshrl.u32 %v1130, 7
        %v1132 = vsub.s32 0, %v1131
        %v1133 = vrot.slane %v1128, %v1132
        %v1135 = vadd.f32 %v1064, %v1133
        %v1136 = vadd.f32 %v1065, %v1133
        %v1137 = vadd.f32 %v1066, %v1133
        %v1138 = vadd.f32 %v1067, %v1133
        %v1139 = vadd.f32 %v1068, %v1133
        %v1140 = vadd.f32 %v1069, %v1133
        %v1141 = vadd.f32 %v1070, %v1133
        %v1142 = vadd.f32 %v1071, %v1133
        %v1143 = vadd.f32 %v1072, %v1133
        %v1144 = vadd.f32 %v1073, %v1133
        %v1145 = vadd.f32 %v1074, %v1133
        %v1146 = vadd.f32 %v1075, %v1133
        %v1147 = vadd.f32 %v1076, %v1133
        %v1148 = vadd.f32 %v1077, %v1133
        %v1149 = vadd.f32 %v1078, %v1133
        %v1150 = vadd.f32 %v1079, %v1133
        %v1151 = vadd.f32 %v1080, %v1133
        %v1152 = vadd.f32 %v1081, %v1133
        %v1153 = vadd.f32 %v1082, %v1133
        %v1154 = vadd.f32 %v1083, %v1133
        %v1155 = vadd.f32 %v1084, %v1133
        %v1156 = vadd.f32 %v1085, %v1133
        %v1157 = vadd.f32 %v1086, %v1133
        %v1158 = vadd.f32 %v1087, %v1133
        %v1159 = vadd.f32 %v1088, %v1133
        %v1160 = vadd.f32 %v1089, %v1133
        %v1161 = vadd.f32 %v1090, %v1133
        %v1162 = vadd.f32 %v1091, %v1133
        %v1163 = vadd.f32 %v1092, %v1133
        %v1164 = vadd.f32 %v1093, %v1133
        %v1165 = vadd.f32 %v1094, %v1133
        %v1166 = vadd.f32 %v1095, %v1133
        %v1167 = vadd.f32 %v1096, %v1133
        %v1168 = vadd.f32 %v1097, %v1133
        %v1169 = vadd.f32 %v1098, %v1133
        %v1170 = vadd.f32 %v1099, %v1133
        %v1171 = vadd.f32 %v1100, %v1133
        %v1172 = vadd.f32 %v1101, %v1133
        %v1173 = vadd.f32 %v1102, %v1133
        %v1174 = vadd.f32 %v1103, %v1133
        %v1175 = vadd.f32 %v1104, %v1133
        %v1176 = vadd.f32 %v1105, %v1133
        %v1177 = vadd.f32 %v1106, %v1133
        %v1178 = vadd.f32 %v1107, %v1133
        %v1179 = vadd.f32 %v1108, %v1133
        %v1180 = vadd.f32 %v1109, %v1133
        %v1181 = vadd.f32 %v1110, %v1133
        %v1182 = vadd.f32 %v1111, %v1133
        %v1183 = vadd.f32 %v1112, %v1133
        %v1184 = vadd.f32 %v1113, %v1133
        %v1185 = vadd.f32 %v1114, %v1133
        %v1186 = vadd.f32 %v1115, %v1133
        %v1187 = vadd.f32 %v1116, %v1133
        %v1188 = vadd.f32 %v1117, %v1133
        %v1189 = vadd.f32 %v1118, %v1133
        %v1190 = vadd.f32 %v1119, %v1133
        %v1191 = vadd.f32 %v1120, %v1133
        %v1192 = vadd.f32 %v1121, %v1133
        %v1193 = vadd.f32 %v1122, %v1133
        %v1194 = vadd.f32 %v1123, %v1133
        %v1195 = vadd.f32 %v1124, %v1133
        %v1196 = vadd.f32 %v1125, %v1133
        %v1197 = vadd.f32 %v1126, %v1133
        %v1198 = vadd.f32 %v1127, %v1133
        %v1199 = vmax.f32 %v1135, 0.0
        %v1200 = vmax.f32 %v1136, 0.0
        %v1201 = vmax.f32 %v1137, 0.0
        %v1202 = vmax.f32 %v1138, 0.0
        %v1203 = vmax.f32 %v1139, 0.0
        %v1204 = vmax.f32 %v1140, 0.0
        %v1205 = vmax.f32 %v1141, 0.0
        %v1206 = vmax.f32 %v1142, 0.0
        %v1207 = vmax.f32 %v1143, 0.0
        %v1208 = vmax.f32 %v1144, 0.0
        %v1209 = vmax.f32 %v1145, 0.0
        %v1210 = vmax.f32 %v1146, 0.0
        %v1211 = vmax.f32 %v1147, 0.0
        %v1212 = vmax.f32 %v1148, 0.0
        %v1213 = vmax.f32 %v1149, 0.0
        %v1214 = vmax.f32 %v1150, 0.0
        %v1215 = vmax.f32 %v1151, 0.0
        %v1216 = vmax.f32 %v1152, 0.0
        %v1217 = vmax.f32 %v1153, 0.0
        %v1218 = vmax.f32 %v1154, 0.0
        %v1219 = vmax.f32 %v1155, 0.0
        %v1220 = vmax.f32 %v1156, 0.0
        %v1221 = vmax.f32 %v1157, 0.0
        %v1222 = vmax.f32 %v1158, 0.0
        %v1223 = vmax.f32 %v1159, 0.0
        %v1224 = vmax.f32 %v1160, 0.0
        %v1225 = vmax.f32 %v1161, 0.0
        %v1226 = vmax.f32 %v1162, 0.0
        %v1227 = vmax.f32 %v1163, 0.0
        %v1228 = vmax.f32 %v1164, 0.0
        %v1229 = vmax.f32 %v1165, 0.0
        %v1230 = vmax.f32 %v1166, 0.0
        %v1231 = vmax.f32 %v1167, 0.0
        %v1232 = vmax.f32 %v1168, 0.0
        %v1233 = vmax.f32 %v1169, 0.0
        %v1234 = vmax.f32 %v1170, 0.0
        %v1235 = vmax.f32 %v1171, 0.0
        %v1236 = vmax.f32 %v1172, 0.0
        %v1237 = vmax.f32 %v1173, 0.0
        %v1238 = vmax.f32 %v1174, 0.0
        %v1239 = vmax.f32 %v1175, 0.0
        %v1240 = vmax.f32 %v1176, 0.0
        %v1241 = vmax.f32 %v1177, 0.0
        %v1242 = vmax.f32 %v1178, 0.0
        %v1243 = vmax.f32 %v1179, 0.0
        %v1244 = vmax.f32 %v1180, 0.0
        %v1245 = vmax.f32 %v1181, 0.0
        %v1246 = vmax.f32 %v1182, 0.0
        %v1247 = vmax.f32 %v1183, 0.0
        %v1248 = vmax.f32 %v1184, 0.0
        %v1249 = vmax.f32 %v1185, 0.0
        %v1250 = vmax.f32 %v1186, 0.0
        %v1251 = vmax.f32 %v1187, 0.0
        %v1252 = vmax.f32 %v1188, 0.0
        %v1253 = vmax.f32 %v1189, 0.0
        %v1254 = vmax.f32 %v1190, 0.0
        %v1255 = vmax.f32 %v1191, 0.0
        %v1256 = vmax.f32 %v1192, 0.0
        %v1257 = vmax.f32 %v1193, 0.0
        %v1258 = vmax.f32 %v1194, 0.0
        %v1259 = vmax.f32 %v1195, 0.0
        %v1260 = vmax.f32 %v1196, 0.0
        %v1261 = vmax.f32 %v1197, 0.0
        %v1262 = vmax.f32 %v1198, 0.0
        %v1263 = vld [vmem:[%s5] sm:$0xf]
        %v1265 = vsel %vm475, %v1199, 0
        %v1268 = vsel %vm475, %v1200, 0
        %v1271 = vsel %vm475, %v1201, 0
        %v1274 = vsel %vm475, %v1202, 0
        %v1277 = vsel %vm475, %v1203, 0
        %v1280 = vsel %vm475, %v1204, 0
        %v1283 = vsel %vm475, %v1205, 0
        %v1286 = vsel %vm475, %v1206, 0
        %v1289 = vsel %vm475, %v1207, 0
        %v1292 = vsel %vm475, %v1208, 0
        %v1295 = vsel %vm475, %v1209, 0
        %v1298 = vsel %vm475, %v1210, 0
        %v1301 = vsel %vm475, %v1211, 0
        %v1304 = vsel %vm475, %v1212, 0
        %v1307 = vsel %vm475, %v1213, 0
        %v1310 = vsel %vm475, %v1214, 0
        %v1313 = vsel %vm475, %v1215, 0
        %v1316 = vsel %vm475, %v1216, 0
        %v1319 = vsel %vm475, %v1217, 0
        %v1322 = vsel %vm475, %v1218, 0
        %v1325 = vsel %vm475, %v1219, 0
        %v1328 = vsel %vm475, %v1220, 0
        %v1331 = vsel %vm475, %v1221, 0
        %v1334 = vsel %vm475, %v1222, 0
        %v1337 = vsel %vm475, %v1223, 0
        %v1340 = vsel %vm475, %v1224, 0
        %v1343 = vsel %vm475, %v1225, 0
        %v1346 = vsel %vm475, %v1226, 0
        %v1349 = vsel %vm475, %v1227, 0
        %v1352 = vsel %vm475, %v1228, 0
        %v1355 = vsel %vm475, %v1229, 0
        %v1358 = vsel %vm475, %v1230, 0
        %v1361 = vsel %vm475, %v1231, 0
        %v1364 = vsel %vm475, %v1232, 0
        %v1367 = vsel %vm475, %v1233, 0
        %v1370 = vsel %vm475, %v1234, 0
        %v1373 = vsel %vm475, %v1235, 0
        %v1376 = vsel %vm475, %v1236, 0
        %v1379 = vsel %vm475, %v1237, 0
        %v1382 = vsel %vm475, %v1238, 0
        %v1385 = vsel %vm475, %v1239, 0
        %v1388 = vsel %vm475, %v1240, 0
        %v1391 = vsel %vm475, %v1241, 0
        %v1394 = vsel %vm475, %v1242, 0
        %v1397 = vsel %vm475, %v1243, 0
        %v1400 = vsel %vm475, %v1244, 0
        %v1403 = vsel %vm475, %v1245, 0
        %v1406 = vsel %vm475, %v1246, 0
        %v1409 = vsel %vm475, %v1247, 0
        %v1412 = vsel %vm475, %v1248, 0
        %v1415 = vsel %vm475, %v1249, 0
        %v1418 = vsel %vm475, %v1250, 0
        %v1421 = vsel %vm475, %v1251, 0
        %v1424 = vsel %vm475, %v1252, 0
        %v1427 = vsel %vm475, %v1253, 0
        %v1430 = vsel %vm475, %v1254, 0
        %v1433 = vsel %vm475, %v1255, 0
        %v1436 = vsel %vm475, %v1256, 0
        %v1439 = vsel %vm475, %v1257, 0
        %v1442 = vsel %vm475, %v1258, 0
        %v1445 = vsel %vm475, %v1259, 0
        %v1448 = vsel %vm475, %v1260, 0
        %v1451 = vsel %vm475, %v1261, 0
        %v1454 = vsel %vm475, %v1262, 0
        %v1457 = vsel %vm668, %v1263, 0
        %1459 = vmatprep.subr.mxu0 0.0
        %1460 = vmatpush1.msra.mxu0 %v1457
        %1461 = vmatprep.subr.mxu0 0.0
        %1462 = vmatpush1.msra.mxu0 0.0
        %1463 = vmatprep.subr.mxu0 0.0
        %1464 = vmatpush1.msra.mxu0 0.0
        %1465 = vmatprep.subr.mxu0 0.0
        %1466 = vmatpush1.msra.mxu0 0.0
        %1467 = vmatprep.subr.mxu0 0.0
        %1468 = vmatpush1.msra.mxu0 0.0
        %1469 = vmatprep.subr.mxu0 0.0
        %1470 = vmatpush1.msra.mxu0 0.0
        %1471 = vmatprep.subr.mxu0 0.0
        %1472 = vmatpush1.msra.mxu0 0.0
        %1473 = vmatprep.subr.mxu0 0.0
        %1474 = vmatpush1.msra.mxu0 0.0
        %1475 = vmatprep.subr.mxu0 0.0
        %1476 = vmatpush1.msra.mxu0 0.0
        %1477 = vmatprep.subr.mxu0 0.0
        %1478 = vmatpush1.msra.mxu0 0.0
        %1479 = vmatprep.subr.mxu0 0.0
        %1480 = vmatpush1.msra.mxu0 0.0
        %1481 = vmatprep.subr.mxu0 0.0
        %1482 = vmatpush1.msra.mxu0 0.0
        %1483 = vmatprep.subr.mxu0 0.0
        %1484 = vmatpush1.msra.mxu0 0.0
        %1485 = vmatprep.subr.mxu0 0.0
        %1486 = vmatpush1.msra.mxu0 0.0
        %1487 = vmatprep.subr.mxu0 0.0
        %1488 = vmatpush1.msra.mxu0 0.0
        %1489 = vmatprep.subr.mxu0 0.0
        %1490 = vmatpush1.msra.mxu0 0.0
        %1491 = vmatprep.subr.mxu0 0.0
        %1492 = vmatpush1.msra.mxu0 0.0
        %1493 = vmatprep.subr.mxu0 0.0
        %1494 = vmatpush1.msra.mxu0 0.0
        %1495 = vmatprep.subr.mxu0 0.0
        %1496 = vmatpush1.msra.mxu0 0.0
        %1497 = vmatprep.subr.mxu0 0.0
        %1498 = vmatpush1.msra.mxu0 0.0
        %1499 = vmatprep.subr.mxu0 0.0
        %1500 = vmatpush1.msra.mxu0 0.0
        %1501 = vmatprep.subr.mxu0 0.0
        %1502 = vmatpush1.msra.mxu0 0.0
        %1503 = vmatprep.subr.mxu0 0.0
        %1504 = vmatpush1.msra.mxu0 0.0
        %1505 = vmatprep.subr.mxu0 0.0
        %1506 = vmatpush1.msra.mxu0 0.0
        %1507 = vmatprep.subr.mxu0 0.0
        %1508 = vmatpush1.msra.mxu0 0.0
        %1509 = vmatprep.subr.mxu0 0.0
        %1510 = vmatpush1.msra.mxu0 0.0
        %1511 = vmatprep.subr.mxu0 0.0
        %1512 = vmatpush1.msra.mxu0 0.0
        %1513 = vmatprep.subr.mxu0 0.0
        %1514 = vmatpush1.msra.mxu0 0.0
        %1515 = vmatprep.subr.mxu0 0.0
        %1516 = vmatpush1.msra.mxu0 0.0
        %1517 = vmatprep.subr.mxu0 0.0
        %1518 = vmatpush1.msra.mxu0 0.0
        %1519 = vmatprep.subr.mxu0 0.0
        %1520 = vmatpush1.msra.mxu0 0.0
        %1521 = vmatprep.subr.mxu0 0.0
        %1522 = vmatpush1.msra.mxu0 0.0
        %1523 = vmatprep.mubr.f32.mxu0 0.0
        %1524 = vmatmul.mubr.f32.gmra.mrb[0].mxu0 %v1265
        %v1525 = vpop.f32.mrb[0].mxu0
        %v1526 = vadd.f32 0.0, %v1525
        %v1527 = vpop.f32.mrb[0].mxu0
        %1528 = vmatprep.mubr.f32.mxu0 0.0
        %1529 = vmatmul.mubr.f32.gmra.mrb[0].mxu0 %v1268
        %v1530 = vpop.f32.mrb[0].mxu0
        %v1531 = vadd.f32 0.0, %v1530
        %v1532 = vpop.f32.mrb[0].mxu0
        %1533 = vmatprep.mubr.f32.mxu0 0.0
        %1534 = vmatmul.mubr.f32.gmra.mrb[0].mxu0 %v1271
        %v1535 = vpop.f32.mrb[0].mxu0
        %v1536 = vadd.f32 0.0, %v1535
        %v1537 = vpop.f32.mrb[0].mxu0
        %1538 = vmatprep.mubr.f32.mxu0 0.0
        %1539 = vmatmul.mubr.f32.gmra.mrb[0].mxu0 %v1274
        %v1540 = vpop.f32.mrb[0].mxu0
        %v1541 = vadd.f32 0.0, %v1540
        %v1542 = vpop.f32.mrb[0].mxu0
        %1543 = vmatprep.mubr.f32.mxu0 0.0
        %1544 = vmatmul.mubr.f32.gmra.mrb[0].mxu0 %v1277
        %v1545 = vpop.f32.mrb[0].mxu0
        %v1546 = vadd.f32 0.0, %v1545
        %v1547 = vpop.f32.mrb[0].mxu0
        %1548 = vmatprep.mubr.f32.mxu0 0.0
        %1549 = vmatmul.mubr.f32.gmra.mrb[0].mxu0 %v1280
        %v1550 = vpop.f32.mrb[0].mxu0
        %v1551 = vadd.f32 0.0, %v1550
        %v1552 = vpop.f32.mrb[0].mxu0
        %1553 = vmatprep.mubr.f32.mxu0 0.0
        %1554 = vmatmul.mubr.f32.gmra.mrb[0].mxu0 %v1283
        %v1555 = vpop.f32.mrb[0].mxu0
        %v1556 = vadd.f32 0.0, %v1555
        %v1557 = vpop.f32.mrb[0].mxu0
        %1558 = vmatprep.mubr.f32.mxu0 0.0
        %1559 = vmatmul.mubr.f32.gmra.mrb[0].mxu0 %v1286
        %v1560 = vpop.f32.mrb[0].mxu0
        %v1561 = vadd.f32 0.0, %v1560
        %v1562 = vpop.f32.mrb[0].mxu0
        %1563 = vmatprep.mubr.f32.mxu0 0.0
        %1564 = vmatmul.mubr.f32.gmra.mrb[0].mxu0 %v1289
        %v1565 = vpop.f32.mrb[0].mxu0
        %v1566 = vadd.f32 0.0, %v1565
        %v1567 = vpop.f32.mrb[0].mxu0
        %1568 = vmatprep.mubr.f32.mxu0 0.0
        %1569 = vmatmul.mubr.f32.gmra.mrb[0].mxu0 %v1292
        %v1570 = vpop.f32.mrb[0].mxu0
        %v1571 = vadd.f32 0.0, %v1570
        %v1572 = vpop.f32.mrb[0].mxu0
        %1573 = vmatprep.mubr.f32.mxu0 0.0
        %1574 = vmatmul.mubr.f32.gmra.mrb[0].mxu0 %v1295
        %v1575 = vpop.f32.mrb[0].mxu0
        %v1576 = vadd.f32 0.0, %v1575
        %v1577 = vpop.f32.mrb[0].mxu0
        %1578 = vmatprep.mubr.f32.mxu0 0.0
        %1579 = vmatmul.mubr.f32.gmra.mrb[0].mxu0 %v1298
        %v1580 = vpop.f32.mrb[0].mxu0
        %v1581 = vadd.f32 0.0, %v1580
        %v1582 = vpop.f32.mrb[0].mxu0
        %1583 = vmatprep.mubr.f32.mxu0 0.0
        %1584 = vmatmul.mubr.f32.gmra.mrb[0].mxu0 %v1301
        %v1585 = vpop.f32.mrb[0].mxu0
        %v1586 = vadd.f32 0.0, %v1585
        %v1587 = vpop.f32.mrb[0].mxu0
        %1588 = vmatprep.mubr.f32.mxu0 0.0
        %1589 = vmatmul.mubr.f32.gmra.mrb[0].mxu0 %v1304
        %v1590 = vpop.f32.mrb[0].mxu0
        %v1591 = vadd.f32 0.0, %v1590
        %v1592 = vpop.f32.mrb[0].mxu0
        %1593 = vmatprep.mubr.f32.mxu0 0.0
        %1594 = vmatmul.mubr.f32.gmra.mrb[0].mxu0 %v1307
        %v1595 = vpop.f32.mrb[0].mxu0
        %v1596 = vadd.f32 0.0, %v1595
        %v1597 = vpop.f32.mrb[0].mxu0
        %1598 = vmatprep.mubr.f32.mxu0 0.0
        %1599 = vmatmul.mubr.f32.gmra.mrb[0].mxu0 %v1310
        %v1600 = vpop.f32.mrb[0].mxu0
        %v1601 = vadd.f32 0.0, %v1600
        %v1602 = vpop.f32.mrb[0].mxu0
        %1603 = vmatprep.mubr.f32.mxu0 0.0
        %1604 = vmatmul.mubr.f32.gmra.mrb[0].mxu0 %v1313
        %v1605 = vpop.f32.mrb[0].mxu0
        %v1606 = vadd.f32 0.0, %v1605
        %v1607 = vpop.f32.mrb[0].mxu0
        %1608 = vmatprep.mubr.f32.mxu0 0.0
        %1609 = vmatmul.mubr.f32.gmra.mrb[0].mxu0 %v1316
        %v1610 = vpop.f32.mrb[0].mxu0
        %v1611 = vadd.f32 0.0, %v1610
        %v1612 = vpop.f32.mrb[0].mxu0
        %1613 = vmatprep.mubr.f32.mxu0 0.0
        %1614 = vmatmul.mubr.f32.gmra.mrb[0].mxu0 %v1319
        %v1615 = vpop.f32.mrb[0].mxu0
        %v1616 = vadd.f32 0.0, %v1615
        %v1617 = vpop.f32.mrb[0].mxu0
        %1618 = vmatprep.mubr.f32.mxu0 0.0
        %1619 = vmatmul.mubr.f32.gmra.mrb[0].mxu0 %v1322
        %v1620 = vpop.f32.mrb[0].mxu0
        %v1621 = vadd.f32 0.0, %v1620
        %v1622 = vpop.f32.mrb[0].mxu0
        %1623 = vmatprep.mubr.f32.mxu0 0.0
        %1624 = vmatmul.mubr.f32.gmra.mrb[0].mxu0 %v1325
        %v1625 = vpop.f32.mrb[0].mxu0
        %v1626 = vadd.f32 0.0, %v1625
        %v1627 = vpop.f32.mrb[0].mxu0
        %1628 = vmatprep.mubr.f32.mxu0 0.0
        %1629 = vmatmul.mubr.f32.gmra.mrb[0].mxu0 %v1328
        %v1630 = vpop.f32.mrb[0].mxu0
        %v1631 = vadd.f32 0.0, %v1630
        %v1632 = vpop.f32.mrb[0].mxu0
        %1633 = vmatprep.mubr.f32.mxu0 0.0
        %1634 = vmatmul.mubr.f32.gmra.mrb[0].mxu0 %v1331
        %v1635 = vpop.f32.mrb[0].mxu0
        %v1636 = vadd.f32 0.0, %v1635
        %v1637 = vpop.f32.mrb[0].mxu0
        %1638 = vmatprep.mubr.f32.mxu0 0.0
        %1639 = vmatmul.mubr.f32.gmra.mrb[0].mxu0 %v1334
        %v1640 = vpop.f32.mrb[0].mxu0
        %v1641 = vadd.f32 0.0, %v1640
        %v1642 = vpop.f32.mrb[0].mxu0
        %1643 = vmatprep.mubr.f32.mxu0 0.0
        %1644 = vmatmul.mubr.f32.gmra.mrb[0].mxu0 %v1337
        %v1645 = vpop.f32.mrb[0].mxu0
        %v1646 = vadd.f32 0.0, %v1645
        %v1647 = vpop.f32.mrb[0].mxu0
        %1648 = vmatprep.mubr.f32.mxu0 0.0
        %1649 = vmatmul.mubr.f32.gmra.mrb[0].mxu0 %v1340
        %v1650 = vpop.f32.mrb[0].mxu0
        %v1651 = vadd.f32 0.0, %v1650
        %v1652 = vpop.f32.mrb[0].mxu0
        %1653 = vmatprep.mubr.f32.mxu0 0.0
        %1654 = vmatmul.mubr.f32.gmra.mrb[0].mxu0 %v1343
        %v1655 = vpop.f32.mrb[0].mxu0
        %v1656 = vadd.f32 0.0, %v1655
        %v1657 = vpop.f32.mrb[0].mxu0
        %1658 = vmatprep.mubr.f32.mxu0 0.0
        %1659 = vmatmul.mubr.f32.gmra.mrb[0].mxu0 %v1346
        %v1660 = vpop.f32.mrb[0].mxu0
        %v1661 = vadd.f32 0.0, %v1660
        %v1662 = vpop.f32.mrb[0].mxu0
        %1663 = vmatprep.mubr.f32.mxu0 0.0
        %1664 = vmatmul.mubr.f32.gmra.mrb[0].mxu0 %v1349
        %v1665 = vpop.f32.mrb[0].mxu0
        %v1666 = vadd.f32 0.0, %v1665
        %v1667 = vpop.f32.mrb[0].mxu0
        %1668 = vmatprep.mubr.f32.mxu0 0.0
        %1669 = vmatmul.mubr.f32.gmra.mrb[0].mxu0 %v1352
        %v1670 = vpop.f32.mrb[0].mxu0
        %v1671 = vadd.f32 0.0, %v1670
        %v1672 = vpop.f32.mrb[0].mxu0
        %1673 = vmatprep.mubr.f32.mxu0 0.0
        %1674 = vmatmul.mubr.f32.gmra.mrb[0].mxu0 %v1355
        %v1675 = vpop.f32.mrb[0].mxu0
        %v1676 = vadd.f32 0.0, %v1675
        %v1677 = vpop.f32.mrb[0].mxu0
        %1678 = vmatprep.mubr.f32.mxu0 0.0
        %1679 = vmatmul.mubr.f32.gmra.mrb[0].mxu0 %v1358
        %v1680 = vpop.f32.mrb[0].mxu0
        %v1681 = vadd.f32 0.0, %v1680
        %v1682 = vpop.f32.mrb[0].mxu0
        %1683 = vmatprep.mubr.f32.mxu0 0.0
        %1684 = vmatmul.mubr.f32.gmra.mrb[0].mxu0 %v1361
        %v1685 = vpop.f32.mrb[0].mxu0
        %v1686 = vadd.f32 0.0, %v1685
        %v1687 = vpop.f32.mrb[0].mxu0
        %1688 = vmatprep.mubr.f32.mxu0 0.0
        %1689 = vmatmul.mubr.f32.gmra.mrb[0].mxu0 %v1364
        %v1690 = vpop.f32.mrb[0].mxu0
        %v1691 = vadd.f32 0.0, %v1690
        %v1692 = vpop.f32.mrb[0].mxu0
        %1693 = vmatprep.mubr.f32.mxu0 0.0
        %1694 = vmatmul.mubr.f32.gmra.mrb[0].mxu0 %v1367
        %v1695 = vpop.f32.mrb[0].mxu0
        %v1696 = vadd.f32 0.0, %v1695
        %v1697 = vpop.f32.mrb[0].mxu0
        %1698 = vmatprep.mubr.f32.mxu0 0.0
        %1699 = vmatmul.mubr.f32.gmra.mrb[0].mxu0 %v1370
        %v1700 = vpop.f32.mrb[0].mxu0
        %v1701 = vadd.f32 0.0, %v1700
        %v1702 = vpop.f32.mrb[0].mxu0
        %1703 = vmatprep.mubr.f32.mxu0 0.0
        %1704 = vmatmul.mubr.f32.gmra.mrb[0].mxu0 %v1373
        %v1705 = vpop.f32.mrb[0].mxu0
        %v1706 = vadd.f32 0.0, %v1705
        %v1707 = vpop.f32.mrb[0].mxu0
        %1708 = vmatprep.mubr.f32.mxu0 0.0
        %1709 = vmatmul.mubr.f32.gmra.mrb[0].mxu0 %v1376
        %v1710 = vpop.f32.mrb[0].mxu0
        %v1711 = vadd.f32 0.0, %v1710
        %v1712 = vpop.f32.mrb[0].mxu0
        %1713 = vmatprep.mubr.f32.mxu0 0.0
        %1714 = vmatmul.mubr.f32.gmra.mrb[0].mxu0 %v1379
        %v1715 = vpop.f32.mrb[0].mxu0
        %v1716 = vadd.f32 0.0, %v1715
        %v1717 = vpop.f32.mrb[0].mxu0
        %1718 = vmatprep.mubr.f32.mxu0 0.0
        %1719 = vmatmul.mubr.f32.gmra.mrb[0].mxu0 %v1382
        %v1720 = vpop.f32.mrb[0].mxu0
        %v1721 = vadd.f32 0.0, %v1720
        %v1722 = vpop.f32.mrb[0].mxu0
        %1723 = vmatprep.mubr.f32.mxu0 0.0
        %1724 = vmatmul.mubr.f32.gmra.mrb[0].mxu0 %v1385
        %v1725 = vpop.f32.mrb[0].mxu0
        %v1726 = vadd.f32 0.0, %v1725
        %v1727 = vpop.f32.mrb[0].mxu0
        %1728 = vmatprep.mubr.f32.mxu0 0.0
        %1729 = vmatmul.mubr.f32.gmra.mrb[0].mxu0 %v1388
        %v1730 = vpop.f32.mrb[0].mxu0
        %v1731 = vadd.f32 0.0, %v1730
        %v1732 = vpop.f32.mrb[0].mxu0
        %1733 = vmatprep.mubr.f32.mxu0 0.0
        %1734 = vmatmul.mubr.f32.gmra.mrb[0].mxu0 %v1391
        %v1735 = vpop.f32.mrb[0].mxu0
        %v1736 = vadd.f32 0.0, %v1735
        %v1737 = vpop.f32.mrb[0].mxu0
        %1738 = vmatprep.mubr.f32.mxu0 0.0
        %1739 = vmatmul.mubr.f32.gmra.mrb[0].mxu0 %v1394
        %v1740 = vpop.f32.mrb[0].mxu0
        %v1741 = vadd.f32 0.0, %v1740
        %v1742 = vpop.f32.mrb[0].mxu0
        %1743 = vmatprep.mubr.f32.mxu0 0.0
        %1744 = vmatmul.mubr.f32.gmra.mrb[0].mxu0 %v1397
        %v1745 = vpop.f32.mrb[0].mxu0
        %v1746 = vadd.f32 0.0, %v1745
        %v1747 = vpop.f32.mrb[0].mxu0
        %1748 = vmatprep.mubr.f32.mxu0 0.0
        %1749 = vmatmul.mubr.f32.gmra.mrb[0].mxu0 %v1400
        %v1750 = vpop.f32.mrb[0].mxu0
        %v1751 = vadd.f32 0.0, %v1750
        %v1752 = vpop.f32.mrb[0].mxu0
        %1753 = vmatprep.mubr.f32.mxu0 0.0
        %1754 = vmatmul.mubr.f32.gmra.mrb[0].mxu0 %v1403
        %v1755 = vpop.f32.mrb[0].mxu0
        %v1756 = vadd.f32 0.0, %v1755
        %v1757 = vpop.f32.mrb[0].mxu0
        %1758 = vmatprep.mubr.f32.mxu0 0.0
        %1759 = vmatmul.mubr.f32.gmra.mrb[0].mxu0 %v1406
        %v1760 = vpop.f32.mrb[0].mxu0
        %v1761 = vadd.f32 0.0, %v1760
        %v1762 = vpop.f32.mrb[0].mxu0
        %1763 = vmatprep.mubr.f32.mxu0 0.0
        %1764 = vmatmul.mubr.f32.gmra.mrb[0].mxu0 %v1409
        %v1765 = vpop.f32.mrb[0].mxu0
        %v1766 = vadd.f32 0.0, %v1765
        %v1767 = vpop.f32.mrb[0].mxu0
        %1768 = vmatprep.mubr.f32.mxu0 0.0
        %1769 = vmatmul.mubr.f32.gmra.mrb[0].mxu0 %v1412
        %v1770 = vpop.f32.mrb[0].mxu0
        %v1771 = vadd.f32 0.0, %v1770
        %v1772 = vpop.f32.mrb[0].mxu0
        %1773 = vmatprep.mubr.f32.mxu0 0.0
        %1774 = vmatmul.mubr.f32.gmra.mrb[0].mxu0 %v1415
        %v1775 = vpop.f32.mrb[0].mxu0
        %v1776 = vadd.f32 0.0, %v1775
        %v1777 = vpop.f32.mrb[0].mxu0
        %1778 = vmatprep.mubr.f32.mxu0 0.0
        %1779 = vmatmul.mubr.f32.gmra.mrb[0].mxu0 %v1418
        %v1780 = vpop.f32.mrb[0].mxu0
        %v1781 = vadd.f32 0.0, %v1780
        %v1782 = vpop.f32.mrb[0].mxu0
        %1783 = vmatprep.mubr.f32.mxu0 0.0
        %1784 = vmatmul.mubr.f32.gmra.mrb[0].mxu0 %v1421
        %v1785 = vpop.f32.mrb[0].mxu0
        %v1786 = vadd.f32 0.0, %v1785
        %v1787 = vpop.f32.mrb[0].mxu0
        %1788 = vmatprep.mubr.f32.mxu0 0.0
        %1789 = vmatmul.mubr.f32.gmra.mrb[0].mxu0 %v1424
        %v1790 = vpop.f32.mrb[0].mxu0
        %v1791 = vadd.f32 0.0, %v1790
        %v1792 = vpop.f32.mrb[0].mxu0
        %1793 = vmatprep.mubr.f32.mxu0 0.0
        %1794 = vmatmul.mubr.f32.gmra.mrb[0].mxu0 %v1427
        %v1795 = vpop.f32.mrb[0].mxu0
        %v1796 = vadd.f32 0.0, %v1795
        %v1797 = vpop.f32.mrb[0].mxu0
        %1798 = vmatprep.mubr.f32.mxu0 0.0
        %1799 = vmatmul.mubr.f32.gmra.mrb[0].mxu0 %v1430
        %v1800 = vpop.f32.mrb[0].mxu0
        %v1801 = vadd.f32 0.0, %v1800
        %v1802 = vpop.f32.mrb[0].mxu0
        %1803 = vmatprep.mubr.f32.mxu0 0.0
        %1804 = vmatmul.mubr.f32.gmra.mrb[0].mxu0 %v1433
        %v1805 = vpop.f32.mrb[0].mxu0
        %v1806 = vadd.f32 0.0, %v1805
        %v1807 = vpop.f32.mrb[0].mxu0
        %1808 = vmatprep.mubr.f32.mxu0 0.0
        %1809 = vmatmul.mubr.f32.gmra.mrb[0].mxu0 %v1436
        %v1810 = vpop.f32.mrb[0].mxu0
        %v1811 = vadd.f32 0.0, %v1810
        %v1812 = vpop.f32.mrb[0].mxu0
        %1813 = vmatprep.mubr.f32.mxu0 0.0
        %1814 = vmatmul.mubr.f32.gmra.mrb[0].mxu0 %v1439
        %v1815 = vpop.f32.mrb[0].mxu0
        %v1816 = vadd.f32 0.0, %v1815
        %v1817 = vpop.f32.mrb[0].mxu0
        %1818 = vmatprep.mubr.f32.mxu0 0.0
        %1819 = vmatmul.mubr.f32.gmra.mrb[0].mxu0 %v1442
        %v1820 = vpop.f32.mrb[0].mxu0
        %v1821 = vadd.f32 0.0, %v1820
        %v1822 = vpop.f32.mrb[0].mxu0
        %1823 = vmatprep.mubr.f32.mxu0 0.0
        %1824 = vmatmul.mubr.f32.gmra.mrb[0].mxu0 %v1445
        %v1825 = vpop.f32.mrb[0].mxu0
        %v1826 = vadd.f32 0.0, %v1825
        %v1827 = vpop.f32.mrb[0].mxu0
        %1828 = vmatprep.mubr.f32.mxu0 0.0
        %1829 = vmatmul.mubr.f32.gmra.mrb[0].mxu0 %v1448
        %v1830 = vpop.f32.mrb[0].mxu0
        %v1831 = vadd.f32 0.0, %v1830
        %v1832 = vpop.f32.mrb[0].mxu0
        %1833 = vmatprep.mubr.f32.mxu0 0.0
        %1834 = vmatmul.mubr.f32.gmra.mrb[0].mxu0 %v1451
        %v1835 = vpop.f32.mrb[0].mxu0
        %v1836 = vadd.f32 0.0, %v1835
        %v1837 = vpop.f32.mrb[0].mxu0
        %1838 = vmatprep.mubr.f32.mxu0 0.0
        %1839 = vmatmul.mubr.f32.gmra.mrb[0].mxu0 %v1454
        %v1840 = vpop.f32.mrb[0].mxu0
        %v1841 = vadd.f32 0.0, %v1840
        %v1842 = vpop.f32.mrb[0].mxu0
        %1843 = vdwg.mxu0
        %v1844 = vld [vmem:[%s6] sm:$0x1]
        %v1846 = vlaneseq
        %v1847 = vshrl.u32 %v1846, 7
        %v1848 = vsub.s32 0, %v1847
        %v1849 = vrot.slane %v1844, %v1848
        %v1851 = vmul.f32 %v1526, %v1849
        %v1852 = vmul.f32 %v1531, %v1849
        %v1853 = vmul.f32 %v1536, %v1849
        %v1854 = vmul.f32 %v1541, %v1849
        %v1855 = vmul.f32 %v1546, %v1849
        %v1856 = vmul.f32 %v1551, %v1849
        %v1857 = vmul.f32 %v1556, %v1849
        %v1858 = vmul.f32 %v1561, %v1849
        %v1859 = vmul.f32 %v1566, %v1849
        %v1860 = vmul.f32 %v1571, %v1849
        %v1861 = vmul.f32 %v1576, %v1849
        %v1862 = vmul.f32 %v1581, %v1849
        %v1863 = vmul.f32 %v1586, %v1849
        %v1864 = vmul.f32 %v1591, %v1849
        %v1865 = vmul.f32 %v1596, %v1849
        %v1866 = vmul.f32 %v1601, %v1849
        %v1867 = vmul.f32 %v1606, %v1849
        %v1868 = vmul.f32 %v1611, %v1849
        %v1869 = vmul.f32 %v1616, %v1849
        %v1870 = vmul.f32 %v1621, %v1849
        %v1871 = vmul.f32 %v1626, %v1849
        %v1872 = vmul.f32 %v1631, %v1849
        %v1873 = vmul.f32 %v1636, %v1849
        %v1874 = vmul.f32 %v1641, %v1849
        %v1875 = vmul.f32 %v1646, %v1849
        %v1876 = vmul.f32 %v1651, %v1849
        %v1877 = vmul.f32 %v1656, %v1849
        %v1878 = vmul.f32 %v1661, %v1849
        %v1879 = vmul.f32 %v1666, %v1849
        %v1880 = vmul.f32 %v1671, %v1849
        %v1881 = vmul.f32 %v1676, %v1849
        %v1882 = vmul.f32 %v1681, %v1849
        %v1883 = vmul.f32 %v1686, %v1849
        %v1884 = vmul.f32 %v1691, %v1849
        %v1885 = vmul.f32 %v1696, %v1849
        %v1886 = vmul.f32 %v1701, %v1849
        %v1887 = vmul.f32 %v1706, %v1849
        %v1888 = vmul.f32 %v1711, %v1849
        %v1889 = vmul.f32 %v1716, %v1849
        %v1890 = vmul.f32 %v1721, %v1849
        %v1891 = vmul.f32 %v1726, %v1849
        %v1892 = vmul.f32 %v1731, %v1849
        %v1893 = vmul.f32 %v1736, %v1849
        %v1894 = vmul.f32 %v1741, %v1849
        %v1895 = vmul.f32 %v1746, %v1849
        %v1896 = vmul.f32 %v1751, %v1849
        %v1897 = vmul.f32 %v1756, %v1849
        %v1898 = vmul.f32 %v1761, %v1849
        %v1899 = vmul.f32 %v1766, %v1849
        %v1900 = vmul.f32 %v1771, %v1849
        %v1901 = vmul.f32 %v1776, %v1849
        %v1902 = vmul.f32 %v1781, %v1849
        %v1903 = vmul.f32 %v1786, %v1849
        %v1904 = vmul.f32 %v1791, %v1849
        %v1905 = vmul.f32 %v1796, %v1849
        %v1906 = vmul.f32 %v1801, %v1849
        %v1907 = vmul.f32 %v1806, %v1849
        %v1908 = vmul.f32 %v1811, %v1849
        %v1909 = vmul.f32 %v1816, %v1849
        %v1910 = vmul.f32 %v1821, %v1849
        %v1911 = vmul.f32 %v1826, %v1849
        %v1912 = vmul.f32 %v1831, %v1849
        %v1913 = vmul.f32 %v1836, %v1849
        %v1914 = vmul.f32 %v1841, %v1849
        %v1915 = vld [vmem:[%s7] sm:$0x1]
        %v1917 = vlaneseq
        %v1918 = vshrl.u32 %v1917, 7
        %v1919 = vsub.s32 0, %v1918
        %v1920 = vrot.slane %v1915, %v1919
        %v1922 = vadd.f32 %v1851, %v1920
        %v1923 = vadd.f32 %v1852, %v1920
        %v1924 = vadd.f32 %v1853, %v1920
        %v1925 = vadd.f32 %v1854, %v1920
        %v1926 = vadd.f32 %v1855, %v1920
        %v1927 = vadd.f32 %v1856, %v1920
        %v1928 = vadd.f32 %v1857, %v1920
        %v1929 = vadd.f32 %v1858, %v1920
        %v1930 = vadd.f32 %v1859, %v1920
        %v1931 = vadd.f32 %v1860, %v1920
        %v1932 = vadd.f32 %v1861, %v1920
        %v1933 = vadd.f32 %v1862, %v1920
        %v1934 = vadd.f32 %v1863, %v1920
        %v1935 = vadd.f32 %v1864, %v1920
        %v1936 = vadd.f32 %v1865, %v1920
        %v1937 = vadd.f32 %v1866, %v1920
        %v1938 = vadd.f32 %v1867, %v1920
        %v1939 = vadd.f32 %v1868, %v1920
        %v1940 = vadd.f32 %v1869, %v1920
        %v1941 = vadd.f32 %v1870, %v1920
        %v1942 = vadd.f32 %v1871, %v1920
        %v1943 = vadd.f32 %v1872, %v1920
        %v1944 = vadd.f32 %v1873, %v1920
        %v1945 = vadd.f32 %v1874, %v1920
        %v1946 = vadd.f32 %v1875, %v1920
        %v1947 = vadd.f32 %v1876, %v1920
        %v1948 = vadd.f32 %v1877, %v1920
        %v1949 = vadd.f32 %v1878, %v1920
        %v1950 = vadd.f32 %v1879, %v1920
        %v1951 = vadd.f32 %v1880, %v1920
        %v1952 = vadd.f32 %v1881, %v1920
        %v1953 = vadd.f32 %v1882, %v1920
        %v1954 = vadd.f32 %v1883, %v1920
        %v1955 = vadd.f32 %v1884, %v1920
        %v1956 = vadd.f32 %v1885, %v1920
        %v1957 = vadd.f32 %v1886, %v1920
        %v1958 = vadd.f32 %v1887, %v1920
        %v1959 = vadd.f32 %v1888, %v1920
        %v1960 = vadd.f32 %v1889, %v1920
        %v1961 = vadd.f32 %v1890, %v1920
        %v1962 = vadd.f32 %v1891, %v1920
        %v1963 = vadd.f32 %v1892, %v1920
        %v1964 = vadd.f32 %v1893, %v1920
        %v1965 = vadd.f32 %v1894, %v1920
        %v1966 = vadd.f32 %v1895, %v1920
        %v1967 = vadd.f32 %v1896, %v1920
        %v1968 = vadd.f32 %v1897, %v1920
        %v1969 = vadd.f32 %v1898, %v1920
        %v1970 = vadd.f32 %v1899, %v1920
        %v1971 = vadd.f32 %v1900, %v1920
        %v1972 = vadd.f32 %v1901, %v1920
        %v1973 = vadd.f32 %v1902, %v1920
        %v1974 = vadd.f32 %v1903, %v1920
        %v1975 = vadd.f32 %v1904, %v1920
        %v1976 = vadd.f32 %v1905, %v1920
        %v1977 = vadd.f32 %v1906, %v1920
        %v1978 = vadd.f32 %v1907, %v1920
        %v1979 = vadd.f32 %v1908, %v1920
        %v1980 = vadd.f32 %v1909, %v1920
        %v1981 = vadd.f32 %v1910, %v1920
        %v1982 = vadd.f32 %v1911, %v1920
        %v1983 = vadd.f32 %v1912, %v1920
        %v1984 = vadd.f32 %v1913, %v1920
        %v1985 = vadd.f32 %v1914, %v1920
        %v1986 = vmax.f32 %v1922, 0.0
        %v1987 = vmax.f32 %v1923, 0.0
        %v1988 = vmax.f32 %v1924, 0.0
        %v1989 = vmax.f32 %v1925, 0.0
        %v1990 = vmax.f32 %v1926, 0.0
        %v1991 = vmax.f32 %v1927, 0.0
        %v1992 = vmax.f32 %v1928, 0.0
        %v1993 = vmax.f32 %v1929, 0.0
        %v1994 = vmax.f32 %v1930, 0.0
        %v1995 = vmax.f32 %v1931, 0.0
        %v1996 = vmax.f32 %v1932, 0.0
        %v1997 = vmax.f32 %v1933, 0.0
        %v1998 = vmax.f32 %v1934, 0.0
        %v1999 = vmax.f32 %v1935, 0.0
        %v2000 = vmax.f32 %v1936, 0.0
        %v2001 = vmax.f32 %v1937, 0.0
        %v2002 = vmax.f32 %v1938, 0.0
        %v2003 = vmax.f32 %v1939, 0.0
        %v2004 = vmax.f32 %v1940, 0.0
        %v2005 = vmax.f32 %v1941, 0.0
        %v2006 = vmax.f32 %v1942, 0.0
        %v2007 = vmax.f32 %v1943, 0.0
        %v2008 = vmax.f32 %v1944, 0.0
        %v2009 = vmax.f32 %v1945, 0.0
        %v2010 = vmax.f32 %v1946, 0.0
        %v2011 = vmax.f32 %v1947, 0.0
        %v2012 = vmax.f32 %v1948, 0.0
        %v2013 = vmax.f32 %v1949, 0.0
        %v2014 = vmax.f32 %v1950, 0.0
        %v2015 = vmax.f32 %v1951, 0.0
        %v2016 = vmax.f32 %v1952, 0.0
        %v2017 = vmax.f32 %v1953, 0.0
        %v2018 = vmax.f32 %v1954, 0.0
        %v2019 = vmax.f32 %v1955, 0.0
        %v2020 = vmax.f32 %v1956, 0.0
        %v2021 = vmax.f32 %v1957, 0.0
        %v2022 = vmax.f32 %v1958, 0.0
        %v2023 = vmax.f32 %v1959, 0.0
        %v2024 = vmax.f32 %v1960, 0.0
        %v2025 = vmax.f32 %v1961, 0.0
        %v2026 = vmax.f32 %v1962, 0.0
        %v2027 = vmax.f32 %v1963, 0.0
        %v2028 = vmax.f32 %v1964, 0.0
        %v2029 = vmax.f32 %v1965, 0.0
        %v2030 = vmax.f32 %v1966, 0.0
        %v2031 = vmax.f32 %v1967, 0.0
        %v2032 = vmax.f32 %v1968, 0.0
        %v2033 = vmax.f32 %v1969, 0.0
        %v2034 = vmax.f32 %v1970, 0.0
        %v2035 = vmax.f32 %v1971, 0.0
        %v2036 = vmax.f32 %v1972, 0.0
        %v2037 = vmax.f32 %v1973, 0.0
        %v2038 = vmax.f32 %v1974, 0.0
        %v2039 = vmax.f32 %v1975, 0.0
        %v2040 = vmax.f32 %v1976, 0.0
        %v2041 = vmax.f32 %v1977, 0.0
        %v2042 = vmax.f32 %v1978, 0.0
        %v2043 = vmax.f32 %v1979, 0.0
        %v2044 = vmax.f32 %v1980, 0.0
        %v2045 = vmax.f32 %v1981, 0.0
        %v2046 = vmax.f32 %v1982, 0.0
        %v2047 = vmax.f32 %v1983, 0.0
        %v2048 = vmax.f32 %v1984, 0.0
        %v2049 = vmax.f32 %v1985, 0.0
        %v2050 = vld [vmem:[%s407] sm:$0xff]
        %v2051 = vld [vmem:[%s407 + $0x8] sm:$0xff]
        %v2052 = vld [vmem:[%s407 + $0x10] sm:$0xff]
        %v2053 = vld [vmem:[%s407 + $0x18] sm:$0xff]
        %v2054 = vld [vmem:[%s407 + $0x20] sm:$0xff]
        %v2055 = vld [vmem:[%s407 + $0x28] sm:$0xff]
        %v2056 = vld [vmem:[%s407 + $0x30] sm:$0xff]
        %v2057 = vld [vmem:[%s407 + $0x38] sm:$0xff]
        %v2058 = vld [vmem:[%s407 + $0x40] sm:$0xff]
        %v2059 = vld [vmem:[%s407 + $0x48] sm:$0xff]
        %v2060 = vld [vmem:[%s407 + $0x50] sm:$0xff]
        %v2061 = vld [vmem:[%s407 + $0x58] sm:$0xff]
        %v2062 = vld [vmem:[%s407 + $0x60] sm:$0xff]
        %v2063 = vld [vmem:[%s407 + $0x68] sm:$0xff]
        %v2064 = vld [vmem:[%s407 + $0x70] sm:$0xff]
        %v2065 = vld [vmem:[%s407 + $0x78] sm:$0xff]
        %v2066 = vld [vmem:[%s407 + $0x80] sm:$0xff]
        %v2067 = vld [vmem:[%s407 + $0x88] sm:$0xff]
        %v2068 = vld [vmem:[%s407 + $0x90] sm:$0xff]
        %v2069 = vld [vmem:[%s407 + $0x98] sm:$0xff]
        %v2070 = vld [vmem:[%s407 + $0xa0] sm:$0xff]
        %v2071 = vld [vmem:[%s407 + $0xa8] sm:$0xff]
        %v2072 = vld [vmem:[%s407 + $0xb0] sm:$0xff]
        %v2073 = vld [vmem:[%s407 + $0xb8] sm:$0xff]
        %v2074 = vld [vmem:[%s407 + $0xc0] sm:$0xff]
        %v2075 = vld [vmem:[%s407 + $0xc8] sm:$0xff]
        %v2076 = vld [vmem:[%s407 + $0xd0] sm:$0xff]
        %v2077 = vld [vmem:[%s407 + $0xd8] sm:$0xff]
        %v2078 = vld [vmem:[%s407 + $0xe0] sm:$0xff]
        %v2079 = vld [vmem:[%s407 + $0xe8] sm:$0xff]
        %v2080 = vld [vmem:[%s407 + $0xf0] sm:$0xff]
        %v2081 = vld [vmem:[%s407 + $0xf8] sm:$0xff]
        %v2082 = vld [vmem:[%s407 + $0x100] sm:$0xff]
        %v2083 = vld [vmem:[%s407 + $0x108] sm:$0xff]
        %v2084 = vld [vmem:[%s407 + $0x110] sm:$0xff]
        %v2085 = vld [vmem:[%s407 + $0x118] sm:$0xff]
        %v2086 = vld [vmem:[%s407 + $0x120] sm:$0xff]
        %v2087 = vld [vmem:[%s407 + $0x128] sm:$0xff]
        %v2088 = vld [vmem:[%s407 + $0x130] sm:$0xff]
        %v2089 = vld [vmem:[%s407 + $0x138] sm:$0xff]
        %v2090 = vld [vmem:[%s407 + $0x140] sm:$0xff]
        %v2091 = vld [vmem:[%s407 + $0x148] sm:$0xff]
        %v2092 = vld [vmem:[%s407 + $0x150] sm:$0xff]
        %v2093 = vld [vmem:[%s407 + $0x158] sm:$0xff]
        %v2094 = vld [vmem:[%s407 + $0x160] sm:$0xff]
        %v2095 = vld [vmem:[%s407 + $0x168] sm:$0xff]
        %v2096 = vld [vmem:[%s407 + $0x170] sm:$0xff]
        %v2097 = vld [vmem:[%s407 + $0x178] sm:$0xff]
        %v2098 = vld [vmem:[%s407 + $0x180] sm:$0xff]
        %v2099 = vld [vmem:[%s407 + $0x188] sm:$0xff]
        %v2100 = vld [vmem:[%s407 + $0x190] sm:$0xff]
        %v2101 = vld [vmem:[%s407 + $0x198] sm:$0xff]
        %v2102 = vld [vmem:[%s407 + $0x1a0] sm:$0xff]
        %v2103 = vld [vmem:[%s407 + $0x1a8] sm:$0xff]
        %v2104 = vld [vmem:[%s407 + $0x1b0] sm:$0xff]
        %v2105 = vld [vmem:[%s407 + $0x1b8] sm:$0xff]
        %v2106 = vld [vmem:[%s407 + $0x1c0] sm:$0xff]
        %v2107 = vld [vmem:[%s407 + $0x1c8] sm:$0xff]
        %v2108 = vld [vmem:[%s407 + $0x1d0] sm:$0xff]
        %v2109 = vld [vmem:[%s407 + $0x1d8] sm:$0xff]
        %v2110 = vld [vmem:[%s407 + $0x1e0] sm:$0xff]
        %v2111 = vld [vmem:[%s407 + $0x1e8] sm:$0xff]
        %v2112 = vld [vmem:[%s407 + $0x1f0] sm:$0xff]
        %v2113 = vld [vmem:[%s407 + $0x1f8] sm:$0xff]
        %v2114 = vld [vmem:[%s8] sm:$0xff]
        %vm2115 = vcmask 64512
        %v2117 = vsel %vm2115, %v2050, 0
        %v2120 = vsel %vm2115, %v2051, 0
        %v2123 = vsel %vm2115, %v2052, 0
        %v2126 = vsel %vm2115, %v2053, 0
        %v2129 = vsel %vm2115, %v2054, 0
        %v2132 = vsel %vm2115, %v2055, 0
        %v2135 = vsel %vm2115, %v2056, 0
        %v2138 = vsel %vm2115, %v2057, 0
        %v2141 = vsel %vm2115, %v2058, 0
        %v2144 = vsel %vm2115, %v2059, 0
        %v2147 = vsel %vm2115, %v2060, 0
        %v2150 = vsel %vm2115, %v2061, 0
        %v2153 = vsel %vm2115, %v2062, 0
        %v2156 = vsel %vm2115, %v2063, 0
        %v2159 = vsel %vm2115, %v2064, 0
        %v2162 = vsel %vm2115, %v2065, 0
        %v2165 = vsel %vm2115, %v2066, 0
        %v2168 = vsel %vm2115, %v2067, 0
        %v2171 = vsel %vm2115, %v2068, 0
        %v2174 = vsel %vm2115, %v2069, 0
        %v2177 = vsel %vm2115, %v2070, 0
        %v2180 = vsel %vm2115, %v2071, 0
        %v2183 = vsel %vm2115, %v2072, 0
        %v2186 = vsel %vm2115, %v2073, 0
        %v2189 = vsel %vm2115, %v2074, 0
        %v2192 = vsel %vm2115, %v2075, 0
        %v2195 = vsel %vm2115, %v2076, 0
        %v2198 = vsel %vm2115, %v2077, 0
        %v2201 = vsel %vm2115, %v2078, 0
        %v2204 = vsel %vm2115, %v2079, 0
        %v2207 = vsel %vm2115, %v2080, 0
        %v2210 = vsel %vm2115, %v2081, 0
        %v2213 = vsel %vm2115, %v2082, 0
        %v2216 = vsel %vm2115, %v2083, 0
        %v2219 = vsel %vm2115, %v2084, 0
        %v2222 = vsel %vm2115, %v2085, 0
        %v2225 = vsel %vm2115, %v2086, 0
        %v2228 = vsel %vm2115, %v2087, 0
        %v2231 = vsel %vm2115, %v2088, 0
        %v2234 = vsel %vm2115, %v2089, 0
        %v2237 = vsel %vm2115, %v2090, 0
        %v2240 = vsel %vm2115, %v2091, 0
        %v2243 = vsel %vm2115, %v2092, 0
        %v2246 = vsel %vm2115, %v2093, 0
        %v2249 = vsel %vm2115, %v2094, 0
        %v2252 = vsel %vm2115, %v2095, 0
        %v2255 = vsel %vm2115, %v2096, 0
        %v2258 = vsel %vm2115, %v2097, 0
        %v2261 = vsel %vm2115, %v2098, 0
        %v2264 = vsel %vm2115, %v2099, 0
        %v2267 = vsel %vm2115, %v2100, 0
        %v2270 = vsel %vm2115, %v2101, 0
        %v2273 = vsel %vm2115, %v2102, 0
        %v2276 = vsel %vm2115, %v2103, 0
        %v2279 = vsel %vm2115, %v2104, 0
        %v2282 = vsel %vm2115, %v2105, 0
        %v2285 = vsel %vm2115, %v2106, 0
        %v2288 = vsel %vm2115, %v2107, 0
        %v2291 = vsel %vm2115, %v2108, 0
        %v2294 = vsel %vm2115, %v2109, 0
        %v2297 = vsel %vm2115, %v2110, 0
        %v2300 = vsel %vm2115, %v2111, 0
        %v2303 = vsel %vm2115, %v2112, 0
        %v2306 = vsel %vm2115, %v2113, 0
        %2308 = vmatprep.subr.mxu0 0.0
        %2309 = vmatpush1.msra.mxu0 %v2114
        %2310 = vmatprep.subr.mxu0 0.0
        %2311 = vmatpush1.msra.mxu0 0.0
        %2312 = vmatprep.subr.mxu0 0.0
        %2313 = vmatpush1.msra.mxu0 0.0
        %2314 = vmatprep.subr.mxu0 0.0
        %2315 = vmatpush1.msra.mxu0 0.0
        %2316 = vmatprep.subr.mxu0 0.0
        %2317 = vmatpush1.msra.mxu0 0.0
        %2318 = vmatprep.subr.mxu0 0.0
        %2319 = vmatpush1.msra.mxu0 0.0
        %2320 = vmatprep.subr.mxu0 0.0
        %2321 = vmatpush1.msra.mxu0 0.0
        %2322 = vmatprep.subr.mxu0 0.0
        %2323 = vmatpush1.msra.mxu0 0.0
        %2324 = vmatprep.subr.mxu0 0.0
        %2325 = vmatpush1.msra.mxu0 0.0
        %2326 = vmatprep.subr.mxu0 0.0
        %2327 = vmatpush1.msra.mxu0 0.0
        %2328 = vmatprep.subr.mxu0 0.0
        %2329 = vmatpush1.msra.mxu0 0.0
        %2330 = vmatprep.subr.mxu0 0.0
        %2331 = vmatpush1.msra.mxu0 0.0
        %2332 = vmatprep.subr.mxu0 0.0
        %2333 = vmatpush1.msra.mxu0 0.0
        %2334 = vmatprep.subr.mxu0 0.0
        %2335 = vmatpush1.msra.mxu0 0.0
        %2336 = vmatprep.subr.mxu0 0.0
        %2337 = vmatpush1.msra.mxu0 0.0
        %2338 = vmatprep.subr.mxu0 0.0
        %2339 = vmatpush1.msra.mxu0 0.0
        %2340 = vmatprep.subr.mxu0 0.0
        %2341 = vmatpush1.msra.mxu0 0.0
        %2342 = vmatprep.subr.mxu0 0.0
        %2343 = vmatpush1.msra.mxu0 0.0
        %2344 = vmatprep.subr.mxu0 0.0
        %2345 = vmatpush1.msra.mxu0 0.0
        %2346 = vmatprep.subr.mxu0 0.0
        %2347 = vmatpush1.msra.mxu0 0.0
        %2348 = vmatprep.subr.mxu0 0.0
        %2349 = vmatpush1.msra.mxu0 0.0
        %2350 = vmatprep.subr.mxu0 0.0
        %2351 = vmatpush1.msra.mxu0 0.0
        %2352 = vmatprep.subr.mxu0 0.0
        %2353 = vmatpush1.msra.mxu0 0.0
        %2354 = vmatprep.subr.mxu0 0.0
        %2355 = vmatpush1.msra.mxu0 0.0
        %2356 = vmatprep.subr.mxu0 0.0
        %2357 = vmatpush1.msra.mxu0 0.0
        %2358 = vmatprep.subr.mxu0 0.0
        %2359 = vmatpush1.msra.mxu0 0.0
        %2360 = vmatprep.subr.mxu0 0.0
        %2361 = vmatpush1.msra.mxu0 0.0
        %2362 = vmatprep.subr.mxu0 0.0
        %2363 = vmatpush1.msra.mxu0 0.0
        %2364 = vmatprep.subr.mxu0 0.0
        %2365 = vmatpush1.msra.mxu0 0.0
        %2366 = vmatprep.subr.mxu0 0.0
        %2367 = vmatpush1.msra.mxu0 0.0
        %2368 = vmatprep.subr.mxu0 0.0
        %2369 = vmatpush1.msra.mxu0 0.0
        %2370 = vmatprep.subr.mxu0 0.0
        %2371 = vmatpush1.msra.mxu0 0.0
        %2372 = vmatprep.mubr.f32.mxu0 0.0
        %2373 = vmatmul.mubr.f32.gmra.mrb[0].mxu0 %v2117
        %v2374 = vpop.f32.mrb[0].mxu0
        %v2375 = vadd.f32 0.0, %v2374
        %v2376 = vpop.f32.mrb[0].mxu0
        %2377 = vmatprep.mubr.f32.mxu0 0.0
        %2378 = vmatmul.mubr.f32.gmra.mrb[0].mxu0 %v2120
        %v2379 = vpop.f32.mrb[0].mxu0
        %v2380 = vadd.f32 0.0, %v2379
        %v2381 = vpop.f32.mrb[0].mxu0
        %2382 = vmatprep.mubr.f32.mxu0 0.0
        %2383 = vmatmul.mubr.f32.gmra.mrb[0].mxu0 %v2123
        %v2384 = vpop.f32.mrb[0].mxu0
        %v2385 = vadd.f32 0.0, %v2384
        %v2386 = vpop.f32.mrb[0].mxu0
        %2387 = vmatprep.mubr.f32.mxu0 0.0
        %2388 = vmatmul.mubr.f32.gmra.mrb[0].mxu0 %v2126
        %v2389 = vpop.f32.mrb[0].mxu0
        %v2390 = vadd.f32 0.0, %v2389
        %v2391 = vpop.f32.mrb[0].mxu0
        %2392 = vmatprep.mubr.f32.mxu0 0.0
        %2393 = vmatmul.mubr.f32.gmra.mrb[0].mxu0 %v2129
        %v2394 = vpop.f32.mrb[0].mxu0
        %v2395 = vadd.f32 0.0, %v2394
        %v2396 = vpop.f32.mrb[0].mxu0
        %2397 = vmatprep.mubr.f32.mxu0 0.0
        %2398 = vmatmul.mubr.f32.gmra.mrb[0].mxu0 %v2132
        %v2399 = vpop.f32.mrb[0].mxu0
        %v2400 = vadd.f32 0.0, %v2399
        %v2401 = vpop.f32.mrb[0].mxu0
        %2402 = vmatprep.mubr.f32.mxu0 0.0
        %2403 = vmatmul.mubr.f32.gmra.mrb[0].mxu0 %v2135
        %v2404 = vpop.f32.mrb[0].mxu0
        %v2405 = vadd.f32 0.0, %v2404
        %v2406 = vpop.f32.mrb[0].mxu0
        %2407 = vmatprep.mubr.f32.mxu0 0.0
        %2408 = vmatmul.mubr.f32.gmra.mrb[0].mxu0 %v2138
        %v2409 = vpop.f32.mrb[0].mxu0
        %v2410 = vadd.f32 0.0, %v2409
        %v2411 = vpop.f32.mrb[0].mxu0
        %2412 = vmatprep.mubr.f32.mxu0 0.0
        %2413 = vmatmul.mubr.f32.gmra.mrb[0].mxu0 %v2141
        %v2414 = vpop.f32.mrb[0].mxu0
        %v2415 = vadd.f32 0.0, %v2414
        %v2416 = vpop.f32.mrb[0].mxu0
        %2417 = vmatprep.mubr.f32.mxu0 0.0
        %2418 = vmatmul.mubr.f32.gmra.mrb[0].mxu0 %v2144
        %v2419 = vpop.f32.mrb[0].mxu0
        %v2420 = vadd.f32 0.0, %v2419
        %v2421 = vpop.f32.mrb[0].mxu0
        %2422 = vmatprep.mubr.f32.mxu0 0.0
        %2423 = vmatmul.mubr.f32.gmra.mrb[0].mxu0 %v2147
        %v2424 = vpop.f32.mrb[0].mxu0
        %v2425 = vadd.f32 0.0, %v2424
        %v2426 = vpop.f32.mrb[0].mxu0
        %2427 = vmatprep.mubr.f32.mxu0 0.0
        %2428 = vmatmul.mubr.f32.gmra.mrb[0].mxu0 %v2150
        %v2429 = vpop.f32.mrb[0].mxu0
        %v2430 = vadd.f32 0.0, %v2429
        %v2431 = vpop.f32.mrb[0].mxu0
        %2432 = vmatprep.mubr.f32.mxu0 0.0
        %2433 = vmatmul.mubr.f32.gmra.mrb[0].mxu0 %v2153
        %v2434 = vpop.f32.mrb[0].mxu0
        %v2435 = vadd.f32 0.0, %v2434
        %v2436 = vpop.f32.mrb[0].mxu0
        %2437 = vmatprep.mubr.f32.mxu0 0.0
        %2438 = vmatmul.mubr.f32.gmra.mrb[0].mxu0 %v2156
        %v2439 = vpop.f32.mrb[0].mxu0
        %v2440 = vadd.f32 0.0, %v2439
        %v2441 = vpop.f32.mrb[0].mxu0
        %2442 = vmatprep.mubr.f32.mxu0 0.0
        %2443 = vmatmul.mubr.f32.gmra.mrb[0].mxu0 %v2159
        %v2444 = vpop.f32.mrb[0].mxu0
        %v2445 = vadd.f32 0.0, %v2444
        %v2446 = vpop.f32.mrb[0].mxu0
        %2447 = vmatprep.mubr.f32.mxu0 0.0
        %2448 = vmatmul.mubr.f32.gmra.mrb[0].mxu0 %v2162
        %v2449 = vpop.f32.mrb[0].mxu0
        %v2450 = vadd.f32 0.0, %v2449
        %v2451 = vpop.f32.mrb[0].mxu0
        %2452 = vmatprep.mubr.f32.mxu0 0.0
        %2453 = vmatmul.mubr.f32.gmra.mrb[0].mxu0 %v2165
        %v2454 = vpop.f32.mrb[0].mxu0
        %v2455 = vadd.f32 0.0, %v2454
        %v2456 = vpop.f32.mrb[0].mxu0
        %2457 = vmatprep.mubr.f32.mxu0 0.0
        %2458 = vmatmul.mubr.f32.gmra.mrb[0].mxu0 %v2168
        %v2459 = vpop.f32.mrb[0].mxu0
        %v2460 = vadd.f32 0.0, %v2459
        %v2461 = vpop.f32.mrb[0].mxu0
        %2462 = vmatprep.mubr.f32.mxu0 0.0
        %2463 = vmatmul.mubr.f32.gmra.mrb[0].mxu0 %v2171
        %v2464 = vpop.f32.mrb[0].mxu0
        %v2465 = vadd.f32 0.0, %v2464
        %v2466 = vpop.f32.mrb[0].mxu0
        %2467 = vmatprep.mubr.f32.mxu0 0.0
        %2468 = vmatmul.mubr.f32.gmra.mrb[0].mxu0 %v2174
        %v2469 = vpop.f32.mrb[0].mxu0
        %v2470 = vadd.f32 0.0, %v2469
        %v2471 = vpop.f32.mrb[0].mxu0
        %2472 = vmatprep.mubr.f32.mxu0 0.0
        %2473 = vmatmul.mubr.f32.gmra.mrb[0].mxu0 %v2177
        %v2474 = vpop.f32.mrb[0].mxu0
        %v2475 = vadd.f32 0.0, %v2474
        %v2476 = vpop.f32.mrb[0].mxu0
        %2477 = vmatprep.mubr.f32.mxu0 0.0
        %2478 = vmatmul.mubr.f32.gmra.mrb[0].mxu0 %v2180
        %v2479 = vpop.f32.mrb[0].mxu0
        %v2480 = vadd.f32 0.0, %v2479
        %v2481 = vpop.f32.mrb[0].mxu0
        %2482 = vmatprep.mubr.f32.mxu0 0.0
        %2483 = vmatmul.mubr.f32.gmra.mrb[0].mxu0 %v2183
        %v2484 = vpop.f32.mrb[0].mxu0
        %v2485 = vadd.f32 0.0, %v2484
        %v2486 = vpop.f32.mrb[0].mxu0
        %2487 = vmatprep.mubr.f32.mxu0 0.0
        %2488 = vmatmul.mubr.f32.gmra.mrb[0].mxu0 %v2186
        %v2489 = vpop.f32.mrb[0].mxu0
        %v2490 = vadd.f32 0.0, %v2489
        %v2491 = vpop.f32.mrb[0].mxu0
        %2492 = vmatprep.mubr.f32.mxu0 0.0
        %2493 = vmatmul.mubr.f32.gmra.mrb[0].mxu0 %v2189
        %v2494 = vpop.f32.mrb[0].mxu0
        %v2495 = vadd.f32 0.0, %v2494
        %v2496 = vpop.f32.mrb[0].mxu0
        %2497 = vmatprep.mubr.f32.mxu0 0.0
        %2498 = vmatmul.mubr.f32.gmra.mrb[0].mxu0 %v2192
        %v2499 = vpop.f32.mrb[0].mxu0
        %v2500 = vadd.f32 0.0, %v2499
        %v2501 = vpop.f32.mrb[0].mxu0
        %2502 = vmatprep.mubr.f32.mxu0 0.0
        %2503 = vmatmul.mubr.f32.gmra.mrb[0].mxu0 %v2195
        %v2504 = vpop.f32.mrb[0].mxu0
        %v2505 = vadd.f32 0.0, %v2504
        %v2506 = vpop.f32.mrb[0].mxu0
        %2507 = vmatprep.mubr.f32.mxu0 0.0
        %2508 = vmatmul.mubr.f32.gmra.mrb[0].mxu0 %v2198
        %v2509 = vpop.f32.mrb[0].mxu0
        %v2510 = vadd.f32 0.0, %v2509
        %v2511 = vpop.f32.mrb[0].mxu0
        %2512 = vmatprep.mubr.f32.mxu0 0.0
        %2513 = vmatmul.mubr.f32.gmra.mrb[0].mxu0 %v2201
        %v2514 = vpop.f32.mrb[0].mxu0
        %v2515 = vadd.f32 0.0, %v2514
        %v2516 = vpop.f32.mrb[0].mxu0
        %2517 = vmatprep.mubr.f32.mxu0 0.0
        %2518 = vmatmul.mubr.f32.gmra.mrb[0].mxu0 %v2204
        %v2519 = vpop.f32.mrb[0].mxu0
        %v2520 = vadd.f32 0.0, %v2519
        %v2521 = vpop.f32.mrb[0].mxu0
        %2522 = vmatprep.mubr.f32.mxu0 0.0
        %2523 = vmatmul.mubr.f32.gmra.mrb[0].mxu0 %v2207
        %v2524 = vpop.f32.mrb[0].mxu0
        %v2525 = vadd.f32 0.0, %v2524
        %v2526 = vpop.f32.mrb[0].mxu0
        %2527 = vmatprep.mubr.f32.mxu0 0.0
        %2528 = vmatmul.mubr.f32.gmra.mrb[0].mxu0 %v2210
        %v2529 = vpop.f32.mrb[0].mxu0
        %v2530 = vadd.f32 0.0, %v2529
        %v2531 = vpop.f32.mrb[0].mxu0
        %2532 = vmatprep.mubr.f32.mxu0 0.0
        %2533 = vmatmul.mubr.f32.gmra.mrb[0].mxu0 %v2213
        %v2534 = vpop.f32.mrb[0].mxu0
        %v2535 = vadd.f32 0.0, %v2534
        %v2536 = vpop.f32.mrb[0].mxu0
        %2537 = vmatprep.mubr.f32.mxu0 0.0
        %2538 = vmatmul.mubr.f32.gmra.mrb[0].mxu0 %v2216
        %v2539 = vpop.f32.mrb[0].mxu0
        %v2540 = vadd.f32 0.0, %v2539
        %v2541 = vpop.f32.mrb[0].mxu0
        %2542 = vmatprep.mubr.f32.mxu0 0.0
        %2543 = vmatmul.mubr.f32.gmra.mrb[0].mxu0 %v2219
        %v2544 = vpop.f32.mrb[0].mxu0
        %v2545 = vadd.f32 0.0, %v2544
        %v2546 = vpop.f32.mrb[0].mxu0
        %2547 = vmatprep.mubr.f32.mxu0 0.0
        %2548 = vmatmul.mubr.f32.gmra.mrb[0].mxu0 %v2222
        %v2549 = vpop.f32.mrb[0].mxu0
        %v2550 = vadd.f32 0.0, %v2549
        %v2551 = vpop.f32.mrb[0].mxu0
        %2552 = vmatprep.mubr.f32.mxu0 0.0
        %2553 = vmatmul.mubr.f32.gmra.mrb[0].mxu0 %v2225
        %v2554 = vpop.f32.mrb[0].mxu0
        %v2555 = vadd.f32 0.0, %v2554
        %v2556 = vpop.f32.mrb[0].mxu0
        %2557 = vmatprep.mubr.f32.mxu0 0.0
        %2558 = vmatmul.mubr.f32.gmra.mrb[0].mxu0 %v2228
        %v2559 = vpop.f32.mrb[0].mxu0
        %v2560 = vadd.f32 0.0, %v2559
        %v2561 = vpop.f32.mrb[0].mxu0
        %2562 = vmatprep.mubr.f32.mxu0 0.0
        %2563 = vmatmul.mubr.f32.gmra.mrb[0].mxu0 %v2231
        %v2564 = vpop.f32.mrb[0].mxu0
        %v2565 = vadd.f32 0.0, %v2564
        %v2566 = vpop.f32.mrb[0].mxu0
        %2567 = vmatprep.mubr.f32.mxu0 0.0
        %2568 = vmatmul.mubr.f32.gmra.mrb[0].mxu0 %v2234
        %v2569 = vpop.f32.mrb[0].mxu0
        %v2570 = vadd.f32 0.0, %v2569
        %v2571 = vpop.f32.mrb[0].mxu0
        %2572 = vmatprep.mubr.f32.mxu0 0.0
        %2573 = vmatmul.mubr.f32.gmra.mrb[0].mxu0 %v2237
        %v2574 = vpop.f32.mrb[0].mxu0
        %v2575 = vadd.f32 0.0, %v2574
        %v2576 = vpop.f32.mrb[0].mxu0
        %2577 = vmatprep.mubr.f32.mxu0 0.0
        %2578 = vmatmul.mubr.f32.gmra.mrb[0].mxu0 %v2240
        %v2579 = vpop.f32.mrb[0].mxu0
        %v2580 = vadd.f32 0.0, %v2579
        %v2581 = vpop.f32.mrb[0].mxu0
        %2582 = vmatprep.mubr.f32.mxu0 0.0
        %2583 = vmatmul.mubr.f32.gmra.mrb[0].mxu0 %v2243
        %v2584 = vpop.f32.mrb[0].mxu0
        %v2585 = vadd.f32 0.0, %v2584
        %v2586 = vpop.f32.mrb[0].mxu0
        %2587 = vmatprep.mubr.f32.mxu0 0.0
        %2588 = vmatmul.mubr.f32.gmra.mrb[0].mxu0 %v2246
        %v2589 = vpop.f32.mrb[0].mxu0
        %v2590 = vadd.f32 0.0, %v2589
        %v2591 = vpop.f32.mrb[0].mxu0
        %2592 = vmatprep.mubr.f32.mxu0 0.0
        %2593 = vmatmul.mubr.f32.gmra.mrb[0].mxu0 %v2249
        %v2594 = vpop.f32.mrb[0].mxu0
        %v2595 = vadd.f32 0.0, %v2594
        %v2596 = vpop.f32.mrb[0].mxu0
        %2597 = vmatprep.mubr.f32.mxu0 0.0
        %2598 = vmatmul.mubr.f32.gmra.mrb[0].mxu0 %v2252
        %v2599 = vpop.f32.mrb[0].mxu0
        %v2600 = vadd.f32 0.0, %v2599
        %v2601 = vpop.f32.mrb[0].mxu0
        %2602 = vmatprep.mubr.f32.mxu0 0.0
        %2603 = vmatmul.mubr.f32.gmra.mrb[0].mxu0 %v2255
        %v2604 = vpop.f32.mrb[0].mxu0
        %v2605 = vadd.f32 0.0, %v2604
        %v2606 = vpop.f32.mrb[0].mxu0
        %2607 = vmatprep.mubr.f32.mxu0 0.0
        %2608 = vmatmul.mubr.f32.gmra.mrb[0].mxu0 %v2258
        %v2609 = vpop.f32.mrb[0].mxu0
        %v2610 = vadd.f32 0.0, %v2609
        %v2611 = vpop.f32.mrb[0].mxu0
        %2612 = vmatprep.mubr.f32.mxu0 0.0
        %2613 = vmatmul.mubr.f32.gmra.mrb[0].mxu0 %v2261
        %v2614 = vpop.f32.mrb[0].mxu0
        %v2615 = vadd.f32 0.0, %v2614
        %v2616 = vpop.f32.mrb[0].mxu0
        %2617 = vmatprep.mubr.f32.mxu0 0.0
        %2618 = vmatmul.mubr.f32.gmra.mrb[0].mxu0 %v2264
        %v2619 = vpop.f32.mrb[0].mxu0
        %v2620 = vadd.f32 0.0, %v2619
        %v2621 = vpop.f32.mrb[0].mxu0
        %2622 = vmatprep.mubr.f32.mxu0 0.0
        %2623 = vmatmul.mubr.f32.gmra.mrb[0].mxu0 %v2267
        %v2624 = vpop.f32.mrb[0].mxu0
        %v2625 = vadd.f32 0.0, %v2624
        %v2626 = vpop.f32.mrb[0].mxu0
        %2627 = vmatprep.mubr.f32.mxu0 0.0
        %2628 = vmatmul.mubr.f32.gmra.mrb[0].mxu0 %v2270
        %v2629 = vpop.f32.mrb[0].mxu0
        %v2630 = vadd.f32 0.0, %v2629
        %v2631 = vpop.f32.mrb[0].mxu0
        %2632 = vmatprep.mubr.f32.mxu0 0.0
        %2633 = vmatmul.mubr.f32.gmra.mrb[0].mxu0 %v2273
        %v2634 = vpop.f32.mrb[0].mxu0
        %v2635 = vadd.f32 0.0, %v2634
        %v2636 = vpop.f32.mrb[0].mxu0
        %2637 = vmatprep.mubr.f32.mxu0 0.0
        %2638 = vmatmul.mubr.f32.gmra.mrb[0].mxu0 %v2276
        %v2639 = vpop.f32.mrb[0].mxu0
        %v2640 = vadd.f32 0.0, %v2639
        %v2641 = vpop.f32.mrb[0].mxu0
        %2642 = vmatprep.mubr.f32.mxu0 0.0
        %2643 = vmatmul.mubr.f32.gmra.mrb[0].mxu0 %v2279
        %v2644 = vpop.f32.mrb[0].mxu0
        %v2645 = vadd.f32 0.0, %v2644
        %v2646 = vpop.f32.mrb[0].mxu0
        %2647 = vmatprep.mubr.f32.mxu0 0.0
        %2648 = vmatmul.mubr.f32.gmra.mrb[0].mxu0 %v2282
        %v2649 = vpop.f32.mrb[0].mxu0
        %v2650 = vadd.f32 0.0, %v2649
        %v2651 = vpop.f32.mrb[0].mxu0
        %2652 = vmatprep.mubr.f32.mxu0 0.0
        %2653 = vmatmul.mubr.f32.gmra.mrb[0].mxu0 %v2285
        %v2654 = vpop.f32.mrb[0].mxu0
        %v2655 = vadd.f32 0.0, %v2654
        %v2656 = vpop.f32.mrb[0].mxu0
        %2657 = vmatprep.mubr.f32.mxu0 0.0
        %2658 = vmatmul.mubr.f32.gmra.mrb[0].mxu0 %v2288
        %v2659 = vpop.f32.mrb[0].mxu0
        %v2660 = vadd.f32 0.0, %v2659
        %v2661 = vpop.f32.mrb[0].mxu0
        %2662 = vmatprep.mubr.f32.mxu0 0.0
        %2663 = vmatmul.mubr.f32.gmra.mrb[0].mxu0 %v2291
        %v2664 = vpop.f32.mrb[0].mxu0
        %v2665 = vadd.f32 0.0, %v2664
        %v2666 = vpop.f32.mrb[0].mxu0
        %2667 = vmatprep.mubr.f32.mxu0 0.0
        %2668 = vmatmul.mubr.f32.gmra.mrb[0].mxu0 %v2294
        %v2669 = vpop.f32.mrb[0].mxu0
        %v2670 = vadd.f32 0.0, %v2669
        %v2671 = vpop.f32.mrb[0].mxu0
        %2672 = vmatprep.mubr.f32.mxu0 0.0
        %2673 = vmatmul.mubr.f32.gmra.mrb[0].mxu0 %v2297
        %v2674 = vpop.f32.mrb[0].mxu0
        %v2675 = vadd.f32 0.0, %v2674
        %v2676 = vpop.f32.mrb[0].mxu0
        %2677 = vmatprep.mubr.f32.mxu0 0.0
        %2678 = vmatmul.mubr.f32.gmra.mrb[0].mxu0 %v2300
        %v2679 = vpop.f32.mrb[0].mxu0
        %v2680 = vadd.f32 0.0, %v2679
        %v2681 = vpop.f32.mrb[0].mxu0
        %2682 = vmatprep.mubr.f32.mxu0 0.0
        %2683 = vmatmul.mubr.f32.gmra.mrb[0].mxu0 %v2303
        %v2684 = vpop.f32.mrb[0].mxu0
        %v2685 = vadd.f32 0.0, %v2684
        %v2686 = vpop.f32.mrb[0].mxu0
        %2687 = vmatprep.mubr.f32.mxu0 0.0
        %2688 = vmatmul.mubr.f32.gmra.mrb[0].mxu0 %v2306
        %v2689 = vpop.f32.mrb[0].mxu0
        %v2690 = vadd.f32 0.0, %v2689
        %v2691 = vpop.f32.mrb[0].mxu0
        %2692 = vdwg.mxu0
        %v2693 = vld [vmem:[%s9] sm:$0x1]
        %v2695 = vlaneseq
        %v2696 = vshrl.u32 %v2695, 7
        %v2697 = vsub.s32 0, %v2696
        %v2698 = vrot.slane %v2693, %v2697
        %v2700 = vmul.f32 %v2375, %v2698
        %v2701 = vmul.f32 %v2380, %v2698
        %v2702 = vmul.f32 %v2385, %v2698
        %v2703 = vmul.f32 %v2390, %v2698
        %v2704 = vmul.f32 %v2395, %v2698
        %v2705 = vmul.f32 %v2400, %v2698
        %v2706 = vmul.f32 %v2405, %v2698
        %v2707 = vmul.f32 %v2410, %v2698
        %v2708 = vmul.f32 %v2415, %v2698
        %v2709 = vmul.f32 %v2420, %v2698
        %v2710 = vmul.f32 %v2425, %v2698
        %v2711 = vmul.f32 %v2430, %v2698
        %v2712 = vmul.f32 %v2435, %v2698
        %v2713 = vmul.f32 %v2440, %v2698
        %v2714 = vmul.f32 %v2445, %v2698
        %v2715 = vmul.f32 %v2450, %v2698
        %v2716 = vmul.f32 %v2455, %v2698
        %v2717 = vmul.f32 %v2460, %v2698
        %v2718 = vmul.f32 %v2465, %v2698
        %v2719 = vmul.f32 %v2470, %v2698
        %v2720 = vmul.f32 %v2475, %v2698
        %v2721 = vmul.f32 %v2480, %v2698
        %v2722 = vmul.f32 %v2485, %v2698
        %v2723 = vmul.f32 %v2490, %v2698
        %v2724 = vmul.f32 %v2495, %v2698
        %v2725 = vmul.f32 %v2500, %v2698
        %v2726 = vmul.f32 %v2505, %v2698
        %v2727 = vmul.f32 %v2510, %v2698
        %v2728 = vmul.f32 %v2515, %v2698
        %v2729 = vmul.f32 %v2520, %v2698
        %v2730 = vmul.f32 %v2525, %v2698
        %v2731 = vmul.f32 %v2530, %v2698
        %v2732 = vmul.f32 %v2535, %v2698
        %v2733 = vmul.f32 %v2540, %v2698
        %v2734 = vmul.f32 %v2545, %v2698
        %v2735 = vmul.f32 %v2550, %v2698
        %v2736 = vmul.f32 %v2555, %v2698
        %v2737 = vmul.f32 %v2560, %v2698
        %v2738 = vmul.f32 %v2565, %v2698
        %v2739 = vmul.f32 %v2570, %v2698
        %v2740 = vmul.f32 %v2575, %v2698
        %v2741 = vmul.f32 %v2580, %v2698
        %v2742 = vmul.f32 %v2585, %v2698
        %v2743 = vmul.f32 %v2590, %v2698
        %v2744 = vmul.f32 %v2595, %v2698
        %v2745 = vmul.f32 %v2600, %v2698
        %v2746 = vmul.f32 %v2605, %v2698
        %v2747 = vmul.f32 %v2610, %v2698
        %v2748 = vmul.f32 %v2615, %v2698
        %v2749 = vmul.f32 %v2620, %v2698
        %v2750 = vmul.f32 %v2625, %v2698
        %v2751 = vmul.f32 %v2630, %v2698
        %v2752 = vmul.f32 %v2635, %v2698
        %v2753 = vmul.f32 %v2640, %v2698
        %v2754 = vmul.f32 %v2645, %v2698
        %v2755 = vmul.f32 %v2650, %v2698
        %v2756 = vmul.f32 %v2655, %v2698
        %v2757 = vmul.f32 %v2660, %v2698
        %v2758 = vmul.f32 %v2665, %v2698
        %v2759 = vmul.f32 %v2670, %v2698
        %v2760 = vmul.f32 %v2675, %v2698
        %v2761 = vmul.f32 %v2680, %v2698
        %v2762 = vmul.f32 %v2685, %v2698
        %v2763 = vmul.f32 %v2690, %v2698
        %v2764 = vld [vmem:[%s10] sm:$0x1]
        %v2766 = vlaneseq
        %v2767 = vshrl.u32 %v2766, 7
        %v2768 = vsub.s32 0, %v2767
        %v2769 = vrot.slane %v2764, %v2768
        %v2771 = vadd.f32 %v2700, %v2769
        %v2772 = vadd.f32 %v2701, %v2769
        %v2773 = vadd.f32 %v2702, %v2769
        %v2774 = vadd.f32 %v2703, %v2769
        %v2775 = vadd.f32 %v2704, %v2769
        %v2776 = vadd.f32 %v2705, %v2769
        %v2777 = vadd.f32 %v2706, %v2769
        %v2778 = vadd.f32 %v2707, %v2769
        %v2779 = vadd.f32 %v2708, %v2769
        %v2780 = vadd.f32 %v2709, %v2769
        %v2781 = vadd.f32 %v2710, %v2769
        %v2782 = vadd.f32 %v2711, %v2769
        %v2783 = vadd.f32 %v2712, %v2769
        %v2784 = vadd.f32 %v2713, %v2769
        %v2785 = vadd.f32 %v2714, %v2769
        %v2786 = vadd.f32 %v2715, %v2769
        %v2787 = vadd.f32 %v2716, %v2769
        %v2788 = vadd.f32 %v2717, %v2769
        %v2789 = vadd.f32 %v2718, %v2769
        %v2790 = vadd.f32 %v2719, %v2769
        %v2791 = vadd.f32 %v2720, %v2769
        %v2792 = vadd.f32 %v2721, %v2769
        %v2793 = vadd.f32 %v2722, %v2769
        %v2794 = vadd.f32 %v2723, %v2769
        %v2795 = vadd.f32 %v2724, %v2769
        %v2796 = vadd.f32 %v2725, %v2769
        %v2797 = vadd.f32 %v2726, %v2769
        %v2798 = vadd.f32 %v2727, %v2769
        %v2799 = vadd.f32 %v2728, %v2769
        %v2800 = vadd.f32 %v2729, %v2769
        %v2801 = vadd.f32 %v2730, %v2769
        %v2802 = vadd.f32 %v2731, %v2769
        %v2803 = vadd.f32 %v2732, %v2769
        %v2804 = vadd.f32 %v2733, %v2769
        %v2805 = vadd.f32 %v2734, %v2769
        %v2806 = vadd.f32 %v2735, %v2769
        %v2807 = vadd.f32 %v2736, %v2769
        %v2808 = vadd.f32 %v2737, %v2769
        %v2809 = vadd.f32 %v2738, %v2769
        %v2810 = vadd.f32 %v2739, %v2769
        %v2811 = vadd.f32 %v2740, %v2769
        %v2812 = vadd.f32 %v2741, %v2769
        %v2813 = vadd.f32 %v2742, %v2769
        %v2814 = vadd.f32 %v2743, %v2769
        %v2815 = vadd.f32 %v2744, %v2769
        %v2816 = vadd.f32 %v2745, %v2769
        %v2817 = vadd.f32 %v2746, %v2769
        %v2818 = vadd.f32 %v2747, %v2769
        %v2819 = vadd.f32 %v2748, %v2769
        %v2820 = vadd.f32 %v2749, %v2769
        %v2821 = vadd.f32 %v2750, %v2769
        %v2822 = vadd.f32 %v2751, %v2769
        %v2823 = vadd.f32 %v2752, %v2769
        %v2824 = vadd.f32 %v2753, %v2769
        %v2825 = vadd.f32 %v2754, %v2769
        %v2826 = vadd.f32 %v2755, %v2769
        %v2827 = vadd.f32 %v2756, %v2769
        %v2828 = vadd.f32 %v2757, %v2769
        %v2829 = vadd.f32 %v2758, %v2769
        %v2830 = vadd.f32 %v2759, %v2769
        %v2831 = vadd.f32 %v2760, %v2769
        %v2832 = vadd.f32 %v2761, %v2769
        %v2833 = vadd.f32 %v2762, %v2769
        %v2834 = vadd.f32 %v2763, %v2769
        %v2835 = vmax.f32 %v2771, 0.0
        %v2836 = vmax.f32 %v2772, 0.0
        %v2837 = vmax.f32 %v2773, 0.0
        %v2838 = vmax.f32 %v2774, 0.0
        %v2839 = vmax.f32 %v2775, 0.0
        %v2840 = vmax.f32 %v2776, 0.0
        %v2841 = vmax.f32 %v2777, 0.0
        %v2842 = vmax.f32 %v2778, 0.0
        %v2843 = vmax.f32 %v2779, 0.0
        %v2844 = vmax.f32 %v2780, 0.0
        %v2845 = vmax.f32 %v2781, 0.0
        %v2846 = vmax.f32 %v2782, 0.0
        %v2847 = vmax.f32 %v2783, 0.0
        %v2848 = vmax.f32 %v2784, 0.0
        %v2849 = vmax.f32 %v2785, 0.0
        %v2850 = vmax.f32 %v2786, 0.0
        %v2851 = vmax.f32 %v2787, 0.0
        %v2852 = vmax.f32 %v2788, 0.0
        %v2853 = vmax.f32 %v2789, 0.0
        %v2854 = vmax.f32 %v2790, 0.0
        %v2855 = vmax.f32 %v2791, 0.0
        %v2856 = vmax.f32 %v2792, 0.0
        %v2857 = vmax.f32 %v2793, 0.0
        %v2858 = vmax.f32 %v2794, 0.0
        %v2859 = vmax.f32 %v2795, 0.0
        %v2860 = vmax.f32 %v2796, 0.0
        %v2861 = vmax.f32 %v2797, 0.0
        %v2862 = vmax.f32 %v2798, 0.0
        %v2863 = vmax.f32 %v2799, 0.0
        %v2864 = vmax.f32 %v2800, 0.0
        %v2865 = vmax.f32 %v2801, 0.0
        %v2866 = vmax.f32 %v2802, 0.0
        %v2867 = vmax.f32 %v2803, 0.0
        %v2868 = vmax.f32 %v2804, 0.0
        %v2869 = vmax.f32 %v2805, 0.0
        %v2870 = vmax.f32 %v2806, 0.0
        %v2871 = vmax.f32 %v2807, 0.0
        %v2872 = vmax.f32 %v2808, 0.0
        %v2873 = vmax.f32 %v2809, 0.0
        %v2874 = vmax.f32 %v2810, 0.0
        %v2875 = vmax.f32 %v2811, 0.0
        %v2876 = vmax.f32 %v2812, 0.0
        %v2877 = vmax.f32 %v2813, 0.0
        %v2878 = vmax.f32 %v2814, 0.0
        %v2879 = vmax.f32 %v2815, 0.0
        %v2880 = vmax.f32 %v2816, 0.0
        %v2881 = vmax.f32 %v2817, 0.0
        %v2882 = vmax.f32 %v2818, 0.0
        %v2883 = vmax.f32 %v2819, 0.0
        %v2884 = vmax.f32 %v2820, 0.0
        %v2885 = vmax.f32 %v2821, 0.0
        %v2886 = vmax.f32 %v2822, 0.0
        %v2887 = vmax.f32 %v2823, 0.0
        %v2888 = vmax.f32 %v2824, 0.0
        %v2889 = vmax.f32 %v2825, 0.0
        %v2890 = vmax.f32 %v2826, 0.0
        %v2891 = vmax.f32 %v2827, 0.0
        %v2892 = vmax.f32 %v2828, 0.0
        %v2893 = vmax.f32 %v2829, 0.0
        %v2894 = vmax.f32 %v2830, 0.0
        %v2895 = vmax.f32 %v2831, 0.0
        %v2896 = vmax.f32 %v2832, 0.0
        %v2897 = vmax.f32 %v2833, 0.0
        %v2898 = vmax.f32 %v2834, 0.0
        %v2899 = vadd.f32 %v1986, %v2835
        %v2900 = vadd.f32 %v1987, %v2836
        %v2901 = vadd.f32 %v1988, %v2837
        %v2902 = vadd.f32 %v1989, %v2838
        %v2903 = vadd.f32 %v1990, %v2839
        %v2904 = vadd.f32 %v1991, %v2840
        %v2905 = vadd.f32 %v1992, %v2841
        %v2906 = vadd.f32 %v1993, %v2842
        %v2907 = vadd.f32 %v1994, %v2843
        %v2908 = vadd.f32 %v1995, %v2844
        %v2909 = vadd.f32 %v1996, %v2845
        %v2910 = vadd.f32 %v1997, %v2846
        %v2911 = vadd.f32 %v1998, %v2847
        %v2912 = vadd.f32 %v1999, %v2848
        %v2913 = vadd.f32 %v2000, %v2849
        %v2914 = vadd.f32 %v2001, %v2850
        %v2915 = vadd.f32 %v2002, %v2851
        %v2916 = vadd.f32 %v2003, %v2852
        %v2917 = vadd.f32 %v2004, %v2853
        %v2918 = vadd.f32 %v2005, %v2854
        %v2919 = vadd.f32 %v2006, %v2855
        %v2920 = vadd.f32 %v2007, %v2856
        %v2921 = vadd.f32 %v2008, %v2857
        %v2922 = vadd.f32 %v2009, %v2858
        %v2923 = vadd.f32 %v2010, %v2859
        %v2924 = vadd.f32 %v2011, %v2860
        %v2925 = vadd.f32 %v2012, %v2861
        %v2926 = vadd.f32 %v2013, %v2862
        %v2927 = vadd.f32 %v2014, %v2863
        %v2928 = vadd.f32 %v2015, %v2864
        %v2929 = vadd.f32 %v2016, %v2865
        %v2930 = vadd.f32 %v2017, %v2866
        %v2931 = vadd.f32 %v2018, %v2867
        %v2932 = vadd.f32 %v2019, %v2868
        %v2933 = vadd.f32 %v2020, %v2869
        %v2934 = vadd.f32 %v2021, %v2870
        %v2935 = vadd.f32 %v2022, %v2871
        %v2936 = vadd.f32 %v2023, %v2872
        %v2937 = vadd.f32 %v2024, %v2873
        %v2938 = vadd.f32 %v2025, %v2874
        %v2939 = vadd.f32 %v2026, %v2875
        %v2940 = vadd.f32 %v2027, %v2876
        %v2941 = vadd.f32 %v2028, %v2877
        %v2942 = vadd.f32 %v2029, %v2878
        %v2943 = vadd.f32 %v2030, %v2879
        %v2944 = vadd.f32 %v2031, %v2880
        %v2945 = vadd.f32 %v2032, %v2881
        %v2946 = vadd.f32 %v2033, %v2882
        %v2947 = vadd.f32 %v2034, %v2883
        %v2948 = vadd.f32 %v2035, %v2884
        %v2949 = vadd.f32 %v2036, %v2885
        %v2950 = vadd.f32 %v2037, %v2886
        %v2951 = vadd.f32 %v2038, %v2887
        %v2952 = vadd.f32 %v2039, %v2888
        %v2953 = vadd.f32 %v2040, %v2889
        %v2954 = vadd.f32 %v2041, %v2890
        %v2955 = vadd.f32 %v2042, %v2891
        %v2956 = vadd.f32 %v2043, %v2892
        %v2957 = vadd.f32 %v2044, %v2893
        %v2958 = vadd.f32 %v2045, %v2894
        %v2959 = vadd.f32 %v2046, %v2895
        %v2960 = vadd.f32 %v2047, %v2896
        %v2961 = vadd.f32 %v2048, %v2897
        %v2962 = vadd.f32 %v2049, %v2898
        %vm2963 = vcmask 130048
        %2964 = vst.msk [vmem:[%s396] sm:$0xff] %vm2963, %v2899
        %2965 = vst.msk [vmem:[%s396 + $0x8] sm:$0xff] %vm2963, %v2900
        %2966 = vst.msk [vmem:[%s396 + $0x10] sm:$0xff] %vm2963, %v2901
        %2967 = vst.msk [vmem:[%s396 + $0x18] sm:$0xff] %vm2963, %v2902
        %2968 = vst.msk [vmem:[%s396 + $0x20] sm:$0xff] %vm2963, %v2903
        %2969 = vst.msk [vmem:[%s396 + $0x28] sm:$0xff] %vm2963, %v2904
        %2970 = vst.msk [vmem:[%s396 + $0x30] sm:$0xff] %vm2963, %v2905
        %2971 = vst.msk [vmem:[%s396 + $0x38] sm:$0xff] %vm2963, %v2906
        %2972 = vst.msk [vmem:[%s396 + $0x40] sm:$0xff] %vm2963, %v2907
        %2973 = vst.msk [vmem:[%s396 + $0x48] sm:$0xff] %vm2963, %v2908
        %2974 = vst.msk [vmem:[%s396 + $0x50] sm:$0xff] %vm2963, %v2909
        %2975 = vst.msk [vmem:[%s396 + $0x58] sm:$0xff] %vm2963, %v2910
        %2976 = vst.msk [vmem:[%s396 + $0x60] sm:$0xff] %vm2963, %v2911
        %2977 = vst.msk [vmem:[%s396 + $0x68] sm:$0xff] %vm2963, %v2912
        %2978 = vst.msk [vmem:[%s396 + $0x70] sm:$0xff] %vm2963, %v2913
        %2979 = vst.msk [vmem:[%s396 + $0x78] sm:$0xff] %vm2963, %v2914
        %2980 = vst.msk [vmem:[%s396 + $0x80] sm:$0xff] %vm2963, %v2915
        %2981 = vst.msk [vmem:[%s396 + $0x88] sm:$0xff] %vm2963, %v2916
        %2982 = vst.msk [vmem:[%s396 + $0x90] sm:$0xff] %vm2963, %v2917
        %2983 = vst.msk [vmem:[%s396 + $0x98] sm:$0xff] %vm2963, %v2918
        %2984 = vst.msk [vmem:[%s396 + $0xa0] sm:$0xff] %vm2963, %v2919
        %2985 = vst.msk [vmem:[%s396 + $0xa8] sm:$0xff] %vm2963, %v2920
        %2986 = vst.msk [vmem:[%s396 + $0xb0] sm:$0xff] %vm2963, %v2921
        %2987 = vst.msk [vmem:[%s396 + $0xb8] sm:$0xff] %vm2963, %v2922
        %2988 = vst.msk [vmem:[%s396 + $0xc0] sm:$0xff] %vm2963, %v2923
        %2989 = vst.msk [vmem:[%s396 + $0xc8] sm:$0xff] %vm2963, %v2924
        %2990 = vst.msk [vmem:[%s396 + $0xd0] sm:$0xff] %vm2963, %v2925
        %2991 = vst.msk [vmem:[%s396 + $0xd8] sm:$0xff] %vm2963, %v2926
        %2992 = vst.msk [vmem:[%s396 + $0xe0] sm:$0xff] %vm2963, %v2927
        %2993 = vst.msk [vmem:[%s396 + $0xe8] sm:$0xff] %vm2963, %v2928
        %2994 = vst.msk [vmem:[%s396 + $0xf0] sm:$0xff] %vm2963, %v2929
        %2995 = vst.msk [vmem:[%s396 + $0xf8] sm:$0xff] %vm2963, %v2930
        %2996 = vst.msk [vmem:[%s396 + $0x100] sm:$0xff] %vm2963, %v2931
        %2997 = vst.msk [vmem:[%s396 + $0x108] sm:$0xff] %vm2963, %v2932
        %2998 = vst.msk [vmem:[%s396 + $0x110] sm:$0xff] %vm2963, %v2933
        %2999 = vst.msk [vmem:[%s396 + $0x118] sm:$0xff] %vm2963, %v2934
        %3000 = vst.msk [vmem:[%s396 + $0x120] sm:$0xff] %vm2963, %v2935
        %3001 = vst.msk [vmem:[%s396 + $0x128] sm:$0xff] %vm2963, %v2936
        %3002 = vst.msk [vmem:[%s396 + $0x130] sm:$0xff] %vm2963, %v2937
        %3003 = vst.msk [vmem:[%s396 + $0x138] sm:$0xff] %vm2963, %v2938
        %3004 = vst.msk [vmem:[%s396 + $0x140] sm:$0xff] %vm2963, %v2939
        %3005 = vst.msk [vmem:[%s396 + $0x148] sm:$0xff] %vm2963, %v2940
        %3006 = vst.msk [vmem:[%s396 + $0x150] sm:$0xff] %vm2963, %v2941
        %3007 = vst.msk [vmem:[%s396 + $0x158] sm:$0xff] %vm2963, %v2942
        %3008 = vst.msk [vmem:[%s396 + $0x160] sm:$0xff] %vm2963, %v2943
        %3009 = vst.msk [vmem:[%s396 + $0x168] sm:$0xff] %vm2963, %v2944
        %3010 = vst.msk [vmem:[%s396 + $0x170] sm:$0xff] %vm2963, %v2945
        %3011 = vst.msk [vmem:[%s396 + $0x178] sm:$0xff] %vm2963, %v2946
        %3012 = vst.msk [vmem:[%s396 + $0x180] sm:$0xff] %vm2963, %v2947
        %3013 = vst.msk [vmem:[%s396 + $0x188] sm:$0xff] %vm2963, %v2948
        %3014 = vst.msk [vmem:[%s396 + $0x190] sm:$0xff] %vm2963, %v2949
        %3015 = vst.msk [vmem:[%s396 + $0x198] sm:$0xff] %vm2963, %v2950
        %3016 = vst.msk [vmem:[%s396 + $0x1a0] sm:$0xff] %vm2963, %v2951
        %3017 = vst.msk [vmem:[%s396 + $0x1a8] sm:$0xff] %vm2963, %v2952
        %3018 = vst.msk [vmem:[%s396 + $0x1b0] sm:$0xff] %vm2963, %v2953
        %3019 = vst.msk [vmem:[%s396 + $0x1b8] sm:$0xff] %vm2963, %v2954
        %3020 = vst.msk [vmem:[%s396 + $0x1c0] sm:$0xff] %vm2963, %v2955
        %3021 = vst.msk [vmem:[%s396 + $0x1c8] sm:$0xff] %vm2963, %v2956
        %3022 = vst.msk [vmem:[%s396 + $0x1d0] sm:$0xff] %vm2963, %v2957
        %3023 = vst.msk [vmem:[%s396 + $0x1d8] sm:$0xff] %vm2963, %v2958
        %3024 = vst.msk [vmem:[%s396 + $0x1e0] sm:$0xff] %vm2963, %v2959
        %3025 = vst.msk [vmem:[%s396 + $0x1e8] sm:$0xff] %vm2963, %v2960
        %3026 = vst.msk [vmem:[%s396 + $0x1f0] sm:$0xff] %vm2963, %v2961
        %3027 = vst.msk [vmem:[%s396 + $0x1f8] sm:$0xff] %vm2963, %v2962
        %s3028 = sand.u32 %s274, 1
        %s3029 = scalar_lea.sflag [#allocation3], %s3028
        %s3030 = sand.u32 %s274, 1
        %s3031 = smul.addr %s3030, 512
        %s3032 = scalar_lea.vmem [#allocation2], %s3031
        // Predicated region
        $region65: #{asym_bottleneck_forward.5} parent=63 // pred_check
          %p3033 = pneg %p284
        $region66: #{asym_bottleneck_forward.5} parent=63 // pred_check_branch
          %3035 = sbr.rel (%p3033) target = $region68
        $region67: #{asym_bottleneck_forward.5} parent=63 // pred_region
          %s3036 = smul.u32 64, %s25
          %s3038 = ssub.s32 8192, 8192
          %3039 = vsyncadd %s3029, %s3038
          %s3040 = smul.addr %s3036, 128
          %s3041 = scalar_lea.hbm %s11, %s3040
          %s3042 = sshll.u32 %s3032, 4
          %s3043 = int_to_ptr.vmem [resolvable:$true] %s3042
          %3048 = dma.vmem_to_hbm [thread:$0]  %s3043, 8192, %s3041, %s3029, 128, 128, 8
        $region68: #{asym_bottleneck_forward.5} parent=63 // pred_fallthru
          _
      $region64: #{asym_bottleneck_forward.5} parent=5 // pred_fallthru
        _
      %p3049 = scmp.le.s32.totalorder 2, %s20
      // Predicated region
      $region69: #{asym_bottleneck_forward.5} parent=5 // pred_check
        %p3050 = pneg %p3049
      $region70: #{asym_bottleneck_forward.5} parent=5 // pred_check_branch
        %3052 = sbr.rel (%p3050) target = $region72
      $region71: #{asym_bottleneck_forward.5} parent=5 // pred_region
        %s3053 = ssub.s32 %s20, 2
        // Predicated region
        $region73: #{asym_bottleneck_forward.5} parent=71 // pred_check
          %p3054 = pneg %p290
        $region74: #{asym_bottleneck_forward.5} parent=71 // pred_check_branch
          %3056 = sbr.rel (%p3054) target = $region76
        $region75: #{asym_bottleneck_forward.5} parent=71 // pred_region
          %s3057 = sand.u32 %s275, 1
          %s3058 = scalar_lea.sflag [#allocation3], %s3057
          %s3059 = sand.u32 %s275, 1
          %s3060 = smul.addr %s3059, 512
          %s3061 = scalar_lea.vmem [#allocation2], %s3060
          %3062 = dma.done %s3058, 8192
        $region76: #{asym_bottleneck_forward.5} parent=71 // pred_fallthru
          _
      $region72: #{asym_bottleneck_forward.5} parent=5 // pred_fallthru
        _
    $region6: #{asym_bottleneck_forward.5} parent=1 // loop_footer
      %s24 = sadd.s32 1, %s20
    $region7: #{asym_bottleneck_forward.5} parent=1 // loop_footer_branch
      %19 = sbr.rel target = $region3
    $region8: #{asym_bottleneck_forward.5} parent=1 // loop_exit
      _
    %3063 = vsyncpa [#allocation3], 1
    %s3064 = scalar_lea.sflag [#allocation3], 1
    %3065 = vsyncpa %s3064, 1

</llo_original>
